<compile_context>
chip_gen: v6e
topology: v6e:2x2x1
jax: 0.10.0
libtpu: 0.0.40
codegen_flags: <defaults>
</compile_context>

<pallas_src>
import functools

import jax
import jax.numpy as jnp
import numpy as np
from jax import lax
from jax.experimental import pallas as pl
from jax.experimental.pallas import tpu as pltpu


def _round_up(x, m):
    return ((x + m - 1) // m) * m


def _block_kernel(x_ref, w1_ref, w2_ref, bn_ref, *rest, stride, has_proj):
    """Fused conv1+BN1+ReLU -> [shortcut] -> conv2+BN2+add+ReLU.

    x_ref:   (1, H, W, Cin)          bf16 input (one batch element)
    w1_ref:  (9*Cin, Cout_p)         bf16 conv1 weights (tap-major rows)
    w2_ref:  (9*Cout_p, Cout_p)      bf16 conv2 weights
    bn_ref:  (6, Cout_p)             f32 rows: s1, b1, s2, b2, s_sc, b_sc
    rest:    [wsc_ref,] o_ref, xpad, out1pad, im2col, acc
    """
    if has_proj:
        wsc_ref, o_ref, xpad, out1pad, im2col, acc = rest
    else:
        o_ref, xpad, out1pad, im2col, acc = rest

    _, h, w, cin = x_ref.shape
    _, hout, wout, coutp = o_ref.shape
    hw = hout * wout

    def build_im2col(src, c, s):
        # Pack the 9 (kh, kw) taps of a 3x3 conv into (hw, 9*c) so the whole
        # conv is one big-K MXU matmul instead of 9 small-K dots.
        for kh in range(3):
            for kw in range(3):
                if s == 1:
                    patch = src[kh:kh + hout, kw:kw + wout, :]
                else:
                    blk = src[kh:kh + (hout - 1) * s + 1,
                              kw:kw + (wout - 1) * s + 1, :]
                    patch = lax.slice(blk, (0, 0, 0), blk.shape, (s, s, 1))
                t = kh * 3 + kw
                im2col[:, t * c:(t + 1) * c] = patch.reshape(hw, c)

    # ---- zero-halo input in VMEM (no HBM jnp.pad of activations) ----
    xpad[...] = jnp.zeros_like(xpad)
    xpad[1:h + 1, 1:w + 1, :] = x_ref[0]

    # ---- conv1 (3x3, stride) + BN1 + ReLU -> padded VMEM scratch ----
    build_im2col(xpad, cin, stride)
    y1 = jnp.dot(im2col[:, :9 * cin], w1_ref[...],
                 preferred_element_type=jnp.float32)
    y1 = jnp.maximum(y1 * bn_ref[0:1, :] + bn_ref[1:2, :], 0.0)
    out1pad[...] = jnp.zeros_like(out1pad)
    out1pad[1:hout + 1, 1:wout + 1, :] = (
        y1.reshape(hout, wout, coutp).astype(out1pad.dtype))

    # ---- shortcut branch -> f32 accumulator ----
    if has_proj:
        if stride == 1:
            xin = xpad[1:1 + hout, 1:1 + wout, :]
        else:
            blk = xpad[1:1 + (hout - 1) * stride + 1,
                       1:1 + (wout - 1) * stride + 1, :]
            xin = lax.slice(blk, (0, 0, 0), blk.shape, (stride, stride, 1))
        res = jnp.dot(xin.reshape(hw, cin), wsc_ref[...],
                      preferred_element_type=jnp.float32)
        acc[...] = res * bn_ref[4:5, :] + bn_ref[5:6, :]
    else:
        # identity shortcut: cin == cout and stride == 1; zero-pad lanes.
        res = xpad[1:1 + hout, 1:1 + wout, :].reshape(hw, cin)
        res = res.astype(jnp.float32)
        if coutp > cin:
            res = jnp.concatenate(
                [res, jnp.zeros((hw, coutp - cin), jnp.float32)], axis=1)
        acc[...] = res

    # ---- conv2 (3x3, 1) + BN2 + residual add + ReLU -> lane-dense store ----
    build_im2col(out1pad, coutp, 1)
    y2 = jnp.dot(im2col[:, :9 * coutp], w2_ref[...],
                 preferred_element_type=jnp.float32)
    out = jnp.maximum(y2 * bn_ref[2:3, :] + bn_ref[3:4, :] + acc[...], 0.0)
    o_ref[0] = out.reshape(hout, wout, coutp).astype(o_ref.dtype)


def fold_bn(gamma, beta, running_mean, running_var, eps=1e-5):
    scale = gamma / jnp.sqrt(running_var + eps)
    bias = beta - running_mean * scale
    return scale, bias


def my_block_forward(x_nchw, params, in_channels, out_channels, stride=1):
    """Pallas implementation of My_Block.forward (x is NCHW like PyTorch)."""
    x = jnp.transpose(x_nchw, (0, 2, 3, 1))             # NCHW -> NHWC
    n, h, w, cin = x.shape
    cout = out_channels
    cout_p = _round_up(cout, 128)                        # lane-dense channels
    hout = (h + 2 - 3) // stride + 1
    wout = (w + 2 - 3) // stride + 1
    has_proj = (in_channels != out_channels) or (stride != 1)

    def pad_lanes(a):                                    # pad last dim -> cout_p
        return jnp.pad(a, [(0, 0)] * (a.ndim - 1) + [(0, cout_p - a.shape[-1])])

    s1, b1 = fold_bn(*params["bn1"])
    s2, b2 = fold_bn(*params["bn2"])
    w1 = pad_lanes(params["w1"]).reshape(9 * cin, cout_p).astype(jnp.bfloat16)
    w2 = jnp.pad(params["w2"], ((0, 0), (0, 0),
                                (0, cout_p - cout), (0, cout_p - cout)))
    w2 = w2.reshape(9 * cout_p, cout_p).astype(jnp.bfloat16)
    if has_proj:
        ssc, bsc = fold_bn(*params["bn_sc"])
        wsc = pad_lanes(params["w_sc"]).reshape(cin, cout_p).astype(jnp.bfloat16)
    else:
        ssc = jnp.zeros((cout,), jnp.float32)
        bsc = jnp.zeros((cout,), jnp.float32)
    bn = jnp.stack([pad_lanes(s1), pad_lanes(b1), pad_lanes(s2), pad_lanes(b2),
                    pad_lanes(ssc), pad_lanes(bsc)]).astype(jnp.float32)

    x_bf = x.astype(jnp.bfloat16)                        # bf16 MXU operands

    in_specs = [
        pl.BlockSpec((1, h, w, cin), lambda i: (i, 0, 0, 0)),
        pl.BlockSpec((9 * cin, cout_p), lambda i: (0, 0)),
        pl.BlockSpec((9 * cout_p, cout_p), lambda i: (0, 0)),
        pl.BlockSpec((6, cout_p), lambda i: (0, 0)),
    ]
    inputs = [x_bf, w1, w2, bn]
    if has_proj:
        in_specs.append(pl.BlockSpec((cin, cout_p), lambda i: (0, 0)))
        inputs.append(wsc)

    scratch_shapes = [
        pltpu.VMEM((h + 2, w + 2, cin), jnp.bfloat16),            # padded x
        pltpu.VMEM((hout + 2, wout + 2, cout_p), jnp.bfloat16),   # padded out1
        pltpu.VMEM((hout * wout, 9 * max(cin, cout_p)), jnp.bfloat16),  # im2col
        pltpu.VMEM((hout * wout, cout_p), jnp.float32),           # shortcut acc
    ]

    flops = 2 * n * hout * wout * (9 * cin * cout_p + 9 * cout_p * cout_p
                                   + (cin * cout_p if has_proj else 0))
    bytes_accessed = int(
        x_bf.size * 2 + w1.size * 2 + w2.size * 2 + bn.size * 4
        + (wsc.size * 2 if has_proj else 0)
        + n * hout * wout * cout_p * 4)

    kernel = functools.partial(_block_kernel, stride=stride, has_proj=has_proj)
    out = pl.pallas_call(
        kernel,
        out_shape=jax.ShapeDtypeStruct((n, hout, wout, cout_p), jnp.float32),
        grid=(n,),
        in_specs=in_specs,
        out_specs=pl.BlockSpec((1, hout, wout, cout_p),
                               lambda i: (i, 0, 0, 0)),
        scratch_shapes=scratch_shapes,
        compiler_params=pltpu.CompilerParams(
            dimension_semantics=("parallel",),
            vmem_limit_bytes=32 * 1024 * 1024),
        cost_estimate=pl.CostEstimate(flops=flops, transcendentals=0,
                                      bytes_accessed=bytes_accessed),
    )(*inputs)

    out = out[..., :cout]                                # drop lane padding
    return jnp.transpose(out, (0, 3, 1, 2))              # NHWC -> NCHW


def init_my_block_params(key, in_channels, out_channels, stride):
    ks = jax.random.split(key, 12)

    def conv_w(k, kh, kw, ci, co):
        fan_in = ci * kh * kw
        return jax.random.normal(k, (kh, kw, ci, co), jnp.float32) / np.sqrt(fan_in)

    def bn_params(k1, k2, k3, c):
        gamma = 1.0 + 0.1 * jax.random.normal(k1, (c,), jnp.float32)
        beta = 0.1 * jax.random.normal(k2, (c,), jnp.float32)
        rmean = 0.1 * jax.random.normal(k3, (c,), jnp.float32)
        rvar = 0.9 * jnp.ones((c,), jnp.float32)
        return gamma, beta, rmean, rvar

    params = {
        "w1": conv_w(ks[0], 3, 3, in_channels, out_channels),
        "bn1": bn_params(ks[1], ks[2], ks[3], out_channels),
        "w2": conv_w(ks[4], 3, 3, out_channels, out_channels),
        "bn2": bn_params(ks[5], ks[6], ks[7], out_channels),
    }
    if in_channels != out_channels or stride != 1:
        params["w_sc"] = conv_w(ks[8], 1, 1, in_channels, out_channels)
        params["bn_sc"] = bn_params(ks[9], ks[10], ks[11], out_channels)
    return params


# -------------------- pure-JAX reference for verification --------------------
def _ref_conv(x, w, stride, pad):
    return lax.conv_general_dilated(
        x, w, (stride, stride), [(pad, pad), (pad, pad)],
        dimension_numbers=("NHWC", "HWIO", "NHWC"))


def ref_forward(x_nchw, params, in_channels, out_channels, stride=1):
    x = jnp.transpose(x_nchw, (0, 2, 3, 1))
    s1, b1 = fold_bn(*params["bn1"])
    s2, b2 = fold_bn(*params["bn2"])
    y = jnp.maximum(_ref_conv(x, params["w1"], stride, 1) * s1 + b1, 0.0)
    if in_channels != out_channels or stride != 1:
        s_sc, b_sc = fold_bn(*params["bn_sc"])
        sc = _ref_conv(x, params["w_sc"], stride, 0) * s_sc + b_sc
    else:
        sc = x
    out = jnp.maximum(_ref_conv(y, params["w2"], 1, 1) * s2 + b2 + sc, 0.0)
    return jnp.transpose(out, (0, 3, 1, 2))


if __name__ == "__main__":
    key = jax.random.PRNGKey(0)
    k1, k2, k3, k4 = jax.random.split(key, 4)

    # Case 1: projection shortcut (in_channels != out_channels).
    N, CIN, H, W, COUT, STRIDE = 2, 4, 16, 16, 8, 1
    x = jax.random.normal(k1, (N, CIN, H, W), jnp.float32)
    params = init_my_block_params(k2, CIN, COUT, STRIDE)
    out = jax.block_until_ready(my_block_forward(x, params, CIN, COUT, STRIDE))
    ref = ref_forward(x, params, CIN, COUT, STRIDE)
    assert out.shape == (N, COUT, H, W)
    np.testing.assert_allclose(np.asarray(out), np.asarray(ref),
                               rtol=2e-2, atol=2e-2)

    # Case 2: identity shortcut (in_channels == out_channels, stride == 1).
    x2 = jax.random.normal(k3, (N, COUT, H, W), jnp.float32)
    params2 = init_my_block_params(k4, COUT, COUT, 1)
    out2 = jax.block_until_ready(my_block_forward(x2, params2, COUT, COUT, 1))
    ref2 = ref_forward(x2, params2, COUT, COUT, 1)
    assert out2.shape == (N, COUT, H, W)
    np.testing.assert_allclose(np.asarray(out2), np.asarray(ref2),
                               rtol=2e-2, atol=2e-2)

    print("KERNEL_OK")
</pallas_src>

<mosaic_0001>
module attributes {stable_mosaic.version = 11 : i64} {
  func.func @_block_kernel(%arg0: i32, %arg1: memref<1x16x16x4xbf16, #tpu.memory_space<vmem>>, %arg2: memref<36x128xbf16, #tpu.memory_space<vmem>>, %arg3: memref<1152x128xbf16, #tpu.memory_space<vmem>>, %arg4: memref<6x128xf32, #tpu.memory_space<vmem>>, %arg5: memref<4x128xbf16, #tpu.memory_space<vmem>>, %arg6: memref<1x16x16x128xf32, #tpu.memory_space<vmem>>, %arg7: memref<18x18x4xbf16, #tpu.memory_space<vmem>>, %arg8: memref<18x18x128xbf16, #tpu.memory_space<vmem>>, %arg9: memref<256x1152xbf16, #tpu.memory_space<vmem>>, %arg10: memref<256x128xf32, #tpu.memory_space<vmem>>) attributes {dimension_semantics = [#tpu.dimension_semantics<parallel>], iteration_bounds = array<i64: 2>, scalar_prefetch = 0 : i64, scratch_operands = 4 : i64, tpu.core_type = #tpu.core_type<tc>, window_params = [{transform_indices = @transform_0, window_bounds = array<i64: 1, 16, 16, 4>}, {pipeline_mode = #tpu.pipeline_mode<synchronous>, transform_indices = @transform_1, window_bounds = array<i64: 36, 128>}, {pipeline_mode = #tpu.pipeline_mode<synchronous>, transform_indices = @transform_2, window_bounds = array<i64: 1152, 128>}, {pipeline_mode = #tpu.pipeline_mode<synchronous>, transform_indices = @transform_3, window_bounds = array<i64: 6, 128>}, {pipeline_mode = #tpu.pipeline_mode<synchronous>, transform_indices = @transform_4, window_bounds = array<i64: 4, 128>}, {transform_indices = @transform_5, window_bounds = array<i64: 1, 16, 16, 128>}]} {
    %cst = arith.constant 0.000000e+00 : bf16
    %0 = vector.broadcast %cst : bf16 to vector<18x18x4xbf16>
    %c0 = arith.constant 0 : index
    %c0_0 = arith.constant 0 : index
    %c0_1 = arith.constant 0 : index
    %1 = vector.load %arg7[%c0, %c0_0, %c0_1] : memref<18x18x4xbf16, #tpu.memory_space<vmem>>, vector<18x18x4xbf16>
    tpu.vector_store %arg7[%c0, %c0_0, %c0_1], %0 {strides = array<i32>} : memref<18x18x4xbf16, #tpu.memory_space<vmem>>, vector<18x18x4xbf16>,
    %c0_2 = arith.constant 0 : index
    %c0_3 = arith.constant 0 : index
    %c0_4 = arith.constant 0 : index
    %c0_5 = arith.constant 0 : index
    %2 = vector.load %arg1[%c0_2, %c0_3, %c0_4, %c0_5] : memref<1x16x16x4xbf16, #tpu.memory_space<vmem>>, vector<1x16x16x4xbf16>
    %3 = vector.shape_cast %2 : vector<1x16x16x4xbf16> to vector<16x16x4xbf16>
    %c1 = arith.constant 1 : index
    %c1_6 = arith.constant 1 : index
    %c0_7 = arith.constant 0 : index
    %4 = vector.load %arg7[%c1, %c1_6, %c0_7] : memref<18x18x4xbf16, #tpu.memory_space<vmem>>, vector<16x16x4xbf16>
    tpu.vector_store %arg7[%c1, %c1_6, %c0_7], %3 {strides = array<i32>} : memref<18x18x4xbf16, #tpu.memory_space<vmem>>, vector<16x16x4xbf16>,
    %c0_8 = arith.constant 0 : index
    %c0_9 = arith.constant 0 : index
    %c0_10 = arith.constant 0 : index
    %5 = vector.load %arg7[%c0_8, %c0_9, %c0_10] : memref<18x18x4xbf16, #tpu.memory_space<vmem>>, vector<16x16x4xbf16>
    %6 = vector.shape_cast %5 : vector<16x16x4xbf16> to vector<256x4xbf16>
    %c0_11 = arith.constant 0 : index
    %c0_12 = arith.constant 0 : index
    %7 = vector.load %arg9[%c0_11, %c0_12] : memref<256x1152xbf16, #tpu.memory_space<vmem>>, vector<256x4xbf16>
    tpu.vector_store %arg9[%c0_11, %c0_12], %6 {strides = array<i32>} : memref<256x1152xbf16, #tpu.memory_space<vmem>>, vector<256x4xbf16>,
    %c0_13 = arith.constant 0 : index
    %c1_14 = arith.constant 1 : index
    %c0_15 = arith.constant 0 : index
    %8 = vector.load %arg7[%c0_13, %c1_14, %c0_15] : memref<18x18x4xbf16, #tpu.memory_space<vmem>>, vector<16x16x4xbf16>
    %9 = vector.shape_cast %8 : vector<16x16x4xbf16> to vector<256x4xbf16>
    %c0_16 = arith.constant 0 : index
    %c4 = arith.constant 4 : index
    %10 = vector.load %arg9[%c0_16, %c4] : memref<256x1152xbf16, #tpu.memory_space<vmem>>, vector<256x4xbf16>
    tpu.vector_store %arg9[%c0_16, %c4], %9 {strides = array<i32>} : memref<256x1152xbf16, #tpu.memory_space<vmem>>, vector<256x4xbf16>,
    %c0_17 = arith.constant 0 : index
    %c2 = arith.constant 2 : index
    %c0_18 = arith.constant 0 : index
    %11 = vector.load %arg7[%c0_17, %c2, %c0_18] : memref<18x18x4xbf16, #tpu.memory_space<vmem>>, vector<16x16x4xbf16>
    %12 = vector.shape_cast %11 : vector<16x16x4xbf16> to vector<256x4xbf16>
    %c0_19 = arith.constant 0 : index
    %c8 = arith.constant 8 : index
    %13 = vector.load %arg9[%c0_19, %c8] : memref<256x1152xbf16, #tpu.memory_space<vmem>>, vector<256x4xbf16>
    tpu.vector_store %arg9[%c0_19, %c8], %12 {strides = array<i32>} : memref<256x1152xbf16, #tpu.memory_space<vmem>>, vector<256x4xbf16>,
    %c1_20 = arith.constant 1 : index
    %c0_21 = arith.constant 0 : index
    %c0_22 = arith.constant 0 : index
    %14 = vector.load %arg7[%c1_20, %c0_21, %c0_22] : memref<18x18x4xbf16, #tpu.memory_space<vmem>>, vector<16x16x4xbf16>
    %15 = vector.shape_cast %14 : vector<16x16x4xbf16> to vector<256x4xbf16>
    %c0_23 = arith.constant 0 : index
    %c12 = arith.constant 12 : index
    %16 = vector.load %arg9[%c0_23, %c12] : memref<256x1152xbf16, #tpu.memory_space<vmem>>, vector<256x4xbf16>
    tpu.vector_store %arg9[%c0_23, %c12], %15 {strides = array<i32>} : memref<256x1152xbf16, #tpu.memory_space<vmem>>, vector<256x4xbf16>,
    %c1_24 = arith.constant 1 : index
    %c1_25 = arith.constant 1 : index
    %c0_26 = arith.constant 0 : index
    %17 = vector.load %arg7[%c1_24, %c1_25, %c0_26] : memref<18x18x4xbf16, #tpu.memory_space<vmem>>, vector<16x16x4xbf16>
    %18 = vector.shape_cast %17 : vector<16x16x4xbf16> to vector<256x4xbf16>
    %c0_27 = arith.constant 0 : index
    %c16 = arith.constant 16 : index
    %19 = vector.load %arg9[%c0_27, %c16] : memref<256x1152xbf16, #tpu.memory_space<vmem>>, vector<256x4xbf16>
    tpu.vector_store %arg9[%c0_27, %c16], %18 {strides = array<i32>} : memref<256x1152xbf16, #tpu.memory_space<vmem>>, vector<256x4xbf16>,
    %c1_28 = arith.constant 1 : index
    %c2_29 = arith.constant 2 : index
    %c0_30 = arith.constant 0 : index
    %20 = vector.load %arg7[%c1_28, %c2_29, %c0_30] : memref<18x18x4xbf16, #tpu.memory_space<vmem>>, vector<16x16x4xbf16>
    %21 = vector.shape_cast %20 : vector<16x16x4xbf16> to vector<256x4xbf16>
    %c0_31 = arith.constant 0 : index
    %c20 = arith.constant 20 : index
    %22 = vector.load %arg9[%c0_31, %c20] : memref<256x1152xbf16, #tpu.memory_space<vmem>>, vector<256x4xbf16>
    tpu.vector_store %arg9[%c0_31, %c20], %21 {strides = array<i32>} : memref<256x1152xbf16, #tpu.memory_space<vmem>>, vector<256x4xbf16>,
    %c2_32 = arith.constant 2 : index
    %c0_33 = arith.constant 0 : index
    %c0_34 = arith.constant 0 : index
    %23 = vector.load %arg7[%c2_32, %c0_33, %c0_34] : memref<18x18x4xbf16, #tpu.memory_space<vmem>>, vector<16x16x4xbf16>
    %24 = vector.shape_cast %23 : vector<16x16x4xbf16> to vector<256x4xbf16>
    %c0_35 = arith.constant 0 : index
    %c24 = arith.constant 24 : index
    %25 = vector.load %arg9[%c0_35, %c24] : memref<256x1152xbf16, #tpu.memory_space<vmem>>, vector<256x4xbf16>
    tpu.vector_store %arg9[%c0_35, %c24], %24 {strides = array<i32>} : memref<256x1152xbf16, #tpu.memory_space<vmem>>, vector<256x4xbf16>,
    %c2_36 = arith.constant 2 : index
    %c1_37 = arith.constant 1 : index
    %c0_38 = arith.constant 0 : index
    %26 = vector.load %arg7[%c2_36, %c1_37, %c0_38] : memref<18x18x4xbf16, #tpu.memory_space<vmem>>, vector<16x16x4xbf16>
    %27 = vector.shape_cast %26 : vector<16x16x4xbf16> to vector<256x4xbf16>
    %c0_39 = arith.constant 0 : index
    %c28 = arith.constant 28 : index
    %28 = vector.load %arg9[%c0_39, %c28] : memref<256x1152xbf16, #tpu.memory_space<vmem>>, vector<256x4xbf16>
    tpu.vector_store %arg9[%c0_39, %c28], %27 {strides = array<i32>} : memref<256x1152xbf16, #tpu.memory_space<vmem>>, vector<256x4xbf16>,
    %c2_40 = arith.constant 2 : index
    %c2_41 = arith.constant 2 : index
    %c0_42 = arith.constant 0 : index
    %29 = vector.load %arg7[%c2_40, %c2_41, %c0_42] : memref<18x18x4xbf16, #tpu.memory_space<vmem>>, vector<16x16x4xbf16>
    %30 = vector.shape_cast %29 : vector<16x16x4xbf16> to vector<256x4xbf16>
    %c0_43 = arith.constant 0 : index
    %c32 = arith.constant 32 : index
    %31 = vector.load %arg9[%c0_43, %c32] : memref<256x1152xbf16, #tpu.memory_space<vmem>>, vector<256x4xbf16>
    tpu.vector_store %arg9[%c0_43, %c32], %30 {strides = array<i32>} : memref<256x1152xbf16, #tpu.memory_space<vmem>>, vector<256x4xbf16>,
    %c0_44 = arith.constant 0 : index
    %c0_45 = arith.constant 0 : index
    %32 = vector.load %arg9[%c0_44, %c0_45] : memref<256x1152xbf16, #tpu.memory_space<vmem>>, vector<256x36xbf16>
    %c0_46 = arith.constant 0 : index
    %c0_47 = arith.constant 0 : index
    %33 = vector.load %arg2[%c0_46, %c0_47] : memref<36x128xbf16, #tpu.memory_space<vmem>>, vector<36x128xbf16>
    %cst_48 = arith.constant dense<0.000000e+00> : vector<256x128xf32>
    %34 = tpu.matmul %32, %33, %cst_48 {dimension_numbers = #tpu.dot_dimension_numbers<[1], [0], [0], [1], [0, 0, 1, 1], [], []>} : vector<256x36xbf16>, vector<36x128xbf16>, vector<256x128xf32> -> vector<256x128xf32>
    %c0_49 = arith.constant 0 : index
    %c0_50 = arith.constant 0 : index
    %35 = vector.load %arg4[%c0_49, %c0_50] : memref<6x128xf32, #tpu.memory_space<vmem>>, vector<1x128xf32>
    %36 = vector.broadcast %35 : vector<1x128xf32> to vector<256x128xf32>
    %37 = arith.mulf %34, %36 : vector<256x128xf32>
    %c1_51 = arith.constant 1 : index
    %c0_52 = arith.constant 0 : index
    %38 = vector.load %arg4[%c1_51, %c0_52] : memref<6x128xf32, #tpu.memory_space<vmem>>, vector<1x128xf32>
    %39 = vector.broadcast %38 : vector<1x128xf32> to vector<256x128xf32>
    %40 = arith.addf %37, %39 : vector<256x128xf32>
    %cst_53 = arith.constant 0.000000e+00 : f32
    %41 = vector.broadcast %cst_53 : f32 to vector<256x128xf32>
    %42 = arith.maximumf %40, %41 : vector<256x128xf32>
    %cst_54 = arith.constant 0.000000e+00 : bf16
    %43 = vector.broadcast %cst_54 : bf16 to vector<18x18x128xbf16>
    %c0_55 = arith.constant 0 : index
    %c0_56 = arith.constant 0 : index
    %c0_57 = arith.constant 0 : index
    %44 = vector.load %arg8[%c0_55, %c0_56, %c0_57] : memref<18x18x128xbf16, #tpu.memory_space<vmem>>, vector<18x18x128xbf16>
    tpu.vector_store %arg8[%c0_55, %c0_56, %c0_57], %43 {strides = array<i32>} : memref<18x18x128xbf16, #tpu.memory_space<vmem>>, vector<18x18x128xbf16>,
    %45 = vector.shape_cast %42 : vector<256x128xf32> to vector<16x16x128xf32>
    %46 = arith.truncf %45 : vector<16x16x128xf32> to vector<16x16x128xbf16>
    %c1_58 = arith.constant 1 : index
    %c1_59 = arith.constant 1 : index
    %c0_60 = arith.constant 0 : index
    %47 = vector.load %arg8[%c1_58, %c1_59, %c0_60] : memref<18x18x128xbf16, #tpu.memory_space<vmem>>, vector<16x16x128xbf16>
    tpu.vector_store %arg8[%c1_58, %c1_59, %c0_60], %46 {strides = array<i32>} : memref<18x18x128xbf16, #tpu.memory_space<vmem>>, vector<16x16x128xbf16>,
    %c1_61 = arith.constant 1 : index
    %c1_62 = arith.constant 1 : index
    %c0_63 = arith.constant 0 : index
    %48 = vector.load %arg7[%c1_61, %c1_62, %c0_63] : memref<18x18x4xbf16, #tpu.memory_space<vmem>>, vector<16x16x4xbf16>
    %49 = vector.shape_cast %48 : vector<16x16x4xbf16> to vector<256x4xbf16>
    %c0_64 = arith.constant 0 : index
    %c0_65 = arith.constant 0 : index
    %50 = vector.load %arg5[%c0_64, %c0_65] : memref<4x128xbf16, #tpu.memory_space<vmem>>, vector<4x128xbf16>
    %cst_66 = arith.constant dense<0.000000e+00> : vector<256x128xf32>
    %51 = tpu.matmul %49, %50, %cst_66 {dimension_numbers = #tpu.dot_dimension_numbers<[1], [0], [0], [1], [0, 0, 1, 1], [], []>} : vector<256x4xbf16>, vector<4x128xbf16>, vector<256x128xf32> -> vector<256x128xf32>
    %c4_67 = arith.constant 4 : index
    %c0_68 = arith.constant 0 : index
    %52 = vector.load %arg4[%c4_67, %c0_68] : memref<6x128xf32, #tpu.memory_space<vmem>>, vector<1x128xf32>
    %53 = vector.broadcast %52 : vector<1x128xf32> to vector<256x128xf32>
    %54 = arith.mulf %51, %53 : vector<256x128xf32>
    %c5 = arith.constant 5 : index
    %c0_69 = arith.constant 0 : index
    %55 = vector.load %arg4[%c5, %c0_69] : memref<6x128xf32, #tpu.memory_space<vmem>>, vector<1x128xf32>
    %56 = vector.broadcast %55 : vector<1x128xf32> to vector<256x128xf32>
    %57 = arith.addf %54, %56 : vector<256x128xf32>
    %c0_70 = arith.constant 0 : index
    %c0_71 = arith.constant 0 : index
    %58 = vector.load %arg10[%c0_70, %c0_71] : memref<256x128xf32, #tpu.memory_space<vmem>>, vector<256x128xf32>
    tpu.vector_store %arg10[%c0_70, %c0_71], %57 {strides = array<i32>} : memref<256x128xf32, #tpu.memory_space<vmem>>, vector<256x128xf32>,
    %c0_72 = arith.constant 0 : index
    %c0_73 = arith.constant 0 : index
    %c0_74 = arith.constant 0 : index
    %59 = vector.load %arg8[%c0_72, %c0_73, %c0_74] : memref<18x18x128xbf16, #tpu.memory_space<vmem>>, vector<16x16x128xbf16>
    %60 = vector.shape_cast %59 : vector<16x16x128xbf16> to vector<256x128xbf16>
    %c0_75 = arith.constant 0 : index
    %c0_76 = arith.constant 0 : index
    %61 = vector.load %arg9[%c0_75, %c0_76] : memref<256x1152xbf16, #tpu.memory_space<vmem>>, vector<256x128xbf16>
    tpu.vector_store %arg9[%c0_75, %c0_76], %60 {strides = array<i32>} : memref<256x1152xbf16, #tpu.memory_space<vmem>>, vector<256x128xbf16>,
    %c0_77 = arith.constant 0 : index
    %c1_78 = arith.constant 1 : index
    %c0_79 = arith.constant 0 : index
    %62 = vector.load %arg8[%c0_77, %c1_78, %c0_79] : memref<18x18x128xbf16, #tpu.memory_space<vmem>>, vector<16x16x128xbf16>
    %63 = vector.shape_cast %62 : vector<16x16x128xbf16> to vector<256x128xbf16>
    %c0_80 = arith.constant 0 : index
    %c128 = arith.constant 128 : index
    %64 = vector.load %arg9[%c0_80, %c128] : memref<256x1152xbf16, #tpu.memory_space<vmem>>, vector<256x128xbf16>
    tpu.vector_store %arg9[%c0_80, %c128], %63 {strides = array<i32>} : memref<256x1152xbf16, #tpu.memory_space<vmem>>, vector<256x128xbf16>,
    %c0_81 = arith.constant 0 : index
    %c2_82 = arith.constant 2 : index
    %c0_83 = arith.constant 0 : index
    %65 = vector.load %arg8[%c0_81, %c2_82, %c0_83] : memref<18x18x128xbf16, #tpu.memory_space<vmem>>, vector<16x16x128xbf16>
    %66 = vector.shape_cast %65 : vector<16x16x128xbf16> to vector<256x128xbf16>
    %c0_84 = arith.constant 0 : index
    %c256 = arith.constant 256 : index
    %67 = vector.load %arg9[%c0_84, %c256] : memref<256x1152xbf16, #tpu.memory_space<vmem>>, vector<256x128xbf16>
    tpu.vector_store %arg9[%c0_84, %c256], %66 {strides = array<i32>} : memref<256x1152xbf16, #tpu.memory_space<vmem>>, vector<256x128xbf16>,
    %c1_85 = arith.constant 1 : index
    %c0_86 = arith.constant 0 : index
    %c0_87 = arith.constant 0 : index
    %68 = vector.load %arg8[%c1_85, %c0_86, %c0_87] : memref<18x18x128xbf16, #tpu.memory_space<vmem>>, vector<16x16x128xbf16>
    %69 = vector.shape_cast %68 : vector<16x16x128xbf16> to vector<256x128xbf16>
    %c0_88 = arith.constant 0 : index
    %c384 = arith.constant 384 : index
    %70 = vector.load %arg9[%c0_88, %c384] : memref<256x1152xbf16, #tpu.memory_space<vmem>>, vector<256x128xbf16>
    tpu.vector_store %arg9[%c0_88, %c384], %69 {strides = array<i32>} : memref<256x1152xbf16, #tpu.memory_space<vmem>>, vector<256x128xbf16>,
    %c1_89 = arith.constant 1 : index
    %c1_90 = arith.constant 1 : index
    %c0_91 = arith.constant 0 : index
    %71 = vector.load %arg8[%c1_89, %c1_90, %c0_91] : memref<18x18x128xbf16, #tpu.memory_space<vmem>>, vector<16x16x128xbf16>
    %72 = vector.shape_cast %71 : vector<16x16x128xbf16> to vector<256x128xbf16>
    %c0_92 = arith.constant 0 : index
    %c512 = arith.constant 512 : index
    %73 = vector.load %arg9[%c0_92, %c512] : memref<256x1152xbf16, #tpu.memory_space<vmem>>, vector<256x128xbf16>
    tpu.vector_store %arg9[%c0_92, %c512], %72 {strides = array<i32>} : memref<256x1152xbf16, #tpu.memory_space<vmem>>, vector<256x128xbf16>,
    %c1_93 = arith.constant 1 : index
    %c2_94 = arith.constant 2 : index
    %c0_95 = arith.constant 0 : index
    %74 = vector.load %arg8[%c1_93, %c2_94, %c0_95] : memref<18x18x128xbf16, #tpu.memory_space<vmem>>, vector<16x16x128xbf16>
    %75 = vector.shape_cast %74 : vector<16x16x128xbf16> to vector<256x128xbf16>
    %c0_96 = arith.constant 0 : index
    %c640 = arith.constant 640 : index
    %76 = vector.load %arg9[%c0_96, %c640] : memref<256x1152xbf16, #tpu.memory_space<vmem>>, vector<256x128xbf16>
    tpu.vector_store %arg9[%c0_96, %c640], %75 {strides = array<i32>} : memref<256x1152xbf16, #tpu.memory_space<vmem>>, vector<256x128xbf16>,
    %c2_97 = arith.constant 2 : index
    %c0_98 = arith.constant 0 : index
    %c0_99 = arith.constant 0 : index
    %77 = vector.load %arg8[%c2_97, %c0_98, %c0_99] : memref<18x18x128xbf16, #tpu.memory_space<vmem>>, vector<16x16x128xbf16>
    %78 = vector.shape_cast %77 : vector<16x16x128xbf16> to vector<256x128xbf16>
    %c0_100 = arith.constant 0 : index
    %c768 = arith.constant 768 : index
    %79 = vector.load %arg9[%c0_100, %c768] : memref<256x1152xbf16, #tpu.memory_space<vmem>>, vector<256x128xbf16>
    tpu.vector_store %arg9[%c0_100, %c768], %78 {strides = array<i32>} : memref<256x1152xbf16, #tpu.memory_space<vmem>>, vector<256x128xbf16>,
    %c2_101 = arith.constant 2 : index
    %c1_102 = arith.constant 1 : index
    %c0_103 = arith.constant 0 : index
    %80 = vector.load %arg8[%c2_101, %c1_102, %c0_103] : memref<18x18x128xbf16, #tpu.memory_space<vmem>>, vector<16x16x128xbf16>
    %81 = vector.shape_cast %80 : vector<16x16x128xbf16> to vector<256x128xbf16>
    %c0_104 = arith.constant 0 : index
    %c896 = arith.constant 896 : index
    %82 = vector.load %arg9[%c0_104, %c896] : memref<256x1152xbf16, #tpu.memory_space<vmem>>, vector<256x128xbf16>
    tpu.vector_store %arg9[%c0_104, %c896], %81 {strides = array<i32>} : memref<256x1152xbf16, #tpu.memory_space<vmem>>, vector<256x128xbf16>,
    %c2_105 = arith.constant 2 : index
    %c2_106 = arith.constant 2 : index
    %c0_107 = arith.constant 0 : index
    %83 = vector.load %arg8[%c2_105, %c2_106, %c0_107] : memref<18x18x128xbf16, #tpu.memory_space<vmem>>, vector<16x16x128xbf16>
    %84 = vector.shape_cast %83 : vector<16x16x128xbf16> to vector<256x128xbf16>
    %c0_108 = arith.constant 0 : index
    %c1024 = arith.constant 1024 : index
    %85 = vector.load %arg9[%c0_108, %c1024] : memref<256x1152xbf16, #tpu.memory_space<vmem>>, vector<256x128xbf16>
    tpu.vector_store %arg9[%c0_108, %c1024], %84 {strides = array<i32>} : memref<256x1152xbf16, #tpu.memory_space<vmem>>, vector<256x128xbf16>,
    %c0_109 = arith.constant 0 : index
    %c0_110 = arith.constant 0 : index
    %86 = vector.load %arg9[%c0_109, %c0_110] : memref<256x1152xbf16, #tpu.memory_space<vmem>>, vector<256x1152xbf16>
    %c0_111 = arith.constant 0 : index
    %c0_112 = arith.constant 0 : index
    %87 = vector.load %arg3[%c0_111, %c0_112] : memref<1152x128xbf16, #tpu.memory_space<vmem>>, vector<1152x128xbf16>
    %cst_113 = arith.constant dense<0.000000e+00> : vector<256x128xf32>
    %88 = tpu.matmul %86, %87, %cst_113 {dimension_numbers = #tpu.dot_dimension_numbers<[1], [0], [0], [1], [0, 0, 1, 1], [], []>} : vector<256x1152xbf16>, vector<1152x128xbf16>, vector<256x128xf32> -> vector<256x128xf32>
    %c2_114 = arith.constant 2 : index
    %c0_115 = arith.constant 0 : index
    %89 = vector.load %arg4[%c2_114, %c0_115] : memref<6x128xf32, #tpu.memory_space<vmem>>, vector<1x128xf32>
    %90 = vector.broadcast %89 : vector<1x128xf32> to vector<256x128xf32>
    %91 = arith.mulf %88, %90 : vector<256x128xf32>
    %c3 = arith.constant 3 : index
    %c0_116 = arith.constant 0 : index
    %92 = vector.load %arg4[%c3, %c0_116] : memref<6x128xf32, #tpu.memory_space<vmem>>, vector<1x128xf32>
    %93 = vector.broadcast %92 : vector<1x128xf32> to vector<256x128xf32>
    %94 = arith.addf %91, %93 : vector<256x128xf32>
    %c0_117 = arith.constant 0 : index
    %c0_118 = arith.constant 0 : index
    %95 = vector.load %arg10[%c0_117, %c0_118] : memref<256x128xf32, #tpu.memory_space<vmem>>, vector<256x128xf32>
    %96 = arith.addf %94, %95 : vector<256x128xf32>
    %cst_119 = arith.constant 0.000000e+00 : f32
    %97 = vector.broadcast %cst_119 : f32 to vector<256x128xf32>
    %98 = arith.maximumf %96, %97 : vector<256x128xf32>
    %99 = vector.shape_cast %98 : vector<256x128xf32> to vector<16x16x128xf32>
    %c0_120 = arith.constant 0 : index
    %c0_121 = arith.constant 0 : index
    %c0_122 = arith.constant 0 : index
    %c0_123 = arith.constant 0 : index
    %100 = vector.load %arg6[%c0_120, %c0_121, %c0_122, %c0_123] : memref<1x16x16x128xf32, #tpu.memory_space<vmem>>, vector<1x16x16x128xf32>
    %101 = vector.shape_cast %100 : vector<1x16x16x128xf32> to vector<16x16x128xf32>
    %102 = vector.shape_cast %99 : vector<16x16x128xf32> to vector<1x16x16x128xf32>
    tpu.vector_store %arg6[%c0_120, %c0_121, %c0_122, %c0_123], %102 {strides = array<i32>} : memref<1x16x16x128xf32, #tpu.memory_space<vmem>>, vector<1x16x16x128xf32>,
    return
  }
  func.func @transform_0(%arg0: i32) -> (i32, i32, i32, i32) {
    %c0_i32 = arith.constant 0 : i32
    %c0_i32_0 = arith.constant 0 : i32
    %c0_i32_1 = arith.constant 0 : i32
    %c0_i32_2 = arith.constant 0 : i32
    return %arg0, %c0_i32, %c0_i32_0, %c0_i32_1 : i32, i32, i32, i32
  }
  func.func @transform_1(%arg0: i32) -> (i32, i32) {
    %c0_i32 = arith.constant 0 : i32
    %c0_i32_0 = arith.constant 0 : i32
    %c0_i32_1 = arith.constant 0 : i32
    return %c0_i32, %c0_i32_0 : i32, i32
  }
  func.func @transform_2(%arg0: i32) -> (i32, i32) {
    %c0_i32 = arith.constant 0 : i32
    %c0_i32_0 = arith.constant 0 : i32
    %c0_i32_1 = arith.constant 0 : i32
    return %c0_i32, %c0_i32_0 : i32, i32
  }
  func.func @transform_3(%arg0: i32) -> (i32, i32) {
    %c0_i32 = arith.constant 0 : i32
    %c0_i32_0 = arith.constant 0 : i32
    %c0_i32_1 = arith.constant 0 : i32
    return %c0_i32, %c0_i32_0 : i32, i32
  }
  func.func @transform_4(%arg0: i32) -> (i32, i32) {
    %c0_i32 = arith.constant 0 : i32
    %c0_i32_0 = arith.constant 0 : i32
    %c0_i32_1 = arith.constant 0 : i32
    return %c0_i32, %c0_i32_0 : i32, i32
  }
  func.func @transform_5(%arg0: i32) -> (i32, i32, i32, i32) {
    %c0_i32 = arith.constant 0 : i32
    %c0_i32_0 = arith.constant 0 : i32
    %c0_i32_1 = arith.constant 0 : i32
    %c0_i32_2 = arith.constant 0 : i32
    return %arg0, %c0_i32, %c0_i32_0, %c0_i32_1 : i32, i32, i32, i32
  }
}

</mosaic_0001>

<llo_original>
// kernel: tpu_custom_call.1
$region0: #{tpu_custom_call.1}
  #allocation0 [shape = 'u32[]', space=smem, size = 0x4, offset = 0x4, fixed_abs, tag = 'smem constant byte address 0x4 - core index']
  #allocation1 [shape = 'u32[144,128]{1,0:T(1,128)}', space=vmem, size = 0x12000, scoped, tag = 'internal scratch']
  #allocation2 [shape = 'bf16[18,18,4]{2,1,0:T(8,128)(2,1)}', space=vmem, size = 0x1b000, scoped, tag = 'scratch operand']
  #allocation3 [shape = 'bf16[18,18,128]{2,1,0:T(8,128)(2,1)}', space=vmem, size = 0x1b000, scoped, tag = 'scratch operand']
  #allocation4 [shape = 'bf16[256,1152]{1,0:T(8,128)(2,1)}', space=vmem, size = 0x90000, scoped, tag = 'scratch operand']
  #allocation5 [shape = 'f32[256,128]{1,0:T(8,128)}', space=vmem, size = 0x20000, scoped, tag = 'scratch operand']
  %s0 = inlined_call_operand.vmem [shape: bf16[2,16,16,4], index: 0, kind: input, shape index: {}]
  %s1 = inlined_call_operand.vmem [shape: bf16[36,128], index: 1, kind: input, shape index: {}]
  %s2 = inlined_call_operand.hbm [shape: bf16[1152,128], index: 2, kind: input, shape index: {}]
  %s3 = inlined_call_operand.vmem [shape: f32[6,128], index: 3, kind: input, shape index: {}]
  %s4 = inlined_call_operand.vmem [shape: bf16[4,128], index: 4, kind: input, shape index: {}]
  %s5 = inlined_call_operand.hbm [shape: f32[2,16,16,128], index: 5, kind: output, shape index: {}]
  %s6 = sld [smem:[#allocation0]]
  $region57: #{tpu_custom_call.1} parent=0
    _
  %s8 = ssub.s32 1, %s6
  %s9 = scalar_select 0, %s8, %s6
  $region1: #{tpu_custom_call.1} parent=0
    #allocation6 [shape = 'u8[294912]{0}', space=vmem, size = 0x48000, scoped, tag = 'input window, operand 2, single buffered']
    #allocation7 [shape = 's32[2]{0}', space=sflag, size = 0x8, scoped, tag = 'scoped memory for tpu_custom_call.1']
    #allocation8 [shape = 's32[2]{0}', space=sflag, size = 0x8, scoped, tag = 'scoped memory for tpu_custom_call.1']
    #allocation9 [shape = 'u8[262144]{0}', space=vmem, size = 0x40000, scoped, tag = 'output window, operand 0']
    %10 = vsyncpa [#allocation7], 0
    %11 = vsyncpa [#allocation8], 0
    %s12 = scalar_lea.sflag [#allocation8], 1
    %13 = vsyncpa %s12, 0
    loop: start=0, step=1, limit=4
    $region2: #{tpu_custom_call.1} parent=1 // loop_pre_header
      _
    $region3: #{tpu_custom_call.1} parent=1 // loop_header
      %s15 = sphi 0, %s19
      %p16 = scmp.ge.s32.totalorder %s15, 4
      %s25 = sphi 0, %s27
      %s28 = sphi 0, %s25
      %s29 = sphi 0, %s28
      %s45 = sphi 0, %s29
      %s49 = sphi 0, %s49
      %s51 = sphi 0, %s49
      %s52 = sphi 0, %s51
      %s66 = sphi 0, %s52
      %s70 = sphi 0, %s70
      %s72 = sphi 0, %s70
      %s73 = sphi 0, %s72
      %s87 = sphi 0, %s73
      %s91 = sphi 0, %s91
      %s93 = sphi 0, %s91
      %s94 = sphi 0, %s93
      %s108 = sphi 0, %s94
      %s112 = sphi 0, %s112
      %s114 = sphi 0, %s112
      %s115 = sphi 0, %s114
      %s129 = sphi 0, %s115
      %s135 = sphi 0, %s137
      %s138 = sphi 0, %s135
      %s139 = sphi 0, %s138
      %s155 = sphi 0, %s139
    $region4: #{tpu_custom_call.1} parent=1 // loop_header_branch
      %18 = sbr.rel (%p16) target = $region8
    $region5: #{tpu_custom_call.1} parent=1 // loop_body
      %s20 = ssub.s32 %s15, 1
      %s21 = ssub.s32 %s15, 2
      %s22 = sadd.s32 %s15, 1
      %s23 = ssub.s32 %s15, %s22
      %p24 = scmp.eq.s32.totalorder %s23, 0
      %s26 = sadd.s32 %s25, 1
      %s27 = scalar_select %p24, %s25, %s26
      %p30 = pneg %p24
      %p31 = scmp.eq.s32.totalorder %s15, 1
      %p32 = por %p30, %p31
      %p33 = scmp.ne.s32.totalorder %s25, %s28
      %p34 = scmp.eq.s32.totalorder %s15, 0
      %p35 = por %p33, %p34
      %p36 = scmp.ne.s32.totalorder %s25, %s28
      %p37 = scmp.eq.s32.totalorder %s20, 1
      %p38 = por %p36, %p37
      %p39 = scmp.ne.s32.totalorder %s28, %s29
      %p40 = scmp.eq.s32.totalorder %s20, 0
      %p41 = por %p39, %p40
      %p42 = scmp.ne.s32.totalorder %s28, %s29
      %p43 = scmp.eq.s32.totalorder %s21, 1
      %p44 = por %p42, %p43
      %p46 = scmp.ne.s32.totalorder %s29, %s45
      %p47 = scmp.eq.s32.totalorder %s21, 0
      %p48 = por %p46, %p47
      %s50 = sadd.s32 %s49, 1
      %p53 = scmp.eq.s32.totalorder %s15, 1
      %p54 = scmp.ne.s32.totalorder %s49, %s51
      %p55 = scmp.eq.s32.totalorder %s15, 0
      %p56 = por %p54, %p55
      %p57 = scmp.ne.s32.totalorder %s49, %s51
      %p58 = scmp.eq.s32.totalorder %s20, 1
      %p59 = por %p57, %p58
      %p60 = scmp.ne.s32.totalorder %s51, %s52
      %p61 = scmp.eq.s32.totalorder %s20, 0
      %p62 = por %p60, %p61
      %p63 = scmp.ne.s32.totalorder %s51, %s52
      %p64 = scmp.eq.s32.totalorder %s21, 1
      %p65 = por %p63, %p64
      %p67 = scmp.ne.s32.totalorder %s52, %s66
      %p68 = scmp.eq.s32.totalorder %s21, 0
      %p69 = por %p67, %p68
      %s71 = sadd.s32 %s70, 1
      %p74 = scmp.eq.s32.totalorder %s15, 1
      %p75 = scmp.ne.s32.totalorder %s70, %s72
      %p76 = scmp.eq.s32.totalorder %s15, 0
      %p77 = por %p75, %p76
      %p78 = scmp.ne.s32.totalorder %s70, %s72
      %p79 = scmp.eq.s32.totalorder %s20, 1
      %p80 = por %p78, %p79
      %p81 = scmp.ne.s32.totalorder %s72, %s73
      %p82 = scmp.eq.s32.totalorder %s20, 0
      %p83 = por %p81, %p82
      %p84 = scmp.ne.s32.totalorder %s72, %s73
      %p85 = scmp.eq.s32.totalorder %s21, 1
      %p86 = por %p84, %p85
      %p88 = scmp.ne.s32.totalorder %s73, %s87
      %p89 = scmp.eq.s32.totalorder %s21, 0
      %p90 = por %p88, %p89
      %s92 = sadd.s32 %s91, 1
      %p95 = scmp.eq.s32.totalorder %s15, 1
      %p96 = scmp.ne.s32.totalorder %s91, %s93
      %p97 = scmp.eq.s32.totalorder %s15, 0
      %p98 = por %p96, %p97
      %p99 = scmp.ne.s32.totalorder %s91, %s93
      %p100 = scmp.eq.s32.totalorder %s20, 1
      %p101 = por %p99, %p100
      %p102 = scmp.ne.s32.totalorder %s93, %s94
      %p103 = scmp.eq.s32.totalorder %s20, 0
      %p104 = por %p102, %p103
      %p105 = scmp.ne.s32.totalorder %s93, %s94
      %p106 = scmp.eq.s32.totalorder %s21, 1
      %p107 = por %p105, %p106
      %p109 = scmp.ne.s32.totalorder %s94, %s108
      %p110 = scmp.eq.s32.totalorder %s21, 0
      %p111 = por %p109, %p110
      %s113 = sadd.s32 %s112, 1
      %p116 = scmp.eq.s32.totalorder %s15, 1
      %p117 = scmp.ne.s32.totalorder %s112, %s114
      %p118 = scmp.eq.s32.totalorder %s15, 0
      %p119 = por %p117, %p118
      %p120 = scmp.ne.s32.totalorder %s112, %s114
      %p121 = scmp.eq.s32.totalorder %s20, 1
      %p122 = por %p120, %p121
      %p123 = scmp.ne.s32.totalorder %s114, %s115
      %p124 = scmp.eq.s32.totalorder %s20, 0
      %p125 = por %p123, %p124
      %p126 = scmp.ne.s32.totalorder %s114, %s115
      %p127 = scmp.eq.s32.totalorder %s21, 1
      %p128 = por %p126, %p127
      %p130 = scmp.ne.s32.totalorder %s115, %s129
      %p131 = scmp.eq.s32.totalorder %s21, 0
      %p132 = por %p130, %p131
      %s133 = ssub.s32 %s15, %s22
      %p134 = scmp.eq.s32.totalorder %s133, 0
      %s136 = sadd.s32 %s135, 1
      %s137 = scalar_select %p134, %s135, %s136
      %p140 = pneg %p134
      %p141 = scmp.eq.s32.totalorder %s15, 1
      %p142 = por %p140, %p141
      %p143 = scmp.ne.s32.totalorder %s135, %s138
      %p144 = scmp.eq.s32.totalorder %s15, 0
      %p145 = por %p143, %p144
      %p146 = scmp.ne.s32.totalorder %s135, %s138
      %p147 = scmp.eq.s32.totalorder %s20, 1
      %p148 = por %p146, %p147
      %p149 = scmp.ne.s32.totalorder %s138, %s139
      %p150 = scmp.eq.s32.totalorder %s20, 0
      %p151 = por %p149, %p150
      %p152 = scmp.ne.s32.totalorder %s138, %s139
      %p153 = scmp.eq.s32.totalorder %s21, 1
      %p154 = por %p152, %p153
      %p156 = scmp.ne.s32.totalorder %s139, %s155
      %p157 = scmp.eq.s32.totalorder %s21, 0
      %p158 = por %p156, %p157
      %p159 = scmp.le.s32.totalorder 1, %s15
      %p160 = scmp.lt.s32.totalorder %s15, 3
      %p161 = pnand %p159, %p160
      %p162 = pneg %p161
      // Predicated region
      $region9: #{tpu_custom_call.1} parent=5 // pred_check
        _
      $region10: #{tpu_custom_call.1} parent=5 // pred_check_branch
        %164 = sbr.rel (%p161) target = $region12
      $region11: #{tpu_custom_call.1} parent=5 // pred_region
        %s165 = ssub.s32 %s15, 1
        // Predicated region
        $region13: #{tpu_custom_call.1} parent=11 // pred_check
          %p166 = pneg %p62
        $region14: #{tpu_custom_call.1} parent=11 // pred_check_branch
          %168 = sbr.rel (%p166) target = $region16
        $region15: #{tpu_custom_call.1} parent=11 // pred_region
          _
        $region16: #{tpu_custom_call.1} parent=11 // pred_fallthru
          _
        // Predicated region
        $region17: #{tpu_custom_call.1} parent=11 // pred_check
          %p169 = pneg %p83
        $region18: #{tpu_custom_call.1} parent=11 // pred_check_branch
          %171 = sbr.rel (%p169) target = $region20
        $region19: #{tpu_custom_call.1} parent=11 // pred_region
          %s173 = ssub.s32 9216, 9216
          %174 = vsyncadd [#allocation7], %s173
          %s175 = sshll.u32 [#allocation6], 4
          %s176 = int_to_ptr.vmem [resolvable:$true] %s175
          %181 = dma.hbm_to_vmem [thread:$0]  %s2, 9216, %s176, [#allocation7], 64, 64, 4
        $region20: #{tpu_custom_call.1} parent=11 // pred_fallthru
          _
        // Predicated region
        $region21: #{tpu_custom_call.1} parent=11 // pred_check
          %p182 = pneg %p104
        $region22: #{tpu_custom_call.1} parent=11 // pred_check_branch
          %184 = sbr.rel (%p182) target = $region24
        $region23: #{tpu_custom_call.1} parent=11 // pred_region
          _
        $region24: #{tpu_custom_call.1} parent=11 // pred_fallthru
          _
        // Predicated region
        $region25: #{tpu_custom_call.1} parent=11 // pred_check
          %p185 = pneg %p125
        $region26: #{tpu_custom_call.1} parent=11 // pred_check_branch
          %187 = sbr.rel (%p185) target = $region28
        $region27: #{tpu_custom_call.1} parent=11 // pred_region
          _
        $region28: #{tpu_custom_call.1} parent=11 // pred_fallthru
          _
      $region12: #{tpu_custom_call.1} parent=5 // pred_fallthru
        _
      %p188 = scmp.lt.s32.totalorder %s15, 2
      // Predicated region
      $region29: #{tpu_custom_call.1} parent=5 // pred_check
        %p189 = pneg %p188
      $region30: #{tpu_custom_call.1} parent=5 // pred_check_branch
        %191 = sbr.rel (%p189) target = $region32
      $region31: #{tpu_custom_call.1} parent=5 // pred_region
        // Predicated region
        $region33: #{tpu_custom_call.1} parent=31 // pred_check
          %p192 = pneg %p35
        $region34: #{tpu_custom_call.1} parent=31 // pred_check_branch
          %194 = sbr.rel (%p192) target = $region36
        $region35: #{tpu_custom_call.1} parent=31 // pred_region
          %p195 = scmp.lt.s32.totalorder %s15, 1
          %s196 = scalar_select %p195, %s15, 1
          %s197 = smul.addr %s196, 32
          %s198 = smul.addr %s197, 4
          %s199 = scalar_lea.vmem %s0, %s198
        $region36: #{tpu_custom_call.1} parent=31 // pred_fallthru
          _
      $region32: #{tpu_custom_call.1} parent=5 // pred_fallthru
        _
      %p200 = scmp.le.s32.totalorder 1, %s15
      %p201 = scmp.lt.s32.totalorder %s15, 3
      %p202 = pnand %p200, %p201
      %p203 = pneg %p202
      // Predicated region
      $region37: #{tpu_custom_call.1} parent=5 // pred_check
        _
      $region38: #{tpu_custom_call.1} parent=5 // pred_check_branch
        %205 = sbr.rel (%p202) target = $region40
      $region39: #{tpu_custom_call.1} parent=5 // pred_region
        %s206 = ssub.s32 %s15, 1
        // Predicated region
        $region41: #{tpu_custom_call.1} parent=39 // pred_check
          %p207 = pneg %p83
        $region42: #{tpu_custom_call.1} parent=39 // pred_check_branch
          %209 = sbr.rel (%p207) target = $region44
        $region43: #{tpu_custom_call.1} parent=39 // pred_region
          %210 = dma.done [#allocation7], 9216
        $region44: #{tpu_custom_call.1} parent=39 // pred_fallthru
          _
        %p211 = scmp.lt.s32.totalorder %s20, 1
        %s212 = scalar_select %p211, %s20, 1
        %s213 = smul.addr %s212, 32
        %s214 = smul.addr %s213, 4
        %s215 = scalar_lea.vmem %s0, %s214
        %p216 = pneg %p41
        %p217 = pneg %p38
        %p218 = pneg %p62
        %p219 = pneg %p59
        %p220 = pneg %p83
        %p221 = pneg %p80
        %p222 = pneg %p104
        %p223 = pneg %p101
        %p224 = pneg %p125
        %p225 = pneg %p122
        %p226 = pneg %p151
        %p227 = pneg %p148
        %s228 = sand.u32 %s138, 1
        %s229 = scalar_lea.sflag [#allocation8], %s228
        %s230 = sand.u32 %s138, 1
        %s231 = smul.addr %s230, 256
        %s232 = scalar_lea.vmem [#allocation9], %s231
        %p233 = scmp.lt.s32.totalorder %s20, 1
        %s234 = scalar_select %p233, %s20, 1
        %s235 = smul.addr %s234, 32
        %s236 = smul.addr %s235, 4
        %s237 = scalar_lea.vmem %s0, %s236
        %vm239 = vcmask 27648
        %240 = vst.msk [vmem:[#allocation2] sm:$0xf] %vm239, 0
        %241 = vst.msk [vmem:[#allocation2 + $0x4] sm:$0xf] %vm239, 0
        %vm242 = vcmask 24576
        %243 = vst.msk [vmem:[#allocation2 + $0x8] sm:$0x1] %vm242, 0
        %244 = vst.msk [vmem:[#allocation2 + $0xc] sm:$0xf] %vm239, 0
        %245 = vst.msk [vmem:[#allocation2 + $0x10] sm:$0xf] %vm239, 0
        %246 = vst.msk [vmem:[#allocation2 + $0x14] sm:$0x1] %vm242, 0
        %247 = vst.msk [vmem:[#allocation2 + $0x18] sm:$0xf] %vm239, 0
        %248 = vst.msk [vmem:[#allocation2 + $0x1c] sm:$0xf] %vm239, 0
        %249 = vst.msk [vmem:[#allocation2 + $0x20] sm:$0x1] %vm242, 0
        %250 = vst.msk [vmem:[#allocation2 + $0x24] sm:$0xf] %vm239, 0
        %251 = vst.msk [vmem:[#allocation2 + $0x28] sm:$0xf] %vm239, 0
        %252 = vst.msk [vmem:[#allocation2 + $0x2c] sm:$0x1] %vm242, 0
        %253 = vst.msk [vmem:[#allocation2 + $0x30] sm:$0xf] %vm239, 0
        %254 = vst.msk [vmem:[#allocation2 + $0x34] sm:$0xf] %vm239, 0
        %255 = vst.msk [vmem:[#allocation2 + $0x38] sm:$0x1] %vm242, 0
        %256 = vst.msk [vmem:[#allocation2 + $0x3c] sm:$0xf] %vm239, 0
        %257 = vst.msk [vmem:[#allocation2 + $0x40] sm:$0xf] %vm239, 0
        %258 = vst.msk [vmem:[#allocation2 + $0x44] sm:$0x1] %vm242, 0
        %259 = vst.msk [vmem:[#allocation2 + $0x48] sm:$0xf] %vm239, 0
        %260 = vst.msk [vmem:[#allocation2 + $0x4c] sm:$0xf] %vm239, 0
        %261 = vst.msk [vmem:[#allocation2 + $0x50] sm:$0x1] %vm242, 0
        %262 = vst.msk [vmem:[#allocation2 + $0x54] sm:$0xf] %vm239, 0
        %263 = vst.msk [vmem:[#allocation2 + $0x58] sm:$0xf] %vm239, 0
        %264 = vst.msk [vmem:[#allocation2 + $0x5c] sm:$0x1] %vm242, 0
        %265 = vst.msk [vmem:[#allocation2 + $0x60] sm:$0xf] %vm239, 0
        %266 = vst.msk [vmem:[#allocation2 + $0x64] sm:$0xf] %vm239, 0
        %267 = vst.msk [vmem:[#allocation2 + $0x68] sm:$0x1] %vm242, 0
        %268 = vst.msk [vmem:[#allocation2 + $0x6c] sm:$0xf] %vm239, 0
        %269 = vst.msk [vmem:[#allocation2 + $0x70] sm:$0xf] %vm239, 0
        %270 = vst.msk [vmem:[#allocation2 + $0x74] sm:$0x1] %vm242, 0
        %271 = vst.msk [vmem:[#allocation2 + $0x78] sm:$0xf] %vm239, 0
        %272 = vst.msk [vmem:[#allocation2 + $0x7c] sm:$0xf] %vm239, 0
        %273 = vst.msk [vmem:[#allocation2 + $0x80] sm:$0x1] %vm242, 0
        %274 = vst.msk [vmem:[#allocation2 + $0x84] sm:$0xf] %vm239, 0
        %275 = vst.msk [vmem:[#allocation2 + $0x88] sm:$0xf] %vm239, 0
        %276 = vst.msk [vmem:[#allocation2 + $0x8c] sm:$0x1] %vm242, 0
        %277 = vst.msk [vmem:[#allocation2 + $0x90] sm:$0xf] %vm239, 0
        %278 = vst.msk [vmem:[#allocation2 + $0x94] sm:$0xf] %vm239, 0
        %279 = vst.msk [vmem:[#allocation2 + $0x98] sm:$0x1] %vm242, 0
        %280 = vst.msk [vmem:[#allocation2 + $0x9c] sm:$0xf] %vm239, 0
        %281 = vst.msk [vmem:[#allocation2 + $0xa0] sm:$0xf] %vm239, 0
        %282 = vst.msk [vmem:[#allocation2 + $0xa4] sm:$0x1] %vm242, 0
        %283 = vst.msk [vmem:[#allocation2 + $0xa8] sm:$0xf] %vm239, 0
        %284 = vst.msk [vmem:[#allocation2 + $0xac] sm:$0xf] %vm239, 0
        %285 = vst.msk [vmem:[#allocation2 + $0xb0] sm:$0x1] %vm242, 0
        %286 = vst.msk [vmem:[#allocation2 + $0xb4] sm:$0xf] %vm239, 0
        %287 = vst.msk [vmem:[#allocation2 + $0xb8] sm:$0xf] %vm239, 0
        %288 = vst.msk [vmem:[#allocation2 + $0xbc] sm:$0x1] %vm242, 0
        %289 = vst.msk [vmem:[#allocation2 + $0xc0] sm:$0xf] %vm239, 0
        %290 = vst.msk [vmem:[#allocation2 + $0xc4] sm:$0xf] %vm239, 0
        %291 = vst.msk [vmem:[#allocation2 + $0xc8] sm:$0x1] %vm242, 0
        %292 = vst.msk [vmem:[#allocation2 + $0xcc] sm:$0xf] %vm239, 0
        %293 = vst.msk [vmem:[#allocation2 + $0xd0] sm:$0xf] %vm239, 0
        %294 = vst.msk [vmem:[#allocation2 + $0xd4] sm:$0x1] %vm242, 0
        %v295 = vld [vmem:[%s237] sm:$0xf]
        %v296 = vld [vmem:[%s237 + $0x4] sm:$0xf]
        %v297 = vld [vmem:[%s237 + $0x8] sm:$0xf]
        %v298 = vld [vmem:[%s237 + $0xc] sm:$0xf]
        %v299 = vld [vmem:[%s237 + $0x10] sm:$0xf]
        %v300 = vld [vmem:[%s237 + $0x14] sm:$0xf]
        %v301 = vld [vmem:[%s237 + $0x18] sm:$0xf]
        %v302 = vld [vmem:[%s237 + $0x1c] sm:$0xf]
        %v303 = vld [vmem:[%s237 + $0x20] sm:$0xf]
        %v304 = vld [vmem:[%s237 + $0x24] sm:$0xf]
        %v305 = vld [vmem:[%s237 + $0x28] sm:$0xf]
        %v306 = vld [vmem:[%s237 + $0x2c] sm:$0xf]
        %v307 = vld [vmem:[%s237 + $0x30] sm:$0xf]
        %v308 = vld [vmem:[%s237 + $0x34] sm:$0xf]
        %v309 = vld [vmem:[%s237 + $0x38] sm:$0xf]
        %v310 = vld [vmem:[%s237 + $0x3c] sm:$0xf]
        %v311 = vld [vmem:[%s237 + $0x40] sm:$0xf]
        %v312 = vld [vmem:[%s237 + $0x44] sm:$0xf]
        %v313 = vld [vmem:[%s237 + $0x48] sm:$0xf]
        %v314 = vld [vmem:[%s237 + $0x4c] sm:$0xf]
        %v315 = vld [vmem:[%s237 + $0x50] sm:$0xf]
        %v316 = vld [vmem:[%s237 + $0x54] sm:$0xf]
        %v317 = vld [vmem:[%s237 + $0x58] sm:$0xf]
        %v318 = vld [vmem:[%s237 + $0x5c] sm:$0xf]
        %v319 = vld [vmem:[%s237 + $0x60] sm:$0xf]
        %v320 = vld [vmem:[%s237 + $0x64] sm:$0xf]
        %v321 = vld [vmem:[%s237 + $0x68] sm:$0xf]
        %v322 = vld [vmem:[%s237 + $0x6c] sm:$0xf]
        %v323 = vld [vmem:[%s237 + $0x70] sm:$0xf]
        %v324 = vld [vmem:[%s237 + $0x74] sm:$0xf]
        %v325 = vld [vmem:[%s237 + $0x78] sm:$0xf]
        %v326 = vld [vmem:[%s237 + $0x7c] sm:$0xf]
        %vm327 = vsmask.f32 256
        %vm328 = vsmask.f32 4368
        %vm329 = vmor %vm327, %vm328
        %v331 = vshrl.u32 %v295, 16
        %v333 = vrot.slane %v331, 7
        %v334 = vshll.u32 %v295, 16
        %v336 = vor.u32 %v333, %v334
        %v337 = vrot.slane %v333, 4
        %v339 = vshrl.u32 %v296, 16
        %v341 = vrot.slane %v339, 7
        %v342 = vshll.u32 %v296, 16
        %v344 = vor.u32 %v341, %v342
        %v345 = vsel %vm329, %v337, %v344
        %v346 = vrot.slane %v341, 4
        %v348 = vshrl.u32 %v297, 16
        %v350 = vrot.slane %v348, 7
        %v351 = vshll.u32 %v297, 16
        %v353 = vor.u32 %v350, %v351
        %v354 = vrot.slane %v350, 4
        %v356 = vshrl.u32 %v298, 16
        %v358 = vrot.slane %v356, 7
        %v359 = vshll.u32 %v298, 16
        %v361 = vor.u32 %v358, %v359
        %v362 = vsel %vm329, %v354, %v361
        %v363 = vrot.slane %v358, 4
        %v365 = vshrl.u32 %v299, 16
        %v367 = vrot.slane %v365, 7
        %v368 = vshll.u32 %v299, 16
        %v370 = vor.u32 %v367, %v368
        %v371 = vrot.slane %v367, 4
        %v373 = vshrl.u32 %v300, 16
        %v375 = vrot.slane %v373, 7
        %v376 = vshll.u32 %v300, 16
        %v378 = vor.u32 %v375, %v376
        %v379 = vsel %vm329, %v371, %v378
        %v380 = vrot.slane %v375, 4
        %v382 = vshrl.u32 %v301, 16
        %v384 = vrot.slane %v382, 7
        %v385 = vshll.u32 %v301, 16
        %v387 = vor.u32 %v384, %v385
        %v388 = vrot.slane %v384, 4
        %v390 = vshrl.u32 %v302, 16
        %v392 = vrot.slane %v390, 7
        %v393 = vshll.u32 %v302, 16
        %v395 = vor.u32 %v392, %v393
        %v396 = vsel %vm329, %v388, %v395
        %v397 = vrot.slane %v392, 4
        %v399 = vshrl.u32 %v303, 16
        %v401 = vrot.slane %v399, 7
        %v402 = vshll.u32 %v303, 16
        %v404 = vor.u32 %v401, %v402
        %v405 = vrot.slane %v401, 4
        %v407 = vshrl.u32 %v304, 16
        %v409 = vrot.slane %v407, 7
        %v410 = vshll.u32 %v304, 16
        %v412 = vor.u32 %v409, %v410
        %v413 = vsel %vm329, %v405, %v412
        %v414 = vrot.slane %v409, 4
        %v416 = vshrl.u32 %v305, 16
        %v418 = vrot.slane %v416, 7
        %v419 = vshll.u32 %v305, 16
        %v421 = vor.u32 %v418, %v419
        %v422 = vrot.slane %v418, 4
        %v424 = vshrl.u32 %v306, 16
        %v426 = vrot.slane %v424, 7
        %v427 = vshll.u32 %v306, 16
        %v429 = vor.u32 %v426, %v427
        %v430 = vsel %vm329, %v422, %v429
        %v431 = vrot.slane %v426, 4
        %v433 = vshrl.u32 %v307, 16
        %v435 = vrot.slane %v433, 7
        %v436 = vshll.u32 %v307, 16
        %v438 = vor.u32 %v435, %v436
        %v439 = vrot.slane %v435, 4
        %v441 = vshrl.u32 %v308, 16
        %v443 = vrot.slane %v441, 7
        %v444 = vshll.u32 %v308, 16
        %v446 = vor.u32 %v443, %v444
        %v447 = vsel %vm329, %v439, %v446
        %v448 = vrot.slane %v443, 4
        %v450 = vshrl.u32 %v309, 16
        %v452 = vrot.slane %v450, 7
        %v453 = vshll.u32 %v309, 16
        %v455 = vor.u32 %v452, %v453
        %v456 = vrot.slane %v452, 4
        %v458 = vshrl.u32 %v310, 16
        %v460 = vrot.slane %v458, 7
        %v461 = vshll.u32 %v310, 16
        %v463 = vor.u32 %v460, %v461
        %v464 = vsel %vm329, %v456, %v463
        %v465 = vrot.slane %v460, 4
        %v467 = vshrl.u32 %v311, 16
        %v469 = vrot.slane %v467, 7
        %v470 = vshll.u32 %v311, 16
        %v472 = vor.u32 %v469, %v470
        %v473 = vrot.slane %v469, 4
        %v475 = vshrl.u32 %v312, 16
        %v477 = vrot.slane %v475, 7
        %v478 = vshll.u32 %v312, 16
        %v480 = vor.u32 %v477, %v478
        %v481 = vsel %vm329, %v473, %v480
        %v482 = vrot.slane %v477, 4
        %v484 = vshrl.u32 %v313, 16
        %v486 = vrot.slane %v484, 7
        %v487 = vshll.u32 %v313, 16
        %v489 = vor.u32 %v486, %v487
        %v490 = vrot.slane %v486, 4
        %v492 = vshrl.u32 %v314, 16
        %v494 = vrot.slane %v492, 7
        %v495 = vshll.u32 %v314, 16
        %v497 = vor.u32 %v494, %v495
        %v498 = vsel %vm329, %v490, %v497
        %v499 = vrot.slane %v494, 4
        %v501 = vshrl.u32 %v315, 16
        %v503 = vrot.slane %v501, 7
        %v504 = vshll.u32 %v315, 16
        %v506 = vor.u32 %v503, %v504
        %v507 = vrot.slane %v503, 4
        %v509 = vshrl.u32 %v316, 16
        %v511 = vrot.slane %v509, 7
        %v512 = vshll.u32 %v316, 16
        %v514 = vor.u32 %v511, %v512
        %v515 = vsel %vm329, %v507, %v514
        %v516 = vrot.slane %v511, 4
        %v518 = vshrl.u32 %v317, 16
        %v520 = vrot.slane %v518, 7
        %v521 = vshll.u32 %v317, 16
        %v523 = vor.u32 %v520, %v521
        %v524 = vrot.slane %v520, 4
        %v526 = vshrl.u32 %v318, 16
        %v528 = vrot.slane %v526, 7
        %v529 = vshll.u32 %v318, 16
        %v531 = vor.u32 %v528, %v529
        %v532 = vsel %vm329, %v524, %v531
        %v533 = vrot.slane %v528, 4
        %v535 = vshrl.u32 %v319, 16
        %v537 = vrot.slane %v535, 7
        %v538 = vshll.u32 %v319, 16
        %v540 = vor.u32 %v537, %v538
        %v541 = vrot.slane %v537, 4
        %v543 = vshrl.u32 %v320, 16
        %v545 = vrot.slane %v543, 7
        %v546 = vshll.u32 %v320, 16
        %v548 = vor.u32 %v545, %v546
        %v549 = vsel %vm329, %v541, %v548
        %v550 = vrot.slane %v545, 4
        %v552 = vshrl.u32 %v321, 16
        %v554 = vrot.slane %v552, 7
        %v555 = vshll.u32 %v321, 16
        %v557 = vor.u32 %v554, %v555
        %v558 = vrot.slane %v554, 4
        %v560 = vshrl.u32 %v322, 16
        %v562 = vrot.slane %v560, 7
        %v563 = vshll.u32 %v322, 16
        %v565 = vor.u32 %v562, %v563
        %v566 = vsel %vm329, %v558, %v565
        %v567 = vrot.slane %v562, 4
        %v569 = vshrl.u32 %v323, 16
        %v571 = vrot.slane %v569, 7
        %v572 = vshll.u32 %v323, 16
        %v574 = vor.u32 %v571, %v572
        %v575 = vrot.slane %v571, 4
        %v577 = vshrl.u32 %v324, 16
        %v579 = vrot.slane %v577, 7
        %v580 = vshll.u32 %v324, 16
        %v582 = vor.u32 %v579, %v580
        %v583 = vsel %vm329, %v575, %v582
        %v584 = vrot.slane %v579, 4
        %v586 = vshrl.u32 %v325, 16
        %v588 = vrot.slane %v586, 7
        %v589 = vshll.u32 %v325, 16
        %v591 = vor.u32 %v588, %v589
        %v592 = vrot.slane %v588, 4
        %v594 = vshrl.u32 %v326, 16
        %v596 = vrot.slane %v594, 7
        %v597 = vshll.u32 %v326, 16
        %v599 = vor.u32 %v596, %v597
        %v600 = vsel %vm329, %v592, %v599
        %v601 = vrot.slane %v596, 4
        %s650 = scalar_lea.vmem [#allocation2], 12
        %vm651 = vcmask 27648
        %vm652 = vsmask.f32 7938
        %vm653 = vmand %vm651, %vm652
        %v654 = vld [vmem:[%s650] sm:$0xf]
        %v655 = vsel %vm653, %v336, %v654
        %656 = vst [vmem:[%s650] sm:$0xf] %v655
        %657 = vst.msk [vmem:[%s650 + $0x4] sm:$0xf] %vm239, %v345
        %vm658 = vcmask 24576
        %vm659 = vmand %vm658, %vm327
        %v660 = vld [vmem:[%s650 + $0x8] sm:$0x1]
        %v661 = vsel %vm659, %v346, %v660
        %662 = vst [vmem:[%s650 + $0x8] sm:$0x1] %v661
        %v663 = vld [vmem:[%s650 + $0xc] sm:$0xf]
        %v664 = vsel %vm653, %v353, %v663
        %665 = vst [vmem:[%s650 + $0xc] sm:$0xf] %v664
        %666 = vst.msk [vmem:[%s650 + $0x10] sm:$0xf] %vm239, %v362
        %v667 = vld [vmem:[%s650 + $0x14] sm:$0x1]
        %v668 = vsel %vm659, %v363, %v667
        %669 = vst [vmem:[%s650 + $0x14] sm:$0x1] %v668
        %v670 = vld [vmem:[%s650 + $0x18] sm:$0xf]
        %v671 = vsel %vm653, %v370, %v670
        %672 = vst [vmem:[%s650 + $0x18] sm:$0xf] %v671
        %673 = vst.msk [vmem:[%s650 + $0x1c] sm:$0xf] %vm239, %v379
        %v674 = vld [vmem:[%s650 + $0x20] sm:$0x1]
        %v675 = vsel %vm659, %v380, %v674
        %676 = vst [vmem:[%s650 + $0x20] sm:$0x1] %v675
        %v677 = vld [vmem:[%s650 + $0x24] sm:$0xf]
        %v678 = vsel %vm653, %v387, %v677
        %679 = vst [vmem:[%s650 + $0x24] sm:$0xf] %v678
        %680 = vst.msk [vmem:[%s650 + $0x28] sm:$0xf] %vm239, %v396
        %v681 = vld [vmem:[%s650 + $0x2c] sm:$0x1]
        %v682 = vsel %vm659, %v397, %v681
        %683 = vst [vmem:[%s650 + $0x2c] sm:$0x1] %v682
        %v684 = vld [vmem:[%s650 + $0x30] sm:$0xf]
        %v685 = vsel %vm653, %v404, %v684
        %686 = vst [vmem:[%s650 + $0x30] sm:$0xf] %v685
        %687 = vst.msk [vmem:[%s650 + $0x34] sm:$0xf] %vm239, %v413
        %v688 = vld [vmem:[%s650 + $0x38] sm:$0x1]
        %v689 = vsel %vm659, %v414, %v688
        %690 = vst [vmem:[%s650 + $0x38] sm:$0x1] %v689
        %v691 = vld [vmem:[%s650 + $0x3c] sm:$0xf]
        %v692 = vsel %vm653, %v421, %v691
        %693 = vst [vmem:[%s650 + $0x3c] sm:$0xf] %v692
        %694 = vst.msk [vmem:[%s650 + $0x40] sm:$0xf] %vm239, %v430
        %v695 = vld [vmem:[%s650 + $0x44] sm:$0x1]
        %v696 = vsel %vm659, %v431, %v695
        %697 = vst [vmem:[%s650 + $0x44] sm:$0x1] %v696
        %v698 = vld [vmem:[%s650 + $0x48] sm:$0xf]
        %v699 = vsel %vm653, %v438, %v698
        %700 = vst [vmem:[%s650 + $0x48] sm:$0xf] %v699
        %701 = vst.msk [vmem:[%s650 + $0x4c] sm:$0xf] %vm239, %v447
        %v702 = vld [vmem:[%s650 + $0x50] sm:$0x1]
        %v703 = vsel %vm659, %v448, %v702
        %704 = vst [vmem:[%s650 + $0x50] sm:$0x1] %v703
        %v705 = vld [vmem:[%s650 + $0x54] sm:$0xf]
        %v706 = vsel %vm653, %v455, %v705
        %707 = vst [vmem:[%s650 + $0x54] sm:$0xf] %v706
        %708 = vst.msk [vmem:[%s650 + $0x58] sm:$0xf] %vm239, %v464
        %v709 = vld [vmem:[%s650 + $0x5c] sm:$0x1]
        %v710 = vsel %vm659, %v465, %v709
        %711 = vst [vmem:[%s650 + $0x5c] sm:$0x1] %v710
        %v712 = vld [vmem:[%s650 + $0x60] sm:$0xf]
        %v713 = vsel %vm653, %v472, %v712
        %714 = vst [vmem:[%s650 + $0x60] sm:$0xf] %v713
        %715 = vst.msk [vmem:[%s650 + $0x64] sm:$0xf] %vm239, %v481
        %v716 = vld [vmem:[%s650 + $0x68] sm:$0x1]
        %v717 = vsel %vm659, %v482, %v716
        %718 = vst [vmem:[%s650 + $0x68] sm:$0x1] %v717
        %v719 = vld [vmem:[%s650 + $0x6c] sm:$0xf]
        %v720 = vsel %vm653, %v489, %v719
        %721 = vst [vmem:[%s650 + $0x6c] sm:$0xf] %v720
        %722 = vst.msk [vmem:[%s650 + $0x70] sm:$0xf] %vm239, %v498
        %v723 = vld [vmem:[%s650 + $0x74] sm:$0x1]
        %v724 = vsel %vm659, %v499, %v723
        %725 = vst [vmem:[%s650 + $0x74] sm:$0x1] %v724
        %v726 = vld [vmem:[%s650 + $0x78] sm:$0xf]
        %v727 = vsel %vm653, %v506, %v726
        %728 = vst [vmem:[%s650 + $0x78] sm:$0xf] %v727
        %729 = vst.msk [vmem:[%s650 + $0x7c] sm:$0xf] %vm239, %v515
        %v730 = vld [vmem:[%s650 + $0x80] sm:$0x1]
        %v731 = vsel %vm659, %v516, %v730
        %732 = vst [vmem:[%s650 + $0x80] sm:$0x1] %v731
        %v733 = vld [vmem:[%s650 + $0x84] sm:$0xf]
        %v734 = vsel %vm653, %v523, %v733
        %735 = vst [vmem:[%s650 + $0x84] sm:$0xf] %v734
        %736 = vst.msk [vmem:[%s650 + $0x88] sm:$0xf] %vm239, %v532
        %v737 = vld [vmem:[%s650 + $0x8c] sm:$0x1]
        %v738 = vsel %vm659, %v533, %v737
        %739 = vst [vmem:[%s650 + $0x8c] sm:$0x1] %v738
        %v740 = vld [vmem:[%s650 + $0x90] sm:$0xf]
        %v741 = vsel %vm653, %v540, %v740
        %742 = vst [vmem:[%s650 + $0x90] sm:$0xf] %v741
        %743 = vst.msk [vmem:[%s650 + $0x94] sm:$0xf] %vm239, %v549
        %v744 = vld [vmem:[%s650 + $0x98] sm:$0x1]
        %v745 = vsel %vm659, %v550, %v744
        %746 = vst [vmem:[%s650 + $0x98] sm:$0x1] %v745
        %v747 = vld [vmem:[%s650 + $0x9c] sm:$0xf]
        %v748 = vsel %vm653, %v557, %v747
        %749 = vst [vmem:[%s650 + $0x9c] sm:$0xf] %v748
        %750 = vst.msk [vmem:[%s650 + $0xa0] sm:$0xf] %vm239, %v566
        %v751 = vld [vmem:[%s650 + $0xa4] sm:$0x1]
        %v752 = vsel %vm659, %v567, %v751
        %753 = vst [vmem:[%s650 + $0xa4] sm:$0x1] %v752
        %v754 = vld [vmem:[%s650 + $0xa8] sm:$0xf]
        %v755 = vsel %vm653, %v574, %v754
        %756 = vst [vmem:[%s650 + $0xa8] sm:$0xf] %v755
        %757 = vst.msk [vmem:[%s650 + $0xac] sm:$0xf] %vm239, %v583
        %v758 = vld [vmem:[%s650 + $0xb0] sm:$0x1]
        %v759 = vsel %vm659, %v584, %v758
        %760 = vst [vmem:[%s650 + $0xb0] sm:$0x1] %v759
        %v761 = vld [vmem:[%s650 + $0xb4] sm:$0xf]
        %v762 = vsel %vm653, %v591, %v761
        %763 = vst [vmem:[%s650 + $0xb4] sm:$0xf] %v762
        %764 = vst.msk [vmem:[%s650 + $0xb8] sm:$0xf] %vm239, %v600
        %v765 = vld [vmem:[%s650 + $0xbc] sm:$0x1]
        %v766 = vsel %vm659, %v601, %v765
        %767 = vst [vmem:[%s650 + $0xbc] sm:$0x1] %v766
        %v768 = vld [vmem:[#allocation2] sm:$0xf]
        %v769 = vld [vmem:[#allocation2 + $0x4] sm:$0xf]
        %v770 = vld [vmem:[#allocation2 + $0xc] sm:$0xf]
        %v771 = vld [vmem:[#allocation2 + $0x10] sm:$0xf]
        %v772 = vld [vmem:[#allocation2 + $0x18] sm:$0xf]
        %v773 = vld [vmem:[#allocation2 + $0x1c] sm:$0xf]
        %v774 = vld [vmem:[#allocation2 + $0x24] sm:$0xf]
        %v775 = vld [vmem:[#allocation2 + $0x28] sm:$0xf]
        %v776 = vld [vmem:[#allocation2 + $0x30] sm:$0xf]
        %v777 = vld [vmem:[#allocation2 + $0x34] sm:$0xf]
        %v778 = vld [vmem:[#allocation2 + $0x3c] sm:$0xf]
        %v779 = vld [vmem:[#allocation2 + $0x40] sm:$0xf]
        %v780 = vld [vmem:[#allocation2 + $0x48] sm:$0xf]
        %v781 = vld [vmem:[#allocation2 + $0x4c] sm:$0xf]
        %v782 = vld [vmem:[#allocation2 + $0x54] sm:$0xf]
        %v783 = vld [vmem:[#allocation2 + $0x58] sm:$0xf]
        %v784 = vld [vmem:[#allocation2 + $0x60] sm:$0xf]
        %v785 = vld [vmem:[#allocation2 + $0x64] sm:$0xf]
        %v786 = vld [vmem:[#allocation2 + $0x6c] sm:$0xf]
        %v787 = vld [vmem:[#allocation2 + $0x70] sm:$0xf]
        %v788 = vld [vmem:[#allocation2 + $0x78] sm:$0xf]
        %v789 = vld [vmem:[#allocation2 + $0x7c] sm:$0xf]
        %v790 = vld [vmem:[#allocation2 + $0x84] sm:$0xf]
        %v791 = vld [vmem:[#allocation2 + $0x88] sm:$0xf]
        %v792 = vld [vmem:[#allocation2 + $0x90] sm:$0xf]
        %v793 = vld [vmem:[#allocation2 + $0x94] sm:$0xf]
        %v794 = vld [vmem:[#allocation2 + $0x9c] sm:$0xf]
        %v795 = vld [vmem:[#allocation2 + $0xa0] sm:$0xf]
        %v796 = vld [vmem:[#allocation2 + $0xa8] sm:$0xf]
        %v797 = vld [vmem:[#allocation2 + $0xac] sm:$0xf]
        %v798 = vld [vmem:[#allocation2 + $0xb4] sm:$0xf]
        %v799 = vld [vmem:[#allocation2 + $0xb8] sm:$0xf]
        %800 = vst.msk [vmem:[#allocation4] sm:$0xf] %vm239, %v768
        %801 = vst.msk [vmem:[#allocation4 + $0x24] sm:$0xf] %vm239, %v769
        %802 = vst.msk [vmem:[#allocation4 + $0x48] sm:$0xf] %vm239, %v770
        %803 = vst.msk [vmem:[#allocation4 + $0x6c] sm:$0xf] %vm239, %v771
        %804 = vst.msk [vmem:[#allocation4 + $0x90] sm:$0xf] %vm239, %v772
        %805 = vst.msk [vmem:[#allocation4 + $0xb4] sm:$0xf] %vm239, %v773
        %806 = vst.msk [vmem:[#allocation4 + $0xd8] sm:$0xf] %vm239, %v774
        %807 = vst.msk [vmem:[#allocation4 + $0xfc] sm:$0xf] %vm239, %v775
        %808 = vst.msk [vmem:[#allocation4 + $0x120] sm:$0xf] %vm239, %v776
        %809 = vst.msk [vmem:[#allocation4 + $0x144] sm:$0xf] %vm239, %v777
        %810 = vst.msk [vmem:[#allocation4 + $0x168] sm:$0xf] %vm239, %v778
        %811 = vst.msk [vmem:[#allocation4 + $0x18c] sm:$0xf] %vm239, %v779
        %812 = vst.msk [vmem:[#allocation4 + $0x1b0] sm:$0xf] %vm239, %v780
        %813 = vst.msk [vmem:[#allocation4 + $0x1d4] sm:$0xf] %vm239, %v781
        %814 = vst.msk [vmem:[#allocation4 + $0x1f8] sm:$0xf] %vm239, %v782
        %815 = vst.msk [vmem:[#allocation4 + $0x21c] sm:$0xf] %vm239, %v783
        %816 = vst.msk [vmem:[#allocation4 + $0x240] sm:$0xf] %vm239, %v784
        %817 = vst.msk [vmem:[#allocation4 + $0x264] sm:$0xf] %vm239, %v785
        %818 = vst.msk [vmem:[#allocation4 + $0x288] sm:$0xf] %vm239, %v786
        %819 = vst.msk [vmem:[#allocation4 + $0x2ac] sm:$0xf] %vm239, %v787
        %820 = vst.msk [vmem:[#allocation4 + $0x2d0] sm:$0xf] %vm239, %v788
        %821 = vst.msk [vmem:[#allocation4 + $0x2f4] sm:$0xf] %vm239, %v789
        %822 = vst.msk [vmem:[#allocation4 + $0x318] sm:$0xf] %vm239, %v790
        %823 = vst.msk [vmem:[#allocation4 + $0x33c] sm:$0xf] %vm239, %v791
        %824 = vst.msk [vmem:[#allocation4 + $0x360] sm:$0xf] %vm239, %v792
        %825 = vst.msk [vmem:[#allocation4 + $0x384] sm:$0xf] %vm239, %v793
        %826 = vst.msk [vmem:[#allocation4 + $0x3a8] sm:$0xf] %vm239, %v794
        %827 = vst.msk [vmem:[#allocation4 + $0x3cc] sm:$0xf] %vm239, %v795
        %828 = vst.msk [vmem:[#allocation4 + $0x3f0] sm:$0xf] %vm239, %v796
        %829 = vst.msk [vmem:[#allocation4 + $0x414] sm:$0xf] %vm239, %v797
        %830 = vst.msk [vmem:[#allocation4 + $0x438] sm:$0xf] %vm239, %v798
        %831 = vst.msk [vmem:[#allocation4 + $0x45c] sm:$0xf] %vm239, %v799
        %v832 = vld [vmem:[#allocation2] sm:$0xf]
        %v833 = vld [vmem:[#allocation2 + $0x4] sm:$0xf]
        %v834 = vld [vmem:[#allocation2 + $0x8] sm:$0x1]
        %v835 = vld [vmem:[#allocation2 + $0xc] sm:$0xf]
        %v836 = vld [vmem:[#allocation2 + $0x10] sm:$0xf]
        %v837 = vld [vmem:[#allocation2 + $0x14] sm:$0x1]
        %v838 = vld [vmem:[#allocation2 + $0x18] sm:$0xf]
        %v839 = vld [vmem:[#allocation2 + $0x1c] sm:$0xf]
        %v840 = vld [vmem:[#allocation2 + $0x20] sm:$0x1]
        %v841 = vld [vmem:[#allocation2 + $0x24] sm:$0xf]
        %v842 = vld [vmem:[#allocation2 + $0x28] sm:$0xf]
        %v843 = vld [vmem:[#allocation2 + $0x2c] sm:$0x1]
        %v844 = vld [vmem:[#allocation2 + $0x30] sm:$0xf]
        %v845 = vld [vmem:[#allocation2 + $0x34] sm:$0xf]
        %v846 = vld [vmem:[#allocation2 + $0x38] sm:$0x1]
        %v847 = vld [vmem:[#allocation2 + $0x3c] sm:$0xf]
        %v848 = vld [vmem:[#allocation2 + $0x40] sm:$0xf]
        %v849 = vld [vmem:[#allocation2 + $0x44] sm:$0x1]
        %v850 = vld [vmem:[#allocation2 + $0x48] sm:$0xf]
        %v851 = vld [vmem:[#allocation2 + $0x4c] sm:$0xf]
        %v852 = vld [vmem:[#allocation2 + $0x50] sm:$0x1]
        %v853 = vld [vmem:[#allocation2 + $0x54] sm:$0xf]
        %v854 = vld [vmem:[#allocation2 + $0x58] sm:$0xf]
        %v855 = vld [vmem:[#allocation2 + $0x5c] sm:$0x1]
        %v856 = vld [vmem:[#allocation2 + $0x60] sm:$0xf]
        %v857 = vld [vmem:[#allocation2 + $0x64] sm:$0xf]
        %v858 = vld [vmem:[#allocation2 + $0x68] sm:$0x1]
        %v859 = vld [vmem:[#allocation2 + $0x6c] sm:$0xf]
        %v860 = vld [vmem:[#allocation2 + $0x70] sm:$0xf]
        %v861 = vld [vmem:[#allocation2 + $0x74] sm:$0x1]
        %v862 = vld [vmem:[#allocation2 + $0x78] sm:$0xf]
        %v863 = vld [vmem:[#allocation2 + $0x7c] sm:$0xf]
        %v864 = vld [vmem:[#allocation2 + $0x80] sm:$0x1]
        %v865 = vld [vmem:[#allocation2 + $0x84] sm:$0xf]
        %v866 = vld [vmem:[#allocation2 + $0x88] sm:$0xf]
        %v867 = vld [vmem:[#allocation2 + $0x8c] sm:$0x1]
        %v868 = vld [vmem:[#allocation2 + $0x90] sm:$0xf]
        %v869 = vld [vmem:[#allocation2 + $0x94] sm:$0xf]
        %v870 = vld [vmem:[#allocation2 + $0x98] sm:$0x1]
        %v871 = vld [vmem:[#allocation2 + $0x9c] sm:$0xf]
        %v872 = vld [vmem:[#allocation2 + $0xa0] sm:$0xf]
        %v873 = vld [vmem:[#allocation2 + $0xa4] sm:$0x1]
        %v874 = vld [vmem:[#allocation2 + $0xa8] sm:$0xf]
        %v875 = vld [vmem:[#allocation2 + $0xac] sm:$0xf]
        %v876 = vld [vmem:[#allocation2 + $0xb0] sm:$0x1]
        %v877 = vld [vmem:[#allocation2 + $0xb4] sm:$0xf]
        %v878 = vld [vmem:[#allocation2 + $0xb8] sm:$0xf]
        %v879 = vld [vmem:[#allocation2 + $0xbc] sm:$0x1]
        %vm880 = vsmask.f32 3328
        %vm881 = vsmask.f32 7440
        %vm882 = vmor %vm880, %vm881
        %v884 = vshrl.u32 %v832, 16
        %v886 = vrot.slane %v884, 4
        %v887 = vshll.u32 %v832, 16
        %v889 = vrot.slane %v887, 5
        %v890 = vor.u32 %v886, %v889
        %v891 = vrot.slane %v890, 4
        %v893 = vshll.u32 %v833, 16
        %v895 = vrot.slane %v893, 5
        %v896 = vsel %vm882, %v891, %v895
        %v897 = vshrl.u32 %v833, 16
        %v899 = vrot.slane %v897, 4
        %v900 = vor.u32 %v899, %v895
        %v901 = vrot.slane %v900, 4
        %v903 = vshll.u32 %v834, 16
        %v905 = vrot.slane %v903, 5
        %v906 = vsel %vm882, %v901, %v905
        %v908 = vshrl.u32 %v835, 16
        %v910 = vrot.slane %v908, 4
        %v911 = vshll.u32 %v835, 16
        %v913 = vrot.slane %v911, 5
        %v914 = vor.u32 %v910, %v913
        %v915 = vrot.slane %v914, 4
        %v917 = vshll.u32 %v836, 16
        %v919 = vrot.slane %v917, 5
        %v920 = vsel %vm882, %v915, %v919
        %v921 = vshrl.u32 %v836, 16
        %v923 = vrot.slane %v921, 4
        %v924 = vor.u32 %v923, %v919
        %v925 = vrot.slane %v924, 4
        %v927 = vshll.u32 %v837, 16
        %v929 = vrot.slane %v927, 5
        %v930 = vsel %vm882, %v925, %v929
        %v932 = vshrl.u32 %v838, 16
        %v934 = vrot.slane %v932, 4
        %v935 = vshll.u32 %v838, 16
        %v937 = vrot.slane %v935, 5
        %v938 = vor.u32 %v934, %v937
        %v939 = vrot.slane %v938, 4
        %v941 = vshll.u32 %v839, 16
        %v943 = vrot.slane %v941, 5
        %v944 = vsel %vm882, %v939, %v943
        %v945 = vshrl.u32 %v839, 16
        %v947 = vrot.slane %v945, 4
        %v948 = vor.u32 %v947, %v943
        %v949 = vrot.slane %v948, 4
        %v951 = vshll.u32 %v840, 16
        %v953 = vrot.slane %v951, 5
        %v954 = vsel %vm882, %v949, %v953
        %v956 = vshrl.u32 %v841, 16
        %v958 = vrot.slane %v956, 4
        %v959 = vshll.u32 %v841, 16
        %v961 = vrot.slane %v959, 5
        %v962 = vor.u32 %v958, %v961
        %v963 = vrot.slane %v962, 4
        %v965 = vshll.u32 %v842, 16
        %v967 = vrot.slane %v965, 5
        %v968 = vsel %vm882, %v963, %v967
        %v969 = vshrl.u32 %v842, 16
        %v971 = vrot.slane %v969, 4
        %v972 = vor.u32 %v971, %v967
        %v973 = vrot.slane %v972, 4
        %v975 = vshll.u32 %v843, 16
        %v977 = vrot.slane %v975, 5
        %v978 = vsel %vm882, %v973, %v977
        %v980 = vshrl.u32 %v844, 16
        %v982 = vrot.slane %v980, 4
        %v983 = vshll.u32 %v844, 16
        %v985 = vrot.slane %v983, 5
        %v986 = vor.u32 %v982, %v985
        %v987 = vrot.slane %v986, 4
        %v989 = vshll.u32 %v845, 16
        %v991 = vrot.slane %v989, 5
        %v992 = vsel %vm882, %v987, %v991
        %v993 = vshrl.u32 %v845, 16
        %v995 = vrot.slane %v993, 4
        %v996 = vor.u32 %v995, %v991
        %v997 = vrot.slane %v996, 4
        %v999 = vshll.u32 %v846, 16
        %v1001 = vrot.slane %v999, 5
        %v1002 = vsel %vm882, %v997, %v1001
        %v1004 = vshrl.u32 %v847, 16
        %v1006 = vrot.slane %v1004, 4
        %v1007 = vshll.u32 %v847, 16
        %v1009 = vrot.slane %v1007, 5
        %v1010 = vor.u32 %v1006, %v1009
        %v1011 = vrot.slane %v1010, 4
        %v1013 = vshll.u32 %v848, 16
        %v1015 = vrot.slane %v1013, 5
        %v1016 = vsel %vm882, %v1011, %v1015
        %v1017 = vshrl.u32 %v848, 16
        %v1019 = vrot.slane %v1017, 4
        %v1020 = vor.u32 %v1019, %v1015
        %v1021 = vrot.slane %v1020, 4
        %v1023 = vshll.u32 %v849, 16
        %v1025 = vrot.slane %v1023, 5
        %v1026 = vsel %vm882, %v1021, %v1025
        %v1028 = vshrl.u32 %v850, 16
        %v1030 = vrot.slane %v1028, 4
        %v1031 = vshll.u32 %v850, 16
        %v1033 = vrot.slane %v1031, 5
        %v1034 = vor.u32 %v1030, %v1033
        %v1035 = vrot.slane %v1034, 4
        %v1037 = vshll.u32 %v851, 16
        %v1039 = vrot.slane %v1037, 5
        %v1040 = vsel %vm882, %v1035, %v1039
        %v1041 = vshrl.u32 %v851, 16
        %v1043 = vrot.slane %v1041, 4
        %v1044 = vor.u32 %v1043, %v1039
        %v1045 = vrot.slane %v1044, 4
        %v1047 = vshll.u32 %v852, 16
        %v1049 = vrot.slane %v1047, 5
        %v1050 = vsel %vm882, %v1045, %v1049
        %v1052 = vshrl.u32 %v853, 16
        %v1054 = vrot.slane %v1052, 4
        %v1055 = vshll.u32 %v853, 16
        %v1057 = vrot.slane %v1055, 5
        %v1058 = vor.u32 %v1054, %v1057
        %v1059 = vrot.slane %v1058, 4
        %v1061 = vshll.u32 %v854, 16
        %v1063 = vrot.slane %v1061, 5
        %v1064 = vsel %vm882, %v1059, %v1063
        %v1065 = vshrl.u32 %v854, 16
        %v1067 = vrot.slane %v1065, 4
        %v1068 = vor.u32 %v1067, %v1063
        %v1069 = vrot.slane %v1068, 4
        %v1071 = vshll.u32 %v855, 16
        %v1073 = vrot.slane %v1071, 5
        %v1074 = vsel %vm882, %v1069, %v1073
        %v1076 = vshrl.u32 %v856, 16
        %v1078 = vrot.slane %v1076, 4
        %v1079 = vshll.u32 %v856, 16
        %v1081 = vrot.slane %v1079, 5
        %v1082 = vor.u32 %v1078, %v1081
        %v1083 = vrot.slane %v1082, 4
        %v1085 = vshll.u32 %v857, 16
        %v1087 = vrot.slane %v1085, 5
        %v1088 = vsel %vm882, %v1083, %v1087
        %v1089 = vshrl.u32 %v857, 16
        %v1091 = vrot.slane %v1089, 4
        %v1092 = vor.u32 %v1091, %v1087
        %v1093 = vrot.slane %v1092, 4
        %v1095 = vshll.u32 %v858, 16
        %v1097 = vrot.slane %v1095, 5
        %v1098 = vsel %vm882, %v1093, %v1097
        %v1100 = vshrl.u32 %v859, 16
        %v1102 = vrot.slane %v1100, 4
        %v1103 = vshll.u32 %v859, 16
        %v1105 = vrot.slane %v1103, 5
        %v1106 = vor.u32 %v1102, %v1105
        %v1107 = vrot.slane %v1106, 4
        %v1109 = vshll.u32 %v860, 16
        %v1111 = vrot.slane %v1109, 5
        %v1112 = vsel %vm882, %v1107, %v1111
        %v1113 = vshrl.u32 %v860, 16
        %v1115 = vrot.slane %v1113, 4
        %v1116 = vor.u32 %v1115, %v1111
        %v1117 = vrot.slane %v1116, 4
        %v1119 = vshll.u32 %v861, 16
        %v1121 = vrot.slane %v1119, 5
        %v1122 = vsel %vm882, %v1117, %v1121
        %v1124 = vshrl.u32 %v862, 16
        %v1126 = vrot.slane %v1124, 4
        %v1127 = vshll.u32 %v862, 16
        %v1129 = vrot.slane %v1127, 5
        %v1130 = vor.u32 %v1126, %v1129
        %v1131 = vrot.slane %v1130, 4
        %v1133 = vshll.u32 %v863, 16
        %v1135 = vrot.slane %v1133, 5
        %v1136 = vsel %vm882, %v1131, %v1135
        %v1137 = vshrl.u32 %v863, 16
        %v1139 = vrot.slane %v1137, 4
        %v1140 = vor.u32 %v1139, %v1135
        %v1141 = vrot.slane %v1140, 4
        %v1143 = vshll.u32 %v864, 16
        %v1145 = vrot.slane %v1143, 5
        %v1146 = vsel %vm882, %v1141, %v1145
        %v1148 = vshrl.u32 %v865, 16
        %v1150 = vrot.slane %v1148, 4
        %v1151 = vshll.u32 %v865, 16
        %v1153 = vrot.slane %v1151, 5
        %v1154 = vor.u32 %v1150, %v1153
        %v1155 = vrot.slane %v1154, 4
        %v1157 = vshll.u32 %v866, 16
        %v1159 = vrot.slane %v1157, 5
        %v1160 = vsel %vm882, %v1155, %v1159
        %v1161 = vshrl.u32 %v866, 16
        %v1163 = vrot.slane %v1161, 4
        %v1164 = vor.u32 %v1163, %v1159
        %v1165 = vrot.slane %v1164, 4
        %v1167 = vshll.u32 %v867, 16
        %v1169 = vrot.slane %v1167, 5
        %v1170 = vsel %vm882, %v1165, %v1169
        %v1172 = vshrl.u32 %v868, 16
        %v1174 = vrot.slane %v1172, 4
        %v1175 = vshll.u32 %v868, 16
        %v1177 = vrot.slane %v1175, 5
        %v1178 = vor.u32 %v1174, %v1177
        %v1179 = vrot.slane %v1178, 4
        %v1181 = vshll.u32 %v869, 16
        %v1183 = vrot.slane %v1181, 5
        %v1184 = vsel %vm882, %v1179, %v1183
        %v1185 = vshrl.u32 %v869, 16
        %v1187 = vrot.slane %v1185, 4
        %v1188 = vor.u32 %v1187, %v1183
        %v1189 = vrot.slane %v1188, 4
        %v1191 = vshll.u32 %v870, 16
        %v1193 = vrot.slane %v1191, 5
        %v1194 = vsel %vm882, %v1189, %v1193
        %v1196 = vshrl.u32 %v871, 16
        %v1198 = vrot.slane %v1196, 4
        %v1199 = vshll.u32 %v871, 16
        %v1201 = vrot.slane %v1199, 5
        %v1202 = vor.u32 %v1198, %v1201
        %v1203 = vrot.slane %v1202, 4
        %v1205 = vshll.u32 %v872, 16
        %v1207 = vrot.slane %v1205, 5
        %v1208 = vsel %vm882, %v1203, %v1207
        %v1209 = vshrl.u32 %v872, 16
        %v1211 = vrot.slane %v1209, 4
        %v1212 = vor.u32 %v1211, %v1207
        %v1213 = vrot.slane %v1212, 4
        %v1215 = vshll.u32 %v873, 16
        %v1217 = vrot.slane %v1215, 5
        %v1218 = vsel %vm882, %v1213, %v1217
        %v1220 = vshrl.u32 %v874, 16
        %v1222 = vrot.slane %v1220, 4
        %v1223 = vshll.u32 %v874, 16
        %v1225 = vrot.slane %v1223, 5
        %v1226 = vor.u32 %v1222, %v1225
        %v1227 = vrot.slane %v1226, 4
        %v1229 = vshll.u32 %v875, 16
        %v1231 = vrot.slane %v1229, 5
        %v1232 = vsel %vm882, %v1227, %v1231
        %v1233 = vshrl.u32 %v875, 16
        %v1235 = vrot.slane %v1233, 4
        %v1236 = vor.u32 %v1235, %v1231
        %v1237 = vrot.slane %v1236, 4
        %v1239 = vshll.u32 %v876, 16
        %v1241 = vrot.slane %v1239, 5
        %v1242 = vsel %vm882, %v1237, %v1241
        %v1244 = vshrl.u32 %v877, 16
        %v1246 = vrot.slane %v1244, 4
        %v1247 = vshll.u32 %v877, 16
        %v1249 = vrot.slane %v1247, 5
        %v1250 = vor.u32 %v1246, %v1249
        %v1251 = vrot.slane %v1250, 4
        %v1253 = vshll.u32 %v878, 16
        %v1255 = vrot.slane %v1253, 5
        %v1256 = vsel %vm882, %v1251, %v1255
        %v1257 = vshrl.u32 %v878, 16
        %v1259 = vrot.slane %v1257, 4
        %v1260 = vor.u32 %v1259, %v1255
        %v1261 = vrot.slane %v1260, 4
        %v1263 = vshll.u32 %v879, 16
        %v1265 = vrot.slane %v1263, 5
        %v1266 = vsel %vm882, %v1261, %v1265
        %1267 = vrot.lane.b32.xlu0 %v896, 4
        %v1268 = vpop.permute.xlu0 %1267
        %1269 = vrot.lane.b32.xlu0 %v906, 4
        %v1270 = vpop.permute.xlu0 %1269
        %1271 = vrot.lane.b32.xlu0 %v920, 4
        %v1272 = vpop.permute.xlu0 %1271
        %1273 = vrot.lane.b32.xlu0 %v930, 4
        %v1274 = vpop.permute.xlu0 %1273
        %1275 = vrot.lane.b32.xlu0 %v944, 4
        %v1276 = vpop.permute.xlu0 %1275
        %1277 = vrot.lane.b32.xlu0 %v954, 4
        %v1278 = vpop.permute.xlu0 %1277
        %1279 = vrot.lane.b32.xlu0 %v968, 4
        %v1280 = vpop.permute.xlu0 %1279
        %1281 = vrot.lane.b32.xlu0 %v978, 4
        %v1282 = vpop.permute.xlu0 %1281
        %1283 = vrot.lane.b32.xlu0 %v992, 4
        %v1284 = vpop.permute.xlu0 %1283
        %1285 = vrot.lane.b32.xlu0 %v1002, 4
        %v1286 = vpop.permute.xlu0 %1285
        %1287 = vrot.lane.b32.xlu0 %v1016, 4
        %v1288 = vpop.permute.xlu0 %1287
        %1289 = vrot.lane.b32.xlu0 %v1026, 4
        %v1290 = vpop.permute.xlu0 %1289
        %1291 = vrot.lane.b32.xlu0 %v1040, 4
        %v1292 = vpop.permute.xlu0 %1291
        %1293 = vrot.lane.b32.xlu0 %v1050, 4
        %v1294 = vpop.permute.xlu0 %1293
        %1295 = vrot.lane.b32.xlu0 %v1064, 4
        %v1296 = vpop.permute.xlu0 %1295
        %1297 = vrot.lane.b32.xlu0 %v1074, 4
        %v1298 = vpop.permute.xlu0 %1297
        %1299 = vrot.lane.b32.xlu0 %v1088, 4
        %v1300 = vpop.permute.xlu0 %1299
        %1301 = vrot.lane.b32.xlu0 %v1098, 4
        %v1302 = vpop.permute.xlu0 %1301
        %1303 = vrot.lane.b32.xlu0 %v1112, 4
        %v1304 = vpop.permute.xlu0 %1303
        %1305 = vrot.lane.b32.xlu0 %v1122, 4
        %v1306 = vpop.permute.xlu0 %1305
        %1307 = vrot.lane.b32.xlu0 %v1136, 4
        %v1308 = vpop.permute.xlu0 %1307
        %1309 = vrot.lane.b32.xlu0 %v1146, 4
        %v1310 = vpop.permute.xlu0 %1309
        %1311 = vrot.lane.b32.xlu0 %v1160, 4
        %v1312 = vpop.permute.xlu0 %1311
        %1313 = vrot.lane.b32.xlu0 %v1170, 4
        %v1314 = vpop.permute.xlu0 %1313
        %1315 = vrot.lane.b32.xlu0 %v1184, 4
        %v1316 = vpop.permute.xlu0 %1315
        %1317 = vrot.lane.b32.xlu0 %v1194, 4
        %v1318 = vpop.permute.xlu0 %1317
        %1319 = vrot.lane.b32.xlu0 %v1208, 4
        %v1320 = vpop.permute.xlu0 %1319
        %1321 = vrot.lane.b32.xlu0 %v1218, 4
        %v1322 = vpop.permute.xlu0 %1321
        %1323 = vrot.lane.b32.xlu0 %v1232, 4
        %v1324 = vpop.permute.xlu0 %1323
        %1325 = vrot.lane.b32.xlu0 %v1242, 4
        %v1326 = vpop.permute.xlu0 %1325
        %1327 = vrot.lane.b32.xlu0 %v1256, 4
        %v1328 = vpop.permute.xlu0 %1327
        %1329 = vrot.lane.b32.xlu0 %v1266, 4
        %v1330 = vpop.permute.xlu0 %1329
        %vm1363 = vcmask 60448
        %1364 = vst.msk [vmem:[#allocation4] sm:$0xf] %vm1363, %v1268
        %1365 = vst.msk [vmem:[#allocation4 + $0x24] sm:$0xf] %vm1363, %v1270
        %1366 = vst.msk [vmem:[#allocation4 + $0x48] sm:$0xf] %vm1363, %v1272
        %1367 = vst.msk [vmem:[#allocation4 + $0x6c] sm:$0xf] %vm1363, %v1274
        %1368 = vst.msk [vmem:[#allocation4 + $0x90] sm:$0xf] %vm1363, %v1276
        %1369 = vst.msk [vmem:[#allocation4 + $0xb4] sm:$0xf] %vm1363, %v1278
        %1370 = vst.msk [vmem:[#allocation4 + $0xd8] sm:$0xf] %vm1363, %v1280
        %1371 = vst.msk [vmem:[#allocation4 + $0xfc] sm:$0xf] %vm1363, %v1282
        %1372 = vst.msk [vmem:[#allocation4 + $0x120] sm:$0xf] %vm1363, %v1284
        %1373 = vst.msk [vmem:[#allocation4 + $0x144] sm:$0xf] %vm1363, %v1286
        %1374 = vst.msk [vmem:[#allocation4 + $0x168] sm:$0xf] %vm1363, %v1288
        %1375 = vst.msk [vmem:[#allocation4 + $0x18c] sm:$0xf] %vm1363, %v1290
        %1376 = vst.msk [vmem:[#allocation4 + $0x1b0] sm:$0xf] %vm1363, %v1292
        %1377 = vst.msk [vmem:[#allocation4 + $0x1d4] sm:$0xf] %vm1363, %v1294
        %1378 = vst.msk [vmem:[#allocation4 + $0x1f8] sm:$0xf] %vm1363, %v1296
        %1379 = vst.msk [vmem:[#allocation4 + $0x21c] sm:$0xf] %vm1363, %v1298
        %1380 = vst.msk [vmem:[#allocation4 + $0x240] sm:$0xf] %vm1363, %v1300
        %1381 = vst.msk [vmem:[#allocation4 + $0x264] sm:$0xf] %vm1363, %v1302
        %1382 = vst.msk [vmem:[#allocation4 + $0x288] sm:$0xf] %vm1363, %v1304
        %1383 = vst.msk [vmem:[#allocation4 + $0x2ac] sm:$0xf] %vm1363, %v1306
        %1384 = vst.msk [vmem:[#allocation4 + $0x2d0] sm:$0xf] %vm1363, %v1308
        %1385 = vst.msk [vmem:[#allocation4 + $0x2f4] sm:$0xf] %vm1363, %v1310
        %1386 = vst.msk [vmem:[#allocation4 + $0x318] sm:$0xf] %vm1363, %v1312
        %1387 = vst.msk [vmem:[#allocation4 + $0x33c] sm:$0xf] %vm1363, %v1314
        %1388 = vst.msk [vmem:[#allocation4 + $0x360] sm:$0xf] %vm1363, %v1316
        %1389 = vst.msk [vmem:[#allocation4 + $0x384] sm:$0xf] %vm1363, %v1318
        %1390 = vst.msk [vmem:[#allocation4 + $0x3a8] sm:$0xf] %vm1363, %v1320
        %1391 = vst.msk [vmem:[#allocation4 + $0x3cc] sm:$0xf] %vm1363, %v1322
        %1392 = vst.msk [vmem:[#allocation4 + $0x3f0] sm:$0xf] %vm1363, %v1324
        %1393 = vst.msk [vmem:[#allocation4 + $0x414] sm:$0xf] %vm1363, %v1326
        %1394 = vst.msk [vmem:[#allocation4 + $0x438] sm:$0xf] %vm1363, %v1328
        %1395 = vst.msk [vmem:[#allocation4 + $0x45c] sm:$0xf] %vm1363, %v1330
        %v1396 = vld [vmem:[#allocation2] sm:$0xe]
        %v1397 = vld [vmem:[#allocation2 + $0x4] sm:$0xf]
        %v1398 = vld [vmem:[#allocation2 + $0x8] sm:$0x1]
        %v1399 = vld [vmem:[#allocation2 + $0xc] sm:$0xe]
        %v1400 = vld [vmem:[#allocation2 + $0x10] sm:$0xf]
        %v1401 = vld [vmem:[#allocation2 + $0x14] sm:$0x1]
        %v1402 = vld [vmem:[#allocation2 + $0x18] sm:$0xe]
        %v1403 = vld [vmem:[#allocation2 + $0x1c] sm:$0xf]
        %v1404 = vld [vmem:[#allocation2 + $0x20] sm:$0x1]
        %v1405 = vld [vmem:[#allocation2 + $0x24] sm:$0xe]
        %v1406 = vld [vmem:[#allocation2 + $0x28] sm:$0xf]
        %v1407 = vld [vmem:[#allocation2 + $0x2c] sm:$0x1]
        %v1408 = vld [vmem:[#allocation2 + $0x30] sm:$0xe]
        %v1409 = vld [vmem:[#allocation2 + $0x34] sm:$0xf]
        %v1410 = vld [vmem:[#allocation2 + $0x38] sm:$0x1]
        %v1411 = vld [vmem:[#allocation2 + $0x3c] sm:$0xe]
        %v1412 = vld [vmem:[#allocation2 + $0x40] sm:$0xf]
        %v1413 = vld [vmem:[#allocation2 + $0x44] sm:$0x1]
        %v1414 = vld [vmem:[#allocation2 + $0x48] sm:$0xe]
        %v1415 = vld [vmem:[#allocation2 + $0x4c] sm:$0xf]
        %v1416 = vld [vmem:[#allocation2 + $0x50] sm:$0x1]
        %v1417 = vld [vmem:[#allocation2 + $0x54] sm:$0xe]
        %v1418 = vld [vmem:[#allocation2 + $0x58] sm:$0xf]
        %v1419 = vld [vmem:[#allocation2 + $0x5c] sm:$0x1]
        %v1420 = vld [vmem:[#allocation2 + $0x60] sm:$0xe]
        %v1421 = vld [vmem:[#allocation2 + $0x64] sm:$0xf]
        %v1422 = vld [vmem:[#allocation2 + $0x68] sm:$0x1]
        %v1423 = vld [vmem:[#allocation2 + $0x6c] sm:$0xe]
        %v1424 = vld [vmem:[#allocation2 + $0x70] sm:$0xf]
        %v1425 = vld [vmem:[#allocation2 + $0x74] sm:$0x1]
        %v1426 = vld [vmem:[#allocation2 + $0x78] sm:$0xe]
        %v1427 = vld [vmem:[#allocation2 + $0x7c] sm:$0xf]
        %v1428 = vld [vmem:[#allocation2 + $0x80] sm:$0x1]
        %v1429 = vld [vmem:[#allocation2 + $0x84] sm:$0xe]
        %v1430 = vld [vmem:[#allocation2 + $0x88] sm:$0xf]
        %v1431 = vld [vmem:[#allocation2 + $0x8c] sm:$0x1]
        %v1432 = vld [vmem:[#allocation2 + $0x90] sm:$0xe]
        %v1433 = vld [vmem:[#allocation2 + $0x94] sm:$0xf]
        %v1434 = vld [vmem:[#allocation2 + $0x98] sm:$0x1]
        %v1435 = vld [vmem:[#allocation2 + $0x9c] sm:$0xe]
        %v1436 = vld [vmem:[#allocation2 + $0xa0] sm:$0xf]
        %v1437 = vld [vmem:[#allocation2 + $0xa4] sm:$0x1]
        %v1438 = vld [vmem:[#allocation2 + $0xa8] sm:$0xe]
        %v1439 = vld [vmem:[#allocation2 + $0xac] sm:$0xf]
        %v1440 = vld [vmem:[#allocation2 + $0xb0] sm:$0x1]
        %v1441 = vld [vmem:[#allocation2 + $0xb4] sm:$0xe]
        %v1442 = vld [vmem:[#allocation2 + $0xb8] sm:$0xf]
        %v1443 = vld [vmem:[#allocation2 + $0xbc] sm:$0x1]
        %vm1492 = vcmask 1042432
        %vm1493 = vcmask 1046532
        %vm1494 = vmor %vm1492, %vm1493
        %v1495 = vrot.slane %v1396, 5
        %v1496 = vrot.slane %v1495, 4
        %v1497 = vrot.slane %v1397, 5
        %v1498 = vsel %vm1494, %v1496, %v1497
        %v1499 = vrot.slane %v1497, 4
        %v1500 = vrot.slane %v1398, 5
        %v1501 = vsel %vm1494, %v1499, %v1500
        %v1502 = vrot.slane %v1399, 5
        %v1503 = vrot.slane %v1502, 4
        %v1504 = vrot.slane %v1400, 5
        %v1505 = vsel %vm1494, %v1503, %v1504
        %v1506 = vrot.slane %v1504, 4
        %v1507 = vrot.slane %v1401, 5
        %v1508 = vsel %vm1494, %v1506, %v1507
        %v1509 = vrot.slane %v1402, 5
        %v1510 = vrot.slane %v1509, 4
        %v1511 = vrot.slane %v1403, 5
        %v1512 = vsel %vm1494, %v1510, %v1511
        %v1513 = vrot.slane %v1511, 4
        %v1514 = vrot.slane %v1404, 5
        %v1515 = vsel %vm1494, %v1513, %v1514
        %v1516 = vrot.slane %v1405, 5
        %v1517 = vrot.slane %v1516, 4
        %v1518 = vrot.slane %v1406, 5
        %v1519 = vsel %vm1494, %v1517, %v1518
        %v1520 = vrot.slane %v1518, 4
        %v1521 = vrot.slane %v1407, 5
        %v1522 = vsel %vm1494, %v1520, %v1521
        %v1523 = vrot.slane %v1408, 5
        %v1524 = vrot.slane %v1523, 4
        %v1525 = vrot.slane %v1409, 5
        %v1526 = vsel %vm1494, %v1524, %v1525
        %v1527 = vrot.slane %v1525, 4
        %v1528 = vrot.slane %v1410, 5
        %v1529 = vsel %vm1494, %v1527, %v1528
        %v1530 = vrot.slane %v1411, 5
        %v1531 = vrot.slane %v1530, 4
        %v1532 = vrot.slane %v1412, 5
        %v1533 = vsel %vm1494, %v1531, %v1532
        %v1534 = vrot.slane %v1532, 4
        %v1535 = vrot.slane %v1413, 5
        %v1536 = vsel %vm1494, %v1534, %v1535
        %v1537 = vrot.slane %v1414, 5
        %v1538 = vrot.slane %v1537, 4
        %v1539 = vrot.slane %v1415, 5
        %v1540 = vsel %vm1494, %v1538, %v1539
        %v1541 = vrot.slane %v1539, 4
        %v1542 = vrot.slane %v1416, 5
        %v1543 = vsel %vm1494, %v1541, %v1542
        %v1544 = vrot.slane %v1417, 5
        %v1545 = vrot.slane %v1544, 4
        %v1546 = vrot.slane %v1418, 5
        %v1547 = vsel %vm1494, %v1545, %v1546
        %v1548 = vrot.slane %v1546, 4
        %v1549 = vrot.slane %v1419, 5
        %v1550 = vsel %vm1494, %v1548, %v1549
        %v1551 = vrot.slane %v1420, 5
        %v1552 = vrot.slane %v1551, 4
        %v1553 = vrot.slane %v1421, 5
        %v1554 = vsel %vm1494, %v1552, %v1553
        %v1555 = vrot.slane %v1553, 4
        %v1556 = vrot.slane %v1422, 5
        %v1557 = vsel %vm1494, %v1555, %v1556
        %v1558 = vrot.slane %v1423, 5
        %v1559 = vrot.slane %v1558, 4
        %v1560 = vrot.slane %v1424, 5
        %v1561 = vsel %vm1494, %v1559, %v1560
        %v1562 = vrot.slane %v1560, 4
        %v1563 = vrot.slane %v1425, 5
        %v1564 = vsel %vm1494, %v1562, %v1563
        %v1565 = vrot.slane %v1426, 5
        %v1566 = vrot.slane %v1565, 4
        %v1567 = vrot.slane %v1427, 5
        %v1568 = vsel %vm1494, %v1566, %v1567
        %v1569 = vrot.slane %v1567, 4
        %v1570 = vrot.slane %v1428, 5
        %v1571 = vsel %vm1494, %v1569, %v1570
        %v1572 = vrot.slane %v1429, 5
        %v1573 = vrot.slane %v1572, 4
        %v1574 = vrot.slane %v1430, 5
        %v1575 = vsel %vm1494, %v1573, %v1574
        %v1576 = vrot.slane %v1574, 4
        %v1577 = vrot.slane %v1431, 5
        %v1578 = vsel %vm1494, %v1576, %v1577
        %v1579 = vrot.slane %v1432, 5
        %v1580 = vrot.slane %v1579, 4
        %v1581 = vrot.slane %v1433, 5
        %v1582 = vsel %vm1494, %v1580, %v1581
        %v1583 = vrot.slane %v1581, 4
        %v1584 = vrot.slane %v1434, 5
        %v1585 = vsel %vm1494, %v1583, %v1584
        %v1586 = vrot.slane %v1435, 5
        %v1587 = vrot.slane %v1586, 4
        %v1588 = vrot.slane %v1436, 5
        %v1589 = vsel %vm1494, %v1587, %v1588
        %v1590 = vrot.slane %v1588, 4
        %v1591 = vrot.slane %v1437, 5
        %v1592 = vsel %vm1494, %v1590, %v1591
        %v1593 = vrot.slane %v1438, 5
        %v1594 = vrot.slane %v1593, 4
        %v1595 = vrot.slane %v1439, 5
        %v1596 = vsel %vm1494, %v1594, %v1595
        %v1597 = vrot.slane %v1595, 4
        %v1598 = vrot.slane %v1440, 5
        %v1599 = vsel %vm1494, %v1597, %v1598
        %v1600 = vrot.slane %v1441, 5
        %v1601 = vrot.slane %v1600, 4
        %v1602 = vrot.slane %v1442, 5
        %v1603 = vsel %vm1494, %v1601, %v1602
        %v1604 = vrot.slane %v1602, 4
        %v1605 = vrot.slane %v1443, 5
        %v1606 = vsel %vm1494, %v1604, %v1605
        %1607 = vrot.lane.b32.xlu0 %v1498, 8
        %v1608 = vpop.permute.xlu0 %1607
        %1609 = vrot.lane.b32.xlu0 %v1501, 8
        %v1610 = vpop.permute.xlu0 %1609
        %1611 = vrot.lane.b32.xlu0 %v1505, 8
        %v1612 = vpop.permute.xlu0 %1611
        %1613 = vrot.lane.b32.xlu0 %v1508, 8
        %v1614 = vpop.permute.xlu0 %1613
        %1615 = vrot.lane.b32.xlu0 %v1512, 8
        %v1616 = vpop.permute.xlu0 %1615
        %1617 = vrot.lane.b32.xlu0 %v1515, 8
        %v1618 = vpop.permute.xlu0 %1617
        %1619 = vrot.lane.b32.xlu0 %v1519, 8
        %v1620 = vpop.permute.xlu0 %1619
        %1621 = vrot.lane.b32.xlu0 %v1522, 8
        %v1622 = vpop.permute.xlu0 %1621
        %1623 = vrot.lane.b32.xlu0 %v1526, 8
        %v1624 = vpop.permute.xlu0 %1623
        %1625 = vrot.lane.b32.xlu0 %v1529, 8
        %v1626 = vpop.permute.xlu0 %1625
        %1627 = vrot.lane.b32.xlu0 %v1533, 8
        %v1628 = vpop.permute.xlu0 %1627
        %1629 = vrot.lane.b32.xlu0 %v1536, 8
        %v1630 = vpop.permute.xlu0 %1629
        %1631 = vrot.lane.b32.xlu0 %v1540, 8
        %v1632 = vpop.permute.xlu0 %1631
        %1633 = vrot.lane.b32.xlu0 %v1543, 8
        %v1634 = vpop.permute.xlu0 %1633
        %1635 = vrot.lane.b32.xlu0 %v1547, 8
        %v1636 = vpop.permute.xlu0 %1635
        %1637 = vrot.lane.b32.xlu0 %v1550, 8
        %v1638 = vpop.permute.xlu0 %1637
        %1639 = vrot.lane.b32.xlu0 %v1554, 8
        %v1640 = vpop.permute.xlu0 %1639
        %1641 = vrot.lane.b32.xlu0 %v1557, 8
        %v1642 = vpop.permute.xlu0 %1641
        %1643 = vrot.lane.b32.xlu0 %v1561, 8
        %v1644 = vpop.permute.xlu0 %1643
        %1645 = vrot.lane.b32.xlu0 %v1564, 8
        %v1646 = vpop.permute.xlu0 %1645
        %1647 = vrot.lane.b32.xlu0 %v1568, 8
        %v1648 = vpop.permute.xlu0 %1647
        %1649 = vrot.lane.b32.xlu0 %v1571, 8
        %v1650 = vpop.permute.xlu0 %1649
        %1651 = vrot.lane.b32.xlu0 %v1575, 8
        %v1652 = vpop.permute.xlu0 %1651
        %1653 = vrot.lane.b32.xlu0 %v1578, 8
        %v1654 = vpop.permute.xlu0 %1653
        %1655 = vrot.lane.b32.xlu0 %v1582, 8
        %v1656 = vpop.permute.xlu0 %1655
        %1657 = vrot.lane.b32.xlu0 %v1585, 8
        %v1658 = vpop.permute.xlu0 %1657
        %1659 = vrot.lane.b32.xlu0 %v1589, 8
        %v1660 = vpop.permute.xlu0 %1659
        %1661 = vrot.lane.b32.xlu0 %v1592, 8
        %v1662 = vpop.permute.xlu0 %1661
        %1663 = vrot.lane.b32.xlu0 %v1596, 8
        %v1664 = vpop.permute.xlu0 %1663
        %1665 = vrot.lane.b32.xlu0 %v1599, 8
        %v1666 = vpop.permute.xlu0 %1665
        %1667 = vrot.lane.b32.xlu0 %v1603, 8
        %v1668 = vpop.permute.xlu0 %1667
        %1669 = vrot.lane.b32.xlu0 %v1606, 8
        %v1670 = vpop.permute.xlu0 %1669
        %vm1703 = vcmask 93248
        %1704 = vst.msk [vmem:[#allocation4] sm:$0xf] %vm1703, %v1608
        %1705 = vst.msk [vmem:[#allocation4 + $0x24] sm:$0xf] %vm1703, %v1610
        %1706 = vst.msk [vmem:[#allocation4 + $0x48] sm:$0xf] %vm1703, %v1612
        %1707 = vst.msk [vmem:[#allocation4 + $0x6c] sm:$0xf] %vm1703, %v1614
        %1708 = vst.msk [vmem:[#allocation4 + $0x90] sm:$0xf] %vm1703, %v1616
        %1709 = vst.msk [vmem:[#allocation4 + $0xb4] sm:$0xf] %vm1703, %v1618
        %1710 = vst.msk [vmem:[#allocation4 + $0xd8] sm:$0xf] %vm1703, %v1620
        %1711 = vst.msk [vmem:[#allocation4 + $0xfc] sm:$0xf] %vm1703, %v1622
        %1712 = vst.msk [vmem:[#allocation4 + $0x120] sm:$0xf] %vm1703, %v1624
        %1713 = vst.msk [vmem:[#allocation4 + $0x144] sm:$0xf] %vm1703, %v1626
        %1714 = vst.msk [vmem:[#allocation4 + $0x168] sm:$0xf] %vm1703, %v1628
        %1715 = vst.msk [vmem:[#allocation4 + $0x18c] sm:$0xf] %vm1703, %v1630
        %1716 = vst.msk [vmem:[#allocation4 + $0x1b0] sm:$0xf] %vm1703, %v1632
        %1717 = vst.msk [vmem:[#allocation4 + $0x1d4] sm:$0xf] %vm1703, %v1634
        %1718 = vst.msk [vmem:[#allocation4 + $0x1f8] sm:$0xf] %vm1703, %v1636
        %1719 = vst.msk [vmem:[#allocation4 + $0x21c] sm:$0xf] %vm1703, %v1638
        %1720 = vst.msk [vmem:[#allocation4 + $0x240] sm:$0xf] %vm1703, %v1640
        %1721 = vst.msk [vmem:[#allocation4 + $0x264] sm:$0xf] %vm1703, %v1642
        %1722 = vst.msk [vmem:[#allocation4 + $0x288] sm:$0xf] %vm1703, %v1644
        %1723 = vst.msk [vmem:[#allocation4 + $0x2ac] sm:$0xf] %vm1703, %v1646
        %1724 = vst.msk [vmem:[#allocation4 + $0x2d0] sm:$0xf] %vm1703, %v1648
        %1725 = vst.msk [vmem:[#allocation4 + $0x2f4] sm:$0xf] %vm1703, %v1650
        %1726 = vst.msk [vmem:[#allocation4 + $0x318] sm:$0xf] %vm1703, %v1652
        %1727 = vst.msk [vmem:[#allocation4 + $0x33c] sm:$0xf] %vm1703, %v1654
        %1728 = vst.msk [vmem:[#allocation4 + $0x360] sm:$0xf] %vm1703, %v1656
        %1729 = vst.msk [vmem:[#allocation4 + $0x384] sm:$0xf] %vm1703, %v1658
        %1730 = vst.msk [vmem:[#allocation4 + $0x3a8] sm:$0xf] %vm1703, %v1660
        %1731 = vst.msk [vmem:[#allocation4 + $0x3cc] sm:$0xf] %vm1703, %v1662
        %1732 = vst.msk [vmem:[#allocation4 + $0x3f0] sm:$0xf] %vm1703, %v1664
        %1733 = vst.msk [vmem:[#allocation4 + $0x414] sm:$0xf] %vm1703, %v1666
        %1734 = vst.msk [vmem:[#allocation4 + $0x438] sm:$0xf] %vm1703, %v1668
        %1735 = vst.msk [vmem:[#allocation4 + $0x45c] sm:$0xf] %vm1703, %v1670
        %v1736 = vld [vmem:[%s650] sm:$0xf]
        %v1737 = vld [vmem:[%s650 + $0x4] sm:$0xf]
        %v1738 = vld [vmem:[%s650 + $0xc] sm:$0xf]
        %v1739 = vld [vmem:[%s650 + $0x10] sm:$0xf]
        %v1740 = vld [vmem:[%s650 + $0x18] sm:$0xf]
        %v1741 = vld [vmem:[%s650 + $0x1c] sm:$0xf]
        %v1742 = vld [vmem:[%s650 + $0x24] sm:$0xf]
        %v1743 = vld [vmem:[%s650 + $0x28] sm:$0xf]
        %v1744 = vld [vmem:[%s650 + $0x30] sm:$0xf]
        %v1745 = vld [vmem:[%s650 + $0x34] sm:$0xf]
        %v1746 = vld [vmem:[%s650 + $0x3c] sm:$0xf]
        %v1747 = vld [vmem:[%s650 + $0x40] sm:$0xf]
        %v1748 = vld [vmem:[%s650 + $0x48] sm:$0xf]
        %v1749 = vld [vmem:[%s650 + $0x4c] sm:$0xf]
        %v1750 = vld [vmem:[%s650 + $0x54] sm:$0xf]
        %v1751 = vld [vmem:[%s650 + $0x58] sm:$0xf]
        %v1752 = vld [vmem:[%s650 + $0x60] sm:$0xf]
        %v1753 = vld [vmem:[%s650 + $0x64] sm:$0xf]
        %v1754 = vld [vmem:[%s650 + $0x6c] sm:$0xf]
        %v1755 = vld [vmem:[%s650 + $0x70] sm:$0xf]
        %v1756 = vld [vmem:[%s650 + $0x78] sm:$0xf]
        %v1757 = vld [vmem:[%s650 + $0x7c] sm:$0xf]
        %v1758 = vld [vmem:[%s650 + $0x84] sm:$0xf]
        %v1759 = vld [vmem:[%s650 + $0x88] sm:$0xf]
        %v1760 = vld [vmem:[%s650 + $0x90] sm:$0xf]
        %v1761 = vld [vmem:[%s650 + $0x94] sm:$0xf]
        %v1762 = vld [vmem:[%s650 + $0x9c] sm:$0xf]
        %v1763 = vld [vmem:[%s650 + $0xa0] sm:$0xf]
        %v1764 = vld [vmem:[%s650 + $0xa8] sm:$0xf]
        %v1765 = vld [vmem:[%s650 + $0xac] sm:$0xf]
        %v1766 = vld [vmem:[%s650 + $0xb4] sm:$0xf]
        %v1767 = vld [vmem:[%s650 + $0xb8] sm:$0xf]
        %1800 = vrot.lane.b32.xlu0 %v1736, 12
        %v1801 = vpop.permute.xlu0 %1800
        %1802 = vrot.lane.b32.xlu0 %v1737, 12
        %v1803 = vpop.permute.xlu0 %1802
        %1804 = vrot.lane.b32.xlu0 %v1738, 12
        %v1805 = vpop.permute.xlu0 %1804
        %1806 = vrot.lane.b32.xlu0 %v1739, 12
        %v1807 = vpop.permute.xlu0 %1806
        %1808 = vrot.lane.b32.xlu0 %v1740, 12
        %v1809 = vpop.permute.xlu0 %1808
        %1810 = vrot.lane.b32.xlu0 %v1741, 12
        %v1811 = vpop.permute.xlu0 %1810
        %1812 = vrot.lane.b32.xlu0 %v1742, 12
        %v1813 = vpop.permute.xlu0 %1812
        %1814 = vrot.lane.b32.xlu0 %v1743, 12
        %v1815 = vpop.permute.xlu0 %1814
        %1816 = vrot.lane.b32.xlu0 %v1744, 12
        %v1817 = vpop.permute.xlu0 %1816
        %1818 = vrot.lane.b32.xlu0 %v1745, 12
        %v1819 = vpop.permute.xlu0 %1818
        %1820 = vrot.lane.b32.xlu0 %v1746, 12
        %v1821 = vpop.permute.xlu0 %1820
        %1822 = vrot.lane.b32.xlu0 %v1747, 12
        %v1823 = vpop.permute.xlu0 %1822
        %1824 = vrot.lane.b32.xlu0 %v1748, 12
        %v1825 = vpop.permute.xlu0 %1824
        %1826 = vrot.lane.b32.xlu0 %v1749, 12
        %v1827 = vpop.permute.xlu0 %1826
        %1828 = vrot.lane.b32.xlu0 %v1750, 12
        %v1829 = vpop.permute.xlu0 %1828
        %1830 = vrot.lane.b32.xlu0 %v1751, 12
        %v1831 = vpop.permute.xlu0 %1830
        %1832 = vrot.lane.b32.xlu0 %v1752, 12
        %v1833 = vpop.permute.xlu0 %1832
        %1834 = vrot.lane.b32.xlu0 %v1753, 12
        %v1835 = vpop.permute.xlu0 %1834
        %1836 = vrot.lane.b32.xlu0 %v1754, 12
        %v1837 = vpop.permute.xlu0 %1836
        %1838 = vrot.lane.b32.xlu0 %v1755, 12
        %v1839 = vpop.permute.xlu0 %1838
        %1840 = vrot.lane.b32.xlu0 %v1756, 12
        %v1841 = vpop.permute.xlu0 %1840
        %1842 = vrot.lane.b32.xlu0 %v1757, 12
        %v1843 = vpop.permute.xlu0 %1842
        %1844 = vrot.lane.b32.xlu0 %v1758, 12
        %v1845 = vpop.permute.xlu0 %1844
        %1846 = vrot.lane.b32.xlu0 %v1759, 12
        %v1847 = vpop.permute.xlu0 %1846
        %1848 = vrot.lane.b32.xlu0 %v1760, 12
        %v1849 = vpop.permute.xlu0 %1848
        %1850 = vrot.lane.b32.xlu0 %v1761, 12
        %v1851 = vpop.permute.xlu0 %1850
        %1852 = vrot.lane.b32.xlu0 %v1762, 12
        %v1853 = vpop.permute.xlu0 %1852
        %1854 = vrot.lane.b32.xlu0 %v1763, 12
        %v1855 = vpop.permute.xlu0 %1854
        %1856 = vrot.lane.b32.xlu0 %v1764, 12
        %v1857 = vpop.permute.xlu0 %1856
        %1858 = vrot.lane.b32.xlu0 %v1765, 12
        %v1859 = vpop.permute.xlu0 %1858
        %1860 = vrot.lane.b32.xlu0 %v1766, 12
        %v1861 = vpop.permute.xlu0 %1860
        %1862 = vrot.lane.b32.xlu0 %v1767, 12
        %v1863 = vpop.permute.xlu0 %1862
        %vm1896 = vcmask 126048
        %1897 = vst.msk [vmem:[#allocation4] sm:$0xf] %vm1896, %v1801
        %1898 = vst.msk [vmem:[#allocation4 + $0x24] sm:$0xf] %vm1896, %v1803
        %1899 = vst.msk [vmem:[#allocation4 + $0x48] sm:$0xf] %vm1896, %v1805
        %1900 = vst.msk [vmem:[#allocation4 + $0x6c] sm:$0xf] %vm1896, %v1807
        %1901 = vst.msk [vmem:[#allocation4 + $0x90] sm:$0xf] %vm1896, %v1809
        %1902 = vst.msk [vmem:[#allocation4 + $0xb4] sm:$0xf] %vm1896, %v1811
        %1903 = vst.msk [vmem:[#allocation4 + $0xd8] sm:$0xf] %vm1896, %v1813
        %1904 = vst.msk [vmem:[#allocation4 + $0xfc] sm:$0xf] %vm1896, %v1815
        %1905 = vst.msk [vmem:[#allocation4 + $0x120] sm:$0xf] %vm1896, %v1817
        %1906 = vst.msk [vmem:[#allocation4 + $0x144] sm:$0xf] %vm1896, %v1819
        %1907 = vst.msk [vmem:[#allocation4 + $0x168] sm:$0xf] %vm1896, %v1821
        %1908 = vst.msk [vmem:[#allocation4 + $0x18c] sm:$0xf] %vm1896, %v1823
        %1909 = vst.msk [vmem:[#allocation4 + $0x1b0] sm:$0xf] %vm1896, %v1825
        %1910 = vst.msk [vmem:[#allocation4 + $0x1d4] sm:$0xf] %vm1896, %v1827
        %1911 = vst.msk [vmem:[#allocation4 + $0x1f8] sm:$0xf] %vm1896, %v1829
        %1912 = vst.msk [vmem:[#allocation4 + $0x21c] sm:$0xf] %vm1896, %v1831
        %1913 = vst.msk [vmem:[#allocation4 + $0x240] sm:$0xf] %vm1896, %v1833
        %1914 = vst.msk [vmem:[#allocation4 + $0x264] sm:$0xf] %vm1896, %v1835
        %1915 = vst.msk [vmem:[#allocation4 + $0x288] sm:$0xf] %vm1896, %v1837
        %1916 = vst.msk [vmem:[#allocation4 + $0x2ac] sm:$0xf] %vm1896, %v1839
        %1917 = vst.msk [vmem:[#allocation4 + $0x2d0] sm:$0xf] %vm1896, %v1841
        %1918 = vst.msk [vmem:[#allocation4 + $0x2f4] sm:$0xf] %vm1896, %v1843
        %1919 = vst.msk [vmem:[#allocation4 + $0x318] sm:$0xf] %vm1896, %v1845
        %1920 = vst.msk [vmem:[#allocation4 + $0x33c] sm:$0xf] %vm1896, %v1847
        %1921 = vst.msk [vmem:[#allocation4 + $0x360] sm:$0xf] %vm1896, %v1849
        %1922 = vst.msk [vmem:[#allocation4 + $0x384] sm:$0xf] %vm1896, %v1851
        %1923 = vst.msk [vmem:[#allocation4 + $0x3a8] sm:$0xf] %vm1896, %v1853
        %1924 = vst.msk [vmem:[#allocation4 + $0x3cc] sm:$0xf] %vm1896, %v1855
        %1925 = vst.msk [vmem:[#allocation4 + $0x3f0] sm:$0xf] %vm1896, %v1857
        %1926 = vst.msk [vmem:[#allocation4 + $0x414] sm:$0xf] %vm1896, %v1859
        %1927 = vst.msk [vmem:[#allocation4 + $0x438] sm:$0xf] %vm1896, %v1861
        %1928 = vst.msk [vmem:[#allocation4 + $0x45c] sm:$0xf] %vm1896, %v1863
        %v1929 = vld [vmem:[%s650] sm:$0xf]
        %v1930 = vld [vmem:[%s650 + $0x4] sm:$0xf]
        %v1931 = vld [vmem:[%s650 + $0x8] sm:$0x1]
        %v1932 = vld [vmem:[%s650 + $0xc] sm:$0xf]
        %v1933 = vld [vmem:[%s650 + $0x10] sm:$0xf]
        %v1934 = vld [vmem:[%s650 + $0x14] sm:$0x1]
        %v1935 = vld [vmem:[%s650 + $0x18] sm:$0xf]
        %v1936 = vld [vmem:[%s650 + $0x1c] sm:$0xf]
        %v1937 = vld [vmem:[%s650 + $0x20] sm:$0x1]
        %v1938 = vld [vmem:[%s650 + $0x24] sm:$0xf]
        %v1939 = vld [vmem:[%s650 + $0x28] sm:$0xf]
        %v1940 = vld [vmem:[%s650 + $0x2c] sm:$0x1]
        %v1941 = vld [vmem:[%s650 + $0x30] sm:$0xf]
        %v1942 = vld [vmem:[%s650 + $0x34] sm:$0xf]
        %v1943 = vld [vmem:[%s650 + $0x38] sm:$0x1]
        %v1944 = vld [vmem:[%s650 + $0x3c] sm:$0xf]
        %v1945 = vld [vmem:[%s650 + $0x40] sm:$0xf]
        %v1946 = vld [vmem:[%s650 + $0x44] sm:$0x1]
        %v1947 = vld [vmem:[%s650 + $0x48] sm:$0xf]
        %v1948 = vld [vmem:[%s650 + $0x4c] sm:$0xf]
        %v1949 = vld [vmem:[%s650 + $0x50] sm:$0x1]
        %v1950 = vld [vmem:[%s650 + $0x54] sm:$0xf]
        %v1951 = vld [vmem:[%s650 + $0x58] sm:$0xf]
        %v1952 = vld [vmem:[%s650 + $0x5c] sm:$0x1]
        %v1953 = vld [vmem:[%s650 + $0x60] sm:$0xf]
        %v1954 = vld [vmem:[%s650 + $0x64] sm:$0xf]
        %v1955 = vld [vmem:[%s650 + $0x68] sm:$0x1]
        %v1956 = vld [vmem:[%s650 + $0x6c] sm:$0xf]
        %v1957 = vld [vmem:[%s650 + $0x70] sm:$0xf]
        %v1958 = vld [vmem:[%s650 + $0x74] sm:$0x1]
        %v1959 = vld [vmem:[%s650 + $0x78] sm:$0xf]
        %v1960 = vld [vmem:[%s650 + $0x7c] sm:$0xf]
        %v1961 = vld [vmem:[%s650 + $0x80] sm:$0x1]
        %v1962 = vld [vmem:[%s650 + $0x84] sm:$0xf]
        %v1963 = vld [vmem:[%s650 + $0x88] sm:$0xf]
        %v1964 = vld [vmem:[%s650 + $0x8c] sm:$0x1]
        %v1965 = vld [vmem:[%s650 + $0x90] sm:$0xf]
        %v1966 = vld [vmem:[%s650 + $0x94] sm:$0xf]
        %v1967 = vld [vmem:[%s650 + $0x98] sm:$0x1]
        %v1968 = vld [vmem:[%s650 + $0x9c] sm:$0xf]
        %v1969 = vld [vmem:[%s650 + $0xa0] sm:$0xf]
        %v1970 = vld [vmem:[%s650 + $0xa4] sm:$0x1]
        %v1971 = vld [vmem:[%s650 + $0xa8] sm:$0xf]
        %v1972 = vld [vmem:[%s650 + $0xac] sm:$0xf]
        %v1973 = vld [vmem:[%s650 + $0xb0] sm:$0x1]
        %v1974 = vld [vmem:[%s650 + $0xb4] sm:$0xf]
        %v1975 = vld [vmem:[%s650 + $0xb8] sm:$0xf]
        %v1976 = vld [vmem:[%s650 + $0xbc] sm:$0x1]
        %v1978 = vshrl.u32 %v1929, 16
        %v1980 = vrot.slane %v1978, 4
        %v1981 = vshll.u32 %v1929, 16
        %v1983 = vrot.slane %v1981, 5
        %v1984 = vor.u32 %v1980, %v1983
        %v1985 = vrot.slane %v1984, 4
        %v1987 = vshll.u32 %v1930, 16
        %v1989 = vrot.slane %v1987, 5
        %v1990 = vsel %vm882, %v1985, %v1989
        %v1991 = vshrl.u32 %v1930, 16
        %v1993 = vrot.slane %v1991, 4
        %v1994 = vor.u32 %v1993, %v1989
        %v1995 = vrot.slane %v1994, 4
        %v1997 = vshll.u32 %v1931, 16
        %v1999 = vrot.slane %v1997, 5
        %v2000 = vsel %vm882, %v1995, %v1999
        %v2002 = vshrl.u32 %v1932, 16
        %v2004 = vrot.slane %v2002, 4
        %v2005 = vshll.u32 %v1932, 16
        %v2007 = vrot.slane %v2005, 5
        %v2008 = vor.u32 %v2004, %v2007
        %v2009 = vrot.slane %v2008, 4
        %v2011 = vshll.u32 %v1933, 16
        %v2013 = vrot.slane %v2011, 5
        %v2014 = vsel %vm882, %v2009, %v2013
        %v2015 = vshrl.u32 %v1933, 16
        %v2017 = vrot.slane %v2015, 4
        %v2018 = vor.u32 %v2017, %v2013
        %v2019 = vrot.slane %v2018, 4
        %v2021 = vshll.u32 %v1934, 16
        %v2023 = vrot.slane %v2021, 5
        %v2024 = vsel %vm882, %v2019, %v2023
        %v2026 = vshrl.u32 %v1935, 16
        %v2028 = vrot.slane %v2026, 4
        %v2029 = vshll.u32 %v1935, 16
        %v2031 = vrot.slane %v2029, 5
        %v2032 = vor.u32 %v2028, %v2031
        %v2033 = vrot.slane %v2032, 4
        %v2035 = vshll.u32 %v1936, 16
        %v2037 = vrot.slane %v2035, 5
        %v2038 = vsel %vm882, %v2033, %v2037
        %v2039 = vshrl.u32 %v1936, 16
        %v2041 = vrot.slane %v2039, 4
        %v2042 = vor.u32 %v2041, %v2037
        %v2043 = vrot.slane %v2042, 4
        %v2045 = vshll.u32 %v1937, 16
        %v2047 = vrot.slane %v2045, 5
        %v2048 = vsel %vm882, %v2043, %v2047
        %v2050 = vshrl.u32 %v1938, 16
        %v2052 = vrot.slane %v2050, 4
        %v2053 = vshll.u32 %v1938, 16
        %v2055 = vrot.slane %v2053, 5
        %v2056 = vor.u32 %v2052, %v2055
        %v2057 = vrot.slane %v2056, 4
        %v2059 = vshll.u32 %v1939, 16
        %v2061 = vrot.slane %v2059, 5
        %v2062 = vsel %vm882, %v2057, %v2061
        %v2063 = vshrl.u32 %v1939, 16
        %v2065 = vrot.slane %v2063, 4
        %v2066 = vor.u32 %v2065, %v2061
        %v2067 = vrot.slane %v2066, 4
        %v2069 = vshll.u32 %v1940, 16
        %v2071 = vrot.slane %v2069, 5
        %v2072 = vsel %vm882, %v2067, %v2071
        %v2074 = vshrl.u32 %v1941, 16
        %v2076 = vrot.slane %v2074, 4
        %v2077 = vshll.u32 %v1941, 16
        %v2079 = vrot.slane %v2077, 5
        %v2080 = vor.u32 %v2076, %v2079
        %v2081 = vrot.slane %v2080, 4
        %v2083 = vshll.u32 %v1942, 16
        %v2085 = vrot.slane %v2083, 5
        %v2086 = vsel %vm882, %v2081, %v2085
        %v2087 = vshrl.u32 %v1942, 16
        %v2089 = vrot.slane %v2087, 4
        %v2090 = vor.u32 %v2089, %v2085
        %v2091 = vrot.slane %v2090, 4
        %v2093 = vshll.u32 %v1943, 16
        %v2095 = vrot.slane %v2093, 5
        %v2096 = vsel %vm882, %v2091, %v2095
        %v2098 = vshrl.u32 %v1944, 16
        %v2100 = vrot.slane %v2098, 4
        %v2101 = vshll.u32 %v1944, 16
        %v2103 = vrot.slane %v2101, 5
        %v2104 = vor.u32 %v2100, %v2103
        %v2105 = vrot.slane %v2104, 4
        %v2107 = vshll.u32 %v1945, 16
        %v2109 = vrot.slane %v2107, 5
        %v2110 = vsel %vm882, %v2105, %v2109
        %v2111 = vshrl.u32 %v1945, 16
        %v2113 = vrot.slane %v2111, 4
        %v2114 = vor.u32 %v2113, %v2109
        %v2115 = vrot.slane %v2114, 4
        %v2117 = vshll.u32 %v1946, 16
        %v2119 = vrot.slane %v2117, 5
        %v2120 = vsel %vm882, %v2115, %v2119
        %v2122 = vshrl.u32 %v1947, 16
        %v2124 = vrot.slane %v2122, 4
        %v2125 = vshll.u32 %v1947, 16
        %v2127 = vrot.slane %v2125, 5
        %v2128 = vor.u32 %v2124, %v2127
        %v2129 = vrot.slane %v2128, 4
        %v2131 = vshll.u32 %v1948, 16
        %v2133 = vrot.slane %v2131, 5
        %v2134 = vsel %vm882, %v2129, %v2133
        %v2135 = vshrl.u32 %v1948, 16
        %v2137 = vrot.slane %v2135, 4
        %v2138 = vor.u32 %v2137, %v2133
        %v2139 = vrot.slane %v2138, 4
        %v2141 = vshll.u32 %v1949, 16
        %v2143 = vrot.slane %v2141, 5
        %v2144 = vsel %vm882, %v2139, %v2143
        %v2146 = vshrl.u32 %v1950, 16
        %v2148 = vrot.slane %v2146, 4
        %v2149 = vshll.u32 %v1950, 16
        %v2151 = vrot.slane %v2149, 5
        %v2152 = vor.u32 %v2148, %v2151
        %v2153 = vrot.slane %v2152, 4
        %v2155 = vshll.u32 %v1951, 16
        %v2157 = vrot.slane %v2155, 5
        %v2158 = vsel %vm882, %v2153, %v2157
        %v2159 = vshrl.u32 %v1951, 16
        %v2161 = vrot.slane %v2159, 4
        %v2162 = vor.u32 %v2161, %v2157
        %v2163 = vrot.slane %v2162, 4
        %v2165 = vshll.u32 %v1952, 16
        %v2167 = vrot.slane %v2165, 5
        %v2168 = vsel %vm882, %v2163, %v2167
        %v2170 = vshrl.u32 %v1953, 16
        %v2172 = vrot.slane %v2170, 4
        %v2173 = vshll.u32 %v1953, 16
        %v2175 = vrot.slane %v2173, 5
        %v2176 = vor.u32 %v2172, %v2175
        %v2177 = vrot.slane %v2176, 4
        %v2179 = vshll.u32 %v1954, 16
        %v2181 = vrot.slane %v2179, 5
        %v2182 = vsel %vm882, %v2177, %v2181
        %v2183 = vshrl.u32 %v1954, 16
        %v2185 = vrot.slane %v2183, 4
        %v2186 = vor.u32 %v2185, %v2181
        %v2187 = vrot.slane %v2186, 4
        %v2189 = vshll.u32 %v1955, 16
        %v2191 = vrot.slane %v2189, 5
        %v2192 = vsel %vm882, %v2187, %v2191
        %v2194 = vshrl.u32 %v1956, 16
        %v2196 = vrot.slane %v2194, 4
        %v2197 = vshll.u32 %v1956, 16
        %v2199 = vrot.slane %v2197, 5
        %v2200 = vor.u32 %v2196, %v2199
        %v2201 = vrot.slane %v2200, 4
        %v2203 = vshll.u32 %v1957, 16
        %v2205 = vrot.slane %v2203, 5
        %v2206 = vsel %vm882, %v2201, %v2205
        %v2207 = vshrl.u32 %v1957, 16
        %v2209 = vrot.slane %v2207, 4
        %v2210 = vor.u32 %v2209, %v2205
        %v2211 = vrot.slane %v2210, 4
        %v2213 = vshll.u32 %v1958, 16
        %v2215 = vrot.slane %v2213, 5
        %v2216 = vsel %vm882, %v2211, %v2215
        %v2218 = vshrl.u32 %v1959, 16
        %v2220 = vrot.slane %v2218, 4
        %v2221 = vshll.u32 %v1959, 16
        %v2223 = vrot.slane %v2221, 5
        %v2224 = vor.u32 %v2220, %v2223
        %v2225 = vrot.slane %v2224, 4
        %v2227 = vshll.u32 %v1960, 16
        %v2229 = vrot.slane %v2227, 5
        %v2230 = vsel %vm882, %v2225, %v2229
        %v2231 = vshrl.u32 %v1960, 16
        %v2233 = vrot.slane %v2231, 4
        %v2234 = vor.u32 %v2233, %v2229
        %v2235 = vrot.slane %v2234, 4
        %v2237 = vshll.u32 %v1961, 16
        %v2239 = vrot.slane %v2237, 5
        %v2240 = vsel %vm882, %v2235, %v2239
        %v2242 = vshrl.u32 %v1962, 16
        %v2244 = vrot.slane %v2242, 4
        %v2245 = vshll.u32 %v1962, 16
        %v2247 = vrot.slane %v2245, 5
        %v2248 = vor.u32 %v2244, %v2247
        %v2249 = vrot.slane %v2248, 4
        %v2251 = vshll.u32 %v1963, 16
        %v2253 = vrot.slane %v2251, 5
        %v2254 = vsel %vm882, %v2249, %v2253
        %v2255 = vshrl.u32 %v1963, 16
        %v2257 = vrot.slane %v2255, 4
        %v2258 = vor.u32 %v2257, %v2253
        %v2259 = vrot.slane %v2258, 4
        %v2261 = vshll.u32 %v1964, 16
        %v2263 = vrot.slane %v2261, 5
        %v2264 = vsel %vm882, %v2259, %v2263
        %v2266 = vshrl.u32 %v1965, 16
        %v2268 = vrot.slane %v2266, 4
        %v2269 = vshll.u32 %v1965, 16
        %v2271 = vrot.slane %v2269, 5
        %v2272 = vor.u32 %v2268, %v2271
        %v2273 = vrot.slane %v2272, 4
        %v2275 = vshll.u32 %v1966, 16
        %v2277 = vrot.slane %v2275, 5
        %v2278 = vsel %vm882, %v2273, %v2277
        %v2279 = vshrl.u32 %v1966, 16
        %v2281 = vrot.slane %v2279, 4
        %v2282 = vor.u32 %v2281, %v2277
        %v2283 = vrot.slane %v2282, 4
        %v2285 = vshll.u32 %v1967, 16
        %v2287 = vrot.slane %v2285, 5
        %v2288 = vsel %vm882, %v2283, %v2287
        %v2290 = vshrl.u32 %v1968, 16
        %v2292 = vrot.slane %v2290, 4
        %v2293 = vshll.u32 %v1968, 16
        %v2295 = vrot.slane %v2293, 5
        %v2296 = vor.u32 %v2292, %v2295
        %v2297 = vrot.slane %v2296, 4
        %v2299 = vshll.u32 %v1969, 16
        %v2301 = vrot.slane %v2299, 5
        %v2302 = vsel %vm882, %v2297, %v2301
        %v2303 = vshrl.u32 %v1969, 16
        %v2305 = vrot.slane %v2303, 4
        %v2306 = vor.u32 %v2305, %v2301
        %v2307 = vrot.slane %v2306, 4
        %v2309 = vshll.u32 %v1970, 16
        %v2311 = vrot.slane %v2309, 5
        %v2312 = vsel %vm882, %v2307, %v2311
        %v2314 = vshrl.u32 %v1971, 16
        %v2316 = vrot.slane %v2314, 4
        %v2317 = vshll.u32 %v1971, 16
        %v2319 = vrot.slane %v2317, 5
        %v2320 = vor.u32 %v2316, %v2319
        %v2321 = vrot.slane %v2320, 4
        %v2323 = vshll.u32 %v1972, 16
        %v2325 = vrot.slane %v2323, 5
        %v2326 = vsel %vm882, %v2321, %v2325
        %v2327 = vshrl.u32 %v1972, 16
        %v2329 = vrot.slane %v2327, 4
        %v2330 = vor.u32 %v2329, %v2325
        %v2331 = vrot.slane %v2330, 4
        %v2333 = vshll.u32 %v1973, 16
        %v2335 = vrot.slane %v2333, 5
        %v2336 = vsel %vm882, %v2331, %v2335
        %v2338 = vshrl.u32 %v1974, 16
        %v2340 = vrot.slane %v2338, 4
        %v2341 = vshll.u32 %v1974, 16
        %v2343 = vrot.slane %v2341, 5
        %v2344 = vor.u32 %v2340, %v2343
        %v2345 = vrot.slane %v2344, 4
        %v2347 = vshll.u32 %v1975, 16
        %v2349 = vrot.slane %v2347, 5
        %v2350 = vsel %vm882, %v2345, %v2349
        %v2351 = vshrl.u32 %v1975, 16
        %v2353 = vrot.slane %v2351, 4
        %v2354 = vor.u32 %v2353, %v2349
        %v2355 = vrot.slane %v2354, 4
        %v2357 = vshll.u32 %v1976, 16
        %v2359 = vrot.slane %v2357, 5
        %v2360 = vsel %vm882, %v2355, %v2359
        %2361 = vrot.lane.b32.xlu0 %v1990, 16
        %v2362 = vpop.permute.xlu0 %2361
        %2363 = vrot.lane.b32.xlu0 %v2000, 16
        %v2364 = vpop.permute.xlu0 %2363
        %2365 = vrot.lane.b32.xlu0 %v2014, 16
        %v2366 = vpop.permute.xlu0 %2365
        %2367 = vrot.lane.b32.xlu0 %v2024, 16
        %v2368 = vpop.permute.xlu0 %2367
        %2369 = vrot.lane.b32.xlu0 %v2038, 16
        %v2370 = vpop.permute.xlu0 %2369
        %2371 = vrot.lane.b32.xlu0 %v2048, 16
        %v2372 = vpop.permute.xlu0 %2371
        %2373 = vrot.lane.b32.xlu0 %v2062, 16
        %v2374 = vpop.permute.xlu0 %2373
        %2375 = vrot.lane.b32.xlu0 %v2072, 16
        %v2376 = vpop.permute.xlu0 %2375
        %2377 = vrot.lane.b32.xlu0 %v2086, 16
        %v2378 = vpop.permute.xlu0 %2377
        %2379 = vrot.lane.b32.xlu0 %v2096, 16
        %v2380 = vpop.permute.xlu0 %2379
        %2381 = vrot.lane.b32.xlu0 %v2110, 16
        %v2382 = vpop.permute.xlu0 %2381
        %2383 = vrot.lane.b32.xlu0 %v2120, 16
        %v2384 = vpop.permute.xlu0 %2383
        %2385 = vrot.lane.b32.xlu0 %v2134, 16
        %v2386 = vpop.permute.xlu0 %2385
        %2387 = vrot.lane.b32.xlu0 %v2144, 16
        %v2388 = vpop.permute.xlu0 %2387
        %2389 = vrot.lane.b32.xlu0 %v2158, 16
        %v2390 = vpop.permute.xlu0 %2389
        %2391 = vrot.lane.b32.xlu0 %v2168, 16
        %v2392 = vpop.permute.xlu0 %2391
        %2393 = vrot.lane.b32.xlu0 %v2182, 16
        %v2394 = vpop.permute.xlu0 %2393
        %2395 = vrot.lane.b32.xlu0 %v2192, 16
        %v2396 = vpop.permute.xlu0 %2395
        %2397 = vrot.lane.b32.xlu0 %v2206, 16
        %v2398 = vpop.permute.xlu0 %2397
        %2399 = vrot.lane.b32.xlu0 %v2216, 16
        %v2400 = vpop.permute.xlu0 %2399
        %2401 = vrot.lane.b32.xlu0 %v2230, 16
        %v2402 = vpop.permute.xlu0 %2401
        %2403 = vrot.lane.b32.xlu0 %v2240, 16
        %v2404 = vpop.permute.xlu0 %2403
        %2405 = vrot.lane.b32.xlu0 %v2254, 16
        %v2406 = vpop.permute.xlu0 %2405
        %2407 = vrot.lane.b32.xlu0 %v2264, 16
        %v2408 = vpop.permute.xlu0 %2407
        %2409 = vrot.lane.b32.xlu0 %v2278, 16
        %v2410 = vpop.permute.xlu0 %2409
        %2411 = vrot.lane.b32.xlu0 %v2288, 16
        %v2412 = vpop.permute.xlu0 %2411
        %2413 = vrot.lane.b32.xlu0 %v2302, 16
        %v2414 = vpop.permute.xlu0 %2413
        %2415 = vrot.lane.b32.xlu0 %v2312, 16
        %v2416 = vpop.permute.xlu0 %2415
        %2417 = vrot.lane.b32.xlu0 %v2326, 16
        %v2418 = vpop.permute.xlu0 %2417
        %2419 = vrot.lane.b32.xlu0 %v2336, 16
        %v2420 = vpop.permute.xlu0 %2419
        %2421 = vrot.lane.b32.xlu0 %v2350, 16
        %v2422 = vpop.permute.xlu0 %2421
        %2423 = vrot.lane.b32.xlu0 %v2360, 16
        %v2424 = vpop.permute.xlu0 %2423
        %vm2457 = vcmask 158848
        %2458 = vst.msk [vmem:[#allocation4] sm:$0xf] %vm2457, %v2362
        %2459 = vst.msk [vmem:[#allocation4 + $0x24] sm:$0xf] %vm2457, %v2364
        %2460 = vst.msk [vmem:[#allocation4 + $0x48] sm:$0xf] %vm2457, %v2366
        %2461 = vst.msk [vmem:[#allocation4 + $0x6c] sm:$0xf] %vm2457, %v2368
        %2462 = vst.msk [vmem:[#allocation4 + $0x90] sm:$0xf] %vm2457, %v2370
        %2463 = vst.msk [vmem:[#allocation4 + $0xb4] sm:$0xf] %vm2457, %v2372
        %2464 = vst.msk [vmem:[#allocation4 + $0xd8] sm:$0xf] %vm2457, %v2374
        %2465 = vst.msk [vmem:[#allocation4 + $0xfc] sm:$0xf] %vm2457, %v2376
        %2466 = vst.msk [vmem:[#allocation4 + $0x120] sm:$0xf] %vm2457, %v2378
        %2467 = vst.msk [vmem:[#allocation4 + $0x144] sm:$0xf] %vm2457, %v2380
        %2468 = vst.msk [vmem:[#allocation4 + $0x168] sm:$0xf] %vm2457, %v2382
        %2469 = vst.msk [vmem:[#allocation4 + $0x18c] sm:$0xf] %vm2457, %v2384
        %2470 = vst.msk [vmem:[#allocation4 + $0x1b0] sm:$0xf] %vm2457, %v2386
        %2471 = vst.msk [vmem:[#allocation4 + $0x1d4] sm:$0xf] %vm2457, %v2388
        %2472 = vst.msk [vmem:[#allocation4 + $0x1f8] sm:$0xf] %vm2457, %v2390
        %2473 = vst.msk [vmem:[#allocation4 + $0x21c] sm:$0xf] %vm2457, %v2392
        %2474 = vst.msk [vmem:[#allocation4 + $0x240] sm:$0xf] %vm2457, %v2394
        %2475 = vst.msk [vmem:[#allocation4 + $0x264] sm:$0xf] %vm2457, %v2396
        %2476 = vst.msk [vmem:[#allocation4 + $0x288] sm:$0xf] %vm2457, %v2398
        %2477 = vst.msk [vmem:[#allocation4 + $0x2ac] sm:$0xf] %vm2457, %v2400
        %2478 = vst.msk [vmem:[#allocation4 + $0x2d0] sm:$0xf] %vm2457, %v2402
        %2479 = vst.msk [vmem:[#allocation4 + $0x2f4] sm:$0xf] %vm2457, %v2404
        %2480 = vst.msk [vmem:[#allocation4 + $0x318] sm:$0xf] %vm2457, %v2406
        %2481 = vst.msk [vmem:[#allocation4 + $0x33c] sm:$0xf] %vm2457, %v2408
        %2482 = vst.msk [vmem:[#allocation4 + $0x360] sm:$0xf] %vm2457, %v2410
        %2483 = vst.msk [vmem:[#allocation4 + $0x384] sm:$0xf] %vm2457, %v2412
        %2484 = vst.msk [vmem:[#allocation4 + $0x3a8] sm:$0xf] %vm2457, %v2414
        %2485 = vst.msk [vmem:[#allocation4 + $0x3cc] sm:$0xf] %vm2457, %v2416
        %2486 = vst.msk [vmem:[#allocation4 + $0x3f0] sm:$0xf] %vm2457, %v2418
        %2487 = vst.msk [vmem:[#allocation4 + $0x414] sm:$0xf] %vm2457, %v2420
        %2488 = vst.msk [vmem:[#allocation4 + $0x438] sm:$0xf] %vm2457, %v2422
        %2489 = vst.msk [vmem:[#allocation4 + $0x45c] sm:$0xf] %vm2457, %v2424
        %v2490 = vld [vmem:[%s650] sm:$0xe]
        %v2491 = vld [vmem:[%s650 + $0x4] sm:$0xf]
        %v2492 = vld [vmem:[%s650 + $0x8] sm:$0x1]
        %v2493 = vld [vmem:[%s650 + $0xc] sm:$0xe]
        %v2494 = vld [vmem:[%s650 + $0x10] sm:$0xf]
        %v2495 = vld [vmem:[%s650 + $0x14] sm:$0x1]
        %v2496 = vld [vmem:[%s650 + $0x18] sm:$0xe]
        %v2497 = vld [vmem:[%s650 + $0x1c] sm:$0xf]
        %v2498 = vld [vmem:[%s650 + $0x20] sm:$0x1]
        %v2499 = vld [vmem:[%s650 + $0x24] sm:$0xe]
        %v2500 = vld [vmem:[%s650 + $0x28] sm:$0xf]
        %v2501 = vld [vmem:[%s650 + $0x2c] sm:$0x1]
        %v2502 = vld [vmem:[%s650 + $0x30] sm:$0xe]
        %v2503 = vld [vmem:[%s650 + $0x34] sm:$0xf]
        %v2504 = vld [vmem:[%s650 + $0x38] sm:$0x1]
        %v2505 = vld [vmem:[%s650 + $0x3c] sm:$0xe]
        %v2506 = vld [vmem:[%s650 + $0x40] sm:$0xf]
        %v2507 = vld [vmem:[%s650 + $0x44] sm:$0x1]
        %v2508 = vld [vmem:[%s650 + $0x48] sm:$0xe]
        %v2509 = vld [vmem:[%s650 + $0x4c] sm:$0xf]
        %v2510 = vld [vmem:[%s650 + $0x50] sm:$0x1]
        %v2511 = vld [vmem:[%s650 + $0x54] sm:$0xe]
        %v2512 = vld [vmem:[%s650 + $0x58] sm:$0xf]
        %v2513 = vld [vmem:[%s650 + $0x5c] sm:$0x1]
        %v2514 = vld [vmem:[%s650 + $0x60] sm:$0xe]
        %v2515 = vld [vmem:[%s650 + $0x64] sm:$0xf]
        %v2516 = vld [vmem:[%s650 + $0x68] sm:$0x1]
        %v2517 = vld [vmem:[%s650 + $0x6c] sm:$0xe]
        %v2518 = vld [vmem:[%s650 + $0x70] sm:$0xf]
        %v2519 = vld [vmem:[%s650 + $0x74] sm:$0x1]
        %v2520 = vld [vmem:[%s650 + $0x78] sm:$0xe]
        %v2521 = vld [vmem:[%s650 + $0x7c] sm:$0xf]
        %v2522 = vld [vmem:[%s650 + $0x80] sm:$0x1]
        %v2523 = vld [vmem:[%s650 + $0x84] sm:$0xe]
        %v2524 = vld [vmem:[%s650 + $0x88] sm:$0xf]
        %v2525 = vld [vmem:[%s650 + $0x8c] sm:$0x1]
        %v2526 = vld [vmem:[%s650 + $0x90] sm:$0xe]
        %v2527 = vld [vmem:[%s650 + $0x94] sm:$0xf]
        %v2528 = vld [vmem:[%s650 + $0x98] sm:$0x1]
        %v2529 = vld [vmem:[%s650 + $0x9c] sm:$0xe]
        %v2530 = vld [vmem:[%s650 + $0xa0] sm:$0xf]
        %v2531 = vld [vmem:[%s650 + $0xa4] sm:$0x1]
        %v2532 = vld [vmem:[%s650 + $0xa8] sm:$0xe]
        %v2533 = vld [vmem:[%s650 + $0xac] sm:$0xf]
        %v2534 = vld [vmem:[%s650 + $0xb0] sm:$0x1]
        %v2535 = vld [vmem:[%s650 + $0xb4] sm:$0xe]
        %v2536 = vld [vmem:[%s650 + $0xb8] sm:$0xf]
        %v2537 = vld [vmem:[%s650 + $0xbc] sm:$0x1]
        %v2586 = vrot.slane %v2490, 5
        %v2587 = vrot.slane %v2586, 4
        %v2588 = vrot.slane %v2491, 5
        %v2589 = vsel %vm1494, %v2587, %v2588
        %v2590 = vrot.slane %v2588, 4
        %v2591 = vrot.slane %v2492, 5
        %v2592 = vsel %vm1494, %v2590, %v2591
        %v2593 = vrot.slane %v2493, 5
        %v2594 = vrot.slane %v2593, 4
        %v2595 = vrot.slane %v2494, 5
        %v2596 = vsel %vm1494, %v2594, %v2595
        %v2597 = vrot.slane %v2595, 4
        %v2598 = vrot.slane %v2495, 5
        %v2599 = vsel %vm1494, %v2597, %v2598
        %v2600 = vrot.slane %v2496, 5
        %v2601 = vrot.slane %v2600, 4
        %v2602 = vrot.slane %v2497, 5
        %v2603 = vsel %vm1494, %v2601, %v2602
        %v2604 = vrot.slane %v2602, 4
        %v2605 = vrot.slane %v2498, 5
        %v2606 = vsel %vm1494, %v2604, %v2605
        %v2607 = vrot.slane %v2499, 5
        %v2608 = vrot.slane %v2607, 4
        %v2609 = vrot.slane %v2500, 5
        %v2610 = vsel %vm1494, %v2608, %v2609
        %v2611 = vrot.slane %v2609, 4
        %v2612 = vrot.slane %v2501, 5
        %v2613 = vsel %vm1494, %v2611, %v2612
        %v2614 = vrot.slane %v2502, 5
        %v2615 = vrot.slane %v2614, 4
        %v2616 = vrot.slane %v2503, 5
        %v2617 = vsel %vm1494, %v2615, %v2616
        %v2618 = vrot.slane %v2616, 4
        %v2619 = vrot.slane %v2504, 5
        %v2620 = vsel %vm1494, %v2618, %v2619
        %v2621 = vrot.slane %v2505, 5
        %v2622 = vrot.slane %v2621, 4
        %v2623 = vrot.slane %v2506, 5
        %v2624 = vsel %vm1494, %v2622, %v2623
        %v2625 = vrot.slane %v2623, 4
        %v2626 = vrot.slane %v2507, 5
        %v2627 = vsel %vm1494, %v2625, %v2626
        %v2628 = vrot.slane %v2508, 5
        %v2629 = vrot.slane %v2628, 4
        %v2630 = vrot.slane %v2509, 5
        %v2631 = vsel %vm1494, %v2629, %v2630
        %v2632 = vrot.slane %v2630, 4
        %v2633 = vrot.slane %v2510, 5
        %v2634 = vsel %vm1494, %v2632, %v2633
        %v2635 = vrot.slane %v2511, 5
        %v2636 = vrot.slane %v2635, 4
        %v2637 = vrot.slane %v2512, 5
        %v2638 = vsel %vm1494, %v2636, %v2637
        %v2639 = vrot.slane %v2637, 4
        %v2640 = vrot.slane %v2513, 5
        %v2641 = vsel %vm1494, %v2639, %v2640
        %v2642 = vrot.slane %v2514, 5
        %v2643 = vrot.slane %v2642, 4
        %v2644 = vrot.slane %v2515, 5
        %v2645 = vsel %vm1494, %v2643, %v2644
        %v2646 = vrot.slane %v2644, 4
        %v2647 = vrot.slane %v2516, 5
        %v2648 = vsel %vm1494, %v2646, %v2647
        %v2649 = vrot.slane %v2517, 5
        %v2650 = vrot.slane %v2649, 4
        %v2651 = vrot.slane %v2518, 5
        %v2652 = vsel %vm1494, %v2650, %v2651
        %v2653 = vrot.slane %v2651, 4
        %v2654 = vrot.slane %v2519, 5
        %v2655 = vsel %vm1494, %v2653, %v2654
        %v2656 = vrot.slane %v2520, 5
        %v2657 = vrot.slane %v2656, 4
        %v2658 = vrot.slane %v2521, 5
        %v2659 = vsel %vm1494, %v2657, %v2658
        %v2660 = vrot.slane %v2658, 4
        %v2661 = vrot.slane %v2522, 5
        %v2662 = vsel %vm1494, %v2660, %v2661
        %v2663 = vrot.slane %v2523, 5
        %v2664 = vrot.slane %v2663, 4
        %v2665 = vrot.slane %v2524, 5
        %v2666 = vsel %vm1494, %v2664, %v2665
        %v2667 = vrot.slane %v2665, 4
        %v2668 = vrot.slane %v2525, 5
        %v2669 = vsel %vm1494, %v2667, %v2668
        %v2670 = vrot.slane %v2526, 5
        %v2671 = vrot.slane %v2670, 4
        %v2672 = vrot.slane %v2527, 5
        %v2673 = vsel %vm1494, %v2671, %v2672
        %v2674 = vrot.slane %v2672, 4
        %v2675 = vrot.slane %v2528, 5
        %v2676 = vsel %vm1494, %v2674, %v2675
        %v2677 = vrot.slane %v2529, 5
        %v2678 = vrot.slane %v2677, 4
        %v2679 = vrot.slane %v2530, 5
        %v2680 = vsel %vm1494, %v2678, %v2679
        %v2681 = vrot.slane %v2679, 4
        %v2682 = vrot.slane %v2531, 5
        %v2683 = vsel %vm1494, %v2681, %v2682
        %v2684 = vrot.slane %v2532, 5
        %v2685 = vrot.slane %v2684, 4
        %v2686 = vrot.slane %v2533, 5
        %v2687 = vsel %vm1494, %v2685, %v2686
        %v2688 = vrot.slane %v2686, 4
        %v2689 = vrot.slane %v2534, 5
        %v2690 = vsel %vm1494, %v2688, %v2689
        %v2691 = vrot.slane %v2535, 5
        %v2692 = vrot.slane %v2691, 4
        %v2693 = vrot.slane %v2536, 5
        %v2694 = vsel %vm1494, %v2692, %v2693
        %v2695 = vrot.slane %v2693, 4
        %v2696 = vrot.slane %v2537, 5
        %v2697 = vsel %vm1494, %v2695, %v2696
        %2698 = vrot.lane.b32.xlu0 %v2589, 20
        %v2699 = vpop.permute.xlu0 %2698
        %2700 = vrot.lane.b32.xlu0 %v2592, 20
        %v2701 = vpop.permute.xlu0 %2700
        %2702 = vrot.lane.b32.xlu0 %v2596, 20
        %v2703 = vpop.permute.xlu0 %2702
        %2704 = vrot.lane.b32.xlu0 %v2599, 20
        %v2705 = vpop.permute.xlu0 %2704
        %2706 = vrot.lane.b32.xlu0 %v2603, 20
        %v2707 = vpop.permute.xlu0 %2706
        %2708 = vrot.lane.b32.xlu0 %v2606, 20
        %v2709 = vpop.permute.xlu0 %2708
        %2710 = vrot.lane.b32.xlu0 %v2610, 20
        %v2711 = vpop.permute.xlu0 %2710
        %2712 = vrot.lane.b32.xlu0 %v2613, 20
        %v2713 = vpop.permute.xlu0 %2712
        %2714 = vrot.lane.b32.xlu0 %v2617, 20
        %v2715 = vpop.permute.xlu0 %2714
        %2716 = vrot.lane.b32.xlu0 %v2620, 20
        %v2717 = vpop.permute.xlu0 %2716
        %2718 = vrot.lane.b32.xlu0 %v2624, 20
        %v2719 = vpop.permute.xlu0 %2718
        %2720 = vrot.lane.b32.xlu0 %v2627, 20
        %v2721 = vpop.permute.xlu0 %2720
        %2722 = vrot.lane.b32.xlu0 %v2631, 20
        %v2723 = vpop.permute.xlu0 %2722
        %2724 = vrot.lane.b32.xlu0 %v2634, 20
        %v2725 = vpop.permute.xlu0 %2724
        %2726 = vrot.lane.b32.xlu0 %v2638, 20
        %v2727 = vpop.permute.xlu0 %2726
        %2728 = vrot.lane.b32.xlu0 %v2641, 20
        %v2729 = vpop.permute.xlu0 %2728
        %2730 = vrot.lane.b32.xlu0 %v2645, 20
        %v2731 = vpop.permute.xlu0 %2730
        %2732 = vrot.lane.b32.xlu0 %v2648, 20
        %v2733 = vpop.permute.xlu0 %2732
        %2734 = vrot.lane.b32.xlu0 %v2652, 20
        %v2735 = vpop.permute.xlu0 %2734
        %2736 = vrot.lane.b32.xlu0 %v2655, 20
        %v2737 = vpop.permute.xlu0 %2736
        %2738 = vrot.lane.b32.xlu0 %v2659, 20
        %v2739 = vpop.permute.xlu0 %2738
        %2740 = vrot.lane.b32.xlu0 %v2662, 20
        %v2741 = vpop.permute.xlu0 %2740
        %2742 = vrot.lane.b32.xlu0 %v2666, 20
        %v2743 = vpop.permute.xlu0 %2742
        %2744 = vrot.lane.b32.xlu0 %v2669, 20
        %v2745 = vpop.permute.xlu0 %2744
        %2746 = vrot.lane.b32.xlu0 %v2673, 20
        %v2747 = vpop.permute.xlu0 %2746
        %2748 = vrot.lane.b32.xlu0 %v2676, 20
        %v2749 = vpop.permute.xlu0 %2748
        %2750 = vrot.lane.b32.xlu0 %v2680, 20
        %v2751 = vpop.permute.xlu0 %2750
        %2752 = vrot.lane.b32.xlu0 %v2683, 20
        %v2753 = vpop.permute.xlu0 %2752
        %2754 = vrot.lane.b32.xlu0 %v2687, 20
        %v2755 = vpop.permute.xlu0 %2754
        %2756 = vrot.lane.b32.xlu0 %v2690, 20
        %v2757 = vpop.permute.xlu0 %2756
        %2758 = vrot.lane.b32.xlu0 %v2694, 20
        %v2759 = vpop.permute.xlu0 %2758
        %2760 = vrot.lane.b32.xlu0 %v2697, 20
        %v2761 = vpop.permute.xlu0 %2760
        %vm2794 = vcmask 191648
        %2795 = vst.msk [vmem:[#allocation4] sm:$0xf] %vm2794, %v2699
        %2796 = vst.msk [vmem:[#allocation4 + $0x24] sm:$0xf] %vm2794, %v2701
        %2797 = vst.msk [vmem:[#allocation4 + $0x48] sm:$0xf] %vm2794, %v2703
        %2798 = vst.msk [vmem:[#allocation4 + $0x6c] sm:$0xf] %vm2794, %v2705
        %2799 = vst.msk [vmem:[#allocation4 + $0x90] sm:$0xf] %vm2794, %v2707
        %2800 = vst.msk [vmem:[#allocation4 + $0xb4] sm:$0xf] %vm2794, %v2709
        %2801 = vst.msk [vmem:[#allocation4 + $0xd8] sm:$0xf] %vm2794, %v2711
        %2802 = vst.msk [vmem:[#allocation4 + $0xfc] sm:$0xf] %vm2794, %v2713
        %2803 = vst.msk [vmem:[#allocation4 + $0x120] sm:$0xf] %vm2794, %v2715
        %2804 = vst.msk [vmem:[#allocation4 + $0x144] sm:$0xf] %vm2794, %v2717
        %2805 = vst.msk [vmem:[#allocation4 + $0x168] sm:$0xf] %vm2794, %v2719
        %2806 = vst.msk [vmem:[#allocation4 + $0x18c] sm:$0xf] %vm2794, %v2721
        %2807 = vst.msk [vmem:[#allocation4 + $0x1b0] sm:$0xf] %vm2794, %v2723
        %2808 = vst.msk [vmem:[#allocation4 + $0x1d4] sm:$0xf] %vm2794, %v2725
        %2809 = vst.msk [vmem:[#allocation4 + $0x1f8] sm:$0xf] %vm2794, %v2727
        %2810 = vst.msk [vmem:[#allocation4 + $0x21c] sm:$0xf] %vm2794, %v2729
        %2811 = vst.msk [vmem:[#allocation4 + $0x240] sm:$0xf] %vm2794, %v2731
        %2812 = vst.msk [vmem:[#allocation4 + $0x264] sm:$0xf] %vm2794, %v2733
        %2813 = vst.msk [vmem:[#allocation4 + $0x288] sm:$0xf] %vm2794, %v2735
        %2814 = vst.msk [vmem:[#allocation4 + $0x2ac] sm:$0xf] %vm2794, %v2737
        %2815 = vst.msk [vmem:[#allocation4 + $0x2d0] sm:$0xf] %vm2794, %v2739
        %2816 = vst.msk [vmem:[#allocation4 + $0x2f4] sm:$0xf] %vm2794, %v2741
        %2817 = vst.msk [vmem:[#allocation4 + $0x318] sm:$0xf] %vm2794, %v2743
        %2818 = vst.msk [vmem:[#allocation4 + $0x33c] sm:$0xf] %vm2794, %v2745
        %2819 = vst.msk [vmem:[#allocation4 + $0x360] sm:$0xf] %vm2794, %v2747
        %2820 = vst.msk [vmem:[#allocation4 + $0x384] sm:$0xf] %vm2794, %v2749
        %2821 = vst.msk [vmem:[#allocation4 + $0x3a8] sm:$0xf] %vm2794, %v2751
        %2822 = vst.msk [vmem:[#allocation4 + $0x3cc] sm:$0xf] %vm2794, %v2753
        %2823 = vst.msk [vmem:[#allocation4 + $0x3f0] sm:$0xf] %vm2794, %v2755
        %2824 = vst.msk [vmem:[#allocation4 + $0x414] sm:$0xf] %vm2794, %v2757
        %2825 = vst.msk [vmem:[#allocation4 + $0x438] sm:$0xf] %vm2794, %v2759
        %2826 = vst.msk [vmem:[#allocation4 + $0x45c] sm:$0xf] %vm2794, %v2761
        %s2827 = scalar_lea.vmem [#allocation2], 24
        %v2828 = vld [vmem:[%s2827] sm:$0xf]
        %v2829 = vld [vmem:[%s2827 + $0x4] sm:$0xf]
        %v2830 = vld [vmem:[%s2827 + $0xc] sm:$0xf]
        %v2831 = vld [vmem:[%s2827 + $0x10] sm:$0xf]
        %v2832 = vld [vmem:[%s2827 + $0x18] sm:$0xf]
        %v2833 = vld [vmem:[%s2827 + $0x1c] sm:$0xf]
        %v2834 = vld [vmem:[%s2827 + $0x24] sm:$0xf]
        %v2835 = vld [vmem:[%s2827 + $0x28] sm:$0xf]
        %v2836 = vld [vmem:[%s2827 + $0x30] sm:$0xf]
        %v2837 = vld [vmem:[%s2827 + $0x34] sm:$0xf]
        %v2838 = vld [vmem:[%s2827 + $0x3c] sm:$0xf]
        %v2839 = vld [vmem:[%s2827 + $0x40] sm:$0xf]
        %v2840 = vld [vmem:[%s2827 + $0x48] sm:$0xf]
        %v2841 = vld [vmem:[%s2827 + $0x4c] sm:$0xf]
        %v2842 = vld [vmem:[%s2827 + $0x54] sm:$0xf]
        %v2843 = vld [vmem:[%s2827 + $0x58] sm:$0xf]
        %v2844 = vld [vmem:[%s2827 + $0x60] sm:$0xf]
        %v2845 = vld [vmem:[%s2827 + $0x64] sm:$0xf]
        %v2846 = vld [vmem:[%s2827 + $0x6c] sm:$0xf]
        %v2847 = vld [vmem:[%s2827 + $0x70] sm:$0xf]
        %v2848 = vld [vmem:[%s2827 + $0x78] sm:$0xf]
        %v2849 = vld [vmem:[%s2827 + $0x7c] sm:$0xf]
        %v2850 = vld [vmem:[%s2827 + $0x84] sm:$0xf]
        %v2851 = vld [vmem:[%s2827 + $0x88] sm:$0xf]
        %v2852 = vld [vmem:[%s2827 + $0x90] sm:$0xf]
        %v2853 = vld [vmem:[%s2827 + $0x94] sm:$0xf]
        %v2854 = vld [vmem:[%s2827 + $0x9c] sm:$0xf]
        %v2855 = vld [vmem:[%s2827 + $0xa0] sm:$0xf]
        %v2856 = vld [vmem:[%s2827 + $0xa8] sm:$0xf]
        %v2857 = vld [vmem:[%s2827 + $0xac] sm:$0xf]
        %v2858 = vld [vmem:[%s2827 + $0xb4] sm:$0xf]
        %v2859 = vld [vmem:[%s2827 + $0xb8] sm:$0xf]
        %2892 = vrot.lane.b32.xlu0 %v2828, 24
        %v2893 = vpop.permute.xlu0 %2892
        %2894 = vrot.lane.b32.xlu0 %v2829, 24
        %v2895 = vpop.permute.xlu0 %2894
        %2896 = vrot.lane.b32.xlu0 %v2830, 24
        %v2897 = vpop.permute.xlu0 %2896
        %2898 = vrot.lane.b32.xlu0 %v2831, 24
        %v2899 = vpop.permute.xlu0 %2898
        %2900 = vrot.lane.b32.xlu0 %v2832, 24
        %v2901 = vpop.permute.xlu0 %2900
        %2902 = vrot.lane.b32.xlu0 %v2833, 24
        %v2903 = vpop.permute.xlu0 %2902
        %2904 = vrot.lane.b32.xlu0 %v2834, 24
        %v2905 = vpop.permute.xlu0 %2904
        %2906 = vrot.lane.b32.xlu0 %v2835, 24
        %v2907 = vpop.permute.xlu0 %2906
        %2908 = vrot.lane.b32.xlu0 %v2836, 24
        %v2909 = vpop.permute.xlu0 %2908
        %2910 = vrot.lane.b32.xlu0 %v2837, 24
        %v2911 = vpop.permute.xlu0 %2910
        %2912 = vrot.lane.b32.xlu0 %v2838, 24
        %v2913 = vpop.permute.xlu0 %2912
        %2914 = vrot.lane.b32.xlu0 %v2839, 24
        %v2915 = vpop.permute.xlu0 %2914
        %2916 = vrot.lane.b32.xlu0 %v2840, 24
        %v2917 = vpop.permute.xlu0 %2916
        %2918 = vrot.lane.b32.xlu0 %v2841, 24
        %v2919 = vpop.permute.xlu0 %2918
        %2920 = vrot.lane.b32.xlu0 %v2842, 24
        %v2921 = vpop.permute.xlu0 %2920
        %2922 = vrot.lane.b32.xlu0 %v2843, 24
        %v2923 = vpop.permute.xlu0 %2922
        %2924 = vrot.lane.b32.xlu0 %v2844, 24
        %v2925 = vpop.permute.xlu0 %2924
        %2926 = vrot.lane.b32.xlu0 %v2845, 24
        %v2927 = vpop.permute.xlu0 %2926
        %2928 = vrot.lane.b32.xlu0 %v2846, 24
        %v2929 = vpop.permute.xlu0 %2928
        %2930 = vrot.lane.b32.xlu0 %v2847, 24
        %v2931 = vpop.permute.xlu0 %2930
        %2932 = vrot.lane.b32.xlu0 %v2848, 24
        %v2933 = vpop.permute.xlu0 %2932
        %2934 = vrot.lane.b32.xlu0 %v2849, 24
        %v2935 = vpop.permute.xlu0 %2934
        %2936 = vrot.lane.b32.xlu0 %v2850, 24
        %v2937 = vpop.permute.xlu0 %2936
        %2938 = vrot.lane.b32.xlu0 %v2851, 24
        %v2939 = vpop.permute.xlu0 %2938
        %2940 = vrot.lane.b32.xlu0 %v2852, 24
        %v2941 = vpop.permute.xlu0 %2940
        %2942 = vrot.lane.b32.xlu0 %v2853, 24
        %v2943 = vpop.permute.xlu0 %2942
        %2944 = vrot.lane.b32.xlu0 %v2854, 24
        %v2945 = vpop.permute.xlu0 %2944
        %2946 = vrot.lane.b32.xlu0 %v2855, 24
        %v2947 = vpop.permute.xlu0 %2946
        %2948 = vrot.lane.b32.xlu0 %v2856, 24
        %v2949 = vpop.permute.xlu0 %2948
        %2950 = vrot.lane.b32.xlu0 %v2857, 24
        %v2951 = vpop.permute.xlu0 %2950
        %2952 = vrot.lane.b32.xlu0 %v2858, 24
        %v2953 = vpop.permute.xlu0 %2952
        %2954 = vrot.lane.b32.xlu0 %v2859, 24
        %v2955 = vpop.permute.xlu0 %2954
        %vm2988 = vcmask 224448
        %2989 = vst.msk [vmem:[#allocation4] sm:$0xf] %vm2988, %v2893
        %2990 = vst.msk [vmem:[#allocation4 + $0x24] sm:$0xf] %vm2988, %v2895
        %2991 = vst.msk [vmem:[#allocation4 + $0x48] sm:$0xf] %vm2988, %v2897
        %2992 = vst.msk [vmem:[#allocation4 + $0x6c] sm:$0xf] %vm2988, %v2899
        %2993 = vst.msk [vmem:[#allocation4 + $0x90] sm:$0xf] %vm2988, %v2901
        %2994 = vst.msk [vmem:[#allocation4 + $0xb4] sm:$0xf] %vm2988, %v2903
        %2995 = vst.msk [vmem:[#allocation4 + $0xd8] sm:$0xf] %vm2988, %v2905
        %2996 = vst.msk [vmem:[#allocation4 + $0xfc] sm:$0xf] %vm2988, %v2907
        %2997 = vst.msk [vmem:[#allocation4 + $0x120] sm:$0xf] %vm2988, %v2909
        %2998 = vst.msk [vmem:[#allocation4 + $0x144] sm:$0xf] %vm2988, %v2911
        %2999 = vst.msk [vmem:[#allocation4 + $0x168] sm:$0xf] %vm2988, %v2913
        %3000 = vst.msk [vmem:[#allocation4 + $0x18c] sm:$0xf] %vm2988, %v2915
        %3001 = vst.msk [vmem:[#allocation4 + $0x1b0] sm:$0xf] %vm2988, %v2917
        %3002 = vst.msk [vmem:[#allocation4 + $0x1d4] sm:$0xf] %vm2988, %v2919
        %3003 = vst.msk [vmem:[#allocation4 + $0x1f8] sm:$0xf] %vm2988, %v2921
        %3004 = vst.msk [vmem:[#allocation4 + $0x21c] sm:$0xf] %vm2988, %v2923
        %3005 = vst.msk [vmem:[#allocation4 + $0x240] sm:$0xf] %vm2988, %v2925
        %3006 = vst.msk [vmem:[#allocation4 + $0x264] sm:$0xf] %vm2988, %v2927
        %3007 = vst.msk [vmem:[#allocation4 + $0x288] sm:$0xf] %vm2988, %v2929
        %3008 = vst.msk [vmem:[#allocation4 + $0x2ac] sm:$0xf] %vm2988, %v2931
        %3009 = vst.msk [vmem:[#allocation4 + $0x2d0] sm:$0xf] %vm2988, %v2933
        %3010 = vst.msk [vmem:[#allocation4 + $0x2f4] sm:$0xf] %vm2988, %v2935
        %3011 = vst.msk [vmem:[#allocation4 + $0x318] sm:$0xf] %vm2988, %v2937
        %3012 = vst.msk [vmem:[#allocation4 + $0x33c] sm:$0xf] %vm2988, %v2939
        %3013 = vst.msk [vmem:[#allocation4 + $0x360] sm:$0xf] %vm2988, %v2941
        %3014 = vst.msk [vmem:[#allocation4 + $0x384] sm:$0xf] %vm2988, %v2943
        %3015 = vst.msk [vmem:[#allocation4 + $0x3a8] sm:$0xf] %vm2988, %v2945
        %3016 = vst.msk [vmem:[#allocation4 + $0x3cc] sm:$0xf] %vm2988, %v2947
        %3017 = vst.msk [vmem:[#allocation4 + $0x3f0] sm:$0xf] %vm2988, %v2949
        %3018 = vst.msk [vmem:[#allocation4 + $0x414] sm:$0xf] %vm2988, %v2951
        %3019 = vst.msk [vmem:[#allocation4 + $0x438] sm:$0xf] %vm2988, %v2953
        %3020 = vst.msk [vmem:[#allocation4 + $0x45c] sm:$0xf] %vm2988, %v2955
        %v3021 = vld [vmem:[%s2827] sm:$0xf]
        %v3022 = vld [vmem:[%s2827 + $0x4] sm:$0xf]
        %v3023 = vld [vmem:[%s2827 + $0x8] sm:$0x1]
        %v3024 = vld [vmem:[%s2827 + $0xc] sm:$0xf]
        %v3025 = vld [vmem:[%s2827 + $0x10] sm:$0xf]
        %v3026 = vld [vmem:[%s2827 + $0x14] sm:$0x1]
        %v3027 = vld [vmem:[%s2827 + $0x18] sm:$0xf]
        %v3028 = vld [vmem:[%s2827 + $0x1c] sm:$0xf]
        %v3029 = vld [vmem:[%s2827 + $0x20] sm:$0x1]
        %v3030 = vld [vmem:[%s2827 + $0x24] sm:$0xf]
        %v3031 = vld [vmem:[%s2827 + $0x28] sm:$0xf]
        %v3032 = vld [vmem:[%s2827 + $0x2c] sm:$0x1]
        %v3033 = vld [vmem:[%s2827 + $0x30] sm:$0xf]
        %v3034 = vld [vmem:[%s2827 + $0x34] sm:$0xf]
        %v3035 = vld [vmem:[%s2827 + $0x38] sm:$0x1]
        %v3036 = vld [vmem:[%s2827 + $0x3c] sm:$0xf]
        %v3037 = vld [vmem:[%s2827 + $0x40] sm:$0xf]
        %v3038 = vld [vmem:[%s2827 + $0x44] sm:$0x1]
        %v3039 = vld [vmem:[%s2827 + $0x48] sm:$0xf]
        %v3040 = vld [vmem:[%s2827 + $0x4c] sm:$0xf]
        %v3041 = vld [vmem:[%s2827 + $0x50] sm:$0x1]
        %v3042 = vld [vmem:[%s2827 + $0x54] sm:$0xf]
        %v3043 = vld [vmem:[%s2827 + $0x58] sm:$0xf]
        %v3044 = vld [vmem:[%s2827 + $0x5c] sm:$0x1]
        %v3045 = vld [vmem:[%s2827 + $0x60] sm:$0xf]
        %v3046 = vld [vmem:[%s2827 + $0x64] sm:$0xf]
        %v3047 = vld [vmem:[%s2827 + $0x68] sm:$0x1]
        %v3048 = vld [vmem:[%s2827 + $0x6c] sm:$0xf]
        %v3049 = vld [vmem:[%s2827 + $0x70] sm:$0xf]
        %v3050 = vld [vmem:[%s2827 + $0x74] sm:$0x1]
        %v3051 = vld [vmem:[%s2827 + $0x78] sm:$0xf]
        %v3052 = vld [vmem:[%s2827 + $0x7c] sm:$0xf]
        %v3053 = vld [vmem:[%s2827 + $0x80] sm:$0x1]
        %v3054 = vld [vmem:[%s2827 + $0x84] sm:$0xf]
        %v3055 = vld [vmem:[%s2827 + $0x88] sm:$0xf]
        %v3056 = vld [vmem:[%s2827 + $0x8c] sm:$0x1]
        %v3057 = vld [vmem:[%s2827 + $0x90] sm:$0xf]
        %v3058 = vld [vmem:[%s2827 + $0x94] sm:$0xf]
        %v3059 = vld [vmem:[%s2827 + $0x98] sm:$0x1]
        %v3060 = vld [vmem:[%s2827 + $0x9c] sm:$0xf]
        %v3061 = vld [vmem:[%s2827 + $0xa0] sm:$0xf]
        %v3062 = vld [vmem:[%s2827 + $0xa4] sm:$0x1]
        %v3063 = vld [vmem:[%s2827 + $0xa8] sm:$0xf]
        %v3064 = vld [vmem:[%s2827 + $0xac] sm:$0xf]
        %v3065 = vld [vmem:[%s2827 + $0xb0] sm:$0x1]
        %v3066 = vld [vmem:[%s2827 + $0xb4] sm:$0xf]
        %v3067 = vld [vmem:[%s2827 + $0xb8] sm:$0xf]
        %v3068 = vld [vmem:[%s2827 + $0xbc] sm:$0x1]
        %v3070 = vshrl.u32 %v3021, 16
        %v3072 = vrot.slane %v3070, 4
        %v3073 = vshll.u32 %v3021, 16
        %v3075 = vrot.slane %v3073, 5
        %v3076 = vor.u32 %v3072, %v3075
        %v3077 = vrot.slane %v3076, 4
        %v3079 = vshll.u32 %v3022, 16
        %v3081 = vrot.slane %v3079, 5
        %v3082 = vsel %vm882, %v3077, %v3081
        %v3083 = vshrl.u32 %v3022, 16
        %v3085 = vrot.slane %v3083, 4
        %v3086 = vor.u32 %v3085, %v3081
        %v3087 = vrot.slane %v3086, 4
        %v3089 = vshll.u32 %v3023, 16
        %v3091 = vrot.slane %v3089, 5
        %v3092 = vsel %vm882, %v3087, %v3091
        %v3094 = vshrl.u32 %v3024, 16
        %v3096 = vrot.slane %v3094, 4
        %v3097 = vshll.u32 %v3024, 16
        %v3099 = vrot.slane %v3097, 5
        %v3100 = vor.u32 %v3096, %v3099
        %v3101 = vrot.slane %v3100, 4
        %v3103 = vshll.u32 %v3025, 16
        %v3105 = vrot.slane %v3103, 5
        %v3106 = vsel %vm882, %v3101, %v3105
        %v3107 = vshrl.u32 %v3025, 16
        %v3109 = vrot.slane %v3107, 4
        %v3110 = vor.u32 %v3109, %v3105
        %v3111 = vrot.slane %v3110, 4
        %v3113 = vshll.u32 %v3026, 16
        %v3115 = vrot.slane %v3113, 5
        %v3116 = vsel %vm882, %v3111, %v3115
        %v3118 = vshrl.u32 %v3027, 16
        %v3120 = vrot.slane %v3118, 4
        %v3121 = vshll.u32 %v3027, 16
        %v3123 = vrot.slane %v3121, 5
        %v3124 = vor.u32 %v3120, %v3123
        %v3125 = vrot.slane %v3124, 4
        %v3127 = vshll.u32 %v3028, 16
        %v3129 = vrot.slane %v3127, 5
        %v3130 = vsel %vm882, %v3125, %v3129
        %v3131 = vshrl.u32 %v3028, 16
        %v3133 = vrot.slane %v3131, 4
        %v3134 = vor.u32 %v3133, %v3129
        %v3135 = vrot.slane %v3134, 4
        %v3137 = vshll.u32 %v3029, 16
        %v3139 = vrot.slane %v3137, 5
        %v3140 = vsel %vm882, %v3135, %v3139
        %v3142 = vshrl.u32 %v3030, 16
        %v3144 = vrot.slane %v3142, 4
        %v3145 = vshll.u32 %v3030, 16
        %v3147 = vrot.slane %v3145, 5
        %v3148 = vor.u32 %v3144, %v3147
        %v3149 = vrot.slane %v3148, 4
        %v3151 = vshll.u32 %v3031, 16
        %v3153 = vrot.slane %v3151, 5
        %v3154 = vsel %vm882, %v3149, %v3153
        %v3155 = vshrl.u32 %v3031, 16
        %v3157 = vrot.slane %v3155, 4
        %v3158 = vor.u32 %v3157, %v3153
        %v3159 = vrot.slane %v3158, 4
        %v3161 = vshll.u32 %v3032, 16
        %v3163 = vrot.slane %v3161, 5
        %v3164 = vsel %vm882, %v3159, %v3163
        %v3166 = vshrl.u32 %v3033, 16
        %v3168 = vrot.slane %v3166, 4
        %v3169 = vshll.u32 %v3033, 16
        %v3171 = vrot.slane %v3169, 5
        %v3172 = vor.u32 %v3168, %v3171
        %v3173 = vrot.slane %v3172, 4
        %v3175 = vshll.u32 %v3034, 16
        %v3177 = vrot.slane %v3175, 5
        %v3178 = vsel %vm882, %v3173, %v3177
        %v3179 = vshrl.u32 %v3034, 16
        %v3181 = vrot.slane %v3179, 4
        %v3182 = vor.u32 %v3181, %v3177
        %v3183 = vrot.slane %v3182, 4
        %v3185 = vshll.u32 %v3035, 16
        %v3187 = vrot.slane %v3185, 5
        %v3188 = vsel %vm882, %v3183, %v3187
        %v3190 = vshrl.u32 %v3036, 16
        %v3192 = vrot.slane %v3190, 4
        %v3193 = vshll.u32 %v3036, 16
        %v3195 = vrot.slane %v3193, 5
        %v3196 = vor.u32 %v3192, %v3195
        %v3197 = vrot.slane %v3196, 4
        %v3199 = vshll.u32 %v3037, 16
        %v3201 = vrot.slane %v3199, 5
        %v3202 = vsel %vm882, %v3197, %v3201
        %v3203 = vshrl.u32 %v3037, 16
        %v3205 = vrot.slane %v3203, 4
        %v3206 = vor.u32 %v3205, %v3201
        %v3207 = vrot.slane %v3206, 4
        %v3209 = vshll.u32 %v3038, 16
        %v3211 = vrot.slane %v3209, 5
        %v3212 = vsel %vm882, %v3207, %v3211
        %v3214 = vshrl.u32 %v3039, 16
        %v3216 = vrot.slane %v3214, 4
        %v3217 = vshll.u32 %v3039, 16
        %v3219 = vrot.slane %v3217, 5
        %v3220 = vor.u32 %v3216, %v3219
        %v3221 = vrot.slane %v3220, 4
        %v3223 = vshll.u32 %v3040, 16
        %v3225 = vrot.slane %v3223, 5
        %v3226 = vsel %vm882, %v3221, %v3225
        %v3227 = vshrl.u32 %v3040, 16
        %v3229 = vrot.slane %v3227, 4
        %v3230 = vor.u32 %v3229, %v3225
        %v3231 = vrot.slane %v3230, 4
        %v3233 = vshll.u32 %v3041, 16
        %v3235 = vrot.slane %v3233, 5
        %v3236 = vsel %vm882, %v3231, %v3235
        %v3238 = vshrl.u32 %v3042, 16
        %v3240 = vrot.slane %v3238, 4
        %v3241 = vshll.u32 %v3042, 16
        %v3243 = vrot.slane %v3241, 5
        %v3244 = vor.u32 %v3240, %v3243
        %v3245 = vrot.slane %v3244, 4
        %v3247 = vshll.u32 %v3043, 16
        %v3249 = vrot.slane %v3247, 5
        %v3250 = vsel %vm882, %v3245, %v3249
        %v3251 = vshrl.u32 %v3043, 16
        %v3253 = vrot.slane %v3251, 4
        %v3254 = vor.u32 %v3253, %v3249
        %v3255 = vrot.slane %v3254, 4
        %v3257 = vshll.u32 %v3044, 16
        %v3259 = vrot.slane %v3257, 5
        %v3260 = vsel %vm882, %v3255, %v3259
        %v3262 = vshrl.u32 %v3045, 16
        %v3264 = vrot.slane %v3262, 4
        %v3265 = vshll.u32 %v3045, 16
        %v3267 = vrot.slane %v3265, 5
        %v3268 = vor.u32 %v3264, %v3267
        %v3269 = vrot.slane %v3268, 4
        %v3271 = vshll.u32 %v3046, 16
        %v3273 = vrot.slane %v3271, 5
        %v3274 = vsel %vm882, %v3269, %v3273
        %v3275 = vshrl.u32 %v3046, 16
        %v3277 = vrot.slane %v3275, 4
        %v3278 = vor.u32 %v3277, %v3273
        %v3279 = vrot.slane %v3278, 4
        %v3281 = vshll.u32 %v3047, 16
        %v3283 = vrot.slane %v3281, 5
        %v3284 = vsel %vm882, %v3279, %v3283
        %v3286 = vshrl.u32 %v3048, 16
        %v3288 = vrot.slane %v3286, 4
        %v3289 = vshll.u32 %v3048, 16
        %v3291 = vrot.slane %v3289, 5
        %v3292 = vor.u32 %v3288, %v3291
        %v3293 = vrot.slane %v3292, 4
        %v3295 = vshll.u32 %v3049, 16
        %v3297 = vrot.slane %v3295, 5
        %v3298 = vsel %vm882, %v3293, %v3297
        %v3299 = vshrl.u32 %v3049, 16
        %v3301 = vrot.slane %v3299, 4
        %v3302 = vor.u32 %v3301, %v3297
        %v3303 = vrot.slane %v3302, 4
        %v3305 = vshll.u32 %v3050, 16
        %v3307 = vrot.slane %v3305, 5
        %v3308 = vsel %vm882, %v3303, %v3307
        %v3310 = vshrl.u32 %v3051, 16
        %v3312 = vrot.slane %v3310, 4
        %v3313 = vshll.u32 %v3051, 16
        %v3315 = vrot.slane %v3313, 5
        %v3316 = vor.u32 %v3312, %v3315
        %v3317 = vrot.slane %v3316, 4
        %v3319 = vshll.u32 %v3052, 16
        %v3321 = vrot.slane %v3319, 5
        %v3322 = vsel %vm882, %v3317, %v3321
        %v3323 = vshrl.u32 %v3052, 16
        %v3325 = vrot.slane %v3323, 4
        %v3326 = vor.u32 %v3325, %v3321
        %v3327 = vrot.slane %v3326, 4
        %v3329 = vshll.u32 %v3053, 16
        %v3331 = vrot.slane %v3329, 5
        %v3332 = vsel %vm882, %v3327, %v3331
        %v3334 = vshrl.u32 %v3054, 16
        %v3336 = vrot.slane %v3334, 4
        %v3337 = vshll.u32 %v3054, 16
        %v3339 = vrot.slane %v3337, 5
        %v3340 = vor.u32 %v3336, %v3339
        %v3341 = vrot.slane %v3340, 4
        %v3343 = vshll.u32 %v3055, 16
        %v3345 = vrot.slane %v3343, 5
        %v3346 = vsel %vm882, %v3341, %v3345
        %v3347 = vshrl.u32 %v3055, 16
        %v3349 = vrot.slane %v3347, 4
        %v3350 = vor.u32 %v3349, %v3345
        %v3351 = vrot.slane %v3350, 4
        %v3353 = vshll.u32 %v3056, 16
        %v3355 = vrot.slane %v3353, 5
        %v3356 = vsel %vm882, %v3351, %v3355
        %v3358 = vshrl.u32 %v3057, 16
        %v3360 = vrot.slane %v3358, 4
        %v3361 = vshll.u32 %v3057, 16
        %v3363 = vrot.slane %v3361, 5
        %v3364 = vor.u32 %v3360, %v3363
        %v3365 = vrot.slane %v3364, 4
        %v3367 = vshll.u32 %v3058, 16
        %v3369 = vrot.slane %v3367, 5
        %v3370 = vsel %vm882, %v3365, %v3369
        %v3371 = vshrl.u32 %v3058, 16
        %v3373 = vrot.slane %v3371, 4
        %v3374 = vor.u32 %v3373, %v3369
        %v3375 = vrot.slane %v3374, 4
        %v3377 = vshll.u32 %v3059, 16
        %v3379 = vrot.slane %v3377, 5
        %v3380 = vsel %vm882, %v3375, %v3379
        %v3382 = vshrl.u32 %v3060, 16
        %v3384 = vrot.slane %v3382, 4
        %v3385 = vshll.u32 %v3060, 16
        %v3387 = vrot.slane %v3385, 5
        %v3388 = vor.u32 %v3384, %v3387
        %v3389 = vrot.slane %v3388, 4
        %v3391 = vshll.u32 %v3061, 16
        %v3393 = vrot.slane %v3391, 5
        %v3394 = vsel %vm882, %v3389, %v3393
        %v3395 = vshrl.u32 %v3061, 16
        %v3397 = vrot.slane %v3395, 4
        %v3398 = vor.u32 %v3397, %v3393
        %v3399 = vrot.slane %v3398, 4
        %v3401 = vshll.u32 %v3062, 16
        %v3403 = vrot.slane %v3401, 5
        %v3404 = vsel %vm882, %v3399, %v3403
        %v3406 = vshrl.u32 %v3063, 16
        %v3408 = vrot.slane %v3406, 4
        %v3409 = vshll.u32 %v3063, 16
        %v3411 = vrot.slane %v3409, 5
        %v3412 = vor.u32 %v3408, %v3411
        %v3413 = vrot.slane %v3412, 4
        %v3415 = vshll.u32 %v3064, 16
        %v3417 = vrot.slane %v3415, 5
        %v3418 = vsel %vm882, %v3413, %v3417
        %v3419 = vshrl.u32 %v3064, 16
        %v3421 = vrot.slane %v3419, 4
        %v3422 = vor.u32 %v3421, %v3417
        %v3423 = vrot.slane %v3422, 4
        %v3425 = vshll.u32 %v3065, 16
        %v3427 = vrot.slane %v3425, 5
        %v3428 = vsel %vm882, %v3423, %v3427
        %v3430 = vshrl.u32 %v3066, 16
        %v3432 = vrot.slane %v3430, 4
        %v3433 = vshll.u32 %v3066, 16
        %v3435 = vrot.slane %v3433, 5
        %v3436 = vor.u32 %v3432, %v3435
        %v3437 = vrot.slane %v3436, 4
        %v3439 = vshll.u32 %v3067, 16
        %v3441 = vrot.slane %v3439, 5
        %v3442 = vsel %vm882, %v3437, %v3441
        %v3443 = vshrl.u32 %v3067, 16
        %v3445 = vrot.slane %v3443, 4
        %v3446 = vor.u32 %v3445, %v3441
        %v3447 = vrot.slane %v3446, 4
        %v3449 = vshll.u32 %v3068, 16
        %v3451 = vrot.slane %v3449, 5
        %v3452 = vsel %vm882, %v3447, %v3451
        %3453 = vrot.lane.b32.xlu0 %v3082, 28
        %v3454 = vpop.permute.xlu0 %3453
        %3455 = vrot.lane.b32.xlu0 %v3092, 28
        %v3456 = vpop.permute.xlu0 %3455
        %3457 = vrot.lane.b32.xlu0 %v3106, 28
        %v3458 = vpop.permute.xlu0 %3457
        %3459 = vrot.lane.b32.xlu0 %v3116, 28
        %v3460 = vpop.permute.xlu0 %3459
        %3461 = vrot.lane.b32.xlu0 %v3130, 28
        %v3462 = vpop.permute.xlu0 %3461
        %3463 = vrot.lane.b32.xlu0 %v3140, 28
        %v3464 = vpop.permute.xlu0 %3463
        %3465 = vrot.lane.b32.xlu0 %v3154, 28
        %v3466 = vpop.permute.xlu0 %3465
        %3467 = vrot.lane.b32.xlu0 %v3164, 28
        %v3468 = vpop.permute.xlu0 %3467
        %3469 = vrot.lane.b32.xlu0 %v3178, 28
        %v3470 = vpop.permute.xlu0 %3469
        %3471 = vrot.lane.b32.xlu0 %v3188, 28
        %v3472 = vpop.permute.xlu0 %3471
        %3473 = vrot.lane.b32.xlu0 %v3202, 28
        %v3474 = vpop.permute.xlu0 %3473
        %3475 = vrot.lane.b32.xlu0 %v3212, 28
        %v3476 = vpop.permute.xlu0 %3475
        %3477 = vrot.lane.b32.xlu0 %v3226, 28
        %v3478 = vpop.permute.xlu0 %3477
        %3479 = vrot.lane.b32.xlu0 %v3236, 28
        %v3480 = vpop.permute.xlu0 %3479
        %3481 = vrot.lane.b32.xlu0 %v3250, 28
        %v3482 = vpop.permute.xlu0 %3481
        %3483 = vrot.lane.b32.xlu0 %v3260, 28
        %v3484 = vpop.permute.xlu0 %3483
        %3485 = vrot.lane.b32.xlu0 %v3274, 28
        %v3486 = vpop.permute.xlu0 %3485
        %3487 = vrot.lane.b32.xlu0 %v3284, 28
        %v3488 = vpop.permute.xlu0 %3487
        %3489 = vrot.lane.b32.xlu0 %v3298, 28
        %v3490 = vpop.permute.xlu0 %3489
        %3491 = vrot.lane.b32.xlu0 %v3308, 28
        %v3492 = vpop.permute.xlu0 %3491
        %3493 = vrot.lane.b32.xlu0 %v3322, 28
        %v3494 = vpop.permute.xlu0 %3493
        %3495 = vrot.lane.b32.xlu0 %v3332, 28
        %v3496 = vpop.permute.xlu0 %3495
        %3497 = vrot.lane.b32.xlu0 %v3346, 28
        %v3498 = vpop.permute.xlu0 %3497
        %3499 = vrot.lane.b32.xlu0 %v3356, 28
        %v3500 = vpop.permute.xlu0 %3499
        %3501 = vrot.lane.b32.xlu0 %v3370, 28
        %v3502 = vpop.permute.xlu0 %3501
        %3503 = vrot.lane.b32.xlu0 %v3380, 28
        %v3504 = vpop.permute.xlu0 %3503
        %3505 = vrot.lane.b32.xlu0 %v3394, 28
        %v3506 = vpop.permute.xlu0 %3505
        %3507 = vrot.lane.b32.xlu0 %v3404, 28
        %v3508 = vpop.permute.xlu0 %3507
        %3509 = vrot.lane.b32.xlu0 %v3418, 28
        %v3510 = vpop.permute.xlu0 %3509
        %3511 = vrot.lane.b32.xlu0 %v3428, 28
        %v3512 = vpop.permute.xlu0 %3511
        %3513 = vrot.lane.b32.xlu0 %v3442, 28
        %v3514 = vpop.permute.xlu0 %3513
        %3515 = vrot.lane.b32.xlu0 %v3452, 28
        %v3516 = vpop.permute.xlu0 %3515
        %vm3549 = vcmask 257248
        %3550 = vst.msk [vmem:[#allocation4] sm:$0xf] %vm3549, %v3454
        %3551 = vst.msk [vmem:[#allocation4 + $0x24] sm:$0xf] %vm3549, %v3456
        %3552 = vst.msk [vmem:[#allocation4 + $0x48] sm:$0xf] %vm3549, %v3458
        %3553 = vst.msk [vmem:[#allocation4 + $0x6c] sm:$0xf] %vm3549, %v3460
        %3554 = vst.msk [vmem:[#allocation4 + $0x90] sm:$0xf] %vm3549, %v3462
        %3555 = vst.msk [vmem:[#allocation4 + $0xb4] sm:$0xf] %vm3549, %v3464
        %3556 = vst.msk [vmem:[#allocation4 + $0xd8] sm:$0xf] %vm3549, %v3466
        %3557 = vst.msk [vmem:[#allocation4 + $0xfc] sm:$0xf] %vm3549, %v3468
        %3558 = vst.msk [vmem:[#allocation4 + $0x120] sm:$0xf] %vm3549, %v3470
        %3559 = vst.msk [vmem:[#allocation4 + $0x144] sm:$0xf] %vm3549, %v3472
        %3560 = vst.msk [vmem:[#allocation4 + $0x168] sm:$0xf] %vm3549, %v3474
        %3561 = vst.msk [vmem:[#allocation4 + $0x18c] sm:$0xf] %vm3549, %v3476
        %3562 = vst.msk [vmem:[#allocation4 + $0x1b0] sm:$0xf] %vm3549, %v3478
        %3563 = vst.msk [vmem:[#allocation4 + $0x1d4] sm:$0xf] %vm3549, %v3480
        %3564 = vst.msk [vmem:[#allocation4 + $0x1f8] sm:$0xf] %vm3549, %v3482
        %3565 = vst.msk [vmem:[#allocation4 + $0x21c] sm:$0xf] %vm3549, %v3484
        %3566 = vst.msk [vmem:[#allocation4 + $0x240] sm:$0xf] %vm3549, %v3486
        %3567 = vst.msk [vmem:[#allocation4 + $0x264] sm:$0xf] %vm3549, %v3488
        %3568 = vst.msk [vmem:[#allocation4 + $0x288] sm:$0xf] %vm3549, %v3490
        %3569 = vst.msk [vmem:[#allocation4 + $0x2ac] sm:$0xf] %vm3549, %v3492
        %3570 = vst.msk [vmem:[#allocation4 + $0x2d0] sm:$0xf] %vm3549, %v3494
        %3571 = vst.msk [vmem:[#allocation4 + $0x2f4] sm:$0xf] %vm3549, %v3496
        %3572 = vst.msk [vmem:[#allocation4 + $0x318] sm:$0xf] %vm3549, %v3498
        %3573 = vst.msk [vmem:[#allocation4 + $0x33c] sm:$0xf] %vm3549, %v3500
        %3574 = vst.msk [vmem:[#allocation4 + $0x360] sm:$0xf] %vm3549, %v3502
        %3575 = vst.msk [vmem:[#allocation4 + $0x384] sm:$0xf] %vm3549, %v3504
        %3576 = vst.msk [vmem:[#allocation4 + $0x3a8] sm:$0xf] %vm3549, %v3506
        %3577 = vst.msk [vmem:[#allocation4 + $0x3cc] sm:$0xf] %vm3549, %v3508
        %3578 = vst.msk [vmem:[#allocation4 + $0x3f0] sm:$0xf] %vm3549, %v3510
        %3579 = vst.msk [vmem:[#allocation4 + $0x414] sm:$0xf] %vm3549, %v3512
        %3580 = vst.msk [vmem:[#allocation4 + $0x438] sm:$0xf] %vm3549, %v3514
        %3581 = vst.msk [vmem:[#allocation4 + $0x45c] sm:$0xf] %vm3549, %v3516
        %v3582 = vld [vmem:[%s2827] sm:$0xe]
        %v3583 = vld [vmem:[%s2827 + $0x4] sm:$0xf]
        %v3584 = vld [vmem:[%s2827 + $0x8] sm:$0x1]
        %v3585 = vld [vmem:[%s2827 + $0xc] sm:$0xe]
        %v3586 = vld [vmem:[%s2827 + $0x10] sm:$0xf]
        %v3587 = vld [vmem:[%s2827 + $0x14] sm:$0x1]
        %v3588 = vld [vmem:[%s2827 + $0x18] sm:$0xe]
        %v3589 = vld [vmem:[%s2827 + $0x1c] sm:$0xf]
        %v3590 = vld [vmem:[%s2827 + $0x20] sm:$0x1]
        %v3591 = vld [vmem:[%s2827 + $0x24] sm:$0xe]
        %v3592 = vld [vmem:[%s2827 + $0x28] sm:$0xf]
        %v3593 = vld [vmem:[%s2827 + $0x2c] sm:$0x1]
        %v3594 = vld [vmem:[%s2827 + $0x30] sm:$0xe]
        %v3595 = vld [vmem:[%s2827 + $0x34] sm:$0xf]
        %v3596 = vld [vmem:[%s2827 + $0x38] sm:$0x1]
        %v3597 = vld [vmem:[%s2827 + $0x3c] sm:$0xe]
        %v3598 = vld [vmem:[%s2827 + $0x40] sm:$0xf]
        %v3599 = vld [vmem:[%s2827 + $0x44] sm:$0x1]
        %v3600 = vld [vmem:[%s2827 + $0x48] sm:$0xe]
        %v3601 = vld [vmem:[%s2827 + $0x4c] sm:$0xf]
        %v3602 = vld [vmem:[%s2827 + $0x50] sm:$0x1]
        %v3603 = vld [vmem:[%s2827 + $0x54] sm:$0xe]
        %v3604 = vld [vmem:[%s2827 + $0x58] sm:$0xf]
        %v3605 = vld [vmem:[%s2827 + $0x5c] sm:$0x1]
        %v3606 = vld [vmem:[%s2827 + $0x60] sm:$0xe]
        %v3607 = vld [vmem:[%s2827 + $0x64] sm:$0xf]
        %v3608 = vld [vmem:[%s2827 + $0x68] sm:$0x1]
        %v3609 = vld [vmem:[%s2827 + $0x6c] sm:$0xe]
        %v3610 = vld [vmem:[%s2827 + $0x70] sm:$0xf]
        %v3611 = vld [vmem:[%s2827 + $0x74] sm:$0x1]
        %v3612 = vld [vmem:[%s2827 + $0x78] sm:$0xe]
        %v3613 = vld [vmem:[%s2827 + $0x7c] sm:$0xf]
        %v3614 = vld [vmem:[%s2827 + $0x80] sm:$0x1]
        %v3615 = vld [vmem:[%s2827 + $0x84] sm:$0xe]
        %v3616 = vld [vmem:[%s2827 + $0x88] sm:$0xf]
        %v3617 = vld [vmem:[%s2827 + $0x8c] sm:$0x1]
        %v3618 = vld [vmem:[%s2827 + $0x90] sm:$0xe]
        %v3619 = vld [vmem:[%s2827 + $0x94] sm:$0xf]
        %v3620 = vld [vmem:[%s2827 + $0x98] sm:$0x1]
        %v3621 = vld [vmem:[%s2827 + $0x9c] sm:$0xe]
        %v3622 = vld [vmem:[%s2827 + $0xa0] sm:$0xf]
        %v3623 = vld [vmem:[%s2827 + $0xa4] sm:$0x1]
        %v3624 = vld [vmem:[%s2827 + $0xa8] sm:$0xe]
        %v3625 = vld [vmem:[%s2827 + $0xac] sm:$0xf]
        %v3626 = vld [vmem:[%s2827 + $0xb0] sm:$0x1]
        %v3627 = vld [vmem:[%s2827 + $0xb4] sm:$0xe]
        %v3628 = vld [vmem:[%s2827 + $0xb8] sm:$0xf]
        %v3629 = vld [vmem:[%s2827 + $0xbc] sm:$0x1]
        %v3678 = vrot.slane %v3582, 5
        %v3679 = vrot.slane %v3678, 4
        %v3680 = vrot.slane %v3583, 5
        %v3681 = vsel %vm1494, %v3679, %v3680
        %v3682 = vrot.slane %v3680, 4
        %v3683 = vrot.slane %v3584, 5
        %v3684 = vsel %vm1494, %v3682, %v3683
        %v3685 = vrot.slane %v3585, 5
        %v3686 = vrot.slane %v3685, 4
        %v3687 = vrot.slane %v3586, 5
        %v3688 = vsel %vm1494, %v3686, %v3687
        %v3689 = vrot.slane %v3687, 4
        %v3690 = vrot.slane %v3587, 5
        %v3691 = vsel %vm1494, %v3689, %v3690
        %v3692 = vrot.slane %v3588, 5
        %v3693 = vrot.slane %v3692, 4
        %v3694 = vrot.slane %v3589, 5
        %v3695 = vsel %vm1494, %v3693, %v3694
        %v3696 = vrot.slane %v3694, 4
        %v3697 = vrot.slane %v3590, 5
        %v3698 = vsel %vm1494, %v3696, %v3697
        %v3699 = vrot.slane %v3591, 5
        %v3700 = vrot.slane %v3699, 4
        %v3701 = vrot.slane %v3592, 5
        %v3702 = vsel %vm1494, %v3700, %v3701
        %v3703 = vrot.slane %v3701, 4
        %v3704 = vrot.slane %v3593, 5
        %v3705 = vsel %vm1494, %v3703, %v3704
        %v3706 = vrot.slane %v3594, 5
        %v3707 = vrot.slane %v3706, 4
        %v3708 = vrot.slane %v3595, 5
        %v3709 = vsel %vm1494, %v3707, %v3708
        %v3710 = vrot.slane %v3708, 4
        %v3711 = vrot.slane %v3596, 5
        %v3712 = vsel %vm1494, %v3710, %v3711
        %v3713 = vrot.slane %v3597, 5
        %v3714 = vrot.slane %v3713, 4
        %v3715 = vrot.slane %v3598, 5
        %v3716 = vsel %vm1494, %v3714, %v3715
        %v3717 = vrot.slane %v3715, 4
        %v3718 = vrot.slane %v3599, 5
        %v3719 = vsel %vm1494, %v3717, %v3718
        %v3720 = vrot.slane %v3600, 5
        %v3721 = vrot.slane %v3720, 4
        %v3722 = vrot.slane %v3601, 5
        %v3723 = vsel %vm1494, %v3721, %v3722
        %v3724 = vrot.slane %v3722, 4
        %v3725 = vrot.slane %v3602, 5
        %v3726 = vsel %vm1494, %v3724, %v3725
        %v3727 = vrot.slane %v3603, 5
        %v3728 = vrot.slane %v3727, 4
        %v3729 = vrot.slane %v3604, 5
        %v3730 = vsel %vm1494, %v3728, %v3729
        %v3731 = vrot.slane %v3729, 4
        %v3732 = vrot.slane %v3605, 5
        %v3733 = vsel %vm1494, %v3731, %v3732
        %v3734 = vrot.slane %v3606, 5
        %v3735 = vrot.slane %v3734, 4
        %v3736 = vrot.slane %v3607, 5
        %v3737 = vsel %vm1494, %v3735, %v3736
        %v3738 = vrot.slane %v3736, 4
        %v3739 = vrot.slane %v3608, 5
        %v3740 = vsel %vm1494, %v3738, %v3739
        %v3741 = vrot.slane %v3609, 5
        %v3742 = vrot.slane %v3741, 4
        %v3743 = vrot.slane %v3610, 5
        %v3744 = vsel %vm1494, %v3742, %v3743
        %v3745 = vrot.slane %v3743, 4
        %v3746 = vrot.slane %v3611, 5
        %v3747 = vsel %vm1494, %v3745, %v3746
        %v3748 = vrot.slane %v3612, 5
        %v3749 = vrot.slane %v3748, 4
        %v3750 = vrot.slane %v3613, 5
        %v3751 = vsel %vm1494, %v3749, %v3750
        %v3752 = vrot.slane %v3750, 4
        %v3753 = vrot.slane %v3614, 5
        %v3754 = vsel %vm1494, %v3752, %v3753
        %v3755 = vrot.slane %v3615, 5
        %v3756 = vrot.slane %v3755, 4
        %v3757 = vrot.slane %v3616, 5
        %v3758 = vsel %vm1494, %v3756, %v3757
        %v3759 = vrot.slane %v3757, 4
        %v3760 = vrot.slane %v3617, 5
        %v3761 = vsel %vm1494, %v3759, %v3760
        %v3762 = vrot.slane %v3618, 5
        %v3763 = vrot.slane %v3762, 4
        %v3764 = vrot.slane %v3619, 5
        %v3765 = vsel %vm1494, %v3763, %v3764
        %v3766 = vrot.slane %v3764, 4
        %v3767 = vrot.slane %v3620, 5
        %v3768 = vsel %vm1494, %v3766, %v3767
        %v3769 = vrot.slane %v3621, 5
        %v3770 = vrot.slane %v3769, 4
        %v3771 = vrot.slane %v3622, 5
        %v3772 = vsel %vm1494, %v3770, %v3771
        %v3773 = vrot.slane %v3771, 4
        %v3774 = vrot.slane %v3623, 5
        %v3775 = vsel %vm1494, %v3773, %v3774
        %v3776 = vrot.slane %v3624, 5
        %v3777 = vrot.slane %v3776, 4
        %v3778 = vrot.slane %v3625, 5
        %v3779 = vsel %vm1494, %v3777, %v3778
        %v3780 = vrot.slane %v3778, 4
        %v3781 = vrot.slane %v3626, 5
        %v3782 = vsel %vm1494, %v3780, %v3781
        %v3783 = vrot.slane %v3627, 5
        %v3784 = vrot.slane %v3783, 4
        %v3785 = vrot.slane %v3628, 5
        %v3786 = vsel %vm1494, %v3784, %v3785
        %v3787 = vrot.slane %v3785, 4
        %v3788 = vrot.slane %v3629, 5
        %v3789 = vsel %vm1494, %v3787, %v3788
        %3790 = vrot.lane.b32.xlu0 %v3681, 32
        %v3791 = vpop.permute.xlu0 %3790
        %3792 = vrot.lane.b32.xlu0 %v3684, 32
        %v3793 = vpop.permute.xlu0 %3792
        %3794 = vrot.lane.b32.xlu0 %v3688, 32
        %v3795 = vpop.permute.xlu0 %3794
        %3796 = vrot.lane.b32.xlu0 %v3691, 32
        %v3797 = vpop.permute.xlu0 %3796
        %3798 = vrot.lane.b32.xlu0 %v3695, 32
        %v3799 = vpop.permute.xlu0 %3798
        %3800 = vrot.lane.b32.xlu0 %v3698, 32
        %v3801 = vpop.permute.xlu0 %3800
        %3802 = vrot.lane.b32.xlu0 %v3702, 32
        %v3803 = vpop.permute.xlu0 %3802
        %3804 = vrot.lane.b32.xlu0 %v3705, 32
        %v3805 = vpop.permute.xlu0 %3804
        %3806 = vrot.lane.b32.xlu0 %v3709, 32
        %v3807 = vpop.permute.xlu0 %3806
        %3808 = vrot.lane.b32.xlu0 %v3712, 32
        %v3809 = vpop.permute.xlu0 %3808
        %3810 = vrot.lane.b32.xlu0 %v3716, 32
        %v3811 = vpop.permute.xlu0 %3810
        %3812 = vrot.lane.b32.xlu0 %v3719, 32
        %v3813 = vpop.permute.xlu0 %3812
        %3814 = vrot.lane.b32.xlu0 %v3723, 32
        %v3815 = vpop.permute.xlu0 %3814
        %3816 = vrot.lane.b32.xlu0 %v3726, 32
        %v3817 = vpop.permute.xlu0 %3816
        %3818 = vrot.lane.b32.xlu0 %v3730, 32
        %v3819 = vpop.permute.xlu0 %3818
        %3820 = vrot.lane.b32.xlu0 %v3733, 32
        %v3821 = vpop.permute.xlu0 %3820
        %3822 = vrot.lane.b32.xlu0 %v3737, 32
        %v3823 = vpop.permute.xlu0 %3822
        %3824 = vrot.lane.b32.xlu0 %v3740, 32
        %v3825 = vpop.permute.xlu0 %3824
        %3826 = vrot.lane.b32.xlu0 %v3744, 32
        %v3827 = vpop.permute.xlu0 %3826
        %3828 = vrot.lane.b32.xlu0 %v3747, 32
        %v3829 = vpop.permute.xlu0 %3828
        %3830 = vrot.lane.b32.xlu0 %v3751, 32
        %v3831 = vpop.permute.xlu0 %3830
        %3832 = vrot.lane.b32.xlu0 %v3754, 32
        %v3833 = vpop.permute.xlu0 %3832
        %3834 = vrot.lane.b32.xlu0 %v3758, 32
        %v3835 = vpop.permute.xlu0 %3834
        %3836 = vrot.lane.b32.xlu0 %v3761, 32
        %v3837 = vpop.permute.xlu0 %3836
        %3838 = vrot.lane.b32.xlu0 %v3765, 32
        %v3839 = vpop.permute.xlu0 %3838
        %3840 = vrot.lane.b32.xlu0 %v3768, 32
        %v3841 = vpop.permute.xlu0 %3840
        %3842 = vrot.lane.b32.xlu0 %v3772, 32
        %v3843 = vpop.permute.xlu0 %3842
        %3844 = vrot.lane.b32.xlu0 %v3775, 32
        %v3845 = vpop.permute.xlu0 %3844
        %3846 = vrot.lane.b32.xlu0 %v3779, 32
        %v3847 = vpop.permute.xlu0 %3846
        %3848 = vrot.lane.b32.xlu0 %v3782, 32
        %v3849 = vpop.permute.xlu0 %3848
        %3850 = vrot.lane.b32.xlu0 %v3786, 32
        %v3851 = vpop.permute.xlu0 %3850
        %3852 = vrot.lane.b32.xlu0 %v3789, 32
        %v3853 = vpop.permute.xlu0 %3852
        %vm3886 = vcmask 290048
        %3887 = vst.msk [vmem:[#allocation4] sm:$0xf] %vm3886, %v3791
        %3888 = vst.msk [vmem:[#allocation4 + $0x24] sm:$0xf] %vm3886, %v3793
        %3889 = vst.msk [vmem:[#allocation4 + $0x48] sm:$0xf] %vm3886, %v3795
        %3890 = vst.msk [vmem:[#allocation4 + $0x6c] sm:$0xf] %vm3886, %v3797
        %3891 = vst.msk [vmem:[#allocation4 + $0x90] sm:$0xf] %vm3886, %v3799
        %3892 = vst.msk [vmem:[#allocation4 + $0xb4] sm:$0xf] %vm3886, %v3801
        %3893 = vst.msk [vmem:[#allocation4 + $0xd8] sm:$0xf] %vm3886, %v3803
        %3894 = vst.msk [vmem:[#allocation4 + $0xfc] sm:$0xf] %vm3886, %v3805
        %3895 = vst.msk [vmem:[#allocation4 + $0x120] sm:$0xf] %vm3886, %v3807
        %3896 = vst.msk [vmem:[#allocation4 + $0x144] sm:$0xf] %vm3886, %v3809
        %3897 = vst.msk [vmem:[#allocation4 + $0x168] sm:$0xf] %vm3886, %v3811
        %3898 = vst.msk [vmem:[#allocation4 + $0x18c] sm:$0xf] %vm3886, %v3813
        %3899 = vst.msk [vmem:[#allocation4 + $0x1b0] sm:$0xf] %vm3886, %v3815
        %3900 = vst.msk [vmem:[#allocation4 + $0x1d4] sm:$0xf] %vm3886, %v3817
        %3901 = vst.msk [vmem:[#allocation4 + $0x1f8] sm:$0xf] %vm3886, %v3819
        %3902 = vst.msk [vmem:[#allocation4 + $0x21c] sm:$0xf] %vm3886, %v3821
        %3903 = vst.msk [vmem:[#allocation4 + $0x240] sm:$0xf] %vm3886, %v3823
        %3904 = vst.msk [vmem:[#allocation4 + $0x264] sm:$0xf] %vm3886, %v3825
        %3905 = vst.msk [vmem:[#allocation4 + $0x288] sm:$0xf] %vm3886, %v3827
        %3906 = vst.msk [vmem:[#allocation4 + $0x2ac] sm:$0xf] %vm3886, %v3829
        %3907 = vst.msk [vmem:[#allocation4 + $0x2d0] sm:$0xf] %vm3886, %v3831
        %3908 = vst.msk [vmem:[#allocation4 + $0x2f4] sm:$0xf] %vm3886, %v3833
        %3909 = vst.msk [vmem:[#allocation4 + $0x318] sm:$0xf] %vm3886, %v3835
        %3910 = vst.msk [vmem:[#allocation4 + $0x33c] sm:$0xf] %vm3886, %v3837
        %3911 = vst.msk [vmem:[#allocation4 + $0x360] sm:$0xf] %vm3886, %v3839
        %3912 = vst.msk [vmem:[#allocation4 + $0x384] sm:$0xf] %vm3886, %v3841
        %3913 = vst.msk [vmem:[#allocation4 + $0x3a8] sm:$0xf] %vm3886, %v3843
        %3914 = vst.msk [vmem:[#allocation4 + $0x3cc] sm:$0xf] %vm3886, %v3845
        %3915 = vst.msk [vmem:[#allocation4 + $0x3f0] sm:$0xf] %vm3886, %v3847
        %3916 = vst.msk [vmem:[#allocation4 + $0x414] sm:$0xf] %vm3886, %v3849
        %3917 = vst.msk [vmem:[#allocation4 + $0x438] sm:$0xf] %vm3886, %v3851
        %3918 = vst.msk [vmem:[#allocation4 + $0x45c] sm:$0xf] %vm3886, %v3853
        %v3919 = vld [vmem:[#allocation4] sm:$0xf]
        %v3920 = vld [vmem:[#allocation4 + $0x24] sm:$0xf]
        %v3921 = vld [vmem:[#allocation4 + $0x48] sm:$0xf]
        %v3922 = vld [vmem:[#allocation4 + $0x6c] sm:$0xf]
        %v3923 = vld [vmem:[#allocation4 + $0x90] sm:$0xf]
        %v3924 = vld [vmem:[#allocation4 + $0xb4] sm:$0xf]
        %v3925 = vld [vmem:[#allocation4 + $0xd8] sm:$0xf]
        %v3926 = vld [vmem:[#allocation4 + $0xfc] sm:$0xf]
        %v3927 = vld [vmem:[#allocation4 + $0x120] sm:$0xf]
        %v3928 = vld [vmem:[#allocation4 + $0x144] sm:$0xf]
        %v3929 = vld [vmem:[#allocation4 + $0x168] sm:$0xf]
        %v3930 = vld [vmem:[#allocation4 + $0x18c] sm:$0xf]
        %v3931 = vld [vmem:[#allocation4 + $0x1b0] sm:$0xf]
        %v3932 = vld [vmem:[#allocation4 + $0x1d4] sm:$0xf]
        %v3933 = vld [vmem:[#allocation4 + $0x1f8] sm:$0xf]
        %v3934 = vld [vmem:[#allocation4 + $0x21c] sm:$0xf]
        %v3935 = vld [vmem:[#allocation4 + $0x240] sm:$0xf]
        %v3936 = vld [vmem:[#allocation4 + $0x264] sm:$0xf]
        %v3937 = vld [vmem:[#allocation4 + $0x288] sm:$0xf]
        %v3938 = vld [vmem:[#allocation4 + $0x2ac] sm:$0xf]
        %v3939 = vld [vmem:[#allocation4 + $0x2d0] sm:$0xf]
        %v3940 = vld [vmem:[#allocation4 + $0x2f4] sm:$0xf]
        %v3941 = vld [vmem:[#allocation4 + $0x318] sm:$0xf]
        %v3942 = vld [vmem:[#allocation4 + $0x33c] sm:$0xf]
        %v3943 = vld [vmem:[#allocation4 + $0x360] sm:$0xf]
        %v3944 = vld [vmem:[#allocation4 + $0x384] sm:$0xf]
        %v3945 = vld [vmem:[#allocation4 + $0x3a8] sm:$0xf]
        %v3946 = vld [vmem:[#allocation4 + $0x3cc] sm:$0xf]
        %v3947 = vld [vmem:[#allocation4 + $0x3f0] sm:$0xf]
        %v3948 = vld [vmem:[#allocation4 + $0x414] sm:$0xf]
        %v3949 = vld [vmem:[#allocation4 + $0x438] sm:$0xf]
        %v3950 = vld [vmem:[#allocation4 + $0x45c] sm:$0xf]
        %v3951 = vld [vmem:[%s1] sm:$0xf]
        %v3952 = vld [vmem:[%s1 + $0x4] sm:$0xf]
        %v3953 = vld [vmem:[%s1 + $0x8] sm:$0xf]
        %v3954 = vld [vmem:[%s1 + $0xc] sm:$0xf]
        %v3955 = vld [vmem:[%s1 + $0x10] sm:$0x3]
        %v3988 = vunpack.c.l.b16 %v3919
        %v3989 = vunpack.c.l.b16 %v3920
        %v3990 = vunpack.c.l.b16 %v3921
        %v3991 = vunpack.c.l.b16 %v3922
        %v3992 = vunpack.c.l.b16 %v3923
        %v3993 = vunpack.c.l.b16 %v3924
        %v3994 = vunpack.c.l.b16 %v3925
        %v3995 = vunpack.c.l.b16 %v3926
        %v3996 = vunpack.c.l.b16 %v3927
        %v3997 = vunpack.c.l.b16 %v3928
        %v3998 = vunpack.c.l.b16 %v3929
        %v3999 = vunpack.c.l.b16 %v3930
        %v4000 = vunpack.c.l.b16 %v3931
        %v4001 = vunpack.c.l.b16 %v3932
        %v4002 = vunpack.c.l.b16 %v3933
        %v4003 = vunpack.c.l.b16 %v3934
        %v4004 = vunpack.c.l.b16 %v3935
        %v4005 = vunpack.c.l.b16 %v3936
        %v4006 = vunpack.c.l.b16 %v3937
        %v4007 = vunpack.c.l.b16 %v3938
        %v4008 = vunpack.c.l.b16 %v3939
        %v4009 = vunpack.c.l.b16 %v3940
        %v4010 = vunpack.c.l.b16 %v3941
        %v4011 = vunpack.c.l.b16 %v3942
        %v4012 = vunpack.c.l.b16 %v3943
        %v4013 = vunpack.c.l.b16 %v3944
        %v4014 = vunpack.c.l.b16 %v3945
        %v4015 = vunpack.c.l.b16 %v3946
        %v4016 = vunpack.c.l.b16 %v3947
        %v4017 = vunpack.c.l.b16 %v3948
        %v4018 = vunpack.c.l.b16 %v3949
        %v4019 = vunpack.c.l.b16 %v3950
        %v4020 = vpack.c.b16 %v3989, %v3988
        %v4021 = vpack.c.b16 %v3991, %v3990
        %v4022 = vpack.c.b16 %v3993, %v3992
        %v4023 = vpack.c.b16 %v3995, %v3994
        %v4024 = vpack.c.b16 %v3997, %v3996
        %v4025 = vpack.c.b16 %v3999, %v3998
        %v4026 = vpack.c.b16 %v4001, %v4000
        %v4027 = vpack.c.b16 %v4003, %v4002
        %v4028 = vpack.c.b16 %v4005, %v4004
        %v4029 = vpack.c.b16 %v4007, %v4006
        %v4030 = vpack.c.b16 %v4009, %v4008
        %v4031 = vpack.c.b16 %v4011, %v4010
        %v4032 = vpack.c.b16 %v4013, %v4012
        %v4033 = vpack.c.b16 %v4015, %v4014
        %v4034 = vpack.c.b16 %v4017, %v4016
        %v4035 = vpack.c.b16 %v4019, %v4018
        %v4041 = vunpack.c.l.b16 %v3951
        %v4042 = vunpack.c.l.b16 %v3952
        %v4043 = vunpack.c.l.b16 %v3953
        %v4044 = vunpack.c.l.b16 %v3954
        %v4045 = vunpack.c.l.b16 %v3955
        %v4046 = vpack.c.b16 %v4042, %v4041
        %v4047 = vpack.c.b16 %v4044, %v4043
        %v4048 = vpack.c.b16 %v4045, %v4045
        %vm4051 = vcmask 293888
        %v4053 = vsel %vm4051, %v4020, 0
        %v4056 = vsel %vm4051, %v4021, 0
        %v4059 = vsel %vm4051, %v4022, 0
        %v4062 = vsel %vm4051, %v4023, 0
        %v4065 = vsel %vm4051, %v4024, 0
        %v4068 = vsel %vm4051, %v4025, 0
        %v4071 = vsel %vm4051, %v4026, 0
        %v4074 = vsel %vm4051, %v4027, 0
        %v4077 = vsel %vm4051, %v4028, 0
        %v4080 = vsel %vm4051, %v4029, 0
        %v4083 = vsel %vm4051, %v4030, 0
        %v4086 = vsel %vm4051, %v4031, 0
        %v4089 = vsel %vm4051, %v4032, 0
        %v4092 = vsel %vm4051, %v4033, 0
        %v4095 = vsel %vm4051, %v4034, 0
        %v4098 = vsel %vm4051, %v4035, 0
        %vm4100 = vcmask 1041408
        %v4102 = vsel %vm4100, %v4048, 0
        %4104 = vmatprep.subr.bf16.mxu0 0
        %4105 = vmatpush1.bf16.msra.mxu0 0
        %4106 = vmatprep.subr.bf16.mxu0 0
        %4107 = vmatpush1.bf16.msra.mxu0 0
        %4108 = vmatprep.subr.bf16.mxu0 0
        %4109 = vmatpush1.bf16.msra.mxu0 0
        %4110 = vmatprep.subr.bf16.mxu0 0
        %4111 = vmatpush1.bf16.msra.mxu0 0
        %4112 = vmatprep.subr.bf16.mxu0 0
        %4113 = vmatpush1.bf16.msra.mxu0 0
        %4114 = vmatprep.subr.bf16.mxu0 0
        %4115 = vmatpush1.bf16.msra.mxu0 %v4102
        %4116 = vmatprep.subr.bf16.mxu0 0
        %4117 = vmatpush1.bf16.msra.mxu0 %v4047
        %4118 = vmatprep.subr.bf16.mxu0 0
        %4119 = vmatpush1.bf16.msra.mxu0 %v4046
        %4120 = vmatprep.subr.bf16.mxu0 0
        %4121 = vmatpush2.bf16.msra.mxu0 0
        %4122 = vmatprep.subr.bf16.mxu0 0
        %4123 = vmatpush2.bf16.msra.mxu0 0
        %4124 = vmatprep.subr.bf16.mxu0 0
        %4125 = vmatpush2.bf16.msra.mxu0 0
        %4126 = vmatprep.subr.bf16.mxu0 0
        %4127 = vmatpush2.bf16.msra.mxu0 0
        %4128 = vmatprep.subr.bf16.mxu0 0
        %4129 = vmatpush2.bf16.msra.mxu0 0
        %4130 = vmatprep.subr.bf16.mxu0 0
        %4131 = vmatpush2.bf16.msra.mxu0 0
        %4132 = vmatprep.subr.bf16.mxu0 0
        %4133 = vmatpush2.bf16.msra.mxu0 0
        %4134 = vmatprep.subr.bf16.mxu0 0
        %4135 = vmatpush2.bf16.msra.mxu0 0
        %4136 = vmatprep.mubr.bf16.mxu0 0
        %4137 = vmatmul.mubr.bf16.gmra.mxu0 %v4053
        %v4138 = vpop.f32.mrf.mxu0
        %v4139 = vadd.f32 0.0, %v4138
        %v4140 = vpop.f32.mrf.mxu0
        %v4141 = vpop.f32.mrf.mxu0
        %v4142 = vadd.f32 0.0, %v4141
        %v4143 = vpop.f32.mrf.mxu0
        %4144 = vmatprep.mubr.bf16.mxu0 0
        %4145 = vmatmul.mubr.bf16.gmra.mxu0 %v4056
        %v4146 = vpop.f32.mrf.mxu0
        %v4147 = vadd.f32 0.0, %v4146
        %v4148 = vpop.f32.mrf.mxu0
        %v4149 = vpop.f32.mrf.mxu0
        %v4150 = vadd.f32 0.0, %v4149
        %v4151 = vpop.f32.mrf.mxu0
        %4152 = vmatprep.mubr.bf16.mxu0 0
        %4153 = vmatmul.mubr.bf16.gmra.mxu0 %v4059
        %v4154 = vpop.f32.mrf.mxu0
        %v4155 = vadd.f32 0.0, %v4154
        %v4156 = vpop.f32.mrf.mxu0
        %v4157 = vpop.f32.mrf.mxu0
        %v4158 = vadd.f32 0.0, %v4157
        %v4159 = vpop.f32.mrf.mxu0
        %4160 = vmatprep.mubr.bf16.mxu0 0
        %4161 = vmatmul.mubr.bf16.gmra.mxu0 %v4062
        %v4162 = vpop.f32.mrf.mxu0
        %v4163 = vadd.f32 0.0, %v4162
        %v4164 = vpop.f32.mrf.mxu0
        %v4165 = vpop.f32.mrf.mxu0
        %v4166 = vadd.f32 0.0, %v4165
        %v4167 = vpop.f32.mrf.mxu0
        %4168 = vmatprep.mubr.bf16.mxu0 0
        %4169 = vmatmul.mubr.bf16.gmra.mxu0 %v4065
        %v4170 = vpop.f32.mrf.mxu0
        %v4171 = vadd.f32 0.0, %v4170
        %v4172 = vpop.f32.mrf.mxu0
        %v4173 = vpop.f32.mrf.mxu0
        %v4174 = vadd.f32 0.0, %v4173
        %v4175 = vpop.f32.mrf.mxu0
        %4176 = vmatprep.mubr.bf16.mxu0 0
        %4177 = vmatmul.mubr.bf16.gmra.mxu0 %v4068
        %v4178 = vpop.f32.mrf.mxu0
        %v4179 = vadd.f32 0.0, %v4178
        %v4180 = vpop.f32.mrf.mxu0
        %v4181 = vpop.f32.mrf.mxu0
        %v4182 = vadd.f32 0.0, %v4181
        %v4183 = vpop.f32.mrf.mxu0
        %4184 = vmatprep.mubr.bf16.mxu0 0
        %4185 = vmatmul.mubr.bf16.gmra.mxu0 %v4071
        %v4186 = vpop.f32.mrf.mxu0
        %v4187 = vadd.f32 0.0, %v4186
        %v4188 = vpop.f32.mrf.mxu0
        %v4189 = vpop.f32.mrf.mxu0
        %v4190 = vadd.f32 0.0, %v4189
        %v4191 = vpop.f32.mrf.mxu0
        %4192 = vmatprep.mubr.bf16.mxu0 0
        %4193 = vmatmul.mubr.bf16.gmra.mxu0 %v4074
        %v4194 = vpop.f32.mrf.mxu0
        %v4195 = vadd.f32 0.0, %v4194
        %v4196 = vpop.f32.mrf.mxu0
        %v4197 = vpop.f32.mrf.mxu0
        %v4198 = vadd.f32 0.0, %v4197
        %v4199 = vpop.f32.mrf.mxu0
        %4200 = vmatprep.mubr.bf16.mxu0 0
        %4201 = vmatmul.mubr.bf16.gmra.mxu0 %v4077
        %v4202 = vpop.f32.mrf.mxu0
        %v4203 = vadd.f32 0.0, %v4202
        %v4204 = vpop.f32.mrf.mxu0
        %v4205 = vpop.f32.mrf.mxu0
        %v4206 = vadd.f32 0.0, %v4205
        %v4207 = vpop.f32.mrf.mxu0
        %4208 = vmatprep.mubr.bf16.mxu0 0
        %4209 = vmatmul.mubr.bf16.gmra.mxu0 %v4080
        %v4210 = vpop.f32.mrf.mxu0
        %v4211 = vadd.f32 0.0, %v4210
        %v4212 = vpop.f32.mrf.mxu0
        %v4213 = vpop.f32.mrf.mxu0
        %v4214 = vadd.f32 0.0, %v4213
        %v4215 = vpop.f32.mrf.mxu0
        %4216 = vmatprep.mubr.bf16.mxu0 0
        %4217 = vmatmul.mubr.bf16.gmra.mxu0 %v4083
        %v4218 = vpop.f32.mrf.mxu0
        %v4219 = vadd.f32 0.0, %v4218
        %v4220 = vpop.f32.mrf.mxu0
        %v4221 = vpop.f32.mrf.mxu0
        %v4222 = vadd.f32 0.0, %v4221
        %v4223 = vpop.f32.mrf.mxu0
        %4224 = vmatprep.mubr.bf16.mxu0 0
        %4225 = vmatmul.mubr.bf16.gmra.mxu0 %v4086
        %v4226 = vpop.f32.mrf.mxu0
        %v4227 = vadd.f32 0.0, %v4226
        %v4228 = vpop.f32.mrf.mxu0
        %v4229 = vpop.f32.mrf.mxu0
        %v4230 = vadd.f32 0.0, %v4229
        %v4231 = vpop.f32.mrf.mxu0
        %4232 = vmatprep.mubr.bf16.mxu0 0
        %4233 = vmatmul.mubr.bf16.gmra.mxu0 %v4089
        %v4234 = vpop.f32.mrf.mxu0
        %v4235 = vadd.f32 0.0, %v4234
        %v4236 = vpop.f32.mrf.mxu0
        %v4237 = vpop.f32.mrf.mxu0
        %v4238 = vadd.f32 0.0, %v4237
        %v4239 = vpop.f32.mrf.mxu0
        %4240 = vmatprep.mubr.bf16.mxu0 0
        %4241 = vmatmul.mubr.bf16.gmra.mxu0 %v4092
        %v4242 = vpop.f32.mrf.mxu0
        %v4243 = vadd.f32 0.0, %v4242
        %v4244 = vpop.f32.mrf.mxu0
        %v4245 = vpop.f32.mrf.mxu0
        %v4246 = vadd.f32 0.0, %v4245
        %v4247 = vpop.f32.mrf.mxu0
        %4248 = vmatprep.mubr.bf16.mxu0 0
        %4249 = vmatmul.mubr.bf16.gmra.mxu0 %v4095
        %v4250 = vpop.f32.mrf.mxu0
        %v4251 = vadd.f32 0.0, %v4250
        %v4252 = vpop.f32.mrf.mxu0
        %v4253 = vpop.f32.mrf.mxu0
        %v4254 = vadd.f32 0.0, %v4253
        %v4255 = vpop.f32.mrf.mxu0
        %4256 = vmatprep.mubr.bf16.mxu0 0
        %4257 = vmatmul.mubr.bf16.gmra.mxu0 %v4098
        %v4258 = vpop.f32.mrf.mxu0
        %v4259 = vadd.f32 0.0, %v4258
        %v4260 = vpop.f32.mrf.mxu0
        %v4261 = vpop.f32.mrf.mxu0
        %v4262 = vadd.f32 0.0, %v4261
        %v4263 = vpop.f32.mrf.mxu0
        %4264 = vdwg.mxu0
        %v4265 = vld [vmem:[%s3] sm:$0x1]
        %v4266 = vlaneseq
        %v4267 = vshrl.u32 %v4266, 7
        %v4268 = vsub.s32 0, %v4267
        %v4269 = vrot.slane %v4265, %v4268
        %v4270 = vmul.f32 %v4139, %v4269
        %v4271 = vmul.f32 %v4142, %v4269
        %v4272 = vmul.f32 %v4147, %v4269
        %v4273 = vmul.f32 %v4150, %v4269
        %v4274 = vmul.f32 %v4155, %v4269
        %v4275 = vmul.f32 %v4158, %v4269
        %v4276 = vmul.f32 %v4163, %v4269
        %v4277 = vmul.f32 %v4166, %v4269
        %v4278 = vmul.f32 %v4171, %v4269
        %v4279 = vmul.f32 %v4174, %v4269
        %v4280 = vmul.f32 %v4179, %v4269
        %v4281 = vmul.f32 %v4182, %v4269
        %v4282 = vmul.f32 %v4187, %v4269
        %v4283 = vmul.f32 %v4190, %v4269
        %v4284 = vmul.f32 %v4195, %v4269
        %v4285 = vmul.f32 %v4198, %v4269
        %v4286 = vmul.f32 %v4203, %v4269
        %v4287 = vmul.f32 %v4206, %v4269
        %v4288 = vmul.f32 %v4211, %v4269
        %v4289 = vmul.f32 %v4214, %v4269
        %v4290 = vmul.f32 %v4219, %v4269
        %v4291 = vmul.f32 %v4222, %v4269
        %v4292 = vmul.f32 %v4227, %v4269
        %v4293 = vmul.f32 %v4230, %v4269
        %v4294 = vmul.f32 %v4235, %v4269
        %v4295 = vmul.f32 %v4238, %v4269
        %v4296 = vmul.f32 %v4243, %v4269
        %v4297 = vmul.f32 %v4246, %v4269
        %v4298 = vmul.f32 %v4251, %v4269
        %v4299 = vmul.f32 %v4254, %v4269
        %v4300 = vmul.f32 %v4259, %v4269
        %v4301 = vmul.f32 %v4262, %v4269
        %v4302 = vld [vmem:[%s3 + $0x1] sm:$0x1]
        %v4303 = vlaneseq
        %v4304 = vshrl.u32 %v4303, 7
        %v4305 = vsub.s32 0, %v4304
        %v4306 = vrot.slane %v4302, %v4305
        %v4307 = vadd.f32 %v4270, %v4306
        %v4308 = vadd.f32 %v4271, %v4306
        %v4309 = vadd.f32 %v4272, %v4306
        %v4310 = vadd.f32 %v4273, %v4306
        %v4311 = vadd.f32 %v4274, %v4306
        %v4312 = vadd.f32 %v4275, %v4306
        %v4313 = vadd.f32 %v4276, %v4306
        %v4314 = vadd.f32 %v4277, %v4306
        %v4315 = vadd.f32 %v4278, %v4306
        %v4316 = vadd.f32 %v4279, %v4306
        %v4317 = vadd.f32 %v4280, %v4306
        %v4318 = vadd.f32 %v4281, %v4306
        %v4319 = vadd.f32 %v4282, %v4306
        %v4320 = vadd.f32 %v4283, %v4306
        %v4321 = vadd.f32 %v4284, %v4306
        %v4322 = vadd.f32 %v4285, %v4306
        %v4323 = vadd.f32 %v4286, %v4306
        %v4324 = vadd.f32 %v4287, %v4306
        %v4325 = vadd.f32 %v4288, %v4306
        %v4326 = vadd.f32 %v4289, %v4306
        %v4327 = vadd.f32 %v4290, %v4306
        %v4328 = vadd.f32 %v4291, %v4306
        %v4329 = vadd.f32 %v4292, %v4306
        %v4330 = vadd.f32 %v4293, %v4306
        %v4331 = vadd.f32 %v4294, %v4306
        %v4332 = vadd.f32 %v4295, %v4306
        %v4333 = vadd.f32 %v4296, %v4306
        %v4334 = vadd.f32 %v4297, %v4306
        %v4335 = vadd.f32 %v4298, %v4306
        %v4336 = vadd.f32 %v4299, %v4306
        %v4337 = vadd.f32 %v4300, %v4306
        %v4338 = vadd.f32 %v4301, %v4306
        %v4339 = vmax.f32 %v4307, 0.0
        %v4340 = vmax.f32 %v4308, 0.0
        %v4341 = vmax.f32 %v4309, 0.0
        %v4342 = vmax.f32 %v4310, 0.0
        %v4343 = vmax.f32 %v4311, 0.0
        %v4344 = vmax.f32 %v4312, 0.0
        %v4345 = vmax.f32 %v4313, 0.0
        %v4346 = vmax.f32 %v4314, 0.0
        %v4347 = vmax.f32 %v4315, 0.0
        %v4348 = vmax.f32 %v4316, 0.0
        %v4349 = vmax.f32 %v4317, 0.0
        %v4350 = vmax.f32 %v4318, 0.0
        %v4351 = vmax.f32 %v4319, 0.0
        %v4352 = vmax.f32 %v4320, 0.0
        %v4353 = vmax.f32 %v4321, 0.0
        %v4354 = vmax.f32 %v4322, 0.0
        %v4355 = vmax.f32 %v4323, 0.0
        %v4356 = vmax.f32 %v4324, 0.0
        %v4357 = vmax.f32 %v4325, 0.0
        %v4358 = vmax.f32 %v4326, 0.0
        %v4359 = vmax.f32 %v4327, 0.0
        %v4360 = vmax.f32 %v4328, 0.0
        %v4361 = vmax.f32 %v4329, 0.0
        %v4362 = vmax.f32 %v4330, 0.0
        %v4363 = vmax.f32 %v4331, 0.0
        %v4364 = vmax.f32 %v4332, 0.0
        %v4365 = vmax.f32 %v4333, 0.0
        %v4366 = vmax.f32 %v4334, 0.0
        %v4367 = vmax.f32 %v4335, 0.0
        %v4368 = vmax.f32 %v4336, 0.0
        %v4369 = vmax.f32 %v4337, 0.0
        %v4370 = vmax.f32 %v4338, 0.0
        %4371 = vst [vmem:[#allocation3] sm:$0xf] 0
        %4372 = vst [vmem:[#allocation3 + $0x4] sm:$0xf] 0
        %4373 = vst [vmem:[#allocation3 + $0x8] sm:$0x1] 0
        %4374 = vst [vmem:[#allocation3 + $0xc] sm:$0xf] 0
        %4375 = vst [vmem:[#allocation3 + $0x10] sm:$0xf] 0
        %4376 = vst [vmem:[#allocation3 + $0x14] sm:$0x1] 0
        %4377 = vst [vmem:[#allocation3 + $0x18] sm:$0xf] 0
        %4378 = vst [vmem:[#allocation3 + $0x1c] sm:$0xf] 0
        %4379 = vst [vmem:[#allocation3 + $0x20] sm:$0x1] 0
        %4380 = vst [vmem:[#allocation3 + $0x24] sm:$0xf] 0
        %4381 = vst [vmem:[#allocation3 + $0x28] sm:$0xf] 0
        %4382 = vst [vmem:[#allocation3 + $0x2c] sm:$0x1] 0
        %4383 = vst [vmem:[#allocation3 + $0x30] sm:$0xf] 0
        %4384 = vst [vmem:[#allocation3 + $0x34] sm:$0xf] 0
        %4385 = vst [vmem:[#allocation3 + $0x38] sm:$0x1] 0
        %4386 = vst [vmem:[#allocation3 + $0x3c] sm:$0xf] 0
        %4387 = vst [vmem:[#allocation3 + $0x40] sm:$0xf] 0
        %4388 = vst [vmem:[#allocation3 + $0x44] sm:$0x1] 0
        %4389 = vst [vmem:[#allocation3 + $0x48] sm:$0xf] 0
        %4390 = vst [vmem:[#allocation3 + $0x4c] sm:$0xf] 0
        %4391 = vst [vmem:[#allocation3 + $0x50] sm:$0x1] 0
        %4392 = vst [vmem:[#allocation3 + $0x54] sm:$0xf] 0
        %4393 = vst [vmem:[#allocation3 + $0x58] sm:$0xf] 0
        %4394 = vst [vmem:[#allocation3 + $0x5c] sm:$0x1] 0
        %4395 = vst [vmem:[#allocation3 + $0x60] sm:$0xf] 0
        %4396 = vst [vmem:[#allocation3 + $0x64] sm:$0xf] 0
        %4397 = vst [vmem:[#allocation3 + $0x68] sm:$0x1] 0
        %4398 = vst [vmem:[#allocation3 + $0x6c] sm:$0xf] 0
        %4399 = vst [vmem:[#allocation3 + $0x70] sm:$0xf] 0
        %4400 = vst [vmem:[#allocation3 + $0x74] sm:$0x1] 0
        %4401 = vst [vmem:[#allocation3 + $0x78] sm:$0xf] 0
        %4402 = vst [vmem:[#allocation3 + $0x7c] sm:$0xf] 0
        %4403 = vst [vmem:[#allocation3 + $0x80] sm:$0x1] 0
        %4404 = vst [vmem:[#allocation3 + $0x84] sm:$0xf] 0
        %4405 = vst [vmem:[#allocation3 + $0x88] sm:$0xf] 0
        %4406 = vst [vmem:[#allocation3 + $0x8c] sm:$0x1] 0
        %4407 = vst [vmem:[#allocation3 + $0x90] sm:$0xf] 0
        %4408 = vst [vmem:[#allocation3 + $0x94] sm:$0xf] 0
        %4409 = vst [vmem:[#allocation3 + $0x98] sm:$0x1] 0
        %4410 = vst [vmem:[#allocation3 + $0x9c] sm:$0xf] 0
        %4411 = vst [vmem:[#allocation3 + $0xa0] sm:$0xf] 0
        %4412 = vst [vmem:[#allocation3 + $0xa4] sm:$0x1] 0
        %4413 = vst [vmem:[#allocation3 + $0xa8] sm:$0xf] 0
        %4414 = vst [vmem:[#allocation3 + $0xac] sm:$0xf] 0
        %4415 = vst [vmem:[#allocation3 + $0xb0] sm:$0x1] 0
        %4416 = vst [vmem:[#allocation3 + $0xb4] sm:$0xf] 0
        %4417 = vst [vmem:[#allocation3 + $0xb8] sm:$0xf] 0
        %4418 = vst [vmem:[#allocation3 + $0xbc] sm:$0x1] 0
        %4419 = vst [vmem:[#allocation3 + $0xc0] sm:$0xf] 0
        %4420 = vst [vmem:[#allocation3 + $0xc4] sm:$0xf] 0
        %4421 = vst [vmem:[#allocation3 + $0xc8] sm:$0x1] 0
        %4422 = vst [vmem:[#allocation3 + $0xcc] sm:$0xf] 0
        %4423 = vst [vmem:[#allocation3 + $0xd0] sm:$0xf] 0
        %4424 = vst [vmem:[#allocation3 + $0xd4] sm:$0x1] 0
        %v4425 = vpack.c.bf16 %v4340, %v4339
        %v4426 = vpack.c.bf16 %v4342, %v4341
        %v4427 = vpack.c.bf16 %v4344, %v4343
        %v4428 = vpack.c.bf16 %v4346, %v4345
        %v4429 = vpack.c.bf16 %v4348, %v4347
        %v4430 = vpack.c.bf16 %v4350, %v4349
        %v4431 = vpack.c.bf16 %v4352, %v4351
        %v4432 = vpack.c.bf16 %v4354, %v4353
        %v4433 = vpack.c.bf16 %v4356, %v4355
        %v4434 = vpack.c.bf16 %v4358, %v4357
        %v4435 = vpack.c.bf16 %v4360, %v4359
        %v4436 = vpack.c.bf16 %v4362, %v4361
        %v4437 = vpack.c.bf16 %v4364, %v4363
        %v4438 = vpack.c.bf16 %v4366, %v4365
        %v4439 = vpack.c.bf16 %v4368, %v4367
        %v4440 = vpack.c.bf16 %v4370, %v4369
        %v4457 = vunpack.c.l.b16 %v4425
        %v4458 = vunpack.c.h.b16 %v4425
        %v4459 = vunpack.c.l.b16 %v4426
        %v4460 = vunpack.c.h.b16 %v4426
        %v4461 = vunpack.c.l.b16 %v4427
        %v4462 = vunpack.c.h.b16 %v4427
        %v4463 = vunpack.c.l.b16 %v4428
        %v4464 = vunpack.c.h.b16 %v4428
        %v4465 = vunpack.c.l.b16 %v4429
        %v4466 = vunpack.c.h.b16 %v4429
        %v4467 = vunpack.c.l.b16 %v4430
        %v4468 = vunpack.c.h.b16 %v4430
        %v4469 = vunpack.c.l.b16 %v4431
        %v4470 = vunpack.c.h.b16 %v4431
        %v4471 = vunpack.c.l.b16 %v4432
        %v4472 = vunpack.c.h.b16 %v4432
        %v4473 = vunpack.c.l.b16 %v4433
        %v4474 = vunpack.c.h.b16 %v4433
        %v4475 = vunpack.c.l.b16 %v4434
        %v4476 = vunpack.c.h.b16 %v4434
        %v4477 = vunpack.c.l.b16 %v4435
        %v4478 = vunpack.c.h.b16 %v4435
        %v4479 = vunpack.c.l.b16 %v4436
        %v4480 = vunpack.c.h.b16 %v4436
        %v4481 = vunpack.c.l.b16 %v4437
        %v4482 = vunpack.c.h.b16 %v4437
        %v4483 = vunpack.c.l.b16 %v4438
        %v4484 = vunpack.c.h.b16 %v4438
        %v4485 = vunpack.c.l.b16 %v4439
        %v4486 = vunpack.c.h.b16 %v4439
        %v4487 = vunpack.c.l.b16 %v4440
        %v4488 = vunpack.c.h.b16 %v4440
        %v4489 = vpack.c.b16 %v4457, %v4457
        %v4490 = vpack.c.b16 %v4458, %v4458
        %v4491 = vpack.c.b16 %v4459, %v4459
        %v4492 = vpack.c.b16 %v4460, %v4460
        %v4493 = vpack.c.b16 %v4461, %v4461
        %v4494 = vpack.c.b16 %v4462, %v4462
        %v4495 = vpack.c.b16 %v4463, %v4463
        %v4496 = vpack.c.b16 %v4464, %v4464
        %v4497 = vpack.c.b16 %v4465, %v4465
        %v4498 = vpack.c.b16 %v4466, %v4466
        %v4499 = vpack.c.b16 %v4467, %v4467
        %v4500 = vpack.c.b16 %v4468, %v4468
        %v4501 = vpack.c.b16 %v4469, %v4469
        %v4502 = vpack.c.b16 %v4470, %v4470
        %v4503 = vpack.c.b16 %v4471, %v4471
        %v4504 = vpack.c.b16 %v4472, %v4472
        %v4505 = vpack.c.b16 %v4473, %v4473
        %v4506 = vpack.c.b16 %v4474, %v4474
        %v4507 = vpack.c.b16 %v4475, %v4475
        %v4508 = vpack.c.b16 %v4476, %v4476
        %v4509 = vpack.c.b16 %v4477, %v4477
        %v4510 = vpack.c.b16 %v4478, %v4478
        %v4511 = vpack.c.b16 %v4479, %v4479
        %v4512 = vpack.c.b16 %v4480, %v4480
        %v4513 = vpack.c.b16 %v4481, %v4481
        %v4514 = vpack.c.b16 %v4482, %v4482
        %v4515 = vpack.c.b16 %v4483, %v4483
        %v4516 = vpack.c.b16 %v4484, %v4484
        %v4517 = vpack.c.b16 %v4485, %v4485
        %v4518 = vpack.c.b16 %v4486, %v4486
        %v4519 = vpack.c.b16 %v4487, %v4487
        %v4520 = vpack.c.b16 %v4488, %v4488
        %v4522 = vshrl.u32 %v4489, 16
        %v4524 = vrot.slane %v4522, 7
        %v4525 = vshll.u32 %v4489, 16
        %v4527 = vor.u32 %v4524, %v4525
        %v4528 = vrot.slane %v4524, 4
        %v4530 = vshrl.u32 %v4490, 16
        %v4532 = vrot.slane %v4530, 7
        %v4533 = vshll.u32 %v4490, 16
        %v4535 = vor.u32 %v4532, %v4533
        %v4536 = vsel %vm329, %v4528, %v4535
        %v4537 = vrot.slane %v4532, 4
        %v4539 = vshrl.u32 %v4491, 16
        %v4541 = vrot.slane %v4539, 7
        %v4542 = vshll.u32 %v4491, 16
        %v4544 = vor.u32 %v4541, %v4542
        %v4545 = vrot.slane %v4541, 4
        %v4547 = vshrl.u32 %v4492, 16
        %v4549 = vrot.slane %v4547, 7
        %v4550 = vshll.u32 %v4492, 16
        %v4552 = vor.u32 %v4549, %v4550
        %v4553 = vsel %vm329, %v4545, %v4552
        %v4554 = vrot.slane %v4549, 4
        %v4556 = vshrl.u32 %v4493, 16
        %v4558 = vrot.slane %v4556, 7
        %v4559 = vshll.u32 %v4493, 16
        %v4561 = vor.u32 %v4558, %v4559
        %v4562 = vrot.slane %v4558, 4
        %v4564 = vshrl.u32 %v4494, 16
        %v4566 = vrot.slane %v4564, 7
        %v4567 = vshll.u32 %v4494, 16
        %v4569 = vor.u32 %v4566, %v4567
        %v4570 = vsel %vm329, %v4562, %v4569
        %v4571 = vrot.slane %v4566, 4
        %v4573 = vshrl.u32 %v4495, 16
        %v4575 = vrot.slane %v4573, 7
        %v4576 = vshll.u32 %v4495, 16
        %v4578 = vor.u32 %v4575, %v4576
        %v4579 = vrot.slane %v4575, 4
        %v4581 = vshrl.u32 %v4496, 16
        %v4583 = vrot.slane %v4581, 7
        %v4584 = vshll.u32 %v4496, 16
        %v4586 = vor.u32 %v4583, %v4584
        %v4587 = vsel %vm329, %v4579, %v4586
        %v4588 = vrot.slane %v4583, 4
        %v4590 = vshrl.u32 %v4497, 16
        %v4592 = vrot.slane %v4590, 7
        %v4593 = vshll.u32 %v4497, 16
        %v4595 = vor.u32 %v4592, %v4593
        %v4596 = vrot.slane %v4592, 4
        %v4598 = vshrl.u32 %v4498, 16
        %v4600 = vrot.slane %v4598, 7
        %v4601 = vshll.u32 %v4498, 16
        %v4603 = vor.u32 %v4600, %v4601
        %v4604 = vsel %vm329, %v4596, %v4603
        %v4605 = vrot.slane %v4600, 4
        %v4607 = vshrl.u32 %v4499, 16
        %v4609 = vrot.slane %v4607, 7
        %v4610 = vshll.u32 %v4499, 16
        %v4612 = vor.u32 %v4609, %v4610
        %v4613 = vrot.slane %v4609, 4
        %v4615 = vshrl.u32 %v4500, 16
        %v4617 = vrot.slane %v4615, 7
        %v4618 = vshll.u32 %v4500, 16
        %v4620 = vor.u32 %v4617, %v4618
        %v4621 = vsel %vm329, %v4613, %v4620
        %v4622 = vrot.slane %v4617, 4
        %v4624 = vshrl.u32 %v4501, 16
        %v4626 = vrot.slane %v4624, 7
        %v4627 = vshll.u32 %v4501, 16
        %v4629 = vor.u32 %v4626, %v4627
        %v4630 = vrot.slane %v4626, 4
        %v4632 = vshrl.u32 %v4502, 16
        %v4634 = vrot.slane %v4632, 7
        %v4635 = vshll.u32 %v4502, 16
        %v4637 = vor.u32 %v4634, %v4635
        %v4638 = vsel %vm329, %v4630, %v4637
        %v4639 = vrot.slane %v4634, 4
        %v4641 = vshrl.u32 %v4503, 16
        %v4643 = vrot.slane %v4641, 7
        %v4644 = vshll.u32 %v4503, 16
        %v4646 = vor.u32 %v4643, %v4644
        %v4647 = vrot.slane %v4643, 4
        %v4649 = vshrl.u32 %v4504, 16
        %v4651 = vrot.slane %v4649, 7
        %v4652 = vshll.u32 %v4504, 16
        %v4654 = vor.u32 %v4651, %v4652
        %v4655 = vsel %vm329, %v4647, %v4654
        %v4656 = vrot.slane %v4651, 4
        %v4658 = vshrl.u32 %v4505, 16
        %v4660 = vrot.slane %v4658, 7
        %v4661 = vshll.u32 %v4505, 16
        %v4663 = vor.u32 %v4660, %v4661
        %v4664 = vrot.slane %v4660, 4
        %v4666 = vshrl.u32 %v4506, 16
        %v4668 = vrot.slane %v4666, 7
        %v4669 = vshll.u32 %v4506, 16
        %v4671 = vor.u32 %v4668, %v4669
        %v4672 = vsel %vm329, %v4664, %v4671
        %v4673 = vrot.slane %v4668, 4
        %v4675 = vshrl.u32 %v4507, 16
        %v4677 = vrot.slane %v4675, 7
        %v4678 = vshll.u32 %v4507, 16
        %v4680 = vor.u32 %v4677, %v4678
        %v4681 = vrot.slane %v4677, 4
        %v4683 = vshrl.u32 %v4508, 16
        %v4685 = vrot.slane %v4683, 7
        %v4686 = vshll.u32 %v4508, 16
        %v4688 = vor.u32 %v4685, %v4686
        %v4689 = vsel %vm329, %v4681, %v4688
        %v4690 = vrot.slane %v4685, 4
        %v4692 = vshrl.u32 %v4509, 16
        %v4694 = vrot.slane %v4692, 7
        %v4695 = vshll.u32 %v4509, 16
        %v4697 = vor.u32 %v4694, %v4695
        %v4698 = vrot.slane %v4694, 4
        %v4700 = vshrl.u32 %v4510, 16
        %v4702 = vrot.slane %v4700, 7
        %v4703 = vshll.u32 %v4510, 16
        %v4705 = vor.u32 %v4702, %v4703
        %v4706 = vsel %vm329, %v4698, %v4705
        %v4707 = vrot.slane %v4702, 4
        %v4709 = vshrl.u32 %v4511, 16
        %v4711 = vrot.slane %v4709, 7
        %v4712 = vshll.u32 %v4511, 16
        %v4714 = vor.u32 %v4711, %v4712
        %v4715 = vrot.slane %v4711, 4
        %v4717 = vshrl.u32 %v4512, 16
        %v4719 = vrot.slane %v4717, 7
        %v4720 = vshll.u32 %v4512, 16
        %v4722 = vor.u32 %v4719, %v4720
        %v4723 = vsel %vm329, %v4715, %v4722
        %v4724 = vrot.slane %v4719, 4
        %v4726 = vshrl.u32 %v4513, 16
        %v4728 = vrot.slane %v4726, 7
        %v4729 = vshll.u32 %v4513, 16
        %v4731 = vor.u32 %v4728, %v4729
        %v4732 = vrot.slane %v4728, 4
        %v4734 = vshrl.u32 %v4514, 16
        %v4736 = vrot.slane %v4734, 7
        %v4737 = vshll.u32 %v4514, 16
        %v4739 = vor.u32 %v4736, %v4737
        %v4740 = vsel %vm329, %v4732, %v4739
        %v4741 = vrot.slane %v4736, 4
        %v4743 = vshrl.u32 %v4515, 16
        %v4745 = vrot.slane %v4743, 7
        %v4746 = vshll.u32 %v4515, 16
        %v4748 = vor.u32 %v4745, %v4746
        %v4749 = vrot.slane %v4745, 4
        %v4751 = vshrl.u32 %v4516, 16
        %v4753 = vrot.slane %v4751, 7
        %v4754 = vshll.u32 %v4516, 16
        %v4756 = vor.u32 %v4753, %v4754
        %v4757 = vsel %vm329, %v4749, %v4756
        %v4758 = vrot.slane %v4753, 4
        %v4760 = vshrl.u32 %v4517, 16
        %v4762 = vrot.slane %v4760, 7
        %v4763 = vshll.u32 %v4517, 16
        %v4765 = vor.u32 %v4762, %v4763
        %v4766 = vrot.slane %v4762, 4
        %v4768 = vshrl.u32 %v4518, 16
        %v4770 = vrot.slane %v4768, 7
        %v4771 = vshll.u32 %v4518, 16
        %v4773 = vor.u32 %v4770, %v4771
        %v4774 = vsel %vm329, %v4766, %v4773
        %v4775 = vrot.slane %v4770, 4
        %v4777 = vshrl.u32 %v4519, 16
        %v4779 = vrot.slane %v4777, 7
        %v4780 = vshll.u32 %v4519, 16
        %v4782 = vor.u32 %v4779, %v4780
        %v4783 = vrot.slane %v4779, 4
        %v4785 = vshrl.u32 %v4520, 16
        %v4787 = vrot.slane %v4785, 7
        %v4788 = vshll.u32 %v4520, 16
        %v4790 = vor.u32 %v4787, %v4788
        %v4791 = vsel %vm329, %v4783, %v4790
        %v4792 = vrot.slane %v4787, 4
        %s4841 = scalar_lea.vmem [#allocation3], 12
        %vm4842 = vcmask 1043456
        %vm4843 = vmand %vm4842, %vm652
        %v4844 = vld [vmem:[%s4841] sm:$0xf]
        %v4845 = vsel %vm4843, %v4527, %v4844
        %4846 = vst [vmem:[%s4841] sm:$0xf] %v4845
        %4847 = vst [vmem:[%s4841 + $0x4] sm:$0xf] %v4536
        %vm4848 = vcmask 1040384
        %vm4849 = vmand %vm4848, %vm327
        %v4850 = vld [vmem:[%s4841 + $0x8] sm:$0x1]
        %v4851 = vsel %vm4849, %v4537, %v4850
        %4852 = vst [vmem:[%s4841 + $0x8] sm:$0x1] %v4851
        %v4853 = vld [vmem:[%s4841 + $0xc] sm:$0xf]
        %v4854 = vsel %vm4843, %v4544, %v4853
        %4855 = vst [vmem:[%s4841 + $0xc] sm:$0xf] %v4854
        %4856 = vst [vmem:[%s4841 + $0x10] sm:$0xf] %v4553
        %v4857 = vld [vmem:[%s4841 + $0x14] sm:$0x1]
        %v4858 = vsel %vm4849, %v4554, %v4857
        %4859 = vst [vmem:[%s4841 + $0x14] sm:$0x1] %v4858
        %v4860 = vld [vmem:[%s4841 + $0x18] sm:$0xf]
        %v4861 = vsel %vm4843, %v4561, %v4860
        %4862 = vst [vmem:[%s4841 + $0x18] sm:$0xf] %v4861
        %4863 = vst [vmem:[%s4841 + $0x1c] sm:$0xf] %v4570
        %v4864 = vld [vmem:[%s4841 + $0x20] sm:$0x1]
        %v4865 = vsel %vm4849, %v4571, %v4864
        %4866 = vst [vmem:[%s4841 + $0x20] sm:$0x1] %v4865
        %v4867 = vld [vmem:[%s4841 + $0x24] sm:$0xf]
        %v4868 = vsel %vm4843, %v4578, %v4867
        %4869 = vst [vmem:[%s4841 + $0x24] sm:$0xf] %v4868
        %4870 = vst [vmem:[%s4841 + $0x28] sm:$0xf] %v4587
        %v4871 = vld [vmem:[%s4841 + $0x2c] sm:$0x1]
        %v4872 = vsel %vm4849, %v4588, %v4871
        %4873 = vst [vmem:[%s4841 + $0x2c] sm:$0x1] %v4872
        %v4874 = vld [vmem:[%s4841 + $0x30] sm:$0xf]
        %v4875 = vsel %vm4843, %v4595, %v4874
        %4876 = vst [vmem:[%s4841 + $0x30] sm:$0xf] %v4875
        %4877 = vst [vmem:[%s4841 + $0x34] sm:$0xf] %v4604
        %v4878 = vld [vmem:[%s4841 + $0x38] sm:$0x1]
        %v4879 = vsel %vm4849, %v4605, %v4878
        %4880 = vst [vmem:[%s4841 + $0x38] sm:$0x1] %v4879
        %v4881 = vld [vmem:[%s4841 + $0x3c] sm:$0xf]
        %v4882 = vsel %vm4843, %v4612, %v4881
        %4883 = vst [vmem:[%s4841 + $0x3c] sm:$0xf] %v4882
        %4884 = vst [vmem:[%s4841 + $0x40] sm:$0xf] %v4621
        %v4885 = vld [vmem:[%s4841 + $0x44] sm:$0x1]
        %v4886 = vsel %vm4849, %v4622, %v4885
        %4887 = vst [vmem:[%s4841 + $0x44] sm:$0x1] %v4886
        %v4888 = vld [vmem:[%s4841 + $0x48] sm:$0xf]
        %v4889 = vsel %vm4843, %v4629, %v4888
        %4890 = vst [vmem:[%s4841 + $0x48] sm:$0xf] %v4889
        %4891 = vst [vmem:[%s4841 + $0x4c] sm:$0xf] %v4638
        %v4892 = vld [vmem:[%s4841 + $0x50] sm:$0x1]
        %v4893 = vsel %vm4849, %v4639, %v4892
        %4894 = vst [vmem:[%s4841 + $0x50] sm:$0x1] %v4893
        %v4895 = vld [vmem:[%s4841 + $0x54] sm:$0xf]
        %v4896 = vsel %vm4843, %v4646, %v4895
        %4897 = vst [vmem:[%s4841 + $0x54] sm:$0xf] %v4896
        %4898 = vst [vmem:[%s4841 + $0x58] sm:$0xf] %v4655
        %v4899 = vld [vmem:[%s4841 + $0x5c] sm:$0x1]
        %v4900 = vsel %vm4849, %v4656, %v4899
        %4901 = vst [vmem:[%s4841 + $0x5c] sm:$0x1] %v4900
        %v4902 = vld [vmem:[%s4841 + $0x60] sm:$0xf]
        %v4903 = vsel %vm4843, %v4663, %v4902
        %4904 = vst [vmem:[%s4841 + $0x60] sm:$0xf] %v4903
        %4905 = vst [vmem:[%s4841 + $0x64] sm:$0xf] %v4672
        %v4906 = vld [vmem:[%s4841 + $0x68] sm:$0x1]
        %v4907 = vsel %vm4849, %v4673, %v4906
        %4908 = vst [vmem:[%s4841 + $0x68] sm:$0x1] %v4907
        %v4909 = vld [vmem:[%s4841 + $0x6c] sm:$0xf]
        %v4910 = vsel %vm4843, %v4680, %v4909
        %4911 = vst [vmem:[%s4841 + $0x6c] sm:$0xf] %v4910
        %4912 = vst [vmem:[%s4841 + $0x70] sm:$0xf] %v4689
        %v4913 = vld [vmem:[%s4841 + $0x74] sm:$0x1]
        %v4914 = vsel %vm4849, %v4690, %v4913
        %4915 = vst [vmem:[%s4841 + $0x74] sm:$0x1] %v4914
        %v4916 = vld [vmem:[%s4841 + $0x78] sm:$0xf]
        %v4917 = vsel %vm4843, %v4697, %v4916
        %4918 = vst [vmem:[%s4841 + $0x78] sm:$0xf] %v4917
        %4919 = vst [vmem:[%s4841 + $0x7c] sm:$0xf] %v4706
        %v4920 = vld [vmem:[%s4841 + $0x80] sm:$0x1]
        %v4921 = vsel %vm4849, %v4707, %v4920
        %4922 = vst [vmem:[%s4841 + $0x80] sm:$0x1] %v4921
        %v4923 = vld [vmem:[%s4841 + $0x84] sm:$0xf]
        %v4924 = vsel %vm4843, %v4714, %v4923
        %4925 = vst [vmem:[%s4841 + $0x84] sm:$0xf] %v4924
        %4926 = vst [vmem:[%s4841 + $0x88] sm:$0xf] %v4723
        %v4927 = vld [vmem:[%s4841 + $0x8c] sm:$0x1]
        %v4928 = vsel %vm4849, %v4724, %v4927
        %4929 = vst [vmem:[%s4841 + $0x8c] sm:$0x1] %v4928
        %v4930 = vld [vmem:[%s4841 + $0x90] sm:$0xf]
        %v4931 = vsel %vm4843, %v4731, %v4930
        %4932 = vst [vmem:[%s4841 + $0x90] sm:$0xf] %v4931
        %4933 = vst [vmem:[%s4841 + $0x94] sm:$0xf] %v4740
        %v4934 = vld [vmem:[%s4841 + $0x98] sm:$0x1]
        %v4935 = vsel %vm4849, %v4741, %v4934
        %4936 = vst [vmem:[%s4841 + $0x98] sm:$0x1] %v4935
        %v4937 = vld [vmem:[%s4841 + $0x9c] sm:$0xf]
        %v4938 = vsel %vm4843, %v4748, %v4937
        %4939 = vst [vmem:[%s4841 + $0x9c] sm:$0xf] %v4938
        %4940 = vst [vmem:[%s4841 + $0xa0] sm:$0xf] %v4757
        %v4941 = vld [vmem:[%s4841 + $0xa4] sm:$0x1]
        %v4942 = vsel %vm4849, %v4758, %v4941
        %4943 = vst [vmem:[%s4841 + $0xa4] sm:$0x1] %v4942
        %v4944 = vld [vmem:[%s4841 + $0xa8] sm:$0xf]
        %v4945 = vsel %vm4843, %v4765, %v4944
        %4946 = vst [vmem:[%s4841 + $0xa8] sm:$0xf] %v4945
        %4947 = vst [vmem:[%s4841 + $0xac] sm:$0xf] %v4774
        %v4948 = vld [vmem:[%s4841 + $0xb0] sm:$0x1]
        %v4949 = vsel %vm4849, %v4775, %v4948
        %4950 = vst [vmem:[%s4841 + $0xb0] sm:$0x1] %v4949
        %v4951 = vld [vmem:[%s4841 + $0xb4] sm:$0xf]
        %v4952 = vsel %vm4843, %v4782, %v4951
        %4953 = vst [vmem:[%s4841 + $0xb4] sm:$0xf] %v4952
        %4954 = vst [vmem:[%s4841 + $0xb8] sm:$0xf] %v4791
        %v4955 = vld [vmem:[%s4841 + $0xbc] sm:$0x1]
        %v4956 = vsel %vm4849, %v4792, %v4955
        %4957 = vst [vmem:[%s4841 + $0xbc] sm:$0x1] %v4956
        %v4958 = vld [vmem:[%s650] sm:$0xf]
        %v4959 = vld [vmem:[%s650 + $0x4] sm:$0xf]
        %v4960 = vld [vmem:[%s650 + $0x8] sm:$0x1]
        %v4961 = vld [vmem:[%s650 + $0xc] sm:$0xf]
        %v4962 = vld [vmem:[%s650 + $0x10] sm:$0xf]
        %v4963 = vld [vmem:[%s650 + $0x14] sm:$0x1]
        %v4964 = vld [vmem:[%s650 + $0x18] sm:$0xf]
        %v4965 = vld [vmem:[%s650 + $0x1c] sm:$0xf]
        %v4966 = vld [vmem:[%s650 + $0x20] sm:$0x1]
        %v4967 = vld [vmem:[%s650 + $0x24] sm:$0xf]
        %v4968 = vld [vmem:[%s650 + $0x28] sm:$0xf]
        %v4969 = vld [vmem:[%s650 + $0x2c] sm:$0x1]
        %v4970 = vld [vmem:[%s650 + $0x30] sm:$0xf]
        %v4971 = vld [vmem:[%s650 + $0x34] sm:$0xf]
        %v4972 = vld [vmem:[%s650 + $0x38] sm:$0x1]
        %v4973 = vld [vmem:[%s650 + $0x3c] sm:$0xf]
        %v4974 = vld [vmem:[%s650 + $0x40] sm:$0xf]
        %v4975 = vld [vmem:[%s650 + $0x44] sm:$0x1]
        %v4976 = vld [vmem:[%s650 + $0x48] sm:$0xf]
        %v4977 = vld [vmem:[%s650 + $0x4c] sm:$0xf]
        %v4978 = vld [vmem:[%s650 + $0x50] sm:$0x1]
        %v4979 = vld [vmem:[%s650 + $0x54] sm:$0xf]
        %v4980 = vld [vmem:[%s650 + $0x58] sm:$0xf]
        %v4981 = vld [vmem:[%s650 + $0x5c] sm:$0x1]
        %v4982 = vld [vmem:[%s650 + $0x60] sm:$0xf]
        %v4983 = vld [vmem:[%s650 + $0x64] sm:$0xf]
        %v4984 = vld [vmem:[%s650 + $0x68] sm:$0x1]
        %v4985 = vld [vmem:[%s650 + $0x6c] sm:$0xf]
        %v4986 = vld [vmem:[%s650 + $0x70] sm:$0xf]
        %v4987 = vld [vmem:[%s650 + $0x74] sm:$0x1]
        %v4988 = vld [vmem:[%s650 + $0x78] sm:$0xf]
        %v4989 = vld [vmem:[%s650 + $0x7c] sm:$0xf]
        %v4990 = vld [vmem:[%s650 + $0x80] sm:$0x1]
        %v4991 = vld [vmem:[%s650 + $0x84] sm:$0xf]
        %v4992 = vld [vmem:[%s650 + $0x88] sm:$0xf]
        %v4993 = vld [vmem:[%s650 + $0x8c] sm:$0x1]
        %v4994 = vld [vmem:[%s650 + $0x90] sm:$0xf]
        %v4995 = vld [vmem:[%s650 + $0x94] sm:$0xf]
        %v4996 = vld [vmem:[%s650 + $0x98] sm:$0x1]
        %v4997 = vld [vmem:[%s650 + $0x9c] sm:$0xf]
        %v4998 = vld [vmem:[%s650 + $0xa0] sm:$0xf]
        %v4999 = vld [vmem:[%s650 + $0xa4] sm:$0x1]
        %v5000 = vld [vmem:[%s650 + $0xa8] sm:$0xf]
        %v5001 = vld [vmem:[%s650 + $0xac] sm:$0xf]
        %v5002 = vld [vmem:[%s650 + $0xb0] sm:$0x1]
        %v5003 = vld [vmem:[%s650 + $0xb4] sm:$0xf]
        %v5004 = vld [vmem:[%s650 + $0xb8] sm:$0xf]
        %v5005 = vld [vmem:[%s650 + $0xbc] sm:$0x1]
        %v5007 = vshrl.u32 %v4958, 16
        %v5009 = vrot.slane %v5007, 4
        %v5010 = vshll.u32 %v4958, 16
        %v5012 = vrot.slane %v5010, 5
        %v5013 = vor.u32 %v5009, %v5012
        %v5014 = vrot.slane %v5013, 4
        %v5016 = vshll.u32 %v4959, 16
        %v5018 = vrot.slane %v5016, 5
        %v5019 = vsel %vm882, %v5014, %v5018
        %v5020 = vshrl.u32 %v4959, 16
        %v5022 = vrot.slane %v5020, 4
        %v5023 = vor.u32 %v5022, %v5018
        %v5024 = vrot.slane %v5023, 4
        %v5026 = vshll.u32 %v4960, 16
        %v5028 = vrot.slane %v5026, 5
        %v5029 = vsel %vm882, %v5024, %v5028
        %v5031 = vshrl.u32 %v4961, 16
        %v5033 = vrot.slane %v5031, 4
        %v5034 = vshll.u32 %v4961, 16
        %v5036 = vrot.slane %v5034, 5
        %v5037 = vor.u32 %v5033, %v5036
        %v5038 = vrot.slane %v5037, 4
        %v5040 = vshll.u32 %v4962, 16
        %v5042 = vrot.slane %v5040, 5
        %v5043 = vsel %vm882, %v5038, %v5042
        %v5044 = vshrl.u32 %v4962, 16
        %v5046 = vrot.slane %v5044, 4
        %v5047 = vor.u32 %v5046, %v5042
        %v5048 = vrot.slane %v5047, 4
        %v5050 = vshll.u32 %v4963, 16
        %v5052 = vrot.slane %v5050, 5
        %v5053 = vsel %vm882, %v5048, %v5052
        %v5055 = vshrl.u32 %v4964, 16
        %v5057 = vrot.slane %v5055, 4
        %v5058 = vshll.u32 %v4964, 16
        %v5060 = vrot.slane %v5058, 5
        %v5061 = vor.u32 %v5057, %v5060
        %v5062 = vrot.slane %v5061, 4
        %v5064 = vshll.u32 %v4965, 16
        %v5066 = vrot.slane %v5064, 5
        %v5067 = vsel %vm882, %v5062, %v5066
        %v5068 = vshrl.u32 %v4965, 16
        %v5070 = vrot.slane %v5068, 4
        %v5071 = vor.u32 %v5070, %v5066
        %v5072 = vrot.slane %v5071, 4
        %v5074 = vshll.u32 %v4966, 16
        %v5076 = vrot.slane %v5074, 5
        %v5077 = vsel %vm882, %v5072, %v5076
        %v5079 = vshrl.u32 %v4967, 16
        %v5081 = vrot.slane %v5079, 4
        %v5082 = vshll.u32 %v4967, 16
        %v5084 = vrot.slane %v5082, 5
        %v5085 = vor.u32 %v5081, %v5084
        %v5086 = vrot.slane %v5085, 4
        %v5088 = vshll.u32 %v4968, 16
        %v5090 = vrot.slane %v5088, 5
        %v5091 = vsel %vm882, %v5086, %v5090
        %v5092 = vshrl.u32 %v4968, 16
        %v5094 = vrot.slane %v5092, 4
        %v5095 = vor.u32 %v5094, %v5090
        %v5096 = vrot.slane %v5095, 4
        %v5098 = vshll.u32 %v4969, 16
        %v5100 = vrot.slane %v5098, 5
        %v5101 = vsel %vm882, %v5096, %v5100
        %v5103 = vshrl.u32 %v4970, 16
        %v5105 = vrot.slane %v5103, 4
        %v5106 = vshll.u32 %v4970, 16
        %v5108 = vrot.slane %v5106, 5
        %v5109 = vor.u32 %v5105, %v5108
        %v5110 = vrot.slane %v5109, 4
        %v5112 = vshll.u32 %v4971, 16
        %v5114 = vrot.slane %v5112, 5
        %v5115 = vsel %vm882, %v5110, %v5114
        %v5116 = vshrl.u32 %v4971, 16
        %v5118 = vrot.slane %v5116, 4
        %v5119 = vor.u32 %v5118, %v5114
        %v5120 = vrot.slane %v5119, 4
        %v5122 = vshll.u32 %v4972, 16
        %v5124 = vrot.slane %v5122, 5
        %v5125 = vsel %vm882, %v5120, %v5124
        %v5127 = vshrl.u32 %v4973, 16
        %v5129 = vrot.slane %v5127, 4
        %v5130 = vshll.u32 %v4973, 16
        %v5132 = vrot.slane %v5130, 5
        %v5133 = vor.u32 %v5129, %v5132
        %v5134 = vrot.slane %v5133, 4
        %v5136 = vshll.u32 %v4974, 16
        %v5138 = vrot.slane %v5136, 5
        %v5139 = vsel %vm882, %v5134, %v5138
        %v5140 = vshrl.u32 %v4974, 16
        %v5142 = vrot.slane %v5140, 4
        %v5143 = vor.u32 %v5142, %v5138
        %v5144 = vrot.slane %v5143, 4
        %v5146 = vshll.u32 %v4975, 16
        %v5148 = vrot.slane %v5146, 5
        %v5149 = vsel %vm882, %v5144, %v5148
        %v5151 = vshrl.u32 %v4976, 16
        %v5153 = vrot.slane %v5151, 4
        %v5154 = vshll.u32 %v4976, 16
        %v5156 = vrot.slane %v5154, 5
        %v5157 = vor.u32 %v5153, %v5156
        %v5158 = vrot.slane %v5157, 4
        %v5160 = vshll.u32 %v4977, 16
        %v5162 = vrot.slane %v5160, 5
        %v5163 = vsel %vm882, %v5158, %v5162
        %v5164 = vshrl.u32 %v4977, 16
        %v5166 = vrot.slane %v5164, 4
        %v5167 = vor.u32 %v5166, %v5162
        %v5168 = vrot.slane %v5167, 4
        %v5170 = vshll.u32 %v4978, 16
        %v5172 = vrot.slane %v5170, 5
        %v5173 = vsel %vm882, %v5168, %v5172
        %v5175 = vshrl.u32 %v4979, 16
        %v5177 = vrot.slane %v5175, 4
        %v5178 = vshll.u32 %v4979, 16
        %v5180 = vrot.slane %v5178, 5
        %v5181 = vor.u32 %v5177, %v5180
        %v5182 = vrot.slane %v5181, 4
        %v5184 = vshll.u32 %v4980, 16
        %v5186 = vrot.slane %v5184, 5
        %v5187 = vsel %vm882, %v5182, %v5186
        %v5188 = vshrl.u32 %v4980, 16
        %v5190 = vrot.slane %v5188, 4
        %v5191 = vor.u32 %v5190, %v5186
        %v5192 = vrot.slane %v5191, 4
        %v5194 = vshll.u32 %v4981, 16
        %v5196 = vrot.slane %v5194, 5
        %v5197 = vsel %vm882, %v5192, %v5196
        %v5199 = vshrl.u32 %v4982, 16
        %v5201 = vrot.slane %v5199, 4
        %v5202 = vshll.u32 %v4982, 16
        %v5204 = vrot.slane %v5202, 5
        %v5205 = vor.u32 %v5201, %v5204
        %v5206 = vrot.slane %v5205, 4
        %v5208 = vshll.u32 %v4983, 16
        %v5210 = vrot.slane %v5208, 5
        %v5211 = vsel %vm882, %v5206, %v5210
        %v5212 = vshrl.u32 %v4983, 16
        %v5214 = vrot.slane %v5212, 4
        %v5215 = vor.u32 %v5214, %v5210
        %v5216 = vrot.slane %v5215, 4
        %v5218 = vshll.u32 %v4984, 16
        %v5220 = vrot.slane %v5218, 5
        %v5221 = vsel %vm882, %v5216, %v5220
        %v5223 = vshrl.u32 %v4985, 16
        %v5225 = vrot.slane %v5223, 4
        %v5226 = vshll.u32 %v4985, 16
        %v5228 = vrot.slane %v5226, 5
        %v5229 = vor.u32 %v5225, %v5228
        %v5230 = vrot.slane %v5229, 4
        %v5232 = vshll.u32 %v4986, 16
        %v5234 = vrot.slane %v5232, 5
        %v5235 = vsel %vm882, %v5230, %v5234
        %v5236 = vshrl.u32 %v4986, 16
        %v5238 = vrot.slane %v5236, 4
        %v5239 = vor.u32 %v5238, %v5234
        %v5240 = vrot.slane %v5239, 4
        %v5242 = vshll.u32 %v4987, 16
        %v5244 = vrot.slane %v5242, 5
        %v5245 = vsel %vm882, %v5240, %v5244
        %v5247 = vshrl.u32 %v4988, 16
        %v5249 = vrot.slane %v5247, 4
        %v5250 = vshll.u32 %v4988, 16
        %v5252 = vrot.slane %v5250, 5
        %v5253 = vor.u32 %v5249, %v5252
        %v5254 = vrot.slane %v5253, 4
        %v5256 = vshll.u32 %v4989, 16
        %v5258 = vrot.slane %v5256, 5
        %v5259 = vsel %vm882, %v5254, %v5258
        %v5260 = vshrl.u32 %v4989, 16
        %v5262 = vrot.slane %v5260, 4
        %v5263 = vor.u32 %v5262, %v5258
        %v5264 = vrot.slane %v5263, 4
        %v5266 = vshll.u32 %v4990, 16
        %v5268 = vrot.slane %v5266, 5
        %v5269 = vsel %vm882, %v5264, %v5268
        %v5271 = vshrl.u32 %v4991, 16
        %v5273 = vrot.slane %v5271, 4
        %v5274 = vshll.u32 %v4991, 16
        %v5276 = vrot.slane %v5274, 5
        %v5277 = vor.u32 %v5273, %v5276
        %v5278 = vrot.slane %v5277, 4
        %v5280 = vshll.u32 %v4992, 16
        %v5282 = vrot.slane %v5280, 5
        %v5283 = vsel %vm882, %v5278, %v5282
        %v5284 = vshrl.u32 %v4992, 16
        %v5286 = vrot.slane %v5284, 4
        %v5287 = vor.u32 %v5286, %v5282
        %v5288 = vrot.slane %v5287, 4
        %v5290 = vshll.u32 %v4993, 16
        %v5292 = vrot.slane %v5290, 5
        %v5293 = vsel %vm882, %v5288, %v5292
        %v5295 = vshrl.u32 %v4994, 16
        %v5297 = vrot.slane %v5295, 4
        %v5298 = vshll.u32 %v4994, 16
        %v5300 = vrot.slane %v5298, 5
        %v5301 = vor.u32 %v5297, %v5300
        %v5302 = vrot.slane %v5301, 4
        %v5304 = vshll.u32 %v4995, 16
        %v5306 = vrot.slane %v5304, 5
        %v5307 = vsel %vm882, %v5302, %v5306
        %v5308 = vshrl.u32 %v4995, 16
        %v5310 = vrot.slane %v5308, 4
        %v5311 = vor.u32 %v5310, %v5306
        %v5312 = vrot.slane %v5311, 4
        %v5314 = vshll.u32 %v4996, 16
        %v5316 = vrot.slane %v5314, 5
        %v5317 = vsel %vm882, %v5312, %v5316
        %v5319 = vshrl.u32 %v4997, 16
        %v5321 = vrot.slane %v5319, 4
        %v5322 = vshll.u32 %v4997, 16
        %v5324 = vrot.slane %v5322, 5
        %v5325 = vor.u32 %v5321, %v5324
        %v5326 = vrot.slane %v5325, 4
        %v5328 = vshll.u32 %v4998, 16
        %v5330 = vrot.slane %v5328, 5
        %v5331 = vsel %vm882, %v5326, %v5330
        %v5332 = vshrl.u32 %v4998, 16
        %v5334 = vrot.slane %v5332, 4
        %v5335 = vor.u32 %v5334, %v5330
        %v5336 = vrot.slane %v5335, 4
        %v5338 = vshll.u32 %v4999, 16
        %v5340 = vrot.slane %v5338, 5
        %v5341 = vsel %vm882, %v5336, %v5340
        %v5343 = vshrl.u32 %v5000, 16
        %v5345 = vrot.slane %v5343, 4
        %v5346 = vshll.u32 %v5000, 16
        %v5348 = vrot.slane %v5346, 5
        %v5349 = vor.u32 %v5345, %v5348
        %v5350 = vrot.slane %v5349, 4
        %v5352 = vshll.u32 %v5001, 16
        %v5354 = vrot.slane %v5352, 5
        %v5355 = vsel %vm882, %v5350, %v5354
        %v5356 = vshrl.u32 %v5001, 16
        %v5358 = vrot.slane %v5356, 4
        %v5359 = vor.u32 %v5358, %v5354
        %v5360 = vrot.slane %v5359, 4
        %v5362 = vshll.u32 %v5002, 16
        %v5364 = vrot.slane %v5362, 5
        %v5365 = vsel %vm882, %v5360, %v5364
        %v5367 = vshrl.u32 %v5003, 16
        %v5369 = vrot.slane %v5367, 4
        %v5370 = vshll.u32 %v5003, 16
        %v5372 = vrot.slane %v5370, 5
        %v5373 = vor.u32 %v5369, %v5372
        %v5374 = vrot.slane %v5373, 4
        %v5376 = vshll.u32 %v5004, 16
        %v5378 = vrot.slane %v5376, 5
        %v5379 = vsel %vm882, %v5374, %v5378
        %v5380 = vshrl.u32 %v5004, 16
        %v5382 = vrot.slane %v5380, 4
        %v5383 = vor.u32 %v5382, %v5378
        %v5384 = vrot.slane %v5383, 4
        %v5386 = vshll.u32 %v5005, 16
        %v5388 = vrot.slane %v5386, 5
        %v5389 = vsel %vm882, %v5384, %v5388
        %v5390 = vld [vmem:[%s4] sm:$0x3]
        %v5391 = vunpack.c.l.b16 %v5019
        %v5392 = vunpack.c.l.b16 %v5029
        %v5393 = vunpack.c.l.b16 %v5043
        %v5394 = vunpack.c.l.b16 %v5053
        %v5395 = vunpack.c.l.b16 %v5067
        %v5396 = vunpack.c.l.b16 %v5077
        %v5397 = vunpack.c.l.b16 %v5091
        %v5398 = vunpack.c.l.b16 %v5101
        %v5399 = vunpack.c.l.b16 %v5115
        %v5400 = vunpack.c.l.b16 %v5125
        %v5401 = vunpack.c.l.b16 %v5139
        %v5402 = vunpack.c.l.b16 %v5149
        %v5403 = vunpack.c.l.b16 %v5163
        %v5404 = vunpack.c.l.b16 %v5173
        %v5405 = vunpack.c.l.b16 %v5187
        %v5406 = vunpack.c.l.b16 %v5197
        %v5407 = vunpack.c.l.b16 %v5211
        %v5408 = vunpack.c.l.b16 %v5221
        %v5409 = vunpack.c.l.b16 %v5235
        %v5410 = vunpack.c.l.b16 %v5245
        %v5411 = vunpack.c.l.b16 %v5259
        %v5412 = vunpack.c.l.b16 %v5269
        %v5413 = vunpack.c.l.b16 %v5283
        %v5414 = vunpack.c.l.b16 %v5293
        %v5415 = vunpack.c.l.b16 %v5307
        %v5416 = vunpack.c.l.b16 %v5317
        %v5417 = vunpack.c.l.b16 %v5331
        %v5418 = vunpack.c.l.b16 %v5341
        %v5419 = vunpack.c.l.b16 %v5355
        %v5420 = vunpack.c.l.b16 %v5365
        %v5421 = vunpack.c.l.b16 %v5379
        %v5422 = vunpack.c.l.b16 %v5389
        %v5423 = vpack.c.b16 %v5392, %v5391
        %v5424 = vpack.c.b16 %v5394, %v5393
        %v5425 = vpack.c.b16 %v5396, %v5395
        %v5426 = vpack.c.b16 %v5398, %v5397
        %v5427 = vpack.c.b16 %v5400, %v5399
        %v5428 = vpack.c.b16 %v5402, %v5401
        %v5429 = vpack.c.b16 %v5404, %v5403
        %v5430 = vpack.c.b16 %v5406, %v5405
        %v5431 = vpack.c.b16 %v5408, %v5407
        %v5432 = vpack.c.b16 %v5410, %v5409
        %v5433 = vpack.c.b16 %v5412, %v5411
        %v5434 = vpack.c.b16 %v5414, %v5413
        %v5435 = vpack.c.b16 %v5416, %v5415
        %v5436 = vpack.c.b16 %v5418, %v5417
        %v5437 = vpack.c.b16 %v5420, %v5419
        %v5438 = vpack.c.b16 %v5422, %v5421
        %vm5439 = vcmask 31744
        %v5441 = vsel %vm5439, %v5423, 0
        %v5444 = vsel %vm5439, %v5424, 0
        %v5447 = vsel %vm5439, %v5425, 0
        %v5450 = vsel %vm5439, %v5426, 0
        %v5453 = vsel %vm5439, %v5427, 0
        %v5456 = vsel %vm5439, %v5428, 0
        %v5459 = vsel %vm5439, %v5429, 0
        %v5462 = vsel %vm5439, %v5430, 0
        %v5465 = vsel %vm5439, %v5431, 0
        %v5468 = vsel %vm5439, %v5432, 0
        %v5471 = vsel %vm5439, %v5433, 0
        %v5474 = vsel %vm5439, %v5434, 0
        %v5477 = vsel %vm5439, %v5435, 0
        %v5480 = vsel %vm5439, %v5436, 0
        %v5483 = vsel %vm5439, %v5437, 0
        %v5486 = vsel %vm5439, %v5438, 0
        %v5489 = vsel %vm4100, %v5390, 0
        %5491 = vmatprep.subr.bf16.mxu0 0
        %5492 = vmatpush1.bf16.msra.mxu0 0
        %5493 = vmatprep.subr.bf16.mxu0 0
        %5494 = vmatpush1.bf16.msra.mxu0 0
        %5495 = vmatprep.subr.bf16.mxu0 0
        %5496 = vmatpush1.bf16.msra.mxu0 0
        %5497 = vmatprep.subr.bf16.mxu0 0
        %5498 = vmatpush1.bf16.msra.mxu0 0
        %5499 = vmatprep.subr.bf16.mxu0 0
        %5500 = vmatpush1.bf16.msra.mxu0 0
        %5501 = vmatprep.subr.bf16.mxu0 0
        %5502 = vmatpush1.bf16.msra.mxu0 0
        %5503 = vmatprep.subr.bf16.mxu0 0
        %5504 = vmatpush1.bf16.msra.mxu0 0
        %5505 = vmatprep.subr.bf16.mxu0 0
        %5506 = vmatpush1.bf16.msra.mxu0 %v5489
        %5507 = vmatprep.subr.bf16.mxu0 0
        %5508 = vmatpush2.bf16.msra.mxu0 0
        %5509 = vmatprep.subr.bf16.mxu0 0
        %5510 = vmatpush2.bf16.msra.mxu0 0
        %5511 = vmatprep.subr.bf16.mxu0 0
        %5512 = vmatpush2.bf16.msra.mxu0 0
        %5513 = vmatprep.subr.bf16.mxu0 0
        %5514 = vmatpush2.bf16.msra.mxu0 0
        %5515 = vmatprep.subr.bf16.mxu0 0
        %5516 = vmatpush2.bf16.msra.mxu0 0
        %5517 = vmatprep.subr.bf16.mxu0 0
        %5518 = vmatpush2.bf16.msra.mxu0 0
        %5519 = vmatprep.subr.bf16.mxu0 0
        %5520 = vmatpush2.bf16.msra.mxu0 0
        %5521 = vmatprep.subr.bf16.mxu0 0
        %5522 = vmatpush2.bf16.msra.mxu0 0
        %5523 = vmatprep.mubr.bf16.mxu0 0
        %5524 = vmatmul.mubr.bf16.gmra.mxu0 %v5441
        %v5525 = vpop.f32.mrf.mxu0
        %v5526 = vadd.f32 0.0, %v5525
        %v5527 = vpop.f32.mrf.mxu0
        %v5528 = vpop.f32.mrf.mxu0
        %v5529 = vadd.f32 0.0, %v5528
        %v5530 = vpop.f32.mrf.mxu0
        %5531 = vmatprep.mubr.bf16.mxu0 0
        %5532 = vmatmul.mubr.bf16.gmra.mxu0 %v5444
        %v5533 = vpop.f32.mrf.mxu0
        %v5534 = vadd.f32 0.0, %v5533
        %v5535 = vpop.f32.mrf.mxu0
        %v5536 = vpop.f32.mrf.mxu0
        %v5537 = vadd.f32 0.0, %v5536
        %v5538 = vpop.f32.mrf.mxu0
        %5539 = vmatprep.mubr.bf16.mxu0 0
        %5540 = vmatmul.mubr.bf16.gmra.mxu0 %v5447
        %v5541 = vpop.f32.mrf.mxu0
        %v5542 = vadd.f32 0.0, %v5541
        %v5543 = vpop.f32.mrf.mxu0
        %v5544 = vpop.f32.mrf.mxu0
        %v5545 = vadd.f32 0.0, %v5544
        %v5546 = vpop.f32.mrf.mxu0
        %5547 = vmatprep.mubr.bf16.mxu0 0
        %5548 = vmatmul.mubr.bf16.gmra.mxu0 %v5450
        %v5549 = vpop.f32.mrf.mxu0
        %v5550 = vadd.f32 0.0, %v5549
        %v5551 = vpop.f32.mrf.mxu0
        %v5552 = vpop.f32.mrf.mxu0
        %v5553 = vadd.f32 0.0, %v5552
        %v5554 = vpop.f32.mrf.mxu0
        %5555 = vmatprep.mubr.bf16.mxu0 0
        %5556 = vmatmul.mubr.bf16.gmra.mxu0 %v5453
        %v5557 = vpop.f32.mrf.mxu0
        %v5558 = vadd.f32 0.0, %v5557
        %v5559 = vpop.f32.mrf.mxu0
        %v5560 = vpop.f32.mrf.mxu0
        %v5561 = vadd.f32 0.0, %v5560
        %v5562 = vpop.f32.mrf.mxu0
        %5563 = vmatprep.mubr.bf16.mxu0 0
        %5564 = vmatmul.mubr.bf16.gmra.mxu0 %v5456
        %v5565 = vpop.f32.mrf.mxu0
        %v5566 = vadd.f32 0.0, %v5565
        %v5567 = vpop.f32.mrf.mxu0
        %v5568 = vpop.f32.mrf.mxu0
        %v5569 = vadd.f32 0.0, %v5568
        %v5570 = vpop.f32.mrf.mxu0
        %5571 = vmatprep.mubr.bf16.mxu0 0
        %5572 = vmatmul.mubr.bf16.gmra.mxu0 %v5459
        %v5573 = vpop.f32.mrf.mxu0
        %v5574 = vadd.f32 0.0, %v5573
        %v5575 = vpop.f32.mrf.mxu0
        %v5576 = vpop.f32.mrf.mxu0
        %v5577 = vadd.f32 0.0, %v5576
        %v5578 = vpop.f32.mrf.mxu0
        %5579 = vmatprep.mubr.bf16.mxu0 0
        %5580 = vmatmul.mubr.bf16.gmra.mxu0 %v5462
        %v5581 = vpop.f32.mrf.mxu0
        %v5582 = vadd.f32 0.0, %v5581
        %v5583 = vpop.f32.mrf.mxu0
        %v5584 = vpop.f32.mrf.mxu0
        %v5585 = vadd.f32 0.0, %v5584
        %v5586 = vpop.f32.mrf.mxu0
        %5587 = vmatprep.mubr.bf16.mxu0 0
        %5588 = vmatmul.mubr.bf16.gmra.mxu0 %v5465
        %v5589 = vpop.f32.mrf.mxu0
        %v5590 = vadd.f32 0.0, %v5589
        %v5591 = vpop.f32.mrf.mxu0
        %v5592 = vpop.f32.mrf.mxu0
        %v5593 = vadd.f32 0.0, %v5592
        %v5594 = vpop.f32.mrf.mxu0
        %5595 = vmatprep.mubr.bf16.mxu0 0
        %5596 = vmatmul.mubr.bf16.gmra.mxu0 %v5468
        %v5597 = vpop.f32.mrf.mxu0
        %v5598 = vadd.f32 0.0, %v5597
        %v5599 = vpop.f32.mrf.mxu0
        %v5600 = vpop.f32.mrf.mxu0
        %v5601 = vadd.f32 0.0, %v5600
        %v5602 = vpop.f32.mrf.mxu0
        %5603 = vmatprep.mubr.bf16.mxu0 0
        %5604 = vmatmul.mubr.bf16.gmra.mxu0 %v5471
        %v5605 = vpop.f32.mrf.mxu0
        %v5606 = vadd.f32 0.0, %v5605
        %v5607 = vpop.f32.mrf.mxu0
        %v5608 = vpop.f32.mrf.mxu0
        %v5609 = vadd.f32 0.0, %v5608
        %v5610 = vpop.f32.mrf.mxu0
        %5611 = vmatprep.mubr.bf16.mxu0 0
        %5612 = vmatmul.mubr.bf16.gmra.mxu0 %v5474
        %v5613 = vpop.f32.mrf.mxu0
        %v5614 = vadd.f32 0.0, %v5613
        %v5615 = vpop.f32.mrf.mxu0
        %v5616 = vpop.f32.mrf.mxu0
        %v5617 = vadd.f32 0.0, %v5616
        %v5618 = vpop.f32.mrf.mxu0
        %5619 = vmatprep.mubr.bf16.mxu0 0
        %5620 = vmatmul.mubr.bf16.gmra.mxu0 %v5477
        %v5621 = vpop.f32.mrf.mxu0
        %v5622 = vadd.f32 0.0, %v5621
        %v5623 = vpop.f32.mrf.mxu0
        %v5624 = vpop.f32.mrf.mxu0
        %v5625 = vadd.f32 0.0, %v5624
        %v5626 = vpop.f32.mrf.mxu0
        %5627 = vmatprep.mubr.bf16.mxu0 0
        %5628 = vmatmul.mubr.bf16.gmra.mxu0 %v5480
        %v5629 = vpop.f32.mrf.mxu0
        %v5630 = vadd.f32 0.0, %v5629
        %v5631 = vpop.f32.mrf.mxu0
        %v5632 = vpop.f32.mrf.mxu0
        %v5633 = vadd.f32 0.0, %v5632
        %v5634 = vpop.f32.mrf.mxu0
        %5635 = vmatprep.mubr.bf16.mxu0 0
        %5636 = vmatmul.mubr.bf16.gmra.mxu0 %v5483
        %v5637 = vpop.f32.mrf.mxu0
        %v5638 = vadd.f32 0.0, %v5637
        %v5639 = vpop.f32.mrf.mxu0
        %v5640 = vpop.f32.mrf.mxu0
        %v5641 = vadd.f32 0.0, %v5640
        %v5642 = vpop.f32.mrf.mxu0
        %5643 = vmatprep.mubr.bf16.mxu0 0
        %5644 = vmatmul.mubr.bf16.gmra.mxu0 %v5486
        %v5645 = vpop.f32.mrf.mxu0
        %v5646 = vadd.f32 0.0, %v5645
        %v5647 = vpop.f32.mrf.mxu0
        %v5648 = vpop.f32.mrf.mxu0
        %v5649 = vadd.f32 0.0, %v5648
        %v5650 = vpop.f32.mrf.mxu0
        %5651 = vdwg.mxu0
        %v5652 = vld [vmem:[%s3 + $0x4] sm:$0x1]
        %v5653 = vlaneseq
        %v5654 = vshrl.u32 %v5653, 7
        %v5655 = vsub.s32 0, %v5654
        %v5656 = vrot.slane %v5652, %v5655
        %v5657 = vmul.f32 %v5526, %v5656
        %v5658 = vmul.f32 %v5529, %v5656
        %v5659 = vmul.f32 %v5534, %v5656
        %v5660 = vmul.f32 %v5537, %v5656
        %v5661 = vmul.f32 %v5542, %v5656
        %v5662 = vmul.f32 %v5545, %v5656
        %v5663 = vmul.f32 %v5550, %v5656
        %v5664 = vmul.f32 %v5553, %v5656
        %v5665 = vmul.f32 %v5558, %v5656
        %v5666 = vmul.f32 %v5561, %v5656
        %v5667 = vmul.f32 %v5566, %v5656
        %v5668 = vmul.f32 %v5569, %v5656
        %v5669 = vmul.f32 %v5574, %v5656
        %v5670 = vmul.f32 %v5577, %v5656
        %v5671 = vmul.f32 %v5582, %v5656
        %v5672 = vmul.f32 %v5585, %v5656
        %v5673 = vmul.f32 %v5590, %v5656
        %v5674 = vmul.f32 %v5593, %v5656
        %v5675 = vmul.f32 %v5598, %v5656
        %v5676 = vmul.f32 %v5601, %v5656
        %v5677 = vmul.f32 %v5606, %v5656
        %v5678 = vmul.f32 %v5609, %v5656
        %v5679 = vmul.f32 %v5614, %v5656
        %v5680 = vmul.f32 %v5617, %v5656
        %v5681 = vmul.f32 %v5622, %v5656
        %v5682 = vmul.f32 %v5625, %v5656
        %v5683 = vmul.f32 %v5630, %v5656
        %v5684 = vmul.f32 %v5633, %v5656
        %v5685 = vmul.f32 %v5638, %v5656
        %v5686 = vmul.f32 %v5641, %v5656
        %v5687 = vmul.f32 %v5646, %v5656
        %v5688 = vmul.f32 %v5649, %v5656
        %v5689 = vld [vmem:[%s3 + $0x5] sm:$0x1]
        %v5690 = vlaneseq
        %v5691 = vshrl.u32 %v5690, 7
        %v5692 = vsub.s32 0, %v5691
        %v5693 = vrot.slane %v5689, %v5692
        %v5694 = vadd.f32 %v5657, %v5693
        %v5695 = vadd.f32 %v5658, %v5693
        %v5696 = vadd.f32 %v5659, %v5693
        %v5697 = vadd.f32 %v5660, %v5693
        %v5698 = vadd.f32 %v5661, %v5693
        %v5699 = vadd.f32 %v5662, %v5693
        %v5700 = vadd.f32 %v5663, %v5693
        %v5701 = vadd.f32 %v5664, %v5693
        %v5702 = vadd.f32 %v5665, %v5693
        %v5703 = vadd.f32 %v5666, %v5693
        %v5704 = vadd.f32 %v5667, %v5693
        %v5705 = vadd.f32 %v5668, %v5693
        %v5706 = vadd.f32 %v5669, %v5693
        %v5707 = vadd.f32 %v5670, %v5693
        %v5708 = vadd.f32 %v5671, %v5693
        %v5709 = vadd.f32 %v5672, %v5693
        %v5710 = vadd.f32 %v5673, %v5693
        %v5711 = vadd.f32 %v5674, %v5693
        %v5712 = vadd.f32 %v5675, %v5693
        %v5713 = vadd.f32 %v5676, %v5693
        %v5714 = vadd.f32 %v5677, %v5693
        %v5715 = vadd.f32 %v5678, %v5693
        %v5716 = vadd.f32 %v5679, %v5693
        %v5717 = vadd.f32 %v5680, %v5693
        %v5718 = vadd.f32 %v5681, %v5693
        %v5719 = vadd.f32 %v5682, %v5693
        %v5720 = vadd.f32 %v5683, %v5693
        %v5721 = vadd.f32 %v5684, %v5693
        %v5722 = vadd.f32 %v5685, %v5693
        %v5723 = vadd.f32 %v5686, %v5693
        %v5724 = vadd.f32 %v5687, %v5693
        %v5725 = vadd.f32 %v5688, %v5693
        %5726 = vst [vmem:[#allocation5] sm:$0xff] %v5694
        %5727 = vst [vmem:[#allocation5 + $0x8] sm:$0xff] %v5695
        %5728 = vst [vmem:[#allocation5 + $0x10] sm:$0xff] %v5696
        %5729 = vst [vmem:[#allocation5 + $0x18] sm:$0xff] %v5697
        %5730 = vst [vmem:[#allocation5 + $0x20] sm:$0xff] %v5698
        %5731 = vst [vmem:[#allocation5 + $0x28] sm:$0xff] %v5699
        %5732 = vst [vmem:[#allocation5 + $0x30] sm:$0xff] %v5700
        %5733 = vst [vmem:[#allocation5 + $0x38] sm:$0xff] %v5701
        %5734 = vst [vmem:[#allocation5 + $0x40] sm:$0xff] %v5702
        %5735 = vst [vmem:[#allocation5 + $0x48] sm:$0xff] %v5703
        %5736 = vst [vmem:[#allocation5 + $0x50] sm:$0xff] %v5704
        %5737 = vst [vmem:[#allocation5 + $0x58] sm:$0xff] %v5705
        %5738 = vst [vmem:[#allocation5 + $0x60] sm:$0xff] %v5706
        %5739 = vst [vmem:[#allocation5 + $0x68] sm:$0xff] %v5707
        %5740 = vst [vmem:[#allocation5 + $0x70] sm:$0xff] %v5708
        %5741 = vst [vmem:[#allocation5 + $0x78] sm:$0xff] %v5709
        %5742 = vst [vmem:[#allocation5 + $0x80] sm:$0xff] %v5710
        %5743 = vst [vmem:[#allocation5 + $0x88] sm:$0xff] %v5711
        %5744 = vst [vmem:[#allocation5 + $0x90] sm:$0xff] %v5712
        %5745 = vst [vmem:[#allocation5 + $0x98] sm:$0xff] %v5713
        %5746 = vst [vmem:[#allocation5 + $0xa0] sm:$0xff] %v5714
        %5747 = vst [vmem:[#allocation5 + $0xa8] sm:$0xff] %v5715
        %5748 = vst [vmem:[#allocation5 + $0xb0] sm:$0xff] %v5716
        %5749 = vst [vmem:[#allocation5 + $0xb8] sm:$0xff] %v5717
        %5750 = vst [vmem:[#allocation5 + $0xc0] sm:$0xff] %v5718
        %5751 = vst [vmem:[#allocation5 + $0xc8] sm:$0xff] %v5719
        %5752 = vst [vmem:[#allocation5 + $0xd0] sm:$0xff] %v5720
        %5753 = vst [vmem:[#allocation5 + $0xd8] sm:$0xff] %v5721
        %5754 = vst [vmem:[#allocation5 + $0xe0] sm:$0xff] %v5722
        %5755 = vst [vmem:[#allocation5 + $0xe8] sm:$0xff] %v5723
        %5756 = vst [vmem:[#allocation5 + $0xf0] sm:$0xff] %v5724
        %5757 = vst [vmem:[#allocation5 + $0xf8] sm:$0xff] %v5725
        %v5758 = vld [vmem:[#allocation3] sm:$0xf]
        %v5759 = vld [vmem:[#allocation3 + $0x4] sm:$0xf]
        %v5760 = vld [vmem:[#allocation3 + $0xc] sm:$0xf]
        %v5761 = vld [vmem:[#allocation3 + $0x10] sm:$0xf]
        %v5762 = vld [vmem:[#allocation3 + $0x18] sm:$0xf]
        %v5763 = vld [vmem:[#allocation3 + $0x1c] sm:$0xf]
        %v5764 = vld [vmem:[#allocation3 + $0x24] sm:$0xf]
        %v5765 = vld [vmem:[#allocation3 + $0x28] sm:$0xf]
        %v5766 = vld [vmem:[#allocation3 + $0x30] sm:$0xf]
        %v5767 = vld [vmem:[#allocation3 + $0x34] sm:$0xf]
        %v5768 = vld [vmem:[#allocation3 + $0x3c] sm:$0xf]
        %v5769 = vld [vmem:[#allocation3 + $0x40] sm:$0xf]
        %v5770 = vld [vmem:[#allocation3 + $0x48] sm:$0xf]
        %v5771 = vld [vmem:[#allocation3 + $0x4c] sm:$0xf]
        %v5772 = vld [vmem:[#allocation3 + $0x54] sm:$0xf]
        %v5773 = vld [vmem:[#allocation3 + $0x58] sm:$0xf]
        %v5774 = vld [vmem:[#allocation3 + $0x60] sm:$0xf]
        %v5775 = vld [vmem:[#allocation3 + $0x64] sm:$0xf]
        %v5776 = vld [vmem:[#allocation3 + $0x6c] sm:$0xf]
        %v5777 = vld [vmem:[#allocation3 + $0x70] sm:$0xf]
        %v5778 = vld [vmem:[#allocation3 + $0x78] sm:$0xf]
        %v5779 = vld [vmem:[#allocation3 + $0x7c] sm:$0xf]
        %v5780 = vld [vmem:[#allocation3 + $0x84] sm:$0xf]
        %v5781 = vld [vmem:[#allocation3 + $0x88] sm:$0xf]
        %v5782 = vld [vmem:[#allocation3 + $0x90] sm:$0xf]
        %v5783 = vld [vmem:[#allocation3 + $0x94] sm:$0xf]
        %v5784 = vld [vmem:[#allocation3 + $0x9c] sm:$0xf]
        %v5785 = vld [vmem:[#allocation3 + $0xa0] sm:$0xf]
        %v5786 = vld [vmem:[#allocation3 + $0xa8] sm:$0xf]
        %v5787 = vld [vmem:[#allocation3 + $0xac] sm:$0xf]
        %v5788 = vld [vmem:[#allocation3 + $0xb4] sm:$0xf]
        %v5789 = vld [vmem:[#allocation3 + $0xb8] sm:$0xf]
        %5790 = vst [vmem:[#allocation4] sm:$0xf] %v5758
        %5791 = vst [vmem:[#allocation4 + $0x24] sm:$0xf] %v5759
        %5792 = vst [vmem:[#allocation4 + $0x48] sm:$0xf] %v5760
        %5793 = vst [vmem:[#allocation4 + $0x6c] sm:$0xf] %v5761
        %5794 = vst [vmem:[#allocation4 + $0x90] sm:$0xf] %v5762
        %5795 = vst [vmem:[#allocation4 + $0xb4] sm:$0xf] %v5763
        %5796 = vst [vmem:[#allocation4 + $0xd8] sm:$0xf] %v5764
        %5797 = vst [vmem:[#allocation4 + $0xfc] sm:$0xf] %v5765
        %5798 = vst [vmem:[#allocation4 + $0x120] sm:$0xf] %v5766
        %5799 = vst [vmem:[#allocation4 + $0x144] sm:$0xf] %v5767
        %5800 = vst [vmem:[#allocation4 + $0x168] sm:$0xf] %v5768
        %5801 = vst [vmem:[#allocation4 + $0x18c] sm:$0xf] %v5769
        %5802 = vst [vmem:[#allocation4 + $0x1b0] sm:$0xf] %v5770
        %5803 = vst [vmem:[#allocation4 + $0x1d4] sm:$0xf] %v5771
        %5804 = vst [vmem:[#allocation4 + $0x1f8] sm:$0xf] %v5772
        %5805 = vst [vmem:[#allocation4 + $0x21c] sm:$0xf] %v5773
        %5806 = vst [vmem:[#allocation4 + $0x240] sm:$0xf] %v5774
        %5807 = vst [vmem:[#allocation4 + $0x264] sm:$0xf] %v5775
        %5808 = vst [vmem:[#allocation4 + $0x288] sm:$0xf] %v5776
        %5809 = vst [vmem:[#allocation4 + $0x2ac] sm:$0xf] %v5777
        %5810 = vst [vmem:[#allocation4 + $0x2d0] sm:$0xf] %v5778
        %5811 = vst [vmem:[#allocation4 + $0x2f4] sm:$0xf] %v5779
        %5812 = vst [vmem:[#allocation4 + $0x318] sm:$0xf] %v5780
        %5813 = vst [vmem:[#allocation4 + $0x33c] sm:$0xf] %v5781
        %5814 = vst [vmem:[#allocation4 + $0x360] sm:$0xf] %v5782
        %5815 = vst [vmem:[#allocation4 + $0x384] sm:$0xf] %v5783
        %5816 = vst [vmem:[#allocation4 + $0x3a8] sm:$0xf] %v5784
        %5817 = vst [vmem:[#allocation4 + $0x3cc] sm:$0xf] %v5785
        %5818 = vst [vmem:[#allocation4 + $0x3f0] sm:$0xf] %v5786
        %5819 = vst [vmem:[#allocation4 + $0x414] sm:$0xf] %v5787
        %5820 = vst [vmem:[#allocation4 + $0x438] sm:$0xf] %v5788
        %5821 = vst [vmem:[#allocation4 + $0x45c] sm:$0xf] %v5789
        %v5822 = vld [vmem:[#allocation3] sm:$0xf]
        %v5823 = vld [vmem:[#allocation3 + $0x4] sm:$0xf]
        %v5824 = vld [vmem:[#allocation3 + $0x8] sm:$0x1]
        %v5825 = vld [vmem:[#allocation3 + $0xc] sm:$0xf]
        %v5826 = vld [vmem:[#allocation3 + $0x10] sm:$0xf]
        %v5827 = vld [vmem:[#allocation3 + $0x14] sm:$0x1]
        %v5828 = vld [vmem:[#allocation3 + $0x18] sm:$0xf]
        %v5829 = vld [vmem:[#allocation3 + $0x1c] sm:$0xf]
        %v5830 = vld [vmem:[#allocation3 + $0x20] sm:$0x1]
        %v5831 = vld [vmem:[#allocation3 + $0x24] sm:$0xf]
        %v5832 = vld [vmem:[#allocation3 + $0x28] sm:$0xf]
        %v5833 = vld [vmem:[#allocation3 + $0x2c] sm:$0x1]
        %v5834 = vld [vmem:[#allocation3 + $0x30] sm:$0xf]
        %v5835 = vld [vmem:[#allocation3 + $0x34] sm:$0xf]
        %v5836 = vld [vmem:[#allocation3 + $0x38] sm:$0x1]
        %v5837 = vld [vmem:[#allocation3 + $0x3c] sm:$0xf]
        %v5838 = vld [vmem:[#allocation3 + $0x40] sm:$0xf]
        %v5839 = vld [vmem:[#allocation3 + $0x44] sm:$0x1]
        %v5840 = vld [vmem:[#allocation3 + $0x48] sm:$0xf]
        %v5841 = vld [vmem:[#allocation3 + $0x4c] sm:$0xf]
        %v5842 = vld [vmem:[#allocation3 + $0x50] sm:$0x1]
        %v5843 = vld [vmem:[#allocation3 + $0x54] sm:$0xf]
        %v5844 = vld [vmem:[#allocation3 + $0x58] sm:$0xf]
        %v5845 = vld [vmem:[#allocation3 + $0x5c] sm:$0x1]
        %v5846 = vld [vmem:[#allocation3 + $0x60] sm:$0xf]
        %v5847 = vld [vmem:[#allocation3 + $0x64] sm:$0xf]
        %v5848 = vld [vmem:[#allocation3 + $0x68] sm:$0x1]
        %v5849 = vld [vmem:[#allocation3 + $0x6c] sm:$0xf]
        %v5850 = vld [vmem:[#allocation3 + $0x70] sm:$0xf]
        %v5851 = vld [vmem:[#allocation3 + $0x74] sm:$0x1]
        %v5852 = vld [vmem:[#allocation3 + $0x78] sm:$0xf]
        %v5853 = vld [vmem:[#allocation3 + $0x7c] sm:$0xf]
        %v5854 = vld [vmem:[#allocation3 + $0x80] sm:$0x1]
        %v5855 = vld [vmem:[#allocation3 + $0x84] sm:$0xf]
        %v5856 = vld [vmem:[#allocation3 + $0x88] sm:$0xf]
        %v5857 = vld [vmem:[#allocation3 + $0x8c] sm:$0x1]
        %v5858 = vld [vmem:[#allocation3 + $0x90] sm:$0xf]
        %v5859 = vld [vmem:[#allocation3 + $0x94] sm:$0xf]
        %v5860 = vld [vmem:[#allocation3 + $0x98] sm:$0x1]
        %v5861 = vld [vmem:[#allocation3 + $0x9c] sm:$0xf]
        %v5862 = vld [vmem:[#allocation3 + $0xa0] sm:$0xf]
        %v5863 = vld [vmem:[#allocation3 + $0xa4] sm:$0x1]
        %v5864 = vld [vmem:[#allocation3 + $0xa8] sm:$0xf]
        %v5865 = vld [vmem:[#allocation3 + $0xac] sm:$0xf]
        %v5866 = vld [vmem:[#allocation3 + $0xb0] sm:$0x1]
        %v5867 = vld [vmem:[#allocation3 + $0xb4] sm:$0xf]
        %v5868 = vld [vmem:[#allocation3 + $0xb8] sm:$0xf]
        %v5869 = vld [vmem:[#allocation3 + $0xbc] sm:$0x1]
        %v5871 = vshrl.u32 %v5822, 16
        %v5873 = vrot.slane %v5871, 4
        %v5874 = vshll.u32 %v5822, 16
        %v5876 = vrot.slane %v5874, 5
        %v5877 = vor.u32 %v5873, %v5876
        %v5878 = vrot.slane %v5877, 4
        %v5880 = vshll.u32 %v5823, 16
        %v5882 = vrot.slane %v5880, 5
        %v5883 = vsel %vm882, %v5878, %v5882
        %v5884 = vshrl.u32 %v5823, 16
        %v5886 = vrot.slane %v5884, 4
        %v5887 = vor.u32 %v5886, %v5882
        %v5888 = vrot.slane %v5887, 4
        %v5890 = vshll.u32 %v5824, 16
        %v5892 = vrot.slane %v5890, 5
        %v5893 = vsel %vm882, %v5888, %v5892
        %v5895 = vshrl.u32 %v5825, 16
        %v5897 = vrot.slane %v5895, 4
        %v5898 = vshll.u32 %v5825, 16
        %v5900 = vrot.slane %v5898, 5
        %v5901 = vor.u32 %v5897, %v5900
        %v5902 = vrot.slane %v5901, 4
        %v5904 = vshll.u32 %v5826, 16
        %v5906 = vrot.slane %v5904, 5
        %v5907 = vsel %vm882, %v5902, %v5906
        %v5908 = vshrl.u32 %v5826, 16
        %v5910 = vrot.slane %v5908, 4
        %v5911 = vor.u32 %v5910, %v5906
        %v5912 = vrot.slane %v5911, 4
        %v5914 = vshll.u32 %v5827, 16
        %v5916 = vrot.slane %v5914, 5
        %v5917 = vsel %vm882, %v5912, %v5916
        %v5919 = vshrl.u32 %v5828, 16
        %v5921 = vrot.slane %v5919, 4
        %v5922 = vshll.u32 %v5828, 16
        %v5924 = vrot.slane %v5922, 5
        %v5925 = vor.u32 %v5921, %v5924
        %v5926 = vrot.slane %v5925, 4
        %v5928 = vshll.u32 %v5829, 16
        %v5930 = vrot.slane %v5928, 5
        %v5931 = vsel %vm882, %v5926, %v5930
        %v5932 = vshrl.u32 %v5829, 16
        %v5934 = vrot.slane %v5932, 4
        %v5935 = vor.u32 %v5934, %v5930
        %v5936 = vrot.slane %v5935, 4
        %v5938 = vshll.u32 %v5830, 16
        %v5940 = vrot.slane %v5938, 5
        %v5941 = vsel %vm882, %v5936, %v5940
        %v5943 = vshrl.u32 %v5831, 16
        %v5945 = vrot.slane %v5943, 4
        %v5946 = vshll.u32 %v5831, 16
        %v5948 = vrot.slane %v5946, 5
        %v5949 = vor.u32 %v5945, %v5948
        %v5950 = vrot.slane %v5949, 4
        %v5952 = vshll.u32 %v5832, 16
        %v5954 = vrot.slane %v5952, 5
        %v5955 = vsel %vm882, %v5950, %v5954
        %v5956 = vshrl.u32 %v5832, 16
        %v5958 = vrot.slane %v5956, 4
        %v5959 = vor.u32 %v5958, %v5954
        %v5960 = vrot.slane %v5959, 4
        %v5962 = vshll.u32 %v5833, 16
        %v5964 = vrot.slane %v5962, 5
        %v5965 = vsel %vm882, %v5960, %v5964
        %v5967 = vshrl.u32 %v5834, 16
        %v5969 = vrot.slane %v5967, 4
        %v5970 = vshll.u32 %v5834, 16
        %v5972 = vrot.slane %v5970, 5
        %v5973 = vor.u32 %v5969, %v5972
        %v5974 = vrot.slane %v5973, 4
        %v5976 = vshll.u32 %v5835, 16
        %v5978 = vrot.slane %v5976, 5
        %v5979 = vsel %vm882, %v5974, %v5978
        %v5980 = vshrl.u32 %v5835, 16
        %v5982 = vrot.slane %v5980, 4
        %v5983 = vor.u32 %v5982, %v5978
        %v5984 = vrot.slane %v5983, 4
        %v5986 = vshll.u32 %v5836, 16
        %v5988 = vrot.slane %v5986, 5
        %v5989 = vsel %vm882, %v5984, %v5988
        %v5991 = vshrl.u32 %v5837, 16
        %v5993 = vrot.slane %v5991, 4
        %v5994 = vshll.u32 %v5837, 16
        %v5996 = vrot.slane %v5994, 5
        %v5997 = vor.u32 %v5993, %v5996
        %v5998 = vrot.slane %v5997, 4
        %v6000 = vshll.u32 %v5838, 16
        %v6002 = vrot.slane %v6000, 5
        %v6003 = vsel %vm882, %v5998, %v6002
        %v6004 = vshrl.u32 %v5838, 16
        %v6006 = vrot.slane %v6004, 4
        %v6007 = vor.u32 %v6006, %v6002
        %v6008 = vrot.slane %v6007, 4
        %v6010 = vshll.u32 %v5839, 16
        %v6012 = vrot.slane %v6010, 5
        %v6013 = vsel %vm882, %v6008, %v6012
        %v6015 = vshrl.u32 %v5840, 16
        %v6017 = vrot.slane %v6015, 4
        %v6018 = vshll.u32 %v5840, 16
        %v6020 = vrot.slane %v6018, 5
        %v6021 = vor.u32 %v6017, %v6020
        %v6022 = vrot.slane %v6021, 4
        %v6024 = vshll.u32 %v5841, 16
        %v6026 = vrot.slane %v6024, 5
        %v6027 = vsel %vm882, %v6022, %v6026
        %v6028 = vshrl.u32 %v5841, 16
        %v6030 = vrot.slane %v6028, 4
        %v6031 = vor.u32 %v6030, %v6026
        %v6032 = vrot.slane %v6031, 4
        %v6034 = vshll.u32 %v5842, 16
        %v6036 = vrot.slane %v6034, 5
        %v6037 = vsel %vm882, %v6032, %v6036
        %v6039 = vshrl.u32 %v5843, 16
        %v6041 = vrot.slane %v6039, 4
        %v6042 = vshll.u32 %v5843, 16
        %v6044 = vrot.slane %v6042, 5
        %v6045 = vor.u32 %v6041, %v6044
        %v6046 = vrot.slane %v6045, 4
        %v6048 = vshll.u32 %v5844, 16
        %v6050 = vrot.slane %v6048, 5
        %v6051 = vsel %vm882, %v6046, %v6050
        %v6052 = vshrl.u32 %v5844, 16
        %v6054 = vrot.slane %v6052, 4
        %v6055 = vor.u32 %v6054, %v6050
        %v6056 = vrot.slane %v6055, 4
        %v6058 = vshll.u32 %v5845, 16
        %v6060 = vrot.slane %v6058, 5
        %v6061 = vsel %vm882, %v6056, %v6060
        %v6063 = vshrl.u32 %v5846, 16
        %v6065 = vrot.slane %v6063, 4
        %v6066 = vshll.u32 %v5846, 16
        %v6068 = vrot.slane %v6066, 5
        %v6069 = vor.u32 %v6065, %v6068
        %v6070 = vrot.slane %v6069, 4
        %v6072 = vshll.u32 %v5847, 16
        %v6074 = vrot.slane %v6072, 5
        %v6075 = vsel %vm882, %v6070, %v6074
        %v6076 = vshrl.u32 %v5847, 16
        %v6078 = vrot.slane %v6076, 4
        %v6079 = vor.u32 %v6078, %v6074
        %v6080 = vrot.slane %v6079, 4
        %v6082 = vshll.u32 %v5848, 16
        %v6084 = vrot.slane %v6082, 5
        %v6085 = vsel %vm882, %v6080, %v6084
        %v6087 = vshrl.u32 %v5849, 16
        %v6089 = vrot.slane %v6087, 4
        %v6090 = vshll.u32 %v5849, 16
        %v6092 = vrot.slane %v6090, 5
        %v6093 = vor.u32 %v6089, %v6092
        %v6094 = vrot.slane %v6093, 4
        %v6096 = vshll.u32 %v5850, 16
        %v6098 = vrot.slane %v6096, 5
        %v6099 = vsel %vm882, %v6094, %v6098
        %v6100 = vshrl.u32 %v5850, 16
        %v6102 = vrot.slane %v6100, 4
        %v6103 = vor.u32 %v6102, %v6098
        %v6104 = vrot.slane %v6103, 4
        %v6106 = vshll.u32 %v5851, 16
        %v6108 = vrot.slane %v6106, 5
        %v6109 = vsel %vm882, %v6104, %v6108
        %v6111 = vshrl.u32 %v5852, 16
        %v6113 = vrot.slane %v6111, 4
        %v6114 = vshll.u32 %v5852, 16
        %v6116 = vrot.slane %v6114, 5
        %v6117 = vor.u32 %v6113, %v6116
        %v6118 = vrot.slane %v6117, 4
        %v6120 = vshll.u32 %v5853, 16
        %v6122 = vrot.slane %v6120, 5
        %v6123 = vsel %vm882, %v6118, %v6122
        %v6124 = vshrl.u32 %v5853, 16
        %v6126 = vrot.slane %v6124, 4
        %v6127 = vor.u32 %v6126, %v6122
        %v6128 = vrot.slane %v6127, 4
        %v6130 = vshll.u32 %v5854, 16
        %v6132 = vrot.slane %v6130, 5
        %v6133 = vsel %vm882, %v6128, %v6132
        %v6135 = vshrl.u32 %v5855, 16
        %v6137 = vrot.slane %v6135, 4
        %v6138 = vshll.u32 %v5855, 16
        %v6140 = vrot.slane %v6138, 5
        %v6141 = vor.u32 %v6137, %v6140
        %v6142 = vrot.slane %v6141, 4
        %v6144 = vshll.u32 %v5856, 16
        %v6146 = vrot.slane %v6144, 5
        %v6147 = vsel %vm882, %v6142, %v6146
        %v6148 = vshrl.u32 %v5856, 16
        %v6150 = vrot.slane %v6148, 4
        %v6151 = vor.u32 %v6150, %v6146
        %v6152 = vrot.slane %v6151, 4
        %v6154 = vshll.u32 %v5857, 16
        %v6156 = vrot.slane %v6154, 5
        %v6157 = vsel %vm882, %v6152, %v6156
        %v6159 = vshrl.u32 %v5858, 16
        %v6161 = vrot.slane %v6159, 4
        %v6162 = vshll.u32 %v5858, 16
        %v6164 = vrot.slane %v6162, 5
        %v6165 = vor.u32 %v6161, %v6164
        %v6166 = vrot.slane %v6165, 4
        %v6168 = vshll.u32 %v5859, 16
        %v6170 = vrot.slane %v6168, 5
        %v6171 = vsel %vm882, %v6166, %v6170
        %v6172 = vshrl.u32 %v5859, 16
        %v6174 = vrot.slane %v6172, 4
        %v6175 = vor.u32 %v6174, %v6170
        %v6176 = vrot.slane %v6175, 4
        %v6178 = vshll.u32 %v5860, 16
        %v6180 = vrot.slane %v6178, 5
        %v6181 = vsel %vm882, %v6176, %v6180
        %v6183 = vshrl.u32 %v5861, 16
        %v6185 = vrot.slane %v6183, 4
        %v6186 = vshll.u32 %v5861, 16
        %v6188 = vrot.slane %v6186, 5
        %v6189 = vor.u32 %v6185, %v6188
        %v6190 = vrot.slane %v6189, 4
        %v6192 = vshll.u32 %v5862, 16
        %v6194 = vrot.slane %v6192, 5
        %v6195 = vsel %vm882, %v6190, %v6194
        %v6196 = vshrl.u32 %v5862, 16
        %v6198 = vrot.slane %v6196, 4
        %v6199 = vor.u32 %v6198, %v6194
        %v6200 = vrot.slane %v6199, 4
        %v6202 = vshll.u32 %v5863, 16
        %v6204 = vrot.slane %v6202, 5
        %v6205 = vsel %vm882, %v6200, %v6204
        %v6207 = vshrl.u32 %v5864, 16
        %v6209 = vrot.slane %v6207, 4
        %v6210 = vshll.u32 %v5864, 16
        %v6212 = vrot.slane %v6210, 5
        %v6213 = vor.u32 %v6209, %v6212
        %v6214 = vrot.slane %v6213, 4
        %v6216 = vshll.u32 %v5865, 16
        %v6218 = vrot.slane %v6216, 5
        %v6219 = vsel %vm882, %v6214, %v6218
        %v6220 = vshrl.u32 %v5865, 16
        %v6222 = vrot.slane %v6220, 4
        %v6223 = vor.u32 %v6222, %v6218
        %v6224 = vrot.slane %v6223, 4
        %v6226 = vshll.u32 %v5866, 16
        %v6228 = vrot.slane %v6226, 5
        %v6229 = vsel %vm882, %v6224, %v6228
        %v6231 = vshrl.u32 %v5867, 16
        %v6233 = vrot.slane %v6231, 4
        %v6234 = vshll.u32 %v5867, 16
        %v6236 = vrot.slane %v6234, 5
        %v6237 = vor.u32 %v6233, %v6236
        %v6238 = vrot.slane %v6237, 4
        %v6240 = vshll.u32 %v5868, 16
        %v6242 = vrot.slane %v6240, 5
        %v6243 = vsel %vm882, %v6238, %v6242
        %v6244 = vshrl.u32 %v5868, 16
        %v6246 = vrot.slane %v6244, 4
        %v6247 = vor.u32 %v6246, %v6242
        %v6248 = vrot.slane %v6247, 4
        %v6250 = vshll.u32 %v5869, 16
        %v6252 = vrot.slane %v6250, 5
        %v6253 = vsel %vm882, %v6248, %v6252
        %6286 = vst [vmem:[#allocation4 + $0x4] sm:$0xf] %v5883
        %6287 = vst [vmem:[#allocation4 + $0x28] sm:$0xf] %v5893
        %6288 = vst [vmem:[#allocation4 + $0x4c] sm:$0xf] %v5907
        %6289 = vst [vmem:[#allocation4 + $0x70] sm:$0xf] %v5917
        %6290 = vst [vmem:[#allocation4 + $0x94] sm:$0xf] %v5931
        %6291 = vst [vmem:[#allocation4 + $0xb8] sm:$0xf] %v5941
        %6292 = vst [vmem:[#allocation4 + $0xdc] sm:$0xf] %v5955
        %6293 = vst [vmem:[#allocation4 + $0x100] sm:$0xf] %v5965
        %6294 = vst [vmem:[#allocation4 + $0x124] sm:$0xf] %v5979
        %6295 = vst [vmem:[#allocation4 + $0x148] sm:$0xf] %v5989
        %6296 = vst [vmem:[#allocation4 + $0x16c] sm:$0xf] %v6003
        %6297 = vst [vmem:[#allocation4 + $0x190] sm:$0xf] %v6013
        %6298 = vst [vmem:[#allocation4 + $0x1b4] sm:$0xf] %v6027
        %6299 = vst [vmem:[#allocation4 + $0x1d8] sm:$0xf] %v6037
        %6300 = vst [vmem:[#allocation4 + $0x1fc] sm:$0xf] %v6051
        %6301 = vst [vmem:[#allocation4 + $0x220] sm:$0xf] %v6061
        %6302 = vst [vmem:[#allocation4 + $0x244] sm:$0xf] %v6075
        %6303 = vst [vmem:[#allocation4 + $0x268] sm:$0xf] %v6085
        %6304 = vst [vmem:[#allocation4 + $0x28c] sm:$0xf] %v6099
        %6305 = vst [vmem:[#allocation4 + $0x2b0] sm:$0xf] %v6109
        %6306 = vst [vmem:[#allocation4 + $0x2d4] sm:$0xf] %v6123
        %6307 = vst [vmem:[#allocation4 + $0x2f8] sm:$0xf] %v6133
        %6308 = vst [vmem:[#allocation4 + $0x31c] sm:$0xf] %v6147
        %6309 = vst [vmem:[#allocation4 + $0x340] sm:$0xf] %v6157
        %6310 = vst [vmem:[#allocation4 + $0x364] sm:$0xf] %v6171
        %6311 = vst [vmem:[#allocation4 + $0x388] sm:$0xf] %v6181
        %6312 = vst [vmem:[#allocation4 + $0x3ac] sm:$0xf] %v6195
        %6313 = vst [vmem:[#allocation4 + $0x3d0] sm:$0xf] %v6205
        %6314 = vst [vmem:[#allocation4 + $0x3f4] sm:$0xf] %v6219
        %6315 = vst [vmem:[#allocation4 + $0x418] sm:$0xf] %v6229
        %6316 = vst [vmem:[#allocation4 + $0x43c] sm:$0xf] %v6243
        %6317 = vst [vmem:[#allocation4 + $0x460] sm:$0xf] %v6253
        %v6318 = vld [vmem:[#allocation3] sm:$0xe]
        %v6319 = vld [vmem:[#allocation3 + $0x4] sm:$0xf]
        %v6320 = vld [vmem:[#allocation3 + $0x8] sm:$0x1]
        %v6321 = vld [vmem:[#allocation3 + $0xc] sm:$0xe]
        %v6322 = vld [vmem:[#allocation3 + $0x10] sm:$0xf]
        %v6323 = vld [vmem:[#allocation3 + $0x14] sm:$0x1]
        %v6324 = vld [vmem:[#allocation3 + $0x18] sm:$0xe]
        %v6325 = vld [vmem:[#allocation3 + $0x1c] sm:$0xf]
        %v6326 = vld [vmem:[#allocation3 + $0x20] sm:$0x1]
        %v6327 = vld [vmem:[#allocation3 + $0x24] sm:$0xe]
        %v6328 = vld [vmem:[#allocation3 + $0x28] sm:$0xf]
        %v6329 = vld [vmem:[#allocation3 + $0x2c] sm:$0x1]
        %v6330 = vld [vmem:[#allocation3 + $0x30] sm:$0xe]
        %v6331 = vld [vmem:[#allocation3 + $0x34] sm:$0xf]
        %v6332 = vld [vmem:[#allocation3 + $0x38] sm:$0x1]
        %v6333 = vld [vmem:[#allocation3 + $0x3c] sm:$0xe]
        %v6334 = vld [vmem:[#allocation3 + $0x40] sm:$0xf]
        %v6335 = vld [vmem:[#allocation3 + $0x44] sm:$0x1]
        %v6336 = vld [vmem:[#allocation3 + $0x48] sm:$0xe]
        %v6337 = vld [vmem:[#allocation3 + $0x4c] sm:$0xf]
        %v6338 = vld [vmem:[#allocation3 + $0x50] sm:$0x1]
        %v6339 = vld [vmem:[#allocation3 + $0x54] sm:$0xe]
        %v6340 = vld [vmem:[#allocation3 + $0x58] sm:$0xf]
        %v6341 = vld [vmem:[#allocation3 + $0x5c] sm:$0x1]
        %v6342 = vld [vmem:[#allocation3 + $0x60] sm:$0xe]
        %v6343 = vld [vmem:[#allocation3 + $0x64] sm:$0xf]
        %v6344 = vld [vmem:[#allocation3 + $0x68] sm:$0x1]
        %v6345 = vld [vmem:[#allocation3 + $0x6c] sm:$0xe]
        %v6346 = vld [vmem:[#allocation3 + $0x70] sm:$0xf]
        %v6347 = vld [vmem:[#allocation3 + $0x74] sm:$0x1]
        %v6348 = vld [vmem:[#allocation3 + $0x78] sm:$0xe]
        %v6349 = vld [vmem:[#allocation3 + $0x7c] sm:$0xf]
        %v6350 = vld [vmem:[#allocation3 + $0x80] sm:$0x1]
        %v6351 = vld [vmem:[#allocation3 + $0x84] sm:$0xe]
        %v6352 = vld [vmem:[#allocation3 + $0x88] sm:$0xf]
        %v6353 = vld [vmem:[#allocation3 + $0x8c] sm:$0x1]
        %v6354 = vld [vmem:[#allocation3 + $0x90] sm:$0xe]
        %v6355 = vld [vmem:[#allocation3 + $0x94] sm:$0xf]
        %v6356 = vld [vmem:[#allocation3 + $0x98] sm:$0x1]
        %v6357 = vld [vmem:[#allocation3 + $0x9c] sm:$0xe]
        %v6358 = vld [vmem:[#allocation3 + $0xa0] sm:$0xf]
        %v6359 = vld [vmem:[#allocation3 + $0xa4] sm:$0x1]
        %v6360 = vld [vmem:[#allocation3 + $0xa8] sm:$0xe]
        %v6361 = vld [vmem:[#allocation3 + $0xac] sm:$0xf]
        %v6362 = vld [vmem:[#allocation3 + $0xb0] sm:$0x1]
        %v6363 = vld [vmem:[#allocation3 + $0xb4] sm:$0xe]
        %v6364 = vld [vmem:[#allocation3 + $0xb8] sm:$0xf]
        %v6365 = vld [vmem:[#allocation3 + $0xbc] sm:$0x1]
        %v6414 = vrot.slane %v6318, 5
        %v6415 = vrot.slane %v6414, 4
        %v6416 = vrot.slane %v6319, 5
        %v6417 = vsel %vm1494, %v6415, %v6416
        %v6418 = vrot.slane %v6416, 4
        %v6419 = vrot.slane %v6320, 5
        %v6420 = vsel %vm1494, %v6418, %v6419
        %v6421 = vrot.slane %v6321, 5
        %v6422 = vrot.slane %v6421, 4
        %v6423 = vrot.slane %v6322, 5
        %v6424 = vsel %vm1494, %v6422, %v6423
        %v6425 = vrot.slane %v6423, 4
        %v6426 = vrot.slane %v6323, 5
        %v6427 = vsel %vm1494, %v6425, %v6426
        %v6428 = vrot.slane %v6324, 5
        %v6429 = vrot.slane %v6428, 4
        %v6430 = vrot.slane %v6325, 5
        %v6431 = vsel %vm1494, %v6429, %v6430
        %v6432 = vrot.slane %v6430, 4
        %v6433 = vrot.slane %v6326, 5
        %v6434 = vsel %vm1494, %v6432, %v6433
        %v6435 = vrot.slane %v6327, 5
        %v6436 = vrot.slane %v6435, 4
        %v6437 = vrot.slane %v6328, 5
        %v6438 = vsel %vm1494, %v6436, %v6437
        %v6439 = vrot.slane %v6437, 4
        %v6440 = vrot.slane %v6329, 5
        %v6441 = vsel %vm1494, %v6439, %v6440
        %v6442 = vrot.slane %v6330, 5
        %v6443 = vrot.slane %v6442, 4
        %v6444 = vrot.slane %v6331, 5
        %v6445 = vsel %vm1494, %v6443, %v6444
        %v6446 = vrot.slane %v6444, 4
        %v6447 = vrot.slane %v6332, 5
        %v6448 = vsel %vm1494, %v6446, %v6447
        %v6449 = vrot.slane %v6333, 5
        %v6450 = vrot.slane %v6449, 4
        %v6451 = vrot.slane %v6334, 5
        %v6452 = vsel %vm1494, %v6450, %v6451
        %v6453 = vrot.slane %v6451, 4
        %v6454 = vrot.slane %v6335, 5
        %v6455 = vsel %vm1494, %v6453, %v6454
        %v6456 = vrot.slane %v6336, 5
        %v6457 = vrot.slane %v6456, 4
        %v6458 = vrot.slane %v6337, 5
        %v6459 = vsel %vm1494, %v6457, %v6458
        %v6460 = vrot.slane %v6458, 4
        %v6461 = vrot.slane %v6338, 5
        %v6462 = vsel %vm1494, %v6460, %v6461
        %v6463 = vrot.slane %v6339, 5
        %v6464 = vrot.slane %v6463, 4
        %v6465 = vrot.slane %v6340, 5
        %v6466 = vsel %vm1494, %v6464, %v6465
        %v6467 = vrot.slane %v6465, 4
        %v6468 = vrot.slane %v6341, 5
        %v6469 = vsel %vm1494, %v6467, %v6468
        %v6470 = vrot.slane %v6342, 5
        %v6471 = vrot.slane %v6470, 4
        %v6472 = vrot.slane %v6343, 5
        %v6473 = vsel %vm1494, %v6471, %v6472
        %v6474 = vrot.slane %v6472, 4
        %v6475 = vrot.slane %v6344, 5
        %v6476 = vsel %vm1494, %v6474, %v6475
        %v6477 = vrot.slane %v6345, 5
        %v6478 = vrot.slane %v6477, 4
        %v6479 = vrot.slane %v6346, 5
        %v6480 = vsel %vm1494, %v6478, %v6479
        %v6481 = vrot.slane %v6479, 4
        %v6482 = vrot.slane %v6347, 5
        %v6483 = vsel %vm1494, %v6481, %v6482
        %v6484 = vrot.slane %v6348, 5
        %v6485 = vrot.slane %v6484, 4
        %v6486 = vrot.slane %v6349, 5
        %v6487 = vsel %vm1494, %v6485, %v6486
        %v6488 = vrot.slane %v6486, 4
        %v6489 = vrot.slane %v6350, 5
        %v6490 = vsel %vm1494, %v6488, %v6489
        %v6491 = vrot.slane %v6351, 5
        %v6492 = vrot.slane %v6491, 4
        %v6493 = vrot.slane %v6352, 5
        %v6494 = vsel %vm1494, %v6492, %v6493
        %v6495 = vrot.slane %v6493, 4
        %v6496 = vrot.slane %v6353, 5
        %v6497 = vsel %vm1494, %v6495, %v6496
        %v6498 = vrot.slane %v6354, 5
        %v6499 = vrot.slane %v6498, 4
        %v6500 = vrot.slane %v6355, 5
        %v6501 = vsel %vm1494, %v6499, %v6500
        %v6502 = vrot.slane %v6500, 4
        %v6503 = vrot.slane %v6356, 5
        %v6504 = vsel %vm1494, %v6502, %v6503
        %v6505 = vrot.slane %v6357, 5
        %v6506 = vrot.slane %v6505, 4
        %v6507 = vrot.slane %v6358, 5
        %v6508 = vsel %vm1494, %v6506, %v6507
        %v6509 = vrot.slane %v6507, 4
        %v6510 = vrot.slane %v6359, 5
        %v6511 = vsel %vm1494, %v6509, %v6510
        %v6512 = vrot.slane %v6360, 5
        %v6513 = vrot.slane %v6512, 4
        %v6514 = vrot.slane %v6361, 5
        %v6515 = vsel %vm1494, %v6513, %v6514
        %v6516 = vrot.slane %v6514, 4
        %v6517 = vrot.slane %v6362, 5
        %v6518 = vsel %vm1494, %v6516, %v6517
        %v6519 = vrot.slane %v6363, 5
        %v6520 = vrot.slane %v6519, 4
        %v6521 = vrot.slane %v6364, 5
        %v6522 = vsel %vm1494, %v6520, %v6521
        %v6523 = vrot.slane %v6521, 4
        %v6524 = vrot.slane %v6365, 5
        %v6525 = vsel %vm1494, %v6523, %v6524
        %6558 = vst [vmem:[#allocation4 + $0x8] sm:$0xf] %v6417
        %6559 = vst [vmem:[#allocation4 + $0x2c] sm:$0xf] %v6420
        %6560 = vst [vmem:[#allocation4 + $0x50] sm:$0xf] %v6424
        %6561 = vst [vmem:[#allocation4 + $0x74] sm:$0xf] %v6427
        %6562 = vst [vmem:[#allocation4 + $0x98] sm:$0xf] %v6431
        %6563 = vst [vmem:[#allocation4 + $0xbc] sm:$0xf] %v6434
        %6564 = vst [vmem:[#allocation4 + $0xe0] sm:$0xf] %v6438
        %6565 = vst [vmem:[#allocation4 + $0x104] sm:$0xf] %v6441
        %6566 = vst [vmem:[#allocation4 + $0x128] sm:$0xf] %v6445
        %6567 = vst [vmem:[#allocation4 + $0x14c] sm:$0xf] %v6448
        %6568 = vst [vmem:[#allocation4 + $0x170] sm:$0xf] %v6452
        %6569 = vst [vmem:[#allocation4 + $0x194] sm:$0xf] %v6455
        %6570 = vst [vmem:[#allocation4 + $0x1b8] sm:$0xf] %v6459
        %6571 = vst [vmem:[#allocation4 + $0x1dc] sm:$0xf] %v6462
        %6572 = vst [vmem:[#allocation4 + $0x200] sm:$0xf] %v6466
        %6573 = vst [vmem:[#allocation4 + $0x224] sm:$0xf] %v6469
        %6574 = vst [vmem:[#allocation4 + $0x248] sm:$0xf] %v6473
        %6575 = vst [vmem:[#allocation4 + $0x26c] sm:$0xf] %v6476
        %6576 = vst [vmem:[#allocation4 + $0x290] sm:$0xf] %v6480
        %6577 = vst [vmem:[#allocation4 + $0x2b4] sm:$0xf] %v6483
        %6578 = vst [vmem:[#allocation4 + $0x2d8] sm:$0xf] %v6487
        %6579 = vst [vmem:[#allocation4 + $0x2fc] sm:$0xf] %v6490
        %6580 = vst [vmem:[#allocation4 + $0x320] sm:$0xf] %v6494
        %6581 = vst [vmem:[#allocation4 + $0x344] sm:$0xf] %v6497
        %6582 = vst [vmem:[#allocation4 + $0x368] sm:$0xf] %v6501
        %6583 = vst [vmem:[#allocation4 + $0x38c] sm:$0xf] %v6504
        %6584 = vst [vmem:[#allocation4 + $0x3b0] sm:$0xf] %v6508
        %6585 = vst [vmem:[#allocation4 + $0x3d4] sm:$0xf] %v6511
        %6586 = vst [vmem:[#allocation4 + $0x3f8] sm:$0xf] %v6515
        %6587 = vst [vmem:[#allocation4 + $0x41c] sm:$0xf] %v6518
        %6588 = vst [vmem:[#allocation4 + $0x440] sm:$0xf] %v6522
        %6589 = vst [vmem:[#allocation4 + $0x464] sm:$0xf] %v6525
        %v6590 = vld [vmem:[%s4841] sm:$0xf]
        %v6591 = vld [vmem:[%s4841 + $0x4] sm:$0xf]
        %v6592 = vld [vmem:[%s4841 + $0xc] sm:$0xf]
        %v6593 = vld [vmem:[%s4841 + $0x10] sm:$0xf]
        %v6594 = vld [vmem:[%s4841 + $0x18] sm:$0xf]
        %v6595 = vld [vmem:[%s4841 + $0x1c] sm:$0xf]
        %v6596 = vld [vmem:[%s4841 + $0x24] sm:$0xf]
        %v6597 = vld [vmem:[%s4841 + $0x28] sm:$0xf]
        %v6598 = vld [vmem:[%s4841 + $0x30] sm:$0xf]
        %v6599 = vld [vmem:[%s4841 + $0x34] sm:$0xf]
        %v6600 = vld [vmem:[%s4841 + $0x3c] sm:$0xf]
        %v6601 = vld [vmem:[%s4841 + $0x40] sm:$0xf]
        %v6602 = vld [vmem:[%s4841 + $0x48] sm:$0xf]
        %v6603 = vld [vmem:[%s4841 + $0x4c] sm:$0xf]
        %v6604 = vld [vmem:[%s4841 + $0x54] sm:$0xf]
        %v6605 = vld [vmem:[%s4841 + $0x58] sm:$0xf]
        %v6606 = vld [vmem:[%s4841 + $0x60] sm:$0xf]
        %v6607 = vld [vmem:[%s4841 + $0x64] sm:$0xf]
        %v6608 = vld [vmem:[%s4841 + $0x6c] sm:$0xf]
        %v6609 = vld [vmem:[%s4841 + $0x70] sm:$0xf]
        %v6610 = vld [vmem:[%s4841 + $0x78] sm:$0xf]
        %v6611 = vld [vmem:[%s4841 + $0x7c] sm:$0xf]
        %v6612 = vld [vmem:[%s4841 + $0x84] sm:$0xf]
        %v6613 = vld [vmem:[%s4841 + $0x88] sm:$0xf]
        %v6614 = vld [vmem:[%s4841 + $0x90] sm:$0xf]
        %v6615 = vld [vmem:[%s4841 + $0x94] sm:$0xf]
        %v6616 = vld [vmem:[%s4841 + $0x9c] sm:$0xf]
        %v6617 = vld [vmem:[%s4841 + $0xa0] sm:$0xf]
        %v6618 = vld [vmem:[%s4841 + $0xa8] sm:$0xf]
        %v6619 = vld [vmem:[%s4841 + $0xac] sm:$0xf]
        %v6620 = vld [vmem:[%s4841 + $0xb4] sm:$0xf]
        %v6621 = vld [vmem:[%s4841 + $0xb8] sm:$0xf]
        %6622 = vst [vmem:[#allocation4 + $0xc] sm:$0xf] %v6590
        %6623 = vst [vmem:[#allocation4 + $0x30] sm:$0xf] %v6591
        %6624 = vst [vmem:[#allocation4 + $0x54] sm:$0xf] %v6592
        %6625 = vst [vmem:[#allocation4 + $0x78] sm:$0xf] %v6593
        %6626 = vst [vmem:[#allocation4 + $0x9c] sm:$0xf] %v6594
        %6627 = vst [vmem:[#allocation4 + $0xc0] sm:$0xf] %v6595
        %6628 = vst [vmem:[#allocation4 + $0xe4] sm:$0xf] %v6596
        %6629 = vst [vmem:[#allocation4 + $0x108] sm:$0xf] %v6597
        %6630 = vst [vmem:[#allocation4 + $0x12c] sm:$0xf] %v6598
        %6631 = vst [vmem:[#allocation4 + $0x150] sm:$0xf] %v6599
        %6632 = vst [vmem:[#allocation4 + $0x174] sm:$0xf] %v6600
        %6633 = vst [vmem:[#allocation4 + $0x198] sm:$0xf] %v6601
        %6634 = vst [vmem:[#allocation4 + $0x1bc] sm:$0xf] %v6602
        %6635 = vst [vmem:[#allocation4 + $0x1e0] sm:$0xf] %v6603
        %6636 = vst [vmem:[#allocation4 + $0x204] sm:$0xf] %v6604
        %6637 = vst [vmem:[#allocation4 + $0x228] sm:$0xf] %v6605
        %6638 = vst [vmem:[#allocation4 + $0x24c] sm:$0xf] %v6606
        %6639 = vst [vmem:[#allocation4 + $0x270] sm:$0xf] %v6607
        %6640 = vst [vmem:[#allocation4 + $0x294] sm:$0xf] %v6608
        %6641 = vst [vmem:[#allocation4 + $0x2b8] sm:$0xf] %v6609
        %6642 = vst [vmem:[#allocation4 + $0x2dc] sm:$0xf] %v6610
        %6643 = vst [vmem:[#allocation4 + $0x300] sm:$0xf] %v6611
        %6644 = vst [vmem:[#allocation4 + $0x324] sm:$0xf] %v6612
        %6645 = vst [vmem:[#allocation4 + $0x348] sm:$0xf] %v6613
        %6646 = vst [vmem:[#allocation4 + $0x36c] sm:$0xf] %v6614
        %6647 = vst [vmem:[#allocation4 + $0x390] sm:$0xf] %v6615
        %6648 = vst [vmem:[#allocation4 + $0x3b4] sm:$0xf] %v6616
        %6649 = vst [vmem:[#allocation4 + $0x3d8] sm:$0xf] %v6617
        %6650 = vst [vmem:[#allocation4 + $0x3fc] sm:$0xf] %v6618
        %6651 = vst [vmem:[#allocation4 + $0x420] sm:$0xf] %v6619
        %6652 = vst [vmem:[#allocation4 + $0x444] sm:$0xf] %v6620
        %6653 = vst [vmem:[#allocation4 + $0x468] sm:$0xf] %v6621
        %v6654 = vld [vmem:[%s4841] sm:$0xf]
        %v6655 = vld [vmem:[%s4841 + $0x4] sm:$0xf]
        %v6656 = vld [vmem:[%s4841 + $0x8] sm:$0x1]
        %v6657 = vld [vmem:[%s4841 + $0xc] sm:$0xf]
        %v6658 = vld [vmem:[%s4841 + $0x10] sm:$0xf]
        %v6659 = vld [vmem:[%s4841 + $0x14] sm:$0x1]
        %v6660 = vld [vmem:[%s4841 + $0x18] sm:$0xf]
        %v6661 = vld [vmem:[%s4841 + $0x1c] sm:$0xf]
        %v6662 = vld [vmem:[%s4841 + $0x20] sm:$0x1]
        %v6663 = vld [vmem:[%s4841 + $0x24] sm:$0xf]
        %v6664 = vld [vmem:[%s4841 + $0x28] sm:$0xf]
        %v6665 = vld [vmem:[%s4841 + $0x2c] sm:$0x1]
        %v6666 = vld [vmem:[%s4841 + $0x30] sm:$0xf]
        %v6667 = vld [vmem:[%s4841 + $0x34] sm:$0xf]
        %v6668 = vld [vmem:[%s4841 + $0x38] sm:$0x1]
        %v6669 = vld [vmem:[%s4841 + $0x3c] sm:$0xf]
        %v6670 = vld [vmem:[%s4841 + $0x40] sm:$0xf]
        %v6671 = vld [vmem:[%s4841 + $0x44] sm:$0x1]
        %v6672 = vld [vmem:[%s4841 + $0x48] sm:$0xf]
        %v6673 = vld [vmem:[%s4841 + $0x4c] sm:$0xf]
        %v6674 = vld [vmem:[%s4841 + $0x50] sm:$0x1]
        %v6675 = vld [vmem:[%s4841 + $0x54] sm:$0xf]
        %v6676 = vld [vmem:[%s4841 + $0x58] sm:$0xf]
        %v6677 = vld [vmem:[%s4841 + $0x5c] sm:$0x1]
        %v6678 = vld [vmem:[%s4841 + $0x60] sm:$0xf]
        %v6679 = vld [vmem:[%s4841 + $0x64] sm:$0xf]
        %v6680 = vld [vmem:[%s4841 + $0x68] sm:$0x1]
        %v6681 = vld [vmem:[%s4841 + $0x6c] sm:$0xf]
        %v6682 = vld [vmem:[%s4841 + $0x70] sm:$0xf]
        %v6683 = vld [vmem:[%s4841 + $0x74] sm:$0x1]
        %v6684 = vld [vmem:[%s4841 + $0x78] sm:$0xf]
        %v6685 = vld [vmem:[%s4841 + $0x7c] sm:$0xf]
        %v6686 = vld [vmem:[%s4841 + $0x80] sm:$0x1]
        %v6687 = vld [vmem:[%s4841 + $0x84] sm:$0xf]
        %v6688 = vld [vmem:[%s4841 + $0x88] sm:$0xf]
        %v6689 = vld [vmem:[%s4841 + $0x8c] sm:$0x1]
        %v6690 = vld [vmem:[%s4841 + $0x90] sm:$0xf]
        %v6691 = vld [vmem:[%s4841 + $0x94] sm:$0xf]
        %v6692 = vld [vmem:[%s4841 + $0x98] sm:$0x1]
        %v6693 = vld [vmem:[%s4841 + $0x9c] sm:$0xf]
        %v6694 = vld [vmem:[%s4841 + $0xa0] sm:$0xf]
        %v6695 = vld [vmem:[%s4841 + $0xa4] sm:$0x1]
        %v6696 = vld [vmem:[%s4841 + $0xa8] sm:$0xf]
        %v6697 = vld [vmem:[%s4841 + $0xac] sm:$0xf]
        %v6698 = vld [vmem:[%s4841 + $0xb0] sm:$0x1]
        %v6699 = vld [vmem:[%s4841 + $0xb4] sm:$0xf]
        %v6700 = vld [vmem:[%s4841 + $0xb8] sm:$0xf]
        %v6701 = vld [vmem:[%s4841 + $0xbc] sm:$0x1]
        %v6703 = vshrl.u32 %v6654, 16
        %v6705 = vrot.slane %v6703, 4
        %v6706 = vshll.u32 %v6654, 16
        %v6708 = vrot.slane %v6706, 5
        %v6709 = vor.u32 %v6705, %v6708
        %v6710 = vrot.slane %v6709, 4
        %v6712 = vshll.u32 %v6655, 16
        %v6714 = vrot.slane %v6712, 5
        %v6715 = vsel %vm882, %v6710, %v6714
        %v6716 = vshrl.u32 %v6655, 16
        %v6718 = vrot.slane %v6716, 4
        %v6719 = vor.u32 %v6718, %v6714
        %v6720 = vrot.slane %v6719, 4
        %v6722 = vshll.u32 %v6656, 16
        %v6724 = vrot.slane %v6722, 5
        %v6725 = vsel %vm882, %v6720, %v6724
        %v6727 = vshrl.u32 %v6657, 16
        %v6729 = vrot.slane %v6727, 4
        %v6730 = vshll.u32 %v6657, 16
        %v6732 = vrot.slane %v6730, 5
        %v6733 = vor.u32 %v6729, %v6732
        %v6734 = vrot.slane %v6733, 4
        %v6736 = vshll.u32 %v6658, 16
        %v6738 = vrot.slane %v6736, 5
        %v6739 = vsel %vm882, %v6734, %v6738
        %v6740 = vshrl.u32 %v6658, 16
        %v6742 = vrot.slane %v6740, 4
        %v6743 = vor.u32 %v6742, %v6738
        %v6744 = vrot.slane %v6743, 4
        %v6746 = vshll.u32 %v6659, 16
        %v6748 = vrot.slane %v6746, 5
        %v6749 = vsel %vm882, %v6744, %v6748
        %v6751 = vshrl.u32 %v6660, 16
        %v6753 = vrot.slane %v6751, 4
        %v6754 = vshll.u32 %v6660, 16
        %v6756 = vrot.slane %v6754, 5
        %v6757 = vor.u32 %v6753, %v6756
        %v6758 = vrot.slane %v6757, 4
        %v6760 = vshll.u32 %v6661, 16
        %v6762 = vrot.slane %v6760, 5
        %v6763 = vsel %vm882, %v6758, %v6762
        %v6764 = vshrl.u32 %v6661, 16
        %v6766 = vrot.slane %v6764, 4
        %v6767 = vor.u32 %v6766, %v6762
        %v6768 = vrot.slane %v6767, 4
        %v6770 = vshll.u32 %v6662, 16
        %v6772 = vrot.slane %v6770, 5
        %v6773 = vsel %vm882, %v6768, %v6772
        %v6775 = vshrl.u32 %v6663, 16
        %v6777 = vrot.slane %v6775, 4
        %v6778 = vshll.u32 %v6663, 16
        %v6780 = vrot.slane %v6778, 5
        %v6781 = vor.u32 %v6777, %v6780
        %v6782 = vrot.slane %v6781, 4
        %v6784 = vshll.u32 %v6664, 16
        %v6786 = vrot.slane %v6784, 5
        %v6787 = vsel %vm882, %v6782, %v6786
        %v6788 = vshrl.u32 %v6664, 16
        %v6790 = vrot.slane %v6788, 4
        %v6791 = vor.u32 %v6790, %v6786
        %v6792 = vrot.slane %v6791, 4
        %v6794 = vshll.u32 %v6665, 16
        %v6796 = vrot.slane %v6794, 5
        %v6797 = vsel %vm882, %v6792, %v6796
        %v6799 = vshrl.u32 %v6666, 16
        %v6801 = vrot.slane %v6799, 4
        %v6802 = vshll.u32 %v6666, 16
        %v6804 = vrot.slane %v6802, 5
        %v6805 = vor.u32 %v6801, %v6804
        %v6806 = vrot.slane %v6805, 4
        %v6808 = vshll.u32 %v6667, 16
        %v6810 = vrot.slane %v6808, 5
        %v6811 = vsel %vm882, %v6806, %v6810
        %v6812 = vshrl.u32 %v6667, 16
        %v6814 = vrot.slane %v6812, 4
        %v6815 = vor.u32 %v6814, %v6810
        %v6816 = vrot.slane %v6815, 4
        %v6818 = vshll.u32 %v6668, 16
        %v6820 = vrot.slane %v6818, 5
        %v6821 = vsel %vm882, %v6816, %v6820
        %v6823 = vshrl.u32 %v6669, 16
        %v6825 = vrot.slane %v6823, 4
        %v6826 = vshll.u32 %v6669, 16
        %v6828 = vrot.slane %v6826, 5
        %v6829 = vor.u32 %v6825, %v6828
        %v6830 = vrot.slane %v6829, 4
        %v6832 = vshll.u32 %v6670, 16
        %v6834 = vrot.slane %v6832, 5
        %v6835 = vsel %vm882, %v6830, %v6834
        %v6836 = vshrl.u32 %v6670, 16
        %v6838 = vrot.slane %v6836, 4
        %v6839 = vor.u32 %v6838, %v6834
        %v6840 = vrot.slane %v6839, 4
        %v6842 = vshll.u32 %v6671, 16
        %v6844 = vrot.slane %v6842, 5
        %v6845 = vsel %vm882, %v6840, %v6844
        %v6847 = vshrl.u32 %v6672, 16
        %v6849 = vrot.slane %v6847, 4
        %v6850 = vshll.u32 %v6672, 16
        %v6852 = vrot.slane %v6850, 5
        %v6853 = vor.u32 %v6849, %v6852
        %v6854 = vrot.slane %v6853, 4
        %v6856 = vshll.u32 %v6673, 16
        %v6858 = vrot.slane %v6856, 5
        %v6859 = vsel %vm882, %v6854, %v6858
        %v6860 = vshrl.u32 %v6673, 16
        %v6862 = vrot.slane %v6860, 4
        %v6863 = vor.u32 %v6862, %v6858
        %v6864 = vrot.slane %v6863, 4
        %v6866 = vshll.u32 %v6674, 16
        %v6868 = vrot.slane %v6866, 5
        %v6869 = vsel %vm882, %v6864, %v6868
        %v6871 = vshrl.u32 %v6675, 16
        %v6873 = vrot.slane %v6871, 4
        %v6874 = vshll.u32 %v6675, 16
        %v6876 = vrot.slane %v6874, 5
        %v6877 = vor.u32 %v6873, %v6876
        %v6878 = vrot.slane %v6877, 4
        %v6880 = vshll.u32 %v6676, 16
        %v6882 = vrot.slane %v6880, 5
        %v6883 = vsel %vm882, %v6878, %v6882
        %v6884 = vshrl.u32 %v6676, 16
        %v6886 = vrot.slane %v6884, 4
        %v6887 = vor.u32 %v6886, %v6882
        %v6888 = vrot.slane %v6887, 4
        %v6890 = vshll.u32 %v6677, 16
        %v6892 = vrot.slane %v6890, 5
        %v6893 = vsel %vm882, %v6888, %v6892
        %v6895 = vshrl.u32 %v6678, 16
        %v6897 = vrot.slane %v6895, 4
        %v6898 = vshll.u32 %v6678, 16
        %v6900 = vrot.slane %v6898, 5
        %v6901 = vor.u32 %v6897, %v6900
        %v6902 = vrot.slane %v6901, 4
        %v6904 = vshll.u32 %v6679, 16
        %v6906 = vrot.slane %v6904, 5
        %v6907 = vsel %vm882, %v6902, %v6906
        %v6908 = vshrl.u32 %v6679, 16
        %v6910 = vrot.slane %v6908, 4
        %v6911 = vor.u32 %v6910, %v6906
        %v6912 = vrot.slane %v6911, 4
        %v6914 = vshll.u32 %v6680, 16
        %v6916 = vrot.slane %v6914, 5
        %v6917 = vsel %vm882, %v6912, %v6916
        %v6919 = vshrl.u32 %v6681, 16
        %v6921 = vrot.slane %v6919, 4
        %v6922 = vshll.u32 %v6681, 16
        %v6924 = vrot.slane %v6922, 5
        %v6925 = vor.u32 %v6921, %v6924
        %v6926 = vrot.slane %v6925, 4
        %v6928 = vshll.u32 %v6682, 16
        %v6930 = vrot.slane %v6928, 5
        %v6931 = vsel %vm882, %v6926, %v6930
        %v6932 = vshrl.u32 %v6682, 16
        %v6934 = vrot.slane %v6932, 4
        %v6935 = vor.u32 %v6934, %v6930
        %v6936 = vrot.slane %v6935, 4
        %v6938 = vshll.u32 %v6683, 16
        %v6940 = vrot.slane %v6938, 5
        %v6941 = vsel %vm882, %v6936, %v6940
        %v6943 = vshrl.u32 %v6684, 16
        %v6945 = vrot.slane %v6943, 4
        %v6946 = vshll.u32 %v6684, 16
        %v6948 = vrot.slane %v6946, 5
        %v6949 = vor.u32 %v6945, %v6948
        %v6950 = vrot.slane %v6949, 4
        %v6952 = vshll.u32 %v6685, 16
        %v6954 = vrot.slane %v6952, 5
        %v6955 = vsel %vm882, %v6950, %v6954
        %v6956 = vshrl.u32 %v6685, 16
        %v6958 = vrot.slane %v6956, 4
        %v6959 = vor.u32 %v6958, %v6954
        %v6960 = vrot.slane %v6959, 4
        %v6962 = vshll.u32 %v6686, 16
        %v6964 = vrot.slane %v6962, 5
        %v6965 = vsel %vm882, %v6960, %v6964
        %v6967 = vshrl.u32 %v6687, 16
        %v6969 = vrot.slane %v6967, 4
        %v6970 = vshll.u32 %v6687, 16
        %v6972 = vrot.slane %v6970, 5
        %v6973 = vor.u32 %v6969, %v6972
        %v6974 = vrot.slane %v6973, 4
        %v6976 = vshll.u32 %v6688, 16
        %v6978 = vrot.slane %v6976, 5
        %v6979 = vsel %vm882, %v6974, %v6978
        %v6980 = vshrl.u32 %v6688, 16
        %v6982 = vrot.slane %v6980, 4
        %v6983 = vor.u32 %v6982, %v6978
        %v6984 = vrot.slane %v6983, 4
        %v6986 = vshll.u32 %v6689, 16
        %v6988 = vrot.slane %v6986, 5
        %v6989 = vsel %vm882, %v6984, %v6988
        %v6991 = vshrl.u32 %v6690, 16
        %v6993 = vrot.slane %v6991, 4
        %v6994 = vshll.u32 %v6690, 16
        %v6996 = vrot.slane %v6994, 5
        %v6997 = vor.u32 %v6993, %v6996
        %v6998 = vrot.slane %v6997, 4
        %v7000 = vshll.u32 %v6691, 16
        %v7002 = vrot.slane %v7000, 5
        %v7003 = vsel %vm882, %v6998, %v7002
        %v7004 = vshrl.u32 %v6691, 16
        %v7006 = vrot.slane %v7004, 4
        %v7007 = vor.u32 %v7006, %v7002
        %v7008 = vrot.slane %v7007, 4
        %v7010 = vshll.u32 %v6692, 16
        %v7012 = vrot.slane %v7010, 5
        %v7013 = vsel %vm882, %v7008, %v7012
        %v7015 = vshrl.u32 %v6693, 16
        %v7017 = vrot.slane %v7015, 4
        %v7018 = vshll.u32 %v6693, 16
        %v7020 = vrot.slane %v7018, 5
        %v7021 = vor.u32 %v7017, %v7020
        %v7022 = vrot.slane %v7021, 4
        %v7024 = vshll.u32 %v6694, 16
        %v7026 = vrot.slane %v7024, 5
        %v7027 = vsel %vm882, %v7022, %v7026
        %v7028 = vshrl.u32 %v6694, 16
        %v7030 = vrot.slane %v7028, 4
        %v7031 = vor.u32 %v7030, %v7026
        %v7032 = vrot.slane %v7031, 4
        %v7034 = vshll.u32 %v6695, 16
        %v7036 = vrot.slane %v7034, 5
        %v7037 = vsel %vm882, %v7032, %v7036
        %v7039 = vshrl.u32 %v6696, 16
        %v7041 = vrot.slane %v7039, 4
        %v7042 = vshll.u32 %v6696, 16
        %v7044 = vrot.slane %v7042, 5
        %v7045 = vor.u32 %v7041, %v7044
        %v7046 = vrot.slane %v7045, 4
        %v7048 = vshll.u32 %v6697, 16
        %v7050 = vrot.slane %v7048, 5
        %v7051 = vsel %vm882, %v7046, %v7050
        %v7052 = vshrl.u32 %v6697, 16
        %v7054 = vrot.slane %v7052, 4
        %v7055 = vor.u32 %v7054, %v7050
        %v7056 = vrot.slane %v7055, 4
        %v7058 = vshll.u32 %v6698, 16
        %v7060 = vrot.slane %v7058, 5
        %v7061 = vsel %vm882, %v7056, %v7060
        %v7063 = vshrl.u32 %v6699, 16
        %v7065 = vrot.slane %v7063, 4
        %v7066 = vshll.u32 %v6699, 16
        %v7068 = vrot.slane %v7066, 5
        %v7069 = vor.u32 %v7065, %v7068
        %v7070 = vrot.slane %v7069, 4
        %v7072 = vshll.u32 %v6700, 16
        %v7074 = vrot.slane %v7072, 5
        %v7075 = vsel %vm882, %v7070, %v7074
        %v7076 = vshrl.u32 %v6700, 16
        %v7078 = vrot.slane %v7076, 4
        %v7079 = vor.u32 %v7078, %v7074
        %v7080 = vrot.slane %v7079, 4
        %v7082 = vshll.u32 %v6701, 16
        %v7084 = vrot.slane %v7082, 5
        %v7085 = vsel %vm882, %v7080, %v7084
        %7118 = vst [vmem:[#allocation4 + $0x10] sm:$0xf] %v6715
        %7119 = vst [vmem:[#allocation4 + $0x34] sm:$0xf] %v6725
        %7120 = vst [vmem:[#allocation4 + $0x58] sm:$0xf] %v6739
        %7121 = vst [vmem:[#allocation4 + $0x7c] sm:$0xf] %v6749
        %7122 = vst [vmem:[#allocation4 + $0xa0] sm:$0xf] %v6763
        %7123 = vst [vmem:[#allocation4 + $0xc4] sm:$0xf] %v6773
        %7124 = vst [vmem:[#allocation4 + $0xe8] sm:$0xf] %v6787
        %7125 = vst [vmem:[#allocation4 + $0x10c] sm:$0xf] %v6797
        %7126 = vst [vmem:[#allocation4 + $0x130] sm:$0xf] %v6811
        %7127 = vst [vmem:[#allocation4 + $0x154] sm:$0xf] %v6821
        %7128 = vst [vmem:[#allocation4 + $0x178] sm:$0xf] %v6835
        %7129 = vst [vmem:[#allocation4 + $0x19c] sm:$0xf] %v6845
        %7130 = vst [vmem:[#allocation4 + $0x1c0] sm:$0xf] %v6859
        %7131 = vst [vmem:[#allocation4 + $0x1e4] sm:$0xf] %v6869
        %7132 = vst [vmem:[#allocation4 + $0x208] sm:$0xf] %v6883
        %7133 = vst [vmem:[#allocation4 + $0x22c] sm:$0xf] %v6893
        %7134 = vst [vmem:[#allocation4 + $0x250] sm:$0xf] %v6907
        %7135 = vst [vmem:[#allocation4 + $0x274] sm:$0xf] %v6917
        %7136 = vst [vmem:[#allocation4 + $0x298] sm:$0xf] %v6931
        %7137 = vst [vmem:[#allocation4 + $0x2bc] sm:$0xf] %v6941
        %7138 = vst [vmem:[#allocation4 + $0x2e0] sm:$0xf] %v6955
        %7139 = vst [vmem:[#allocation4 + $0x304] sm:$0xf] %v6965
        %7140 = vst [vmem:[#allocation4 + $0x328] sm:$0xf] %v6979
        %7141 = vst [vmem:[#allocation4 + $0x34c] sm:$0xf] %v6989
        %7142 = vst [vmem:[#allocation4 + $0x370] sm:$0xf] %v7003
        %7143 = vst [vmem:[#allocation4 + $0x394] sm:$0xf] %v7013
        %7144 = vst [vmem:[#allocation4 + $0x3b8] sm:$0xf] %v7027
        %7145 = vst [vmem:[#allocation4 + $0x3dc] sm:$0xf] %v7037
        %7146 = vst [vmem:[#allocation4 + $0x400] sm:$0xf] %v7051
        %7147 = vst [vmem:[#allocation4 + $0x424] sm:$0xf] %v7061
        %7148 = vst [vmem:[#allocation4 + $0x448] sm:$0xf] %v7075
        %7149 = vst [vmem:[#allocation4 + $0x46c] sm:$0xf] %v7085
        %v7150 = vld [vmem:[%s4841] sm:$0xe]
        %v7151 = vld [vmem:[%s4841 + $0x4] sm:$0xf]
        %v7152 = vld [vmem:[%s4841 + $0x8] sm:$0x1]
        %v7153 = vld [vmem:[%s4841 + $0xc] sm:$0xe]
        %v7154 = vld [vmem:[%s4841 + $0x10] sm:$0xf]
        %v7155 = vld [vmem:[%s4841 + $0x14] sm:$0x1]
        %v7156 = vld [vmem:[%s4841 + $0x18] sm:$0xe]
        %v7157 = vld [vmem:[%s4841 + $0x1c] sm:$0xf]
        %v7158 = vld [vmem:[%s4841 + $0x20] sm:$0x1]
        %v7159 = vld [vmem:[%s4841 + $0x24] sm:$0xe]
        %v7160 = vld [vmem:[%s4841 + $0x28] sm:$0xf]
        %v7161 = vld [vmem:[%s4841 + $0x2c] sm:$0x1]
        %v7162 = vld [vmem:[%s4841 + $0x30] sm:$0xe]
        %v7163 = vld [vmem:[%s4841 + $0x34] sm:$0xf]
        %v7164 = vld [vmem:[%s4841 + $0x38] sm:$0x1]
        %v7165 = vld [vmem:[%s4841 + $0x3c] sm:$0xe]
        %v7166 = vld [vmem:[%s4841 + $0x40] sm:$0xf]
        %v7167 = vld [vmem:[%s4841 + $0x44] sm:$0x1]
        %v7168 = vld [vmem:[%s4841 + $0x48] sm:$0xe]
        %v7169 = vld [vmem:[%s4841 + $0x4c] sm:$0xf]
        %v7170 = vld [vmem:[%s4841 + $0x50] sm:$0x1]
        %v7171 = vld [vmem:[%s4841 + $0x54] sm:$0xe]
        %v7172 = vld [vmem:[%s4841 + $0x58] sm:$0xf]
        %v7173 = vld [vmem:[%s4841 + $0x5c] sm:$0x1]
        %v7174 = vld [vmem:[%s4841 + $0x60] sm:$0xe]
        %v7175 = vld [vmem:[%s4841 + $0x64] sm:$0xf]
        %v7176 = vld [vmem:[%s4841 + $0x68] sm:$0x1]
        %v7177 = vld [vmem:[%s4841 + $0x6c] sm:$0xe]
        %v7178 = vld [vmem:[%s4841 + $0x70] sm:$0xf]
        %v7179 = vld [vmem:[%s4841 + $0x74] sm:$0x1]
        %v7180 = vld [vmem:[%s4841 + $0x78] sm:$0xe]
        %v7181 = vld [vmem:[%s4841 + $0x7c] sm:$0xf]
        %v7182 = vld [vmem:[%s4841 + $0x80] sm:$0x1]
        %v7183 = vld [vmem:[%s4841 + $0x84] sm:$0xe]
        %v7184 = vld [vmem:[%s4841 + $0x88] sm:$0xf]
        %v7185 = vld [vmem:[%s4841 + $0x8c] sm:$0x1]
        %v7186 = vld [vmem:[%s4841 + $0x90] sm:$0xe]
        %v7187 = vld [vmem:[%s4841 + $0x94] sm:$0xf]
        %v7188 = vld [vmem:[%s4841 + $0x98] sm:$0x1]
        %v7189 = vld [vmem:[%s4841 + $0x9c] sm:$0xe]
        %v7190 = vld [vmem:[%s4841 + $0xa0] sm:$0xf]
        %v7191 = vld [vmem:[%s4841 + $0xa4] sm:$0x1]
        %v7192 = vld [vmem:[%s4841 + $0xa8] sm:$0xe]
        %v7193 = vld [vmem:[%s4841 + $0xac] sm:$0xf]
        %v7194 = vld [vmem:[%s4841 + $0xb0] sm:$0x1]
        %v7195 = vld [vmem:[%s4841 + $0xb4] sm:$0xe]
        %v7196 = vld [vmem:[%s4841 + $0xb8] sm:$0xf]
        %v7197 = vld [vmem:[%s4841 + $0xbc] sm:$0x1]
        %v7246 = vrot.slane %v7150, 5
        %v7247 = vrot.slane %v7246, 4
        %v7248 = vrot.slane %v7151, 5
        %v7249 = vsel %vm1494, %v7247, %v7248
        %v7250 = vrot.slane %v7248, 4
        %v7251 = vrot.slane %v7152, 5
        %v7252 = vsel %vm1494, %v7250, %v7251
        %v7253 = vrot.slane %v7153, 5
        %v7254 = vrot.slane %v7253, 4
        %v7255 = vrot.slane %v7154, 5
        %v7256 = vsel %vm1494, %v7254, %v7255
        %v7257 = vrot.slane %v7255, 4
        %v7258 = vrot.slane %v7155, 5
        %v7259 = vsel %vm1494, %v7257, %v7258
        %v7260 = vrot.slane %v7156, 5
        %v7261 = vrot.slane %v7260, 4
        %v7262 = vrot.slane %v7157, 5
        %v7263 = vsel %vm1494, %v7261, %v7262
        %v7264 = vrot.slane %v7262, 4
        %v7265 = vrot.slane %v7158, 5
        %v7266 = vsel %vm1494, %v7264, %v7265
        %v7267 = vrot.slane %v7159, 5
        %v7268 = vrot.slane %v7267, 4
        %v7269 = vrot.slane %v7160, 5
        %v7270 = vsel %vm1494, %v7268, %v7269
        %v7271 = vrot.slane %v7269, 4
        %v7272 = vrot.slane %v7161, 5
        %v7273 = vsel %vm1494, %v7271, %v7272
        %v7274 = vrot.slane %v7162, 5
        %v7275 = vrot.slane %v7274, 4
        %v7276 = vrot.slane %v7163, 5
        %v7277 = vsel %vm1494, %v7275, %v7276
        %v7278 = vrot.slane %v7276, 4
        %v7279 = vrot.slane %v7164, 5
        %v7280 = vsel %vm1494, %v7278, %v7279
        %v7281 = vrot.slane %v7165, 5
        %v7282 = vrot.slane %v7281, 4
        %v7283 = vrot.slane %v7166, 5
        %v7284 = vsel %vm1494, %v7282, %v7283
        %v7285 = vrot.slane %v7283, 4
        %v7286 = vrot.slane %v7167, 5
        %v7287 = vsel %vm1494, %v7285, %v7286
        %v7288 = vrot.slane %v7168, 5
        %v7289 = vrot.slane %v7288, 4
        %v7290 = vrot.slane %v7169, 5
        %v7291 = vsel %vm1494, %v7289, %v7290
        %v7292 = vrot.slane %v7290, 4
        %v7293 = vrot.slane %v7170, 5
        %v7294 = vsel %vm1494, %v7292, %v7293
        %v7295 = vrot.slane %v7171, 5
        %v7296 = vrot.slane %v7295, 4
        %v7297 = vrot.slane %v7172, 5
        %v7298 = vsel %vm1494, %v7296, %v7297
        %v7299 = vrot.slane %v7297, 4
        %v7300 = vrot.slane %v7173, 5
        %v7301 = vsel %vm1494, %v7299, %v7300
        %v7302 = vrot.slane %v7174, 5
        %v7303 = vrot.slane %v7302, 4
        %v7304 = vrot.slane %v7175, 5
        %v7305 = vsel %vm1494, %v7303, %v7304
        %v7306 = vrot.slane %v7304, 4
        %v7307 = vrot.slane %v7176, 5
        %v7308 = vsel %vm1494, %v7306, %v7307
        %v7309 = vrot.slane %v7177, 5
        %v7310 = vrot.slane %v7309, 4
        %v7311 = vrot.slane %v7178, 5
        %v7312 = vsel %vm1494, %v7310, %v7311
        %v7313 = vrot.slane %v7311, 4
        %v7314 = vrot.slane %v7179, 5
        %v7315 = vsel %vm1494, %v7313, %v7314
        %v7316 = vrot.slane %v7180, 5
        %v7317 = vrot.slane %v7316, 4
        %v7318 = vrot.slane %v7181, 5
        %v7319 = vsel %vm1494, %v7317, %v7318
        %v7320 = vrot.slane %v7318, 4
        %v7321 = vrot.slane %v7182, 5
        %v7322 = vsel %vm1494, %v7320, %v7321
        %v7323 = vrot.slane %v7183, 5
        %v7324 = vrot.slane %v7323, 4
        %v7325 = vrot.slane %v7184, 5
        %v7326 = vsel %vm1494, %v7324, %v7325
        %v7327 = vrot.slane %v7325, 4
        %v7328 = vrot.slane %v7185, 5
        %v7329 = vsel %vm1494, %v7327, %v7328
        %v7330 = vrot.slane %v7186, 5
        %v7331 = vrot.slane %v7330, 4
        %v7332 = vrot.slane %v7187, 5
        %v7333 = vsel %vm1494, %v7331, %v7332
        %v7334 = vrot.slane %v7332, 4
        %v7335 = vrot.slane %v7188, 5
        %v7336 = vsel %vm1494, %v7334, %v7335
        %v7337 = vrot.slane %v7189, 5
        %v7338 = vrot.slane %v7337, 4
        %v7339 = vrot.slane %v7190, 5
        %v7340 = vsel %vm1494, %v7338, %v7339
        %v7341 = vrot.slane %v7339, 4
        %v7342 = vrot.slane %v7191, 5
        %v7343 = vsel %vm1494, %v7341, %v7342
        %v7344 = vrot.slane %v7192, 5
        %v7345 = vrot.slane %v7344, 4
        %v7346 = vrot.slane %v7193, 5
        %v7347 = vsel %vm1494, %v7345, %v7346
        %v7348 = vrot.slane %v7346, 4
        %v7349 = vrot.slane %v7194, 5
        %v7350 = vsel %vm1494, %v7348, %v7349
        %v7351 = vrot.slane %v7195, 5
        %v7352 = vrot.slane %v7351, 4
        %v7353 = vrot.slane %v7196, 5
        %v7354 = vsel %vm1494, %v7352, %v7353
        %v7355 = vrot.slane %v7353, 4
        %v7356 = vrot.slane %v7197, 5
        %v7357 = vsel %vm1494, %v7355, %v7356
        %7390 = vst [vmem:[#allocation4 + $0x14] sm:$0xf] %v7249
        %7391 = vst [vmem:[#allocation4 + $0x38] sm:$0xf] %v7252
        %7392 = vst [vmem:[#allocation4 + $0x5c] sm:$0xf] %v7256
        %7393 = vst [vmem:[#allocation4 + $0x80] sm:$0xf] %v7259
        %7394 = vst [vmem:[#allocation4 + $0xa4] sm:$0xf] %v7263
        %7395 = vst [vmem:[#allocation4 + $0xc8] sm:$0xf] %v7266
        %7396 = vst [vmem:[#allocation4 + $0xec] sm:$0xf] %v7270
        %7397 = vst [vmem:[#allocation4 + $0x110] sm:$0xf] %v7273
        %7398 = vst [vmem:[#allocation4 + $0x134] sm:$0xf] %v7277
        %7399 = vst [vmem:[#allocation4 + $0x158] sm:$0xf] %v7280
        %7400 = vst [vmem:[#allocation4 + $0x17c] sm:$0xf] %v7284
        %7401 = vst [vmem:[#allocation4 + $0x1a0] sm:$0xf] %v7287
        %7402 = vst [vmem:[#allocation4 + $0x1c4] sm:$0xf] %v7291
        %7403 = vst [vmem:[#allocation4 + $0x1e8] sm:$0xf] %v7294
        %7404 = vst [vmem:[#allocation4 + $0x20c] sm:$0xf] %v7298
        %7405 = vst [vmem:[#allocation4 + $0x230] sm:$0xf] %v7301
        %7406 = vst [vmem:[#allocation4 + $0x254] sm:$0xf] %v7305
        %7407 = vst [vmem:[#allocation4 + $0x278] sm:$0xf] %v7308
        %7408 = vst [vmem:[#allocation4 + $0x29c] sm:$0xf] %v7312
        %7409 = vst [vmem:[#allocation4 + $0x2c0] sm:$0xf] %v7315
        %7410 = vst [vmem:[#allocation4 + $0x2e4] sm:$0xf] %v7319
        %7411 = vst [vmem:[#allocation4 + $0x308] sm:$0xf] %v7322
        %7412 = vst [vmem:[#allocation4 + $0x32c] sm:$0xf] %v7326
        %7413 = vst [vmem:[#allocation4 + $0x350] sm:$0xf] %v7329
        %7414 = vst [vmem:[#allocation4 + $0x374] sm:$0xf] %v7333
        %7415 = vst [vmem:[#allocation4 + $0x398] sm:$0xf] %v7336
        %7416 = vst [vmem:[#allocation4 + $0x3bc] sm:$0xf] %v7340
        %7417 = vst [vmem:[#allocation4 + $0x3e0] sm:$0xf] %v7343
        %7418 = vst [vmem:[#allocation4 + $0x404] sm:$0xf] %v7347
        %7419 = vst [vmem:[#allocation4 + $0x428] sm:$0xf] %v7350
        %7420 = vst [vmem:[#allocation4 + $0x44c] sm:$0xf] %v7354
        %7421 = vst [vmem:[#allocation4 + $0x470] sm:$0xf] %v7357
        %s7422 = scalar_lea.vmem [#allocation3], 24
        %v7423 = vld [vmem:[%s7422] sm:$0xf]
        %v7424 = vld [vmem:[%s7422 + $0x4] sm:$0xf]
        %v7425 = vld [vmem:[%s7422 + $0xc] sm:$0xf]
        %v7426 = vld [vmem:[%s7422 + $0x10] sm:$0xf]
        %v7427 = vld [vmem:[%s7422 + $0x18] sm:$0xf]
        %v7428 = vld [vmem:[%s7422 + $0x1c] sm:$0xf]
        %v7429 = vld [vmem:[%s7422 + $0x24] sm:$0xf]
        %v7430 = vld [vmem:[%s7422 + $0x28] sm:$0xf]
        %v7431 = vld [vmem:[%s7422 + $0x30] sm:$0xf]
        %v7432 = vld [vmem:[%s7422 + $0x34] sm:$0xf]
        %v7433 = vld [vmem:[%s7422 + $0x3c] sm:$0xf]
        %v7434 = vld [vmem:[%s7422 + $0x40] sm:$0xf]
        %v7435 = vld [vmem:[%s7422 + $0x48] sm:$0xf]
        %v7436 = vld [vmem:[%s7422 + $0x4c] sm:$0xf]
        %v7437 = vld [vmem:[%s7422 + $0x54] sm:$0xf]
        %v7438 = vld [vmem:[%s7422 + $0x58] sm:$0xf]
        %v7439 = vld [vmem:[%s7422 + $0x60] sm:$0xf]
        %v7440 = vld [vmem:[%s7422 + $0x64] sm:$0xf]
        %v7441 = vld [vmem:[%s7422 + $0x6c] sm:$0xf]
        %v7442 = vld [vmem:[%s7422 + $0x70] sm:$0xf]
        %v7443 = vld [vmem:[%s7422 + $0x78] sm:$0xf]
        %v7444 = vld [vmem:[%s7422 + $0x7c] sm:$0xf]
        %v7445 = vld [vmem:[%s7422 + $0x84] sm:$0xf]
        %v7446 = vld [vmem:[%s7422 + $0x88] sm:$0xf]
        %v7447 = vld [vmem:[%s7422 + $0x90] sm:$0xf]
        %v7448 = vld [vmem:[%s7422 + $0x94] sm:$0xf]
        %v7449 = vld [vmem:[%s7422 + $0x9c] sm:$0xf]
        %v7450 = vld [vmem:[%s7422 + $0xa0] sm:$0xf]
        %v7451 = vld [vmem:[%s7422 + $0xa8] sm:$0xf]
        %v7452 = vld [vmem:[%s7422 + $0xac] sm:$0xf]
        %v7453 = vld [vmem:[%s7422 + $0xb4] sm:$0xf]
        %v7454 = vld [vmem:[%s7422 + $0xb8] sm:$0xf]
        %7455 = vst [vmem:[#allocation4 + $0x18] sm:$0xf] %v7423
        %7456 = vst [vmem:[#allocation4 + $0x3c] sm:$0xf] %v7424
        %7457 = vst [vmem:[#allocation4 + $0x60] sm:$0xf] %v7425
        %7458 = vst [vmem:[#allocation4 + $0x84] sm:$0xf] %v7426
        %7459 = vst [vmem:[#allocation4 + $0xa8] sm:$0xf] %v7427
        %7460 = vst [vmem:[#allocation4 + $0xcc] sm:$0xf] %v7428
        %7461 = vst [vmem:[#allocation4 + $0xf0] sm:$0xf] %v7429
        %7462 = vst [vmem:[#allocation4 + $0x114] sm:$0xf] %v7430
        %7463 = vst [vmem:[#allocation4 + $0x138] sm:$0xf] %v7431
        %7464 = vst [vmem:[#allocation4 + $0x15c] sm:$0xf] %v7432
        %7465 = vst [vmem:[#allocation4 + $0x180] sm:$0xf] %v7433
        %7466 = vst [vmem:[#allocation4 + $0x1a4] sm:$0xf] %v7434
        %7467 = vst [vmem:[#allocation4 + $0x1c8] sm:$0xf] %v7435
        %7468 = vst [vmem:[#allocation4 + $0x1ec] sm:$0xf] %v7436
        %7469 = vst [vmem:[#allocation4 + $0x210] sm:$0xf] %v7437
        %7470 = vst [vmem:[#allocation4 + $0x234] sm:$0xf] %v7438
        %7471 = vst [vmem:[#allocation4 + $0x258] sm:$0xf] %v7439
        %7472 = vst [vmem:[#allocation4 + $0x27c] sm:$0xf] %v7440
        %7473 = vst [vmem:[#allocation4 + $0x2a0] sm:$0xf] %v7441
        %7474 = vst [vmem:[#allocation4 + $0x2c4] sm:$0xf] %v7442
        %7475 = vst [vmem:[#allocation4 + $0x2e8] sm:$0xf] %v7443
        %7476 = vst [vmem:[#allocation4 + $0x30c] sm:$0xf] %v7444
        %7477 = vst [vmem:[#allocation4 + $0x330] sm:$0xf] %v7445
        %7478 = vst [vmem:[#allocation4 + $0x354] sm:$0xf] %v7446
        %7479 = vst [vmem:[#allocation4 + $0x378] sm:$0xf] %v7447
        %7480 = vst [vmem:[#allocation4 + $0x39c] sm:$0xf] %v7448
        %7481 = vst [vmem:[#allocation4 + $0x3c0] sm:$0xf] %v7449
        %7482 = vst [vmem:[#allocation4 + $0x3e4] sm:$0xf] %v7450
        %7483 = vst [vmem:[#allocation4 + $0x408] sm:$0xf] %v7451
        %7484 = vst [vmem:[#allocation4 + $0x42c] sm:$0xf] %v7452
        %7485 = vst [vmem:[#allocation4 + $0x450] sm:$0xf] %v7453
        %7486 = vst [vmem:[#allocation4 + $0x474] sm:$0xf] %v7454
        %v7487 = vld [vmem:[%s7422] sm:$0xf]
        %v7488 = vld [vmem:[%s7422 + $0x4] sm:$0xf]
        %v7489 = vld [vmem:[%s7422 + $0x8] sm:$0x1]
        %v7490 = vld [vmem:[%s7422 + $0xc] sm:$0xf]
        %v7491 = vld [vmem:[%s7422 + $0x10] sm:$0xf]
        %v7492 = vld [vmem:[%s7422 + $0x14] sm:$0x1]
        %v7493 = vld [vmem:[%s7422 + $0x18] sm:$0xf]
        %v7494 = vld [vmem:[%s7422 + $0x1c] sm:$0xf]
        %v7495 = vld [vmem:[%s7422 + $0x20] sm:$0x1]
        %v7496 = vld [vmem:[%s7422 + $0x24] sm:$0xf]
        %v7497 = vld [vmem:[%s7422 + $0x28] sm:$0xf]
        %v7498 = vld [vmem:[%s7422 + $0x2c] sm:$0x1]
        %v7499 = vld [vmem:[%s7422 + $0x30] sm:$0xf]
        %v7500 = vld [vmem:[%s7422 + $0x34] sm:$0xf]
        %v7501 = vld [vmem:[%s7422 + $0x38] sm:$0x1]
        %v7502 = vld [vmem:[%s7422 + $0x3c] sm:$0xf]
        %v7503 = vld [vmem:[%s7422 + $0x40] sm:$0xf]
        %v7504 = vld [vmem:[%s7422 + $0x44] sm:$0x1]
        %v7505 = vld [vmem:[%s7422 + $0x48] sm:$0xf]
        %v7506 = vld [vmem:[%s7422 + $0x4c] sm:$0xf]
        %v7507 = vld [vmem:[%s7422 + $0x50] sm:$0x1]
        %v7508 = vld [vmem:[%s7422 + $0x54] sm:$0xf]
        %v7509 = vld [vmem:[%s7422 + $0x58] sm:$0xf]
        %v7510 = vld [vmem:[%s7422 + $0x5c] sm:$0x1]
        %v7511 = vld [vmem:[%s7422 + $0x60] sm:$0xf]
        %v7512 = vld [vmem:[%s7422 + $0x64] sm:$0xf]
        %v7513 = vld [vmem:[%s7422 + $0x68] sm:$0x1]
        %v7514 = vld [vmem:[%s7422 + $0x6c] sm:$0xf]
        %v7515 = vld [vmem:[%s7422 + $0x70] sm:$0xf]
        %v7516 = vld [vmem:[%s7422 + $0x74] sm:$0x1]
        %v7517 = vld [vmem:[%s7422 + $0x78] sm:$0xf]
        %v7518 = vld [vmem:[%s7422 + $0x7c] sm:$0xf]
        %v7519 = vld [vmem:[%s7422 + $0x80] sm:$0x1]
        %v7520 = vld [vmem:[%s7422 + $0x84] sm:$0xf]
        %v7521 = vld [vmem:[%s7422 + $0x88] sm:$0xf]
        %v7522 = vld [vmem:[%s7422 + $0x8c] sm:$0x1]
        %v7523 = vld [vmem:[%s7422 + $0x90] sm:$0xf]
        %v7524 = vld [vmem:[%s7422 + $0x94] sm:$0xf]
        %v7525 = vld [vmem:[%s7422 + $0x98] sm:$0x1]
        %v7526 = vld [vmem:[%s7422 + $0x9c] sm:$0xf]
        %v7527 = vld [vmem:[%s7422 + $0xa0] sm:$0xf]
        %v7528 = vld [vmem:[%s7422 + $0xa4] sm:$0x1]
        %v7529 = vld [vmem:[%s7422 + $0xa8] sm:$0xf]
        %v7530 = vld [vmem:[%s7422 + $0xac] sm:$0xf]
        %v7531 = vld [vmem:[%s7422 + $0xb0] sm:$0x1]
        %v7532 = vld [vmem:[%s7422 + $0xb4] sm:$0xf]
        %v7533 = vld [vmem:[%s7422 + $0xb8] sm:$0xf]
        %v7534 = vld [vmem:[%s7422 + $0xbc] sm:$0x1]
        %v7536 = vshrl.u32 %v7487, 16
        %v7538 = vrot.slane %v7536, 4
        %v7539 = vshll.u32 %v7487, 16
        %v7541 = vrot.slane %v7539, 5
        %v7542 = vor.u32 %v7538, %v7541
        %v7543 = vrot.slane %v7542, 4
        %v7545 = vshll.u32 %v7488, 16
        %v7547 = vrot.slane %v7545, 5
        %v7548 = vsel %vm882, %v7543, %v7547
        %v7549 = vshrl.u32 %v7488, 16
        %v7551 = vrot.slane %v7549, 4
        %v7552 = vor.u32 %v7551, %v7547
        %v7553 = vrot.slane %v7552, 4
        %v7555 = vshll.u32 %v7489, 16
        %v7557 = vrot.slane %v7555, 5
        %v7558 = vsel %vm882, %v7553, %v7557
        %v7560 = vshrl.u32 %v7490, 16
        %v7562 = vrot.slane %v7560, 4
        %v7563 = vshll.u32 %v7490, 16
        %v7565 = vrot.slane %v7563, 5
        %v7566 = vor.u32 %v7562, %v7565
        %v7567 = vrot.slane %v7566, 4
        %v7569 = vshll.u32 %v7491, 16
        %v7571 = vrot.slane %v7569, 5
        %v7572 = vsel %vm882, %v7567, %v7571
        %v7573 = vshrl.u32 %v7491, 16
        %v7575 = vrot.slane %v7573, 4
        %v7576 = vor.u32 %v7575, %v7571
        %v7577 = vrot.slane %v7576, 4
        %v7579 = vshll.u32 %v7492, 16
        %v7581 = vrot.slane %v7579, 5
        %v7582 = vsel %vm882, %v7577, %v7581
        %v7584 = vshrl.u32 %v7493, 16
        %v7586 = vrot.slane %v7584, 4
        %v7587 = vshll.u32 %v7493, 16
        %v7589 = vrot.slane %v7587, 5
        %v7590 = vor.u32 %v7586, %v7589
        %v7591 = vrot.slane %v7590, 4
        %v7593 = vshll.u32 %v7494, 16
        %v7595 = vrot.slane %v7593, 5
        %v7596 = vsel %vm882, %v7591, %v7595
        %v7597 = vshrl.u32 %v7494, 16
        %v7599 = vrot.slane %v7597, 4
        %v7600 = vor.u32 %v7599, %v7595
        %v7601 = vrot.slane %v7600, 4
        %v7603 = vshll.u32 %v7495, 16
        %v7605 = vrot.slane %v7603, 5
        %v7606 = vsel %vm882, %v7601, %v7605
        %v7608 = vshrl.u32 %v7496, 16
        %v7610 = vrot.slane %v7608, 4
        %v7611 = vshll.u32 %v7496, 16
        %v7613 = vrot.slane %v7611, 5
        %v7614 = vor.u32 %v7610, %v7613
        %v7615 = vrot.slane %v7614, 4
        %v7617 = vshll.u32 %v7497, 16
        %v7619 = vrot.slane %v7617, 5
        %v7620 = vsel %vm882, %v7615, %v7619
        %v7621 = vshrl.u32 %v7497, 16
        %v7623 = vrot.slane %v7621, 4
        %v7624 = vor.u32 %v7623, %v7619
        %v7625 = vrot.slane %v7624, 4
        %v7627 = vshll.u32 %v7498, 16
        %v7629 = vrot.slane %v7627, 5
        %v7630 = vsel %vm882, %v7625, %v7629
        %v7632 = vshrl.u32 %v7499, 16
        %v7634 = vrot.slane %v7632, 4
        %v7635 = vshll.u32 %v7499, 16
        %v7637 = vrot.slane %v7635, 5
        %v7638 = vor.u32 %v7634, %v7637
        %v7639 = vrot.slane %v7638, 4
        %v7641 = vshll.u32 %v7500, 16
        %v7643 = vrot.slane %v7641, 5
        %v7644 = vsel %vm882, %v7639, %v7643
        %v7645 = vshrl.u32 %v7500, 16
        %v7647 = vrot.slane %v7645, 4
        %v7648 = vor.u32 %v7647, %v7643
        %v7649 = vrot.slane %v7648, 4
        %v7651 = vshll.u32 %v7501, 16
        %v7653 = vrot.slane %v7651, 5
        %v7654 = vsel %vm882, %v7649, %v7653
        %v7656 = vshrl.u32 %v7502, 16
        %v7658 = vrot.slane %v7656, 4
        %v7659 = vshll.u32 %v7502, 16
        %v7661 = vrot.slane %v7659, 5
        %v7662 = vor.u32 %v7658, %v7661
        %v7663 = vrot.slane %v7662, 4
        %v7665 = vshll.u32 %v7503, 16
        %v7667 = vrot.slane %v7665, 5
        %v7668 = vsel %vm882, %v7663, %v7667
        %v7669 = vshrl.u32 %v7503, 16
        %v7671 = vrot.slane %v7669, 4
        %v7672 = vor.u32 %v7671, %v7667
        %v7673 = vrot.slane %v7672, 4
        %v7675 = vshll.u32 %v7504, 16
        %v7677 = vrot.slane %v7675, 5
        %v7678 = vsel %vm882, %v7673, %v7677
        %v7680 = vshrl.u32 %v7505, 16
        %v7682 = vrot.slane %v7680, 4
        %v7683 = vshll.u32 %v7505, 16
        %v7685 = vrot.slane %v7683, 5
        %v7686 = vor.u32 %v7682, %v7685
        %v7687 = vrot.slane %v7686, 4
        %v7689 = vshll.u32 %v7506, 16
        %v7691 = vrot.slane %v7689, 5
        %v7692 = vsel %vm882, %v7687, %v7691
        %v7693 = vshrl.u32 %v7506, 16
        %v7695 = vrot.slane %v7693, 4
        %v7696 = vor.u32 %v7695, %v7691
        %v7697 = vrot.slane %v7696, 4
        %v7699 = vshll.u32 %v7507, 16
        %v7701 = vrot.slane %v7699, 5
        %v7702 = vsel %vm882, %v7697, %v7701
        %v7704 = vshrl.u32 %v7508, 16
        %v7706 = vrot.slane %v7704, 4
        %v7707 = vshll.u32 %v7508, 16
        %v7709 = vrot.slane %v7707, 5
        %v7710 = vor.u32 %v7706, %v7709
        %v7711 = vrot.slane %v7710, 4
        %v7713 = vshll.u32 %v7509, 16
        %v7715 = vrot.slane %v7713, 5
        %v7716 = vsel %vm882, %v7711, %v7715
        %v7717 = vshrl.u32 %v7509, 16
        %v7719 = vrot.slane %v7717, 4
        %v7720 = vor.u32 %v7719, %v7715
        %v7721 = vrot.slane %v7720, 4
        %v7723 = vshll.u32 %v7510, 16
        %v7725 = vrot.slane %v7723, 5
        %v7726 = vsel %vm882, %v7721, %v7725
        %v7728 = vshrl.u32 %v7511, 16
        %v7730 = vrot.slane %v7728, 4
        %v7731 = vshll.u32 %v7511, 16
        %v7733 = vrot.slane %v7731, 5
        %v7734 = vor.u32 %v7730, %v7733
        %v7735 = vrot.slane %v7734, 4
        %v7737 = vshll.u32 %v7512, 16
        %v7739 = vrot.slane %v7737, 5
        %v7740 = vsel %vm882, %v7735, %v7739
        %v7741 = vshrl.u32 %v7512, 16
        %v7743 = vrot.slane %v7741, 4
        %v7744 = vor.u32 %v7743, %v7739
        %v7745 = vrot.slane %v7744, 4
        %v7747 = vshll.u32 %v7513, 16
        %v7749 = vrot.slane %v7747, 5
        %v7750 = vsel %vm882, %v7745, %v7749
        %v7752 = vshrl.u32 %v7514, 16
        %v7754 = vrot.slane %v7752, 4
        %v7755 = vshll.u32 %v7514, 16
        %v7757 = vrot.slane %v7755, 5
        %v7758 = vor.u32 %v7754, %v7757
        %v7759 = vrot.slane %v7758, 4
        %v7761 = vshll.u32 %v7515, 16
        %v7763 = vrot.slane %v7761, 5
        %v7764 = vsel %vm882, %v7759, %v7763
        %v7765 = vshrl.u32 %v7515, 16
        %v7767 = vrot.slane %v7765, 4
        %v7768 = vor.u32 %v7767, %v7763
        %v7769 = vrot.slane %v7768, 4
        %v7771 = vshll.u32 %v7516, 16
        %v7773 = vrot.slane %v7771, 5
        %v7774 = vsel %vm882, %v7769, %v7773
        %v7776 = vshrl.u32 %v7517, 16
        %v7778 = vrot.slane %v7776, 4
        %v7779 = vshll.u32 %v7517, 16
        %v7781 = vrot.slane %v7779, 5
        %v7782 = vor.u32 %v7778, %v7781
        %v7783 = vrot.slane %v7782, 4
        %v7785 = vshll.u32 %v7518, 16
        %v7787 = vrot.slane %v7785, 5
        %v7788 = vsel %vm882, %v7783, %v7787
        %v7789 = vshrl.u32 %v7518, 16
        %v7791 = vrot.slane %v7789, 4
        %v7792 = vor.u32 %v7791, %v7787
        %v7793 = vrot.slane %v7792, 4
        %v7795 = vshll.u32 %v7519, 16
        %v7797 = vrot.slane %v7795, 5
        %v7798 = vsel %vm882, %v7793, %v7797
        %v7800 = vshrl.u32 %v7520, 16
        %v7802 = vrot.slane %v7800, 4
        %v7803 = vshll.u32 %v7520, 16
        %v7805 = vrot.slane %v7803, 5
        %v7806 = vor.u32 %v7802, %v7805
        %v7807 = vrot.slane %v7806, 4
        %v7809 = vshll.u32 %v7521, 16
        %v7811 = vrot.slane %v7809, 5
        %v7812 = vsel %vm882, %v7807, %v7811
        %v7813 = vshrl.u32 %v7521, 16
        %v7815 = vrot.slane %v7813, 4
        %v7816 = vor.u32 %v7815, %v7811
        %v7817 = vrot.slane %v7816, 4
        %v7819 = vshll.u32 %v7522, 16
        %v7821 = vrot.slane %v7819, 5
        %v7822 = vsel %vm882, %v7817, %v7821
        %v7824 = vshrl.u32 %v7523, 16
        %v7826 = vrot.slane %v7824, 4
        %v7827 = vshll.u32 %v7523, 16
        %v7829 = vrot.slane %v7827, 5
        %v7830 = vor.u32 %v7826, %v7829
        %v7831 = vrot.slane %v7830, 4
        %v7833 = vshll.u32 %v7524, 16
        %v7835 = vrot.slane %v7833, 5
        %v7836 = vsel %vm882, %v7831, %v7835
        %v7837 = vshrl.u32 %v7524, 16
        %v7839 = vrot.slane %v7837, 4
        %v7840 = vor.u32 %v7839, %v7835
        %v7841 = vrot.slane %v7840, 4
        %v7843 = vshll.u32 %v7525, 16
        %v7845 = vrot.slane %v7843, 5
        %v7846 = vsel %vm882, %v7841, %v7845
        %v7848 = vshrl.u32 %v7526, 16
        %v7850 = vrot.slane %v7848, 4
        %v7851 = vshll.u32 %v7526, 16
        %v7853 = vrot.slane %v7851, 5
        %v7854 = vor.u32 %v7850, %v7853
        %v7855 = vrot.slane %v7854, 4
        %v7857 = vshll.u32 %v7527, 16
        %v7859 = vrot.slane %v7857, 5
        %v7860 = vsel %vm882, %v7855, %v7859
        %v7861 = vshrl.u32 %v7527, 16
        %v7863 = vrot.slane %v7861, 4
        %v7864 = vor.u32 %v7863, %v7859
        %v7865 = vrot.slane %v7864, 4
        %v7867 = vshll.u32 %v7528, 16
        %v7869 = vrot.slane %v7867, 5
        %v7870 = vsel %vm882, %v7865, %v7869
        %v7872 = vshrl.u32 %v7529, 16
        %v7874 = vrot.slane %v7872, 4
        %v7875 = vshll.u32 %v7529, 16
        %v7877 = vrot.slane %v7875, 5
        %v7878 = vor.u32 %v7874, %v7877
        %v7879 = vrot.slane %v7878, 4
        %v7881 = vshll.u32 %v7530, 16
        %v7883 = vrot.slane %v7881, 5
        %v7884 = vsel %vm882, %v7879, %v7883
        %v7885 = vshrl.u32 %v7530, 16
        %v7887 = vrot.slane %v7885, 4
        %v7888 = vor.u32 %v7887, %v7883
        %v7889 = vrot.slane %v7888, 4
        %v7891 = vshll.u32 %v7531, 16
        %v7893 = vrot.slane %v7891, 5
        %v7894 = vsel %vm882, %v7889, %v7893
        %v7896 = vshrl.u32 %v7532, 16
        %v7898 = vrot.slane %v7896, 4
        %v7899 = vshll.u32 %v7532, 16
        %v7901 = vrot.slane %v7899, 5
        %v7902 = vor.u32 %v7898, %v7901
        %v7903 = vrot.slane %v7902, 4
        %v7905 = vshll.u32 %v7533, 16
        %v7907 = vrot.slane %v7905, 5
        %v7908 = vsel %vm882, %v7903, %v7907
        %v7909 = vshrl.u32 %v7533, 16
        %v7911 = vrot.slane %v7909, 4
        %v7912 = vor.u32 %v7911, %v7907
        %v7913 = vrot.slane %v7912, 4
        %v7915 = vshll.u32 %v7534, 16
        %v7917 = vrot.slane %v7915, 5
        %v7918 = vsel %vm882, %v7913, %v7917
        %7951 = vst [vmem:[#allocation4 + $0x1c] sm:$0xf] %v7548
        %7952 = vst [vmem:[#allocation4 + $0x40] sm:$0xf] %v7558
        %7953 = vst [vmem:[#allocation4 + $0x64] sm:$0xf] %v7572
        %7954 = vst [vmem:[#allocation4 + $0x88] sm:$0xf] %v7582
        %7955 = vst [vmem:[#allocation4 + $0xac] sm:$0xf] %v7596
        %7956 = vst [vmem:[#allocation4 + $0xd0] sm:$0xf] %v7606
        %7957 = vst [vmem:[#allocation4 + $0xf4] sm:$0xf] %v7620
        %7958 = vst [vmem:[#allocation4 + $0x118] sm:$0xf] %v7630
        %7959 = vst [vmem:[#allocation4 + $0x13c] sm:$0xf] %v7644
        %7960 = vst [vmem:[#allocation4 + $0x160] sm:$0xf] %v7654
        %7961 = vst [vmem:[#allocation4 + $0x184] sm:$0xf] %v7668
        %7962 = vst [vmem:[#allocation4 + $0x1a8] sm:$0xf] %v7678
        %7963 = vst [vmem:[#allocation4 + $0x1cc] sm:$0xf] %v7692
        %7964 = vst [vmem:[#allocation4 + $0x1f0] sm:$0xf] %v7702
        %7965 = vst [vmem:[#allocation4 + $0x214] sm:$0xf] %v7716
        %7966 = vst [vmem:[#allocation4 + $0x238] sm:$0xf] %v7726
        %7967 = vst [vmem:[#allocation4 + $0x25c] sm:$0xf] %v7740
        %7968 = vst [vmem:[#allocation4 + $0x280] sm:$0xf] %v7750
        %7969 = vst [vmem:[#allocation4 + $0x2a4] sm:$0xf] %v7764
        %7970 = vst [vmem:[#allocation4 + $0x2c8] sm:$0xf] %v7774
        %7971 = vst [vmem:[#allocation4 + $0x2ec] sm:$0xf] %v7788
        %7972 = vst [vmem:[#allocation4 + $0x310] sm:$0xf] %v7798
        %7973 = vst [vmem:[#allocation4 + $0x334] sm:$0xf] %v7812
        %7974 = vst [vmem:[#allocation4 + $0x358] sm:$0xf] %v7822
        %7975 = vst [vmem:[#allocation4 + $0x37c] sm:$0xf] %v7836
        %7976 = vst [vmem:[#allocation4 + $0x3a0] sm:$0xf] %v7846
        %7977 = vst [vmem:[#allocation4 + $0x3c4] sm:$0xf] %v7860
        %7978 = vst [vmem:[#allocation4 + $0x3e8] sm:$0xf] %v7870
        %7979 = vst [vmem:[#allocation4 + $0x40c] sm:$0xf] %v7884
        %7980 = vst [vmem:[#allocation4 + $0x430] sm:$0xf] %v7894
        %7981 = vst [vmem:[#allocation4 + $0x454] sm:$0xf] %v7908
        %7982 = vst [vmem:[#allocation4 + $0x478] sm:$0xf] %v7918
        %v7983 = vld [vmem:[%s7422] sm:$0xe]
        %v7984 = vld [vmem:[%s7422 + $0x4] sm:$0xf]
        %v7985 = vld [vmem:[%s7422 + $0x8] sm:$0x1]
        %v7986 = vld [vmem:[%s7422 + $0xc] sm:$0xe]
        %v7987 = vld [vmem:[%s7422 + $0x10] sm:$0xf]
        %v7988 = vld [vmem:[%s7422 + $0x14] sm:$0x1]
        %v7989 = vld [vmem:[%s7422 + $0x18] sm:$0xe]
        %v7990 = vld [vmem:[%s7422 + $0x1c] sm:$0xf]
        %v7991 = vld [vmem:[%s7422 + $0x20] sm:$0x1]
        %v7992 = vld [vmem:[%s7422 + $0x24] sm:$0xe]
        %v7993 = vld [vmem:[%s7422 + $0x28] sm:$0xf]
        %v7994 = vld [vmem:[%s7422 + $0x2c] sm:$0x1]
        %v7995 = vld [vmem:[%s7422 + $0x30] sm:$0xe]
        %v7996 = vld [vmem:[%s7422 + $0x34] sm:$0xf]
        %v7997 = vld [vmem:[%s7422 + $0x38] sm:$0x1]
        %v7998 = vld [vmem:[%s7422 + $0x3c] sm:$0xe]
        %v7999 = vld [vmem:[%s7422 + $0x40] sm:$0xf]
        %v8000 = vld [vmem:[%s7422 + $0x44] sm:$0x1]
        %v8001 = vld [vmem:[%s7422 + $0x48] sm:$0xe]
        %v8002 = vld [vmem:[%s7422 + $0x4c] sm:$0xf]
        %v8003 = vld [vmem:[%s7422 + $0x50] sm:$0x1]
        %v8004 = vld [vmem:[%s7422 + $0x54] sm:$0xe]
        %v8005 = vld [vmem:[%s7422 + $0x58] sm:$0xf]
        %v8006 = vld [vmem:[%s7422 + $0x5c] sm:$0x1]
        %v8007 = vld [vmem:[%s7422 + $0x60] sm:$0xe]
        %v8008 = vld [vmem:[%s7422 + $0x64] sm:$0xf]
        %v8009 = vld [vmem:[%s7422 + $0x68] sm:$0x1]
        %v8010 = vld [vmem:[%s7422 + $0x6c] sm:$0xe]
        %v8011 = vld [vmem:[%s7422 + $0x70] sm:$0xf]
        %v8012 = vld [vmem:[%s7422 + $0x74] sm:$0x1]
        %v8013 = vld [vmem:[%s7422 + $0x78] sm:$0xe]
        %v8014 = vld [vmem:[%s7422 + $0x7c] sm:$0xf]
        %v8015 = vld [vmem:[%s7422 + $0x80] sm:$0x1]
        %v8016 = vld [vmem:[%s7422 + $0x84] sm:$0xe]
        %v8017 = vld [vmem:[%s7422 + $0x88] sm:$0xf]
        %v8018 = vld [vmem:[%s7422 + $0x8c] sm:$0x1]
        %v8019 = vld [vmem:[%s7422 + $0x90] sm:$0xe]
        %v8020 = vld [vmem:[%s7422 + $0x94] sm:$0xf]
        %v8021 = vld [vmem:[%s7422 + $0x98] sm:$0x1]
        %v8022 = vld [vmem:[%s7422 + $0x9c] sm:$0xe]
        %v8023 = vld [vmem:[%s7422 + $0xa0] sm:$0xf]
        %v8024 = vld [vmem:[%s7422 + $0xa4] sm:$0x1]
        %v8025 = vld [vmem:[%s7422 + $0xa8] sm:$0xe]
        %v8026 = vld [vmem:[%s7422 + $0xac] sm:$0xf]
        %v8027 = vld [vmem:[%s7422 + $0xb0] sm:$0x1]
        %v8028 = vld [vmem:[%s7422 + $0xb4] sm:$0xe]
        %v8029 = vld [vmem:[%s7422 + $0xb8] sm:$0xf]
        %v8030 = vld [vmem:[%s7422 + $0xbc] sm:$0x1]
        %v8079 = vrot.slane %v7983, 5
        %v8080 = vrot.slane %v8079, 4
        %v8081 = vrot.slane %v7984, 5
        %v8082 = vsel %vm1494, %v8080, %v8081
        %v8083 = vrot.slane %v8081, 4
        %v8084 = vrot.slane %v7985, 5
        %v8085 = vsel %vm1494, %v8083, %v8084
        %v8086 = vrot.slane %v7986, 5
        %v8087 = vrot.slane %v8086, 4
        %v8088 = vrot.slane %v7987, 5
        %v8089 = vsel %vm1494, %v8087, %v8088
        %v8090 = vrot.slane %v8088, 4
        %v8091 = vrot.slane %v7988, 5
        %v8092 = vsel %vm1494, %v8090, %v8091
        %v8093 = vrot.slane %v7989, 5
        %v8094 = vrot.slane %v8093, 4
        %v8095 = vrot.slane %v7990, 5
        %v8096 = vsel %vm1494, %v8094, %v8095
        %v8097 = vrot.slane %v8095, 4
        %v8098 = vrot.slane %v7991, 5
        %v8099 = vsel %vm1494, %v8097, %v8098
        %v8100 = vrot.slane %v7992, 5
        %v8101 = vrot.slane %v8100, 4
        %v8102 = vrot.slane %v7993, 5
        %v8103 = vsel %vm1494, %v8101, %v8102
        %v8104 = vrot.slane %v8102, 4
        %v8105 = vrot.slane %v7994, 5
        %v8106 = vsel %vm1494, %v8104, %v8105
        %v8107 = vrot.slane %v7995, 5
        %v8108 = vrot.slane %v8107, 4
        %v8109 = vrot.slane %v7996, 5
        %v8110 = vsel %vm1494, %v8108, %v8109
        %v8111 = vrot.slane %v8109, 4
        %v8112 = vrot.slane %v7997, 5
        %v8113 = vsel %vm1494, %v8111, %v8112
        %v8114 = vrot.slane %v7998, 5
        %v8115 = vrot.slane %v8114, 4
        %v8116 = vrot.slane %v7999, 5
        %v8117 = vsel %vm1494, %v8115, %v8116
        %v8118 = vrot.slane %v8116, 4
        %v8119 = vrot.slane %v8000, 5
        %v8120 = vsel %vm1494, %v8118, %v8119
        %v8121 = vrot.slane %v8001, 5
        %v8122 = vrot.slane %v8121, 4
        %v8123 = vrot.slane %v8002, 5
        %v8124 = vsel %vm1494, %v8122, %v8123
        %v8125 = vrot.slane %v8123, 4
        %v8126 = vrot.slane %v8003, 5
        %v8127 = vsel %vm1494, %v8125, %v8126
        %v8128 = vrot.slane %v8004, 5
        %v8129 = vrot.slane %v8128, 4
        %v8130 = vrot.slane %v8005, 5
        %v8131 = vsel %vm1494, %v8129, %v8130
        %v8132 = vrot.slane %v8130, 4
        %v8133 = vrot.slane %v8006, 5
        %v8134 = vsel %vm1494, %v8132, %v8133
        %v8135 = vrot.slane %v8007, 5
        %v8136 = vrot.slane %v8135, 4
        %v8137 = vrot.slane %v8008, 5
        %v8138 = vsel %vm1494, %v8136, %v8137
        %v8139 = vrot.slane %v8137, 4
        %v8140 = vrot.slane %v8009, 5
        %v8141 = vsel %vm1494, %v8139, %v8140
        %v8142 = vrot.slane %v8010, 5
        %v8143 = vrot.slane %v8142, 4
        %v8144 = vrot.slane %v8011, 5
        %v8145 = vsel %vm1494, %v8143, %v8144
        %v8146 = vrot.slane %v8144, 4
        %v8147 = vrot.slane %v8012, 5
        %v8148 = vsel %vm1494, %v8146, %v8147
        %v8149 = vrot.slane %v8013, 5
        %v8150 = vrot.slane %v8149, 4
        %v8151 = vrot.slane %v8014, 5
        %v8152 = vsel %vm1494, %v8150, %v8151
        %v8153 = vrot.slane %v8151, 4
        %v8154 = vrot.slane %v8015, 5
        %v8155 = vsel %vm1494, %v8153, %v8154
        %v8156 = vrot.slane %v8016, 5
        %v8157 = vrot.slane %v8156, 4
        %v8158 = vrot.slane %v8017, 5
        %v8159 = vsel %vm1494, %v8157, %v8158
        %v8160 = vrot.slane %v8158, 4
        %v8161 = vrot.slane %v8018, 5
        %v8162 = vsel %vm1494, %v8160, %v8161
        %v8163 = vrot.slane %v8019, 5
        %v8164 = vrot.slane %v8163, 4
        %v8165 = vrot.slane %v8020, 5
        %v8166 = vsel %vm1494, %v8164, %v8165
        %v8167 = vrot.slane %v8165, 4
        %v8168 = vrot.slane %v8021, 5
        %v8169 = vsel %vm1494, %v8167, %v8168
        %v8170 = vrot.slane %v8022, 5
        %v8171 = vrot.slane %v8170, 4
        %v8172 = vrot.slane %v8023, 5
        %v8173 = vsel %vm1494, %v8171, %v8172
        %v8174 = vrot.slane %v8172, 4
        %v8175 = vrot.slane %v8024, 5
        %v8176 = vsel %vm1494, %v8174, %v8175
        %v8177 = vrot.slane %v8025, 5
        %v8178 = vrot.slane %v8177, 4
        %v8179 = vrot.slane %v8026, 5
        %v8180 = vsel %vm1494, %v8178, %v8179
        %v8181 = vrot.slane %v8179, 4
        %v8182 = vrot.slane %v8027, 5
        %v8183 = vsel %vm1494, %v8181, %v8182
        %v8184 = vrot.slane %v8028, 5
        %v8185 = vrot.slane %v8184, 4
        %v8186 = vrot.slane %v8029, 5
        %v8187 = vsel %vm1494, %v8185, %v8186
        %v8188 = vrot.slane %v8186, 4
        %v8189 = vrot.slane %v8030, 5
        %v8190 = vsel %vm1494, %v8188, %v8189
        %8223 = vst [vmem:[#allocation4 + $0x20] sm:$0xf] %v8082
        %8224 = vst [vmem:[#allocation4 + $0x44] sm:$0xf] %v8085
        %8225 = vst [vmem:[#allocation4 + $0x68] sm:$0xf] %v8089
        %8226 = vst [vmem:[#allocation4 + $0x8c] sm:$0xf] %v8092
        %8227 = vst [vmem:[#allocation4 + $0xb0] sm:$0xf] %v8096
        %8228 = vst [vmem:[#allocation4 + $0xd4] sm:$0xf] %v8099
        %8229 = vst [vmem:[#allocation4 + $0xf8] sm:$0xf] %v8103
        %8230 = vst [vmem:[#allocation4 + $0x11c] sm:$0xf] %v8106
        %8231 = vst [vmem:[#allocation4 + $0x140] sm:$0xf] %v8110
        %8232 = vst [vmem:[#allocation4 + $0x164] sm:$0xf] %v8113
        %8233 = vst [vmem:[#allocation4 + $0x188] sm:$0xf] %v8117
        %8234 = vst [vmem:[#allocation4 + $0x1ac] sm:$0xf] %v8120
        %8235 = vst [vmem:[#allocation4 + $0x1d0] sm:$0xf] %v8124
        %8236 = vst [vmem:[#allocation4 + $0x1f4] sm:$0xf] %v8127
        %8237 = vst [vmem:[#allocation4 + $0x218] sm:$0xf] %v8131
        %8238 = vst [vmem:[#allocation4 + $0x23c] sm:$0xf] %v8134
        %8239 = vst [vmem:[#allocation4 + $0x260] sm:$0xf] %v8138
        %8240 = vst [vmem:[#allocation4 + $0x284] sm:$0xf] %v8141
        %8241 = vst [vmem:[#allocation4 + $0x2a8] sm:$0xf] %v8145
        %8242 = vst [vmem:[#allocation4 + $0x2cc] sm:$0xf] %v8148
        %8243 = vst [vmem:[#allocation4 + $0x2f0] sm:$0xf] %v8152
        %8244 = vst [vmem:[#allocation4 + $0x314] sm:$0xf] %v8155
        %8245 = vst [vmem:[#allocation4 + $0x338] sm:$0xf] %v8159
        %8246 = vst [vmem:[#allocation4 + $0x35c] sm:$0xf] %v8162
        %8247 = vst [vmem:[#allocation4 + $0x380] sm:$0xf] %v8166
        %8248 = vst [vmem:[#allocation4 + $0x3a4] sm:$0xf] %v8169
        %8249 = vst [vmem:[#allocation4 + $0x3c8] sm:$0xf] %v8173
        %8250 = vst [vmem:[#allocation4 + $0x3ec] sm:$0xf] %v8176
        %8251 = vst [vmem:[#allocation4 + $0x410] sm:$0xf] %v8180
        %8252 = vst [vmem:[#allocation4 + $0x434] sm:$0xf] %v8183
        %8253 = vst [vmem:[#allocation4 + $0x458] sm:$0xf] %v8187
        %8254 = vst [vmem:[#allocation4 + $0x47c] sm:$0xf] %v8190
        %v8255 = vld [vmem:[#allocation4] sm:$0xff]
        %v8256 = vld [vmem:[#allocation4 + $0x8] sm:$0xff]
        %v8257 = vld [vmem:[#allocation4 + $0x10] sm:$0xff]
        %v8258 = vld [vmem:[#allocation4 + $0x18] sm:$0xff]
        %v8259 = vld [vmem:[#allocation4 + $0x20] sm:$0xf]
        %v8260 = vld [vmem:[#allocation4 + $0x24] sm:$0xff]
        %v8261 = vld [vmem:[#allocation4 + $0x2c] sm:$0xff]
        %v8262 = vld [vmem:[#allocation4 + $0x34] sm:$0xff]
        %v8263 = vld [vmem:[#allocation4 + $0x3c] sm:$0xff]
        %v8264 = vld [vmem:[#allocation4 + $0x44] sm:$0xf]
        %v8265 = vld [vmem:[#allocation4 + $0x48] sm:$0xff]
        %v8266 = vld [vmem:[#allocation4 + $0x50] sm:$0xff]
        %v8267 = vld [vmem:[#allocation4 + $0x58] sm:$0xff]
        %v8268 = vld [vmem:[#allocation4 + $0x60] sm:$0xff]
        %v8269 = vld [vmem:[#allocation4 + $0x68] sm:$0xf]
        %v8270 = vld [vmem:[#allocation4 + $0x6c] sm:$0xff]
        %v8271 = vld [vmem:[#allocation4 + $0x74] sm:$0xff]
        %v8272 = vld [vmem:[#allocation4 + $0x7c] sm:$0xff]
        %v8273 = vld [vmem:[#allocation4 + $0x84] sm:$0xff]
        %v8274 = vld [vmem:[#allocation4 + $0x8c] sm:$0xf]
        %v8275 = vld [vmem:[#allocation4 + $0x90] sm:$0xff]
        %v8276 = vld [vmem:[#allocation4 + $0x98] sm:$0xff]
        %v8277 = vld [vmem:[#allocation4 + $0xa0] sm:$0xff]
        %v8278 = vld [vmem:[#allocation4 + $0xa8] sm:$0xff]
        %v8279 = vld [vmem:[#allocation4 + $0xb0] sm:$0xf]
        %v8280 = vld [vmem:[#allocation4 + $0xb4] sm:$0xff]
        %v8281 = vld [vmem:[#allocation4 + $0xbc] sm:$0xff]
        %v8282 = vld [vmem:[#allocation4 + $0xc4] sm:$0xff]
        %v8283 = vld [vmem:[#allocation4 + $0xcc] sm:$0xff]
        %v8284 = vld [vmem:[#allocation4 + $0xd4] sm:$0xf]
        %v8285 = vld [vmem:[#allocation4 + $0xd8] sm:$0xff]
        %v8286 = vld [vmem:[#allocation4 + $0xe0] sm:$0xff]
        %v8287 = vld [vmem:[#allocation4 + $0xe8] sm:$0xff]
        %v8288 = vld [vmem:[#allocation4 + $0xf0] sm:$0xff]
        %v8289 = vld [vmem:[#allocation4 + $0xf8] sm:$0xf]
        %v8290 = vld [vmem:[#allocation4 + $0xfc] sm:$0xff]
        %v8291 = vld [vmem:[#allocation4 + $0x104] sm:$0xff]
        %v8292 = vld [vmem:[#allocation4 + $0x10c] sm:$0xff]
        %v8293 = vld [vmem:[#allocation4 + $0x114] sm:$0xff]
        %v8294 = vld [vmem:[#allocation4 + $0x11c] sm:$0xf]
        %v8295 = vld [vmem:[#allocation4 + $0x120] sm:$0xff]
        %v8296 = vld [vmem:[#allocation4 + $0x128] sm:$0xff]
        %v8297 = vld [vmem:[#allocation4 + $0x130] sm:$0xff]
        %v8298 = vld [vmem:[#allocation4 + $0x138] sm:$0xff]
        %v8299 = vld [vmem:[#allocation4 + $0x140] sm:$0xf]
        %v8300 = vld [vmem:[#allocation4 + $0x144] sm:$0xff]
        %v8301 = vld [vmem:[#allocation4 + $0x14c] sm:$0xff]
        %v8302 = vld [vmem:[#allocation4 + $0x154] sm:$0xff]
        %v8303 = vld [vmem:[#allocation4 + $0x15c] sm:$0xff]
        %v8304 = vld [vmem:[#allocation4 + $0x164] sm:$0xf]
        %v8305 = vld [vmem:[#allocation4 + $0x168] sm:$0xff]
        %v8306 = vld [vmem:[#allocation4 + $0x170] sm:$0xff]
        %v8307 = vld [vmem:[#allocation4 + $0x178] sm:$0xff]
        %v8308 = vld [vmem:[#allocation4 + $0x180] sm:$0xff]
        %v8309 = vld [vmem:[#allocation4 + $0x188] sm:$0xf]
        %v8310 = vld [vmem:[#allocation4 + $0x18c] sm:$0xff]
        %v8311 = vld [vmem:[#allocation4 + $0x194] sm:$0xff]
        %v8312 = vld [vmem:[#allocation4 + $0x19c] sm:$0xff]
        %v8313 = vld [vmem:[#allocation4 + $0x1a4] sm:$0xff]
        %v8314 = vld [vmem:[#allocation4 + $0x1ac] sm:$0xf]
        %v8315 = vld [vmem:[#allocation4 + $0x1b0] sm:$0xff]
        %v8316 = vld [vmem:[#allocation4 + $0x1b8] sm:$0xff]
        %v8317 = vld [vmem:[#allocation4 + $0x1c0] sm:$0xff]
        %v8318 = vld [vmem:[#allocation4 + $0x1c8] sm:$0xff]
        %v8319 = vld [vmem:[#allocation4 + $0x1d0] sm:$0xf]
        %v8320 = vld [vmem:[#allocation4 + $0x1d4] sm:$0xff]
        %v8321 = vld [vmem:[#allocation4 + $0x1dc] sm:$0xff]
        %v8322 = vld [vmem:[#allocation4 + $0x1e4] sm:$0xff]
        %v8323 = vld [vmem:[#allocation4 + $0x1ec] sm:$0xff]
        %v8324 = vld [vmem:[#allocation4 + $0x1f4] sm:$0xf]
        %v8325 = vld [vmem:[#allocation4 + $0x1f8] sm:$0xff]
        %v8326 = vld [vmem:[#allocation4 + $0x200] sm:$0xff]
        %v8327 = vld [vmem:[#allocation4 + $0x208] sm:$0xff]
        %v8328 = vld [vmem:[#allocation4 + $0x210] sm:$0xff]
        %v8329 = vld [vmem:[#allocation4 + $0x218] sm:$0xf]
        %v8330 = vld [vmem:[#allocation4 + $0x21c] sm:$0xff]
        %v8331 = vld [vmem:[#allocation4 + $0x224] sm:$0xff]
        %v8332 = vld [vmem:[#allocation4 + $0x22c] sm:$0xff]
        %v8333 = vld [vmem:[#allocation4 + $0x234] sm:$0xff]
        %v8334 = vld [vmem:[#allocation4 + $0x23c] sm:$0xf]
        %v8335 = vld [vmem:[#allocation4 + $0x240] sm:$0xff]
        %v8336 = vld [vmem:[#allocation4 + $0x248] sm:$0xff]
        %v8337 = vld [vmem:[#allocation4 + $0x250] sm:$0xff]
        %v8338 = vld [vmem:[#allocation4 + $0x258] sm:$0xff]
        %v8339 = vld [vmem:[#allocation4 + $0x260] sm:$0xf]
        %v8340 = vld [vmem:[#allocation4 + $0x264] sm:$0xff]
        %v8341 = vld [vmem:[#allocation4 + $0x26c] sm:$0xff]
        %v8342 = vld [vmem:[#allocation4 + $0x274] sm:$0xff]
        %v8343 = vld [vmem:[#allocation4 + $0x27c] sm:$0xff]
        %v8344 = vld [vmem:[#allocation4 + $0x284] sm:$0xf]
        %v8345 = vld [vmem:[#allocation4 + $0x288] sm:$0xff]
        %v8346 = vld [vmem:[#allocation4 + $0x290] sm:$0xff]
        %v8347 = vld [vmem:[#allocation4 + $0x298] sm:$0xff]
        %v8348 = vld [vmem:[#allocation4 + $0x2a0] sm:$0xff]
        %v8349 = vld [vmem:[#allocation4 + $0x2a8] sm:$0xf]
        %v8350 = vld [vmem:[#allocation4 + $0x2ac] sm:$0xff]
        %v8351 = vld [vmem:[#allocation4 + $0x2b4] sm:$0xff]
        %v8352 = vld [vmem:[#allocation4 + $0x2bc] sm:$0xff]
        %v8353 = vld [vmem:[#allocation4 + $0x2c4] sm:$0xff]
        %v8354 = vld [vmem:[#allocation4 + $0x2cc] sm:$0xf]
        %v8355 = vld [vmem:[#allocation4 + $0x2d0] sm:$0xff]
        %v8356 = vld [vmem:[#allocation4 + $0x2d8] sm:$0xff]
        %v8357 = vld [vmem:[#allocation4 + $0x2e0] sm:$0xff]
        %v8358 = vld [vmem:[#allocation4 + $0x2e8] sm:$0xff]
        %v8359 = vld [vmem:[#allocation4 + $0x2f0] sm:$0xf]
        %v8360 = vld [vmem:[#allocation4 + $0x2f4] sm:$0xff]
        %v8361 = vld [vmem:[#allocation4 + $0x2fc] sm:$0xff]
        %v8362 = vld [vmem:[#allocation4 + $0x304] sm:$0xff]
        %v8363 = vld [vmem:[#allocation4 + $0x30c] sm:$0xff]
        %v8364 = vld [vmem:[#allocation4 + $0x314] sm:$0xf]
        %v8365 = vld [vmem:[#allocation4 + $0x318] sm:$0xff]
        %v8366 = vld [vmem:[#allocation4 + $0x320] sm:$0xff]
        %v8367 = vld [vmem:[#allocation4 + $0x328] sm:$0xff]
        %v8368 = vld [vmem:[#allocation4 + $0x330] sm:$0xff]
        %v8369 = vld [vmem:[#allocation4 + $0x338] sm:$0xf]
        %v8370 = vld [vmem:[#allocation4 + $0x33c] sm:$0xff]
        %v8371 = vld [vmem:[#allocation4 + $0x344] sm:$0xff]
        %v8372 = vld [vmem:[#allocation4 + $0x34c] sm:$0xff]
        %v8373 = vld [vmem:[#allocation4 + $0x354] sm:$0xff]
        %v8374 = vld [vmem:[#allocation4 + $0x35c] sm:$0xf]
        %v8375 = vld [vmem:[#allocation4 + $0x360] sm:$0xff]
        %v8376 = vld [vmem:[#allocation4 + $0x368] sm:$0xff]
        %v8377 = vld [vmem:[#allocation4 + $0x370] sm:$0xff]
        %v8378 = vld [vmem:[#allocation4 + $0x378] sm:$0xff]
        %v8379 = vld [vmem:[#allocation4 + $0x380] sm:$0xf]
        %v8380 = vld [vmem:[#allocation4 + $0x384] sm:$0xff]
        %v8381 = vld [vmem:[#allocation4 + $0x38c] sm:$0xff]
        %v8382 = vld [vmem:[#allocation4 + $0x394] sm:$0xff]
        %v8383 = vld [vmem:[#allocation4 + $0x39c] sm:$0xff]
        %v8384 = vld [vmem:[#allocation4 + $0x3a4] sm:$0xf]
        %v8385 = vld [vmem:[#allocation4 + $0x3a8] sm:$0xff]
        %v8386 = vld [vmem:[#allocation4 + $0x3b0] sm:$0xff]
        %v8387 = vld [vmem:[#allocation4 + $0x3b8] sm:$0xff]
        %v8388 = vld [vmem:[#allocation4 + $0x3c0] sm:$0xff]
        %v8389 = vld [vmem:[#allocation4 + $0x3c8] sm:$0xf]
        %v8390 = vld [vmem:[#allocation4 + $0x3cc] sm:$0xff]
        %v8391 = vld [vmem:[#allocation4 + $0x3d4] sm:$0xff]
        %v8392 = vld [vmem:[#allocation4 + $0x3dc] sm:$0xff]
        %v8393 = vld [vmem:[#allocation4 + $0x3e4] sm:$0xff]
        %v8394 = vld [vmem:[#allocation4 + $0x3ec] sm:$0xf]
        %v8395 = vld [vmem:[#allocation4 + $0x3f0] sm:$0xff]
        %v8396 = vld [vmem:[#allocation4 + $0x3f8] sm:$0xff]
        %v8397 = vld [vmem:[#allocation4 + $0x400] sm:$0xff]
        %v8398 = vld [vmem:[#allocation4 + $0x408] sm:$0xff]
        %v8399 = vld [vmem:[#allocation4 + $0x410] sm:$0xf]
        %v8400 = vld [vmem:[#allocation4 + $0x414] sm:$0xff]
        %v8401 = vld [vmem:[#allocation4 + $0x41c] sm:$0xff]
        %v8402 = vld [vmem:[#allocation4 + $0x424] sm:$0xff]
        %v8403 = vld [vmem:[#allocation4 + $0x42c] sm:$0xff]
        %v8404 = vld [vmem:[#allocation4 + $0x434] sm:$0xf]
        %v8405 = vld [vmem:[#allocation4 + $0x438] sm:$0xff]
        %v8406 = vld [vmem:[#allocation4 + $0x440] sm:$0xff]
        %v8407 = vld [vmem:[#allocation4 + $0x448] sm:$0xff]
        %v8408 = vld [vmem:[#allocation4 + $0x450] sm:$0xff]
        %v8409 = vld [vmem:[#allocation4 + $0x458] sm:$0xf]
        %v8410 = vld [vmem:[#allocation4 + $0x45c] sm:$0xff]
        %v8411 = vld [vmem:[#allocation4 + $0x464] sm:$0xff]
        %v8412 = vld [vmem:[#allocation4 + $0x46c] sm:$0xff]
        %v8413 = vld [vmem:[#allocation4 + $0x474] sm:$0xff]
        %v8414 = vld [vmem:[#allocation4 + $0x47c] sm:$0xf]
        %v8415 = vld [vmem:[#allocation6] sm:$0xf]
        %v8416 = vld [vmem:[#allocation6 + $0x4] sm:$0xf]
        %v8417 = vld [vmem:[#allocation6 + $0x8] sm:$0xf]
        %v8418 = vld [vmem:[#allocation6 + $0xc] sm:$0xf]
        %v8419 = vld [vmem:[#allocation6 + $0x10] sm:$0xf]
        %v8420 = vld [vmem:[#allocation6 + $0x14] sm:$0xf]
        %v8421 = vld [vmem:[#allocation6 + $0x18] sm:$0xf]
        %v8422 = vld [vmem:[#allocation6 + $0x1c] sm:$0xf]
        %v8423 = vld [vmem:[#allocation6 + $0x20] sm:$0xf]
        %v8424 = vld [vmem:[#allocation6 + $0x24] sm:$0xf]
        %v8425 = vld [vmem:[#allocation6 + $0x28] sm:$0xf]
        %v8426 = vld [vmem:[#allocation6 + $0x2c] sm:$0xf]
        %v8427 = vld [vmem:[#allocation6 + $0x30] sm:$0xf]
        %v8428 = vld [vmem:[#allocation6 + $0x34] sm:$0xf]
        %v8429 = vld [vmem:[#allocation6 + $0x38] sm:$0xf]
        %v8430 = vld [vmem:[#allocation6 + $0x3c] sm:$0xf]
        %v8431 = vld [vmem:[#allocation6 + $0x40] sm:$0xf]
        %v8432 = vld [vmem:[#allocation6 + $0x44] sm:$0xf]
        %v8433 = vld [vmem:[#allocation6 + $0x48] sm:$0xf]
        %v8434 = vld [vmem:[#allocation6 + $0x4c] sm:$0xf]
        %v8435 = vld [vmem:[#allocation6 + $0x50] sm:$0xf]
        %v8436 = vld [vmem:[#allocation6 + $0x54] sm:$0xf]
        %v8437 = vld [vmem:[#allocation6 + $0x58] sm:$0xf]
        %v8438 = vld [vmem:[#allocation6 + $0x5c] sm:$0xf]
        %v8439 = vld [vmem:[#allocation6 + $0x60] sm:$0xf]
        %v8440 = vld [vmem:[#allocation6 + $0x64] sm:$0xf]
        %v8441 = vld [vmem:[#allocation6 + $0x68] sm:$0xf]
        %v8442 = vld [vmem:[#allocation6 + $0x6c] sm:$0xf]
        %v8443 = vld [vmem:[#allocation6 + $0x70] sm:$0xf]
        %v8444 = vld [vmem:[#allocation6 + $0x74] sm:$0xf]
        %v8445 = vld [vmem:[#allocation6 + $0x78] sm:$0xf]
        %v8446 = vld [vmem:[#allocation6 + $0x7c] sm:$0xf]
        %v8447 = vld [vmem:[#allocation6 + $0x80] sm:$0xf]
        %v8448 = vld [vmem:[#allocation6 + $0x84] sm:$0xf]
        %v8449 = vld [vmem:[#allocation6 + $0x88] sm:$0xf]
        %v8450 = vld [vmem:[#allocation6 + $0x8c] sm:$0xf]
        %v8451 = vld [vmem:[#allocation6 + $0x90] sm:$0xf]
        %v8452 = vld [vmem:[#allocation6 + $0x94] sm:$0xf]
        %v8453 = vld [vmem:[#allocation6 + $0x98] sm:$0xf]
        %v8454 = vld [vmem:[#allocation6 + $0x9c] sm:$0xf]
        %v8455 = vld [vmem:[#allocation6 + $0xa0] sm:$0xf]
        %v8456 = vld [vmem:[#allocation6 + $0xa4] sm:$0xf]
        %v8457 = vld [vmem:[#allocation6 + $0xa8] sm:$0xf]
        %v8458 = vld [vmem:[#allocation6 + $0xac] sm:$0xf]
        %v8459 = vld [vmem:[#allocation6 + $0xb0] sm:$0xf]
        %v8460 = vld [vmem:[#allocation6 + $0xb4] sm:$0xf]
        %v8461 = vld [vmem:[#allocation6 + $0xb8] sm:$0xf]
        %v8462 = vld [vmem:[#allocation6 + $0xbc] sm:$0xf]
        %v8463 = vld [vmem:[#allocation6 + $0xc0] sm:$0xf]
        %v8464 = vld [vmem:[#allocation6 + $0xc4] sm:$0xf]
        %v8465 = vld [vmem:[#allocation6 + $0xc8] sm:$0xf]
        %v8466 = vld [vmem:[#allocation6 + $0xcc] sm:$0xf]
        %v8467 = vld [vmem:[#allocation6 + $0xd0] sm:$0xf]
        %v8468 = vld [vmem:[#allocation6 + $0xd4] sm:$0xf]
        %v8469 = vld [vmem:[#allocation6 + $0xd8] sm:$0xf]
        %v8470 = vld [vmem:[#allocation6 + $0xdc] sm:$0xf]
        %v8471 = vld [vmem:[#allocation6 + $0xe0] sm:$0xf]
        %v8472 = vld [vmem:[#allocation6 + $0xe4] sm:$0xf]
        %v8473 = vld [vmem:[#allocation6 + $0xe8] sm:$0xf]
        %v8474 = vld [vmem:[#allocation6 + $0xec] sm:$0xf]
        %v8475 = vld [vmem:[#allocation6 + $0xf0] sm:$0xf]
        %v8476 = vld [vmem:[#allocation6 + $0xf4] sm:$0xf]
        %v8477 = vld [vmem:[#allocation6 + $0xf8] sm:$0xf]
        %v8478 = vld [vmem:[#allocation6 + $0xfc] sm:$0xf]
        %v8479 = vld [vmem:[#allocation6 + $0x100] sm:$0xf]
        %v8480 = vld [vmem:[#allocation6 + $0x104] sm:$0xf]
        %v8481 = vld [vmem:[#allocation6 + $0x108] sm:$0xf]
        %v8482 = vld [vmem:[#allocation6 + $0x10c] sm:$0xf]
        %v8483 = vld [vmem:[#allocation6 + $0x110] sm:$0xf]
        %v8484 = vld [vmem:[#allocation6 + $0x114] sm:$0xf]
        %v8485 = vld [vmem:[#allocation6 + $0x118] sm:$0xf]
        %v8486 = vld [vmem:[#allocation6 + $0x11c] sm:$0xf]
        %v8487 = vld [vmem:[#allocation6 + $0x120] sm:$0xf]
        %v8488 = vld [vmem:[#allocation6 + $0x124] sm:$0xf]
        %v8489 = vld [vmem:[#allocation6 + $0x128] sm:$0xf]
        %v8490 = vld [vmem:[#allocation6 + $0x12c] sm:$0xf]
        %v8491 = vld [vmem:[#allocation6 + $0x130] sm:$0xf]
        %v8492 = vld [vmem:[#allocation6 + $0x134] sm:$0xf]
        %v8493 = vld [vmem:[#allocation6 + $0x138] sm:$0xf]
        %v8494 = vld [vmem:[#allocation6 + $0x13c] sm:$0xf]
        %v8495 = vld [vmem:[#allocation6 + $0x140] sm:$0xf]
        %v8496 = vld [vmem:[#allocation6 + $0x144] sm:$0xf]
        %v8497 = vld [vmem:[#allocation6 + $0x148] sm:$0xf]
        %v8498 = vld [vmem:[#allocation6 + $0x14c] sm:$0xf]
        %v8499 = vld [vmem:[#allocation6 + $0x150] sm:$0xf]
        %v8500 = vld [vmem:[#allocation6 + $0x154] sm:$0xf]
        %v8501 = vld [vmem:[#allocation6 + $0x158] sm:$0xf]
        %v8502 = vld [vmem:[#allocation6 + $0x15c] sm:$0xf]
        %v8503 = vld [vmem:[#allocation6 + $0x160] sm:$0xf]
        %v8504 = vld [vmem:[#allocation6 + $0x164] sm:$0xf]
        %v8505 = vld [vmem:[#allocation6 + $0x168] sm:$0xf]
        %v8506 = vld [vmem:[#allocation6 + $0x16c] sm:$0xf]
        %v8507 = vld [vmem:[#allocation6 + $0x170] sm:$0xf]
        %v8508 = vld [vmem:[#allocation6 + $0x174] sm:$0xf]
        %v8509 = vld [vmem:[#allocation6 + $0x178] sm:$0xf]
        %v8510 = vld [vmem:[#allocation6 + $0x17c] sm:$0xf]
        %v8511 = vld [vmem:[#allocation6 + $0x180] sm:$0xf]
        %v8512 = vld [vmem:[#allocation6 + $0x184] sm:$0xf]
        %v8513 = vld [vmem:[#allocation6 + $0x188] sm:$0xf]
        %v8514 = vld [vmem:[#allocation6 + $0x18c] sm:$0xf]
        %v8515 = vld [vmem:[#allocation6 + $0x190] sm:$0xf]
        %v8516 = vld [vmem:[#allocation6 + $0x194] sm:$0xf]
        %v8517 = vld [vmem:[#allocation6 + $0x198] sm:$0xf]
        %v8518 = vld [vmem:[#allocation6 + $0x19c] sm:$0xf]
        %v8519 = vld [vmem:[#allocation6 + $0x1a0] sm:$0xf]
        %v8520 = vld [vmem:[#allocation6 + $0x1a4] sm:$0xf]
        %v8521 = vld [vmem:[#allocation6 + $0x1a8] sm:$0xf]
        %v8522 = vld [vmem:[#allocation6 + $0x1ac] sm:$0xf]
        %v8523 = vld [vmem:[#allocation6 + $0x1b0] sm:$0xf]
        %v8524 = vld [vmem:[#allocation6 + $0x1b4] sm:$0xf]
        %v8525 = vld [vmem:[#allocation6 + $0x1b8] sm:$0xf]
        %v8526 = vld [vmem:[#allocation6 + $0x1bc] sm:$0xf]
        %v8527 = vld [vmem:[#allocation6 + $0x1c0] sm:$0xf]
        %v8528 = vld [vmem:[#allocation6 + $0x1c4] sm:$0xf]
        %v8529 = vld [vmem:[#allocation6 + $0x1c8] sm:$0xf]
        %v8530 = vld [vmem:[#allocation6 + $0x1cc] sm:$0xf]
        %v8531 = vld [vmem:[#allocation6 + $0x1d0] sm:$0xf]
        %v8532 = vld [vmem:[#allocation6 + $0x1d4] sm:$0xf]
        %v8533 = vld [vmem:[#allocation6 + $0x1d8] sm:$0xf]
        %v8534 = vld [vmem:[#allocation6 + $0x1dc] sm:$0xf]
        %v8535 = vld [vmem:[#allocation6 + $0x1e0] sm:$0xf]
        %v8536 = vld [vmem:[#allocation6 + $0x1e4] sm:$0xf]
        %v8537 = vld [vmem:[#allocation6 + $0x1e8] sm:$0xf]
        %v8538 = vld [vmem:[#allocation6 + $0x1ec] sm:$0xf]
        %v8539 = vld [vmem:[#allocation6 + $0x1f0] sm:$0xf]
        %v8540 = vld [vmem:[#allocation6 + $0x1f4] sm:$0xf]
        %v8541 = vld [vmem:[#allocation6 + $0x1f8] sm:$0xf]
        %v8542 = vld [vmem:[#allocation6 + $0x1fc] sm:$0xf]
        %v8543 = vld [vmem:[#allocation6 + $0x200] sm:$0xf]
        %v8544 = vld [vmem:[#allocation6 + $0x204] sm:$0xf]
        %v8545 = vld [vmem:[#allocation6 + $0x208] sm:$0xf]
        %v8546 = vld [vmem:[#allocation6 + $0x20c] sm:$0xf]
        %v8547 = vld [vmem:[#allocation6 + $0x210] sm:$0xf]
        %v8548 = vld [vmem:[#allocation6 + $0x214] sm:$0xf]
        %v8549 = vld [vmem:[#allocation6 + $0x218] sm:$0xf]
        %v8550 = vld [vmem:[#allocation6 + $0x21c] sm:$0xf]
        %v8551 = vld [vmem:[#allocation6 + $0x220] sm:$0xf]
        %v8552 = vld [vmem:[#allocation6 + $0x224] sm:$0xf]
        %v8553 = vld [vmem:[#allocation6 + $0x228] sm:$0xf]
        %v8554 = vld [vmem:[#allocation6 + $0x22c] sm:$0xf]
        %v8555 = vld [vmem:[#allocation6 + $0x230] sm:$0xf]
        %v8556 = vld [vmem:[#allocation6 + $0x234] sm:$0xf]
        %v8557 = vld [vmem:[#allocation6 + $0x238] sm:$0xf]
        %v8558 = vld [vmem:[#allocation6 + $0x23c] sm:$0xf]
        %v8719 = vunpack.c.l.b16 %v8255
        %v8720 = vunpack.c.h.b16 %v8255
        %v8721 = vunpack.c.l.b16 %v8256
        %v8722 = vunpack.c.h.b16 %v8256
        %v8723 = vunpack.c.l.b16 %v8257
        %v8724 = vunpack.c.h.b16 %v8257
        %v8725 = vunpack.c.l.b16 %v8258
        %v8726 = vunpack.c.h.b16 %v8258
        %v8727 = vunpack.c.l.b16 %v8259
        %v8728 = vunpack.c.l.b16 %v8260
        %v8729 = vunpack.c.h.b16 %v8260
        %v8730 = vunpack.c.l.b16 %v8261
        %v8731 = vunpack.c.h.b16 %v8261
        %v8732 = vunpack.c.l.b16 %v8262
        %v8733 = vunpack.c.h.b16 %v8262
        %v8734 = vunpack.c.l.b16 %v8263
        %v8735 = vunpack.c.h.b16 %v8263
        %v8736 = vunpack.c.l.b16 %v8264
        %v8737 = vunpack.c.l.b16 %v8265
        %v8738 = vunpack.c.h.b16 %v8265
        %v8739 = vunpack.c.l.b16 %v8266
        %v8740 = vunpack.c.h.b16 %v8266
        %v8741 = vunpack.c.l.b16 %v8267
        %v8742 = vunpack.c.h.b16 %v8267
        %v8743 = vunpack.c.l.b16 %v8268
        %v8744 = vunpack.c.h.b16 %v8268
        %v8745 = vunpack.c.l.b16 %v8269
        %v8746 = vunpack.c.l.b16 %v8270
        %v8747 = vunpack.c.h.b16 %v8270
        %v8748 = vunpack.c.l.b16 %v8271
        %v8749 = vunpack.c.h.b16 %v8271
        %v8750 = vunpack.c.l.b16 %v8272
        %v8751 = vunpack.c.h.b16 %v8272
        %v8752 = vunpack.c.l.b16 %v8273
        %v8753 = vunpack.c.h.b16 %v8273
        %v8754 = vunpack.c.l.b16 %v8274
        %v8755 = vunpack.c.l.b16 %v8275
        %v8756 = vunpack.c.h.b16 %v8275
        %v8757 = vunpack.c.l.b16 %v8276
        %v8758 = vunpack.c.h.b16 %v8276
        %v8759 = vunpack.c.l.b16 %v8277
        %v8760 = vunpack.c.h.b16 %v8277
        %v8761 = vunpack.c.l.b16 %v8278
        %v8762 = vunpack.c.h.b16 %v8278
        %v8763 = vunpack.c.l.b16 %v8279
        %v8764 = vunpack.c.l.b16 %v8280
        %v8765 = vunpack.c.h.b16 %v8280
        %v8766 = vunpack.c.l.b16 %v8281
        %v8767 = vunpack.c.h.b16 %v8281
        %v8768 = vunpack.c.l.b16 %v8282
        %v8769 = vunpack.c.h.b16 %v8282
        %v8770 = vunpack.c.l.b16 %v8283
        %v8771 = vunpack.c.h.b16 %v8283
        %v8772 = vunpack.c.l.b16 %v8284
        %v8773 = vunpack.c.l.b16 %v8285
        %v8774 = vunpack.c.h.b16 %v8285
        %v8775 = vunpack.c.l.b16 %v8286
        %v8776 = vunpack.c.h.b16 %v8286
        %v8777 = vunpack.c.l.b16 %v8287
        %v8778 = vunpack.c.h.b16 %v8287
        %v8779 = vunpack.c.l.b16 %v8288
        %v8780 = vunpack.c.h.b16 %v8288
        %v8781 = vunpack.c.l.b16 %v8289
        %v8782 = vunpack.c.l.b16 %v8290
        %v8783 = vunpack.c.h.b16 %v8290
        %v8784 = vunpack.c.l.b16 %v8291
        %v8785 = vunpack.c.h.b16 %v8291
        %v8786 = vunpack.c.l.b16 %v8292
        %v8787 = vunpack.c.h.b16 %v8292
        %v8788 = vunpack.c.l.b16 %v8293
        %v8789 = vunpack.c.h.b16 %v8293
        %v8790 = vunpack.c.l.b16 %v8294
        %v8791 = vunpack.c.l.b16 %v8295
        %v8792 = vunpack.c.h.b16 %v8295
        %v8793 = vunpack.c.l.b16 %v8296
        %v8794 = vunpack.c.h.b16 %v8296
        %v8795 = vunpack.c.l.b16 %v8297
        %v8796 = vunpack.c.h.b16 %v8297
        %v8797 = vunpack.c.l.b16 %v8298
        %v8798 = vunpack.c.h.b16 %v8298
        %v8799 = vunpack.c.l.b16 %v8299
        %v8800 = vunpack.c.l.b16 %v8300
        %v8801 = vunpack.c.h.b16 %v8300
        %v8802 = vunpack.c.l.b16 %v8301
        %v8803 = vunpack.c.h.b16 %v8301
        %v8804 = vunpack.c.l.b16 %v8302
        %v8805 = vunpack.c.h.b16 %v8302
        %v8806 = vunpack.c.l.b16 %v8303
        %v8807 = vunpack.c.h.b16 %v8303
        %v8808 = vunpack.c.l.b16 %v8304
        %v8809 = vunpack.c.l.b16 %v8305
        %v8810 = vunpack.c.h.b16 %v8305
        %v8811 = vunpack.c.l.b16 %v8306
        %v8812 = vunpack.c.h.b16 %v8306
        %v8813 = vunpack.c.l.b16 %v8307
        %v8814 = vunpack.c.h.b16 %v8307
        %v8815 = vunpack.c.l.b16 %v8308
        %v8816 = vunpack.c.h.b16 %v8308
        %v8817 = vunpack.c.l.b16 %v8309
        %v8818 = vunpack.c.l.b16 %v8310
        %v8819 = vunpack.c.h.b16 %v8310
        %v8820 = vunpack.c.l.b16 %v8311
        %v8821 = vunpack.c.h.b16 %v8311
        %v8822 = vunpack.c.l.b16 %v8312
        %v8823 = vunpack.c.h.b16 %v8312
        %v8824 = vunpack.c.l.b16 %v8313
        %v8825 = vunpack.c.h.b16 %v8313
        %v8826 = vunpack.c.l.b16 %v8314
        %v8827 = vunpack.c.l.b16 %v8315
        %v8828 = vunpack.c.h.b16 %v8315
        %v8829 = vunpack.c.l.b16 %v8316
        %v8830 = vunpack.c.h.b16 %v8316
        %v8831 = vunpack.c.l.b16 %v8317
        %v8832 = vunpack.c.h.b16 %v8317
        %v8833 = vunpack.c.l.b16 %v8318
        %v8834 = vunpack.c.h.b16 %v8318
        %v8835 = vunpack.c.l.b16 %v8319
        %v8836 = vunpack.c.l.b16 %v8320
        %v8837 = vunpack.c.h.b16 %v8320
        %v8838 = vunpack.c.l.b16 %v8321
        %v8839 = vunpack.c.h.b16 %v8321
        %v8840 = vunpack.c.l.b16 %v8322
        %v8841 = vunpack.c.h.b16 %v8322
        %v8842 = vunpack.c.l.b16 %v8323
        %v8843 = vunpack.c.h.b16 %v8323
        %v8844 = vunpack.c.l.b16 %v8324
        %v8845 = vunpack.c.l.b16 %v8325
        %v8846 = vunpack.c.h.b16 %v8325
        %v8847 = vunpack.c.l.b16 %v8326
        %v8848 = vunpack.c.h.b16 %v8326
        %v8849 = vunpack.c.l.b16 %v8327
        %v8850 = vunpack.c.h.b16 %v8327
        %v8851 = vunpack.c.l.b16 %v8328
        %v8852 = vunpack.c.h.b16 %v8328
        %v8853 = vunpack.c.l.b16 %v8329
        %v8854 = vunpack.c.l.b16 %v8330
        %v8855 = vunpack.c.h.b16 %v8330
        %v8856 = vunpack.c.l.b16 %v8331
        %v8857 = vunpack.c.h.b16 %v8331
        %v8858 = vunpack.c.l.b16 %v8332
        %v8859 = vunpack.c.h.b16 %v8332
        %v8860 = vunpack.c.l.b16 %v8333
        %v8861 = vunpack.c.h.b16 %v8333
        %v8862 = vunpack.c.l.b16 %v8334
        %v8863 = vunpack.c.l.b16 %v8335
        %v8864 = vunpack.c.h.b16 %v8335
        %v8865 = vunpack.c.l.b16 %v8336
        %v8866 = vunpack.c.h.b16 %v8336
        %v8867 = vunpack.c.l.b16 %v8337
        %v8868 = vunpack.c.h.b16 %v8337
        %v8869 = vunpack.c.l.b16 %v8338
        %v8870 = vunpack.c.h.b16 %v8338
        %v8871 = vunpack.c.l.b16 %v8339
        %v8872 = vunpack.c.l.b16 %v8340
        %v8873 = vunpack.c.h.b16 %v8340
        %v8874 = vunpack.c.l.b16 %v8341
        %v8875 = vunpack.c.h.b16 %v8341
        %v8876 = vunpack.c.l.b16 %v8342
        %v8877 = vunpack.c.h.b16 %v8342
        %v8878 = vunpack.c.l.b16 %v8343
        %v8879 = vunpack.c.h.b16 %v8343
        %v8880 = vunpack.c.l.b16 %v8344
        %v8881 = vunpack.c.l.b16 %v8345
        %v8882 = vunpack.c.h.b16 %v8345
        %v8883 = vunpack.c.l.b16 %v8346
        %v8884 = vunpack.c.h.b16 %v8346
        %v8885 = vunpack.c.l.b16 %v8347
        %v8886 = vunpack.c.h.b16 %v8347
        %v8887 = vunpack.c.l.b16 %v8348
        %v8888 = vunpack.c.h.b16 %v8348
        %v8889 = vunpack.c.l.b16 %v8349
        %v8890 = vunpack.c.l.b16 %v8350
        %v8891 = vunpack.c.h.b16 %v8350
        %v8892 = vunpack.c.l.b16 %v8351
        %v8893 = vunpack.c.h.b16 %v8351
        %v8894 = vunpack.c.l.b16 %v8352
        %v8895 = vunpack.c.h.b16 %v8352
        %v8896 = vunpack.c.l.b16 %v8353
        %v8897 = vunpack.c.h.b16 %v8353
        %v8898 = vunpack.c.l.b16 %v8354
        %v8899 = vunpack.c.l.b16 %v8355
        %v8900 = vunpack.c.h.b16 %v8355
        %v8901 = vunpack.c.l.b16 %v8356
        %v8902 = vunpack.c.h.b16 %v8356
        %v8903 = vunpack.c.l.b16 %v8357
        %v8904 = vunpack.c.h.b16 %v8357
        %v8905 = vunpack.c.l.b16 %v8358
        %v8906 = vunpack.c.h.b16 %v8358
        %v8907 = vunpack.c.l.b16 %v8359
        %v8908 = vunpack.c.l.b16 %v8360
        %v8909 = vunpack.c.h.b16 %v8360
        %v8910 = vunpack.c.l.b16 %v8361
        %v8911 = vunpack.c.h.b16 %v8361
        %v8912 = vunpack.c.l.b16 %v8362
        %v8913 = vunpack.c.h.b16 %v8362
        %v8914 = vunpack.c.l.b16 %v8363
        %v8915 = vunpack.c.h.b16 %v8363
        %v8916 = vunpack.c.l.b16 %v8364
        %v8917 = vunpack.c.l.b16 %v8365
        %v8918 = vunpack.c.h.b16 %v8365
        %v8919 = vunpack.c.l.b16 %v8366
        %v8920 = vunpack.c.h.b16 %v8366
        %v8921 = vunpack.c.l.b16 %v8367
        %v8922 = vunpack.c.h.b16 %v8367
        %v8923 = vunpack.c.l.b16 %v8368
        %v8924 = vunpack.c.h.b16 %v8368
        %v8925 = vunpack.c.l.b16 %v8369
        %v8926 = vunpack.c.l.b16 %v8370
        %v8927 = vunpack.c.h.b16 %v8370
        %v8928 = vunpack.c.l.b16 %v8371
        %v8929 = vunpack.c.h.b16 %v8371
        %v8930 = vunpack.c.l.b16 %v8372
        %v8931 = vunpack.c.h.b16 %v8372
        %v8932 = vunpack.c.l.b16 %v8373
        %v8933 = vunpack.c.h.b16 %v8373
        %v8934 = vunpack.c.l.b16 %v8374
        %v8935 = vunpack.c.l.b16 %v8375
        %v8936 = vunpack.c.h.b16 %v8375
        %v8937 = vunpack.c.l.b16 %v8376
        %v8938 = vunpack.c.h.b16 %v8376
        %v8939 = vunpack.c.l.b16 %v8377
        %v8940 = vunpack.c.h.b16 %v8377
        %v8941 = vunpack.c.l.b16 %v8378
        %v8942 = vunpack.c.h.b16 %v8378
        %v8943 = vunpack.c.l.b16 %v8379
        %v8944 = vunpack.c.l.b16 %v8380
        %v8945 = vunpack.c.h.b16 %v8380
        %v8946 = vunpack.c.l.b16 %v8381
        %v8947 = vunpack.c.h.b16 %v8381
        %v8948 = vunpack.c.l.b16 %v8382
        %v8949 = vunpack.c.h.b16 %v8382
        %v8950 = vunpack.c.l.b16 %v8383
        %v8951 = vunpack.c.h.b16 %v8383
        %v8952 = vunpack.c.l.b16 %v8384
        %v8953 = vunpack.c.l.b16 %v8385
        %v8954 = vunpack.c.h.b16 %v8385
        %v8955 = vunpack.c.l.b16 %v8386
        %v8956 = vunpack.c.h.b16 %v8386
        %v8957 = vunpack.c.l.b16 %v8387
        %v8958 = vunpack.c.h.b16 %v8387
        %v8959 = vunpack.c.l.b16 %v8388
        %v8960 = vunpack.c.h.b16 %v8388
        %v8961 = vunpack.c.l.b16 %v8389
        %v8962 = vunpack.c.l.b16 %v8390
        %v8963 = vunpack.c.h.b16 %v8390
        %v8964 = vunpack.c.l.b16 %v8391
        %v8965 = vunpack.c.h.b16 %v8391
        %v8966 = vunpack.c.l.b16 %v8392
        %v8967 = vunpack.c.h.b16 %v8392
        %v8968 = vunpack.c.l.b16 %v8393
        %v8969 = vunpack.c.h.b16 %v8393
        %v8970 = vunpack.c.l.b16 %v8394
        %v8971 = vunpack.c.l.b16 %v8395
        %v8972 = vunpack.c.h.b16 %v8395
        %v8973 = vunpack.c.l.b16 %v8396
        %v8974 = vunpack.c.h.b16 %v8396
        %v8975 = vunpack.c.l.b16 %v8397
        %v8976 = vunpack.c.h.b16 %v8397
        %v8977 = vunpack.c.l.b16 %v8398
        %v8978 = vunpack.c.h.b16 %v8398
        %v8979 = vunpack.c.l.b16 %v8399
        %v8980 = vunpack.c.l.b16 %v8400
        %v8981 = vunpack.c.h.b16 %v8400
        %v8982 = vunpack.c.l.b16 %v8401
        %v8983 = vunpack.c.h.b16 %v8401
        %v8984 = vunpack.c.l.b16 %v8402
        %v8985 = vunpack.c.h.b16 %v8402
        %v8986 = vunpack.c.l.b16 %v8403
        %v8987 = vunpack.c.h.b16 %v8403
        %v8988 = vunpack.c.l.b16 %v8404
        %v8989 = vunpack.c.l.b16 %v8405
        %v8990 = vunpack.c.h.b16 %v8405
        %v8991 = vunpack.c.l.b16 %v8406
        %v8992 = vunpack.c.h.b16 %v8406
        %v8993 = vunpack.c.l.b16 %v8407
        %v8994 = vunpack.c.h.b16 %v8407
        %v8995 = vunpack.c.l.b16 %v8408
        %v8996 = vunpack.c.h.b16 %v8408
        %v8997 = vunpack.c.l.b16 %v8409
        %v8998 = vunpack.c.l.b16 %v8410
        %v8999 = vunpack.c.h.b16 %v8410
        %v9000 = vunpack.c.l.b16 %v8411
        %v9001 = vunpack.c.h.b16 %v8411
        %v9002 = vunpack.c.l.b16 %v8412
        %v9003 = vunpack.c.h.b16 %v8412
        %v9004 = vunpack.c.l.b16 %v8413
        %v9005 = vunpack.c.h.b16 %v8413
        %v9006 = vunpack.c.l.b16 %v8414
        %v9007 = vpack.c.b16 %v8728, %v8719
        %v9008 = vpack.c.b16 %v8729, %v8720
        %v9009 = vpack.c.b16 %v8730, %v8721
        %v9010 = vpack.c.b16 %v8731, %v8722
        %v9011 = vpack.c.b16 %v8732, %v8723
        %v9012 = vpack.c.b16 %v8733, %v8724
        %v9013 = vpack.c.b16 %v8734, %v8725
        %v9014 = vpack.c.b16 %v8735, %v8726
        %v9015 = vpack.c.b16 %v8736, %v8727
        %v9016 = vpack.c.b16 %v8746, %v8737
        %v9017 = vpack.c.b16 %v8747, %v8738
        %v9018 = vpack.c.b16 %v8748, %v8739
        %v9019 = vpack.c.b16 %v8749, %v8740
        %v9020 = vpack.c.b16 %v8750, %v8741
        %v9021 = vpack.c.b16 %v8751, %v8742
        %v9022 = vpack.c.b16 %v8752, %v8743
        %v9023 = vpack.c.b16 %v8753, %v8744
        %v9024 = vpack.c.b16 %v8754, %v8745
        %v9025 = vpack.c.b16 %v8764, %v8755
        %v9026 = vpack.c.b16 %v8765, %v8756
        %v9027 = vpack.c.b16 %v8766, %v8757
        %v9028 = vpack.c.b16 %v8767, %v8758
        %v9029 = vpack.c.b16 %v8768, %v8759
        %v9030 = vpack.c.b16 %v8769, %v8760
        %v9031 = vpack.c.b16 %v8770, %v8761
        %v9032 = vpack.c.b16 %v8771, %v8762
        %v9033 = vpack.c.b16 %v8772, %v8763
        %v9034 = vpack.c.b16 %v8782, %v8773
        %v9035 = vpack.c.b16 %v8783, %v8774
        %v9036 = vpack.c.b16 %v8784, %v8775
        %v9037 = vpack.c.b16 %v8785, %v8776
        %v9038 = vpack.c.b16 %v8786, %v8777
        %v9039 = vpack.c.b16 %v8787, %v8778
        %v9040 = vpack.c.b16 %v8788, %v8779
        %v9041 = vpack.c.b16 %v8789, %v8780
        %v9042 = vpack.c.b16 %v8790, %v8781
        %v9043 = vpack.c.b16 %v8800, %v8791
        %v9044 = vpack.c.b16 %v8801, %v8792
        %v9045 = vpack.c.b16 %v8802, %v8793
        %v9046 = vpack.c.b16 %v8803, %v8794
        %v9047 = vpack.c.b16 %v8804, %v8795
        %v9048 = vpack.c.b16 %v8805, %v8796
        %v9049 = vpack.c.b16 %v8806, %v8797
        %v9050 = vpack.c.b16 %v8807, %v8798
        %v9051 = vpack.c.b16 %v8808, %v8799
        %v9052 = vpack.c.b16 %v8818, %v8809
        %v9053 = vpack.c.b16 %v8819, %v8810
        %v9054 = vpack.c.b16 %v8820, %v8811
        %v9055 = vpack.c.b16 %v8821, %v8812
        %v9056 = vpack.c.b16 %v8822, %v8813
        %v9057 = vpack.c.b16 %v8823, %v8814
        %v9058 = vpack.c.b16 %v8824, %v8815
        %v9059 = vpack.c.b16 %v8825, %v8816
        %v9060 = vpack.c.b16 %v8826, %v8817
        %v9061 = vpack.c.b16 %v8836, %v8827
        %v9062 = vpack.c.b16 %v8837, %v8828
        %v9063 = vpack.c.b16 %v8838, %v8829
        %v9064 = vpack.c.b16 %v8839, %v8830
        %v9065 = vpack.c.b16 %v8840, %v8831
        %v9066 = vpack.c.b16 %v8841, %v8832
        %v9067 = vpack.c.b16 %v8842, %v8833
        %v9068 = vpack.c.b16 %v8843, %v8834
        %v9069 = vpack.c.b16 %v8844, %v8835
        %v9070 = vpack.c.b16 %v8854, %v8845
        %v9071 = vpack.c.b16 %v8855, %v8846
        %v9072 = vpack.c.b16 %v8856, %v8847
        %v9073 = vpack.c.b16 %v8857, %v8848
        %v9074 = vpack.c.b16 %v8858, %v8849
        %v9075 = vpack.c.b16 %v8859, %v8850
        %v9076 = vpack.c.b16 %v8860, %v8851
        %v9077 = vpack.c.b16 %v8861, %v8852
        %v9078 = vpack.c.b16 %v8862, %v8853
        %v9079 = vpack.c.b16 %v8872, %v8863
        %v9080 = vpack.c.b16 %v8873, %v8864
        %v9081 = vpack.c.b16 %v8874, %v8865
        %v9082 = vpack.c.b16 %v8875, %v8866
        %v9083 = vpack.c.b16 %v8876, %v8867
        %v9084 = vpack.c.b16 %v8877, %v8868
        %v9085 = vpack.c.b16 %v8878, %v8869
        %v9086 = vpack.c.b16 %v8879, %v8870
        %v9087 = vpack.c.b16 %v8880, %v8871
        %v9088 = vpack.c.b16 %v8890, %v8881
        %v9089 = vpack.c.b16 %v8891, %v8882
        %v9090 = vpack.c.b16 %v8892, %v8883
        %v9091 = vpack.c.b16 %v8893, %v8884
        %v9092 = vpack.c.b16 %v8894, %v8885
        %v9093 = vpack.c.b16 %v8895, %v8886
        %v9094 = vpack.c.b16 %v8896, %v8887
        %v9095 = vpack.c.b16 %v8897, %v8888
        %v9096 = vpack.c.b16 %v8898, %v8889
        %v9097 = vpack.c.b16 %v8908, %v8899
        %v9098 = vpack.c.b16 %v8909, %v8900
        %v9099 = vpack.c.b16 %v8910, %v8901
        %v9100 = vpack.c.b16 %v8911, %v8902
        %v9101 = vpack.c.b16 %v8912, %v8903
        %v9102 = vpack.c.b16 %v8913, %v8904
        %v9103 = vpack.c.b16 %v8914, %v8905
        %v9104 = vpack.c.b16 %v8915, %v8906
        %v9105 = vpack.c.b16 %v8916, %v8907
        %v9106 = vpack.c.b16 %v8926, %v8917
        %v9107 = vpack.c.b16 %v8927, %v8918
        %v9108 = vpack.c.b16 %v8928, %v8919
        %v9109 = vpack.c.b16 %v8929, %v8920
        %v9110 = vpack.c.b16 %v8930, %v8921
        %v9111 = vpack.c.b16 %v8931, %v8922
        %v9112 = vpack.c.b16 %v8932, %v8923
        %v9113 = vpack.c.b16 %v8933, %v8924
        %v9114 = vpack.c.b16 %v8934, %v8925
        %v9115 = vpack.c.b16 %v8944, %v8935
        %v9116 = vpack.c.b16 %v8945, %v8936
        %v9117 = vpack.c.b16 %v8946, %v8937
        %v9118 = vpack.c.b16 %v8947, %v8938
        %v9119 = vpack.c.b16 %v8948, %v8939
        %v9120 = vpack.c.b16 %v8949, %v8940
        %v9121 = vpack.c.b16 %v8950, %v8941
        %v9122 = vpack.c.b16 %v8951, %v8942
        %v9123 = vpack.c.b16 %v8952, %v8943
        %v9124 = vpack.c.b16 %v8962, %v8953
        %v9125 = vpack.c.b16 %v8963, %v8954
        %v9126 = vpack.c.b16 %v8964, %v8955
        %v9127 = vpack.c.b16 %v8965, %v8956
        %v9128 = vpack.c.b16 %v8966, %v8957
        %v9129 = vpack.c.b16 %v8967, %v8958
        %v9130 = vpack.c.b16 %v8968, %v8959
        %v9131 = vpack.c.b16 %v8969, %v8960
        %v9132 = vpack.c.b16 %v8970, %v8961
        %v9133 = vpack.c.b16 %v8980, %v8971
        %v9134 = vpack.c.b16 %v8981, %v8972
        %v9135 = vpack.c.b16 %v8982, %v8973
        %v9136 = vpack.c.b16 %v8983, %v8974
        %v9137 = vpack.c.b16 %v8984, %v8975
        %v9138 = vpack.c.b16 %v8985, %v8976
        %v9139 = vpack.c.b16 %v8986, %v8977
        %v9140 = vpack.c.b16 %v8987, %v8978
        %v9141 = vpack.c.b16 %v8988, %v8979
        %v9142 = vpack.c.b16 %v8998, %v8989
        %v9143 = vpack.c.b16 %v8999, %v8990
        %v9144 = vpack.c.b16 %v9000, %v8991
        %v9145 = vpack.c.b16 %v9001, %v8992
        %v9146 = vpack.c.b16 %v9002, %v8993
        %v9147 = vpack.c.b16 %v9003, %v8994
        %v9148 = vpack.c.b16 %v9004, %v8995
        %v9149 = vpack.c.b16 %v9005, %v8996
        %v9150 = vpack.c.b16 %v9006, %v8997
        %v9439 = vunpack.c.l.b16 %v8415
        %v9440 = vunpack.c.l.b16 %v8416
        %v9441 = vunpack.c.l.b16 %v8417
        %v9442 = vunpack.c.l.b16 %v8418
        %v9443 = vunpack.c.l.b16 %v8419
        %v9444 = vunpack.c.l.b16 %v8420
        %v9445 = vunpack.c.l.b16 %v8421
        %v9446 = vunpack.c.l.b16 %v8422
        %v9447 = vunpack.c.l.b16 %v8423
        %v9448 = vunpack.c.l.b16 %v8424
        %v9449 = vunpack.c.l.b16 %v8425
        %v9450 = vunpack.c.l.b16 %v8426
        %v9451 = vunpack.c.l.b16 %v8427
        %v9452 = vunpack.c.l.b16 %v8428
        %v9453 = vunpack.c.l.b16 %v8429
        %v9454 = vunpack.c.l.b16 %v8430
        %v9455 = vunpack.c.l.b16 %v8431
        %v9456 = vunpack.c.l.b16 %v8432
        %v9457 = vunpack.c.l.b16 %v8433
        %v9458 = vunpack.c.l.b16 %v8434
        %v9459 = vunpack.c.l.b16 %v8435
        %v9460 = vunpack.c.l.b16 %v8436
        %v9461 = vunpack.c.l.b16 %v8437
        %v9462 = vunpack.c.l.b16 %v8438
        %v9463 = vunpack.c.l.b16 %v8439
        %v9464 = vunpack.c.l.b16 %v8440
        %v9465 = vunpack.c.l.b16 %v8441
        %v9466 = vunpack.c.l.b16 %v8442
        %v9467 = vunpack.c.l.b16 %v8443
        %v9468 = vunpack.c.l.b16 %v8444
        %v9469 = vunpack.c.l.b16 %v8445
        %v9470 = vunpack.c.l.b16 %v8446
        %v9471 = vunpack.c.l.b16 %v8447
        %v9472 = vunpack.c.l.b16 %v8448
        %v9473 = vunpack.c.l.b16 %v8449
        %v9474 = vunpack.c.l.b16 %v8450
        %v9475 = vunpack.c.l.b16 %v8451
        %v9476 = vunpack.c.l.b16 %v8452
        %v9477 = vunpack.c.l.b16 %v8453
        %v9478 = vunpack.c.l.b16 %v8454
        %v9479 = vunpack.c.l.b16 %v8455
        %v9480 = vunpack.c.l.b16 %v8456
        %v9481 = vunpack.c.l.b16 %v8457
        %v9482 = vunpack.c.l.b16 %v8458
        %v9483 = vunpack.c.l.b16 %v8459
        %v9484 = vunpack.c.l.b16 %v8460
        %v9485 = vunpack.c.l.b16 %v8461
        %v9486 = vunpack.c.l.b16 %v8462
        %v9487 = vunpack.c.l.b16 %v8463
        %v9488 = vunpack.c.l.b16 %v8464
        %v9489 = vunpack.c.l.b16 %v8465
        %v9490 = vunpack.c.l.b16 %v8466
        %v9491 = vunpack.c.l.b16 %v8467
        %v9492 = vunpack.c.l.b16 %v8468
        %v9493 = vunpack.c.l.b16 %v8469
        %v9494 = vunpack.c.l.b16 %v8470
        %v9495 = vunpack.c.l.b16 %v8471
        %v9496 = vunpack.c.l.b16 %v8472
        %v9497 = vunpack.c.l.b16 %v8473
        %v9498 = vunpack.c.l.b16 %v8474
        %v9499 = vunpack.c.l.b16 %v8475
        %v9500 = vunpack.c.l.b16 %v8476
        %v9501 = vunpack.c.l.b16 %v8477
        %v9502 = vunpack.c.l.b16 %v8478
        %v9503 = vunpack.c.l.b16 %v8479
        %v9504 = vunpack.c.l.b16 %v8480
        %v9505 = vunpack.c.l.b16 %v8481
        %v9506 = vunpack.c.l.b16 %v8482
        %v9507 = vunpack.c.l.b16 %v8483
        %v9508 = vunpack.c.l.b16 %v8484
        %v9509 = vunpack.c.l.b16 %v8485
        %v9510 = vunpack.c.l.b16 %v8486
        %v9511 = vunpack.c.l.b16 %v8487
        %v9512 = vunpack.c.l.b16 %v8488
        %v9513 = vunpack.c.l.b16 %v8489
        %v9514 = vunpack.c.l.b16 %v8490
        %v9515 = vunpack.c.l.b16 %v8491
        %v9516 = vunpack.c.l.b16 %v8492
        %v9517 = vunpack.c.l.b16 %v8493
        %v9518 = vunpack.c.l.b16 %v8494
        %v9519 = vunpack.c.l.b16 %v8495
        %v9520 = vunpack.c.l.b16 %v8496
        %v9521 = vunpack.c.l.b16 %v8497
        %v9522 = vunpack.c.l.b16 %v8498
        %v9523 = vunpack.c.l.b16 %v8499
        %v9524 = vunpack.c.l.b16 %v8500
        %v9525 = vunpack.c.l.b16 %v8501
        %v9526 = vunpack.c.l.b16 %v8502
        %v9527 = vunpack.c.l.b16 %v8503
        %v9528 = vunpack.c.l.b16 %v8504
        %v9529 = vunpack.c.l.b16 %v8505
        %v9530 = vunpack.c.l.b16 %v8506
        %v9531 = vunpack.c.l.b16 %v8507
        %v9532 = vunpack.c.l.b16 %v8508
        %v9533 = vunpack.c.l.b16 %v8509
        %v9534 = vunpack.c.l.b16 %v8510
        %v9535 = vunpack.c.l.b16 %v8511
        %v9536 = vunpack.c.l.b16 %v8512
        %v9537 = vunpack.c.l.b16 %v8513
        %v9538 = vunpack.c.l.b16 %v8514
        %v9539 = vunpack.c.l.b16 %v8515
        %v9540 = vunpack.c.l.b16 %v8516
        %v9541 = vunpack.c.l.b16 %v8517
        %v9542 = vunpack.c.l.b16 %v8518
        %v9543 = vunpack.c.l.b16 %v8519
        %v9544 = vunpack.c.l.b16 %v8520
        %v9545 = vunpack.c.l.b16 %v8521
        %v9546 = vunpack.c.l.b16 %v8522
        %v9547 = vunpack.c.l.b16 %v8523
        %v9548 = vunpack.c.l.b16 %v8524
        %v9549 = vunpack.c.l.b16 %v8525
        %v9550 = vunpack.c.l.b16 %v8526
        %v9551 = vunpack.c.l.b16 %v8527
        %v9552 = vunpack.c.l.b16 %v8528
        %v9553 = vunpack.c.l.b16 %v8529
        %v9554 = vunpack.c.l.b16 %v8530
        %v9555 = vunpack.c.l.b16 %v8531
        %v9556 = vunpack.c.l.b16 %v8532
        %v9557 = vunpack.c.l.b16 %v8533
        %v9558 = vunpack.c.l.b16 %v8534
        %v9559 = vunpack.c.l.b16 %v8535
        %v9560 = vunpack.c.l.b16 %v8536
        %v9561 = vunpack.c.l.b16 %v8537
        %v9562 = vunpack.c.l.b16 %v8538
        %v9563 = vunpack.c.l.b16 %v8539
        %v9564 = vunpack.c.l.b16 %v8540
        %v9565 = vunpack.c.l.b16 %v8541
        %v9566 = vunpack.c.l.b16 %v8542
        %v9567 = vunpack.c.l.b16 %v8543
        %v9568 = vunpack.c.l.b16 %v8544
        %v9569 = vunpack.c.l.b16 %v8545
        %v9570 = vunpack.c.l.b16 %v8546
        %v9571 = vunpack.c.l.b16 %v8547
        %v9572 = vunpack.c.l.b16 %v8548
        %v9573 = vunpack.c.l.b16 %v8549
        %v9574 = vunpack.c.l.b16 %v8550
        %v9575 = vunpack.c.l.b16 %v8551
        %v9576 = vunpack.c.l.b16 %v8552
        %v9577 = vunpack.c.l.b16 %v8553
        %v9578 = vunpack.c.l.b16 %v8554
        %v9579 = vunpack.c.l.b16 %v8555
        %v9580 = vunpack.c.l.b16 %v8556
        %v9581 = vunpack.c.l.b16 %v8557
        %v9582 = vunpack.c.l.b16 %v8558
        %v9583 = vpack.c.b16 %v9440, %v9439
        %v9584 = vpack.c.b16 %v9442, %v9441
        %v9585 = vpack.c.b16 %v9444, %v9443
        %v9586 = vpack.c.b16 %v9446, %v9445
        %v9587 = vpack.c.b16 %v9448, %v9447
        %v9588 = vpack.c.b16 %v9450, %v9449
        %v9589 = vpack.c.b16 %v9452, %v9451
        %v9590 = vpack.c.b16 %v9454, %v9453
        %v9591 = vpack.c.b16 %v9456, %v9455
        %v9592 = vpack.c.b16 %v9458, %v9457
        %v9593 = vpack.c.b16 %v9460, %v9459
        %v9594 = vpack.c.b16 %v9462, %v9461
        %v9595 = vpack.c.b16 %v9464, %v9463
        %v9596 = vpack.c.b16 %v9466, %v9465
        %v9597 = vpack.c.b16 %v9468, %v9467
        %v9598 = vpack.c.b16 %v9470, %v9469
        %v9599 = vpack.c.b16 %v9472, %v9471
        %v9600 = vpack.c.b16 %v9474, %v9473
        %v9601 = vpack.c.b16 %v9476, %v9475
        %v9602 = vpack.c.b16 %v9478, %v9477
        %v9603 = vpack.c.b16 %v9480, %v9479
        %v9604 = vpack.c.b16 %v9482, %v9481
        %v9605 = vpack.c.b16 %v9484, %v9483
        %v9606 = vpack.c.b16 %v9486, %v9485
        %v9607 = vpack.c.b16 %v9488, %v9487
        %v9608 = vpack.c.b16 %v9490, %v9489
        %v9609 = vpack.c.b16 %v9492, %v9491
        %v9610 = vpack.c.b16 %v9494, %v9493
        %v9611 = vpack.c.b16 %v9496, %v9495
        %v9612 = vpack.c.b16 %v9498, %v9497
        %v9613 = vpack.c.b16 %v9500, %v9499
        %v9614 = vpack.c.b16 %v9502, %v9501
        %v9615 = vpack.c.b16 %v9504, %v9503
        %v9616 = vpack.c.b16 %v9506, %v9505
        %v9617 = vpack.c.b16 %v9508, %v9507
        %v9618 = vpack.c.b16 %v9510, %v9509
        %v9619 = vpack.c.b16 %v9512, %v9511
        %v9620 = vpack.c.b16 %v9514, %v9513
        %v9621 = vpack.c.b16 %v9516, %v9515
        %v9622 = vpack.c.b16 %v9518, %v9517
        %v9623 = vpack.c.b16 %v9520, %v9519
        %v9624 = vpack.c.b16 %v9522, %v9521
        %v9625 = vpack.c.b16 %v9524, %v9523
        %v9626 = vpack.c.b16 %v9526, %v9525
        %v9627 = vpack.c.b16 %v9528, %v9527
        %v9628 = vpack.c.b16 %v9530, %v9529
        %v9629 = vpack.c.b16 %v9532, %v9531
        %v9630 = vpack.c.b16 %v9534, %v9533
        %v9631 = vpack.c.b16 %v9536, %v9535
        %v9632 = vpack.c.b16 %v9538, %v9537
        %v9633 = vpack.c.b16 %v9540, %v9539
        %v9634 = vpack.c.b16 %v9542, %v9541
        %v9635 = vpack.c.b16 %v9544, %v9543
        %v9636 = vpack.c.b16 %v9546, %v9545
        %v9637 = vpack.c.b16 %v9548, %v9547
        %v9638 = vpack.c.b16 %v9550, %v9549
        %v9639 = vpack.c.b16 %v9552, %v9551
        %v9640 = vpack.c.b16 %v9554, %v9553
        %v9641 = vpack.c.b16 %v9556, %v9555
        %v9642 = vpack.c.b16 %v9558, %v9557
        %v9643 = vpack.c.b16 %v9560, %v9559
        %v9644 = vpack.c.b16 %v9562, %v9561
        %v9645 = vpack.c.b16 %v9564, %v9563
        %v9646 = vpack.c.b16 %v9566, %v9565
        %v9647 = vpack.c.b16 %v9568, %v9567
        %v9648 = vpack.c.b16 %v9570, %v9569
        %v9649 = vpack.c.b16 %v9572, %v9571
        %v9650 = vpack.c.b16 %v9574, %v9573
        %v9651 = vpack.c.b16 %v9576, %v9575
        %v9652 = vpack.c.b16 %v9578, %v9577
        %v9653 = vpack.c.b16 %v9580, %v9579
        %v9654 = vpack.c.b16 %v9582, %v9581
        %9727 = vmatprep.subr.bf16.mxu0 0
        %9728 = vmatpush1.bf16.msra.mxu0 %v9590
        %9729 = vmatprep.subr.bf16.mxu0 0
        %9730 = vmatpush1.bf16.msra.mxu0 %v9589
        %9731 = vmatprep.subr.bf16.mxu0 0
        %9732 = vmatpush1.bf16.msra.mxu0 %v9588
        %9733 = vmatprep.subr.bf16.mxu0 0
        %9734 = vmatpush1.bf16.msra.mxu0 %v9587
        %9735 = vmatprep.subr.bf16.mxu0 0
        %9736 = vmatpush1.bf16.msra.mxu0 %v9586
        %9737 = vmatprep.subr.bf16.mxu0 0
        %9738 = vmatpush1.bf16.msra.mxu0 %v9585
        %9739 = vmatprep.subr.bf16.mxu0 0
        %9740 = vmatpush1.bf16.msra.mxu0 %v9584
        %9741 = vmatprep.subr.bf16.mxu0 0
        %9742 = vmatpush1.bf16.msra.mxu0 %v9583
        %9743 = vmatprep.subr.bf16.mxu0 0
        %9744 = vmatpush2.bf16.msra.mxu0 %v9598
        %9745 = vmatprep.subr.bf16.mxu0 0
        %9746 = vmatpush2.bf16.msra.mxu0 %v9597
        %9747 = vmatprep.subr.bf16.mxu0 0
        %9748 = vmatpush2.bf16.msra.mxu0 %v9596
        %9749 = vmatprep.subr.bf16.mxu0 0
        %9750 = vmatpush2.bf16.msra.mxu0 %v9595
        %9751 = vmatprep.subr.bf16.mxu0 0
        %9752 = vmatpush2.bf16.msra.mxu0 %v9594
        %9753 = vmatprep.subr.bf16.mxu0 0
        %9754 = vmatpush2.bf16.msra.mxu0 %v9593
        %9755 = vmatprep.subr.bf16.mxu0 0
        %9756 = vmatpush2.bf16.msra.mxu0 %v9592
        %9757 = vmatprep.subr.bf16.mxu0 0
        %9758 = vmatpush2.bf16.msra.mxu0 %v9591
        %9759 = vmatprep.mubr.bf16.mxu0 %v9008
        %9760 = vmatmul.mubr.bf16.gmra.mxu0 %v9007
        %v9761 = vpop.f32.mrf.mxu0
        %v9762 = vadd.f32 0.0, %v9761
        %v9763 = vpop.f32.mrf.mxu0
        %v9764 = vpop.f32.mrf.mxu0
        %v9765 = vadd.f32 0.0, %v9764
        %v9766 = vpop.f32.mrf.mxu0
        %9767 = vmatprep.mubr.bf16.mxu0 %v9017
        %9768 = vmatmul.mubr.bf16.gmra.mxu0 %v9016
        %v9769 = vpop.f32.mrf.mxu0
        %v9770 = vadd.f32 0.0, %v9769
        %v9771 = vpop.f32.mrf.mxu0
        %v9772 = vpop.f32.mrf.mxu0
        %v9773 = vadd.f32 0.0, %v9772
        %v9774 = vpop.f32.mrf.mxu0
        %9775 = vmatprep.mubr.bf16.mxu0 %v9026
        %9776 = vmatmul.mubr.bf16.gmra.mxu0 %v9025
        %v9777 = vpop.f32.mrf.mxu0
        %v9778 = vadd.f32 0.0, %v9777
        %v9779 = vpop.f32.mrf.mxu0
        %v9780 = vpop.f32.mrf.mxu0
        %v9781 = vadd.f32 0.0, %v9780
        %v9782 = vpop.f32.mrf.mxu0
        %9783 = vmatprep.mubr.bf16.mxu0 %v9035
        %9784 = vmatmul.mubr.bf16.gmra.mxu0 %v9034
        %v9785 = vpop.f32.mrf.mxu0
        %v9786 = vadd.f32 0.0, %v9785
        %v9787 = vpop.f32.mrf.mxu0
        %v9788 = vpop.f32.mrf.mxu0
        %v9789 = vadd.f32 0.0, %v9788
        %v9790 = vpop.f32.mrf.mxu0
        %9791 = vmatprep.mubr.bf16.mxu0 %v9044
        %9792 = vmatmul.mubr.bf16.gmra.mxu0 %v9043
        %v9793 = vpop.f32.mrf.mxu0
        %v9794 = vadd.f32 0.0, %v9793
        %v9795 = vpop.f32.mrf.mxu0
        %v9796 = vpop.f32.mrf.mxu0
        %v9797 = vadd.f32 0.0, %v9796
        %v9798 = vpop.f32.mrf.mxu0
        %9799 = vmatprep.mubr.bf16.mxu0 %v9053
        %9800 = vmatmul.mubr.bf16.gmra.mxu0 %v9052
        %v9801 = vpop.f32.mrf.mxu0
        %v9802 = vadd.f32 0.0, %v9801
        %v9803 = vpop.f32.mrf.mxu0
        %v9804 = vpop.f32.mrf.mxu0
        %v9805 = vadd.f32 0.0, %v9804
        %v9806 = vpop.f32.mrf.mxu0
        %9807 = vmatprep.mubr.bf16.mxu0 %v9062
        %9808 = vmatmul.mubr.bf16.gmra.mxu0 %v9061
        %v9809 = vpop.f32.mrf.mxu0
        %v9810 = vadd.f32 0.0, %v9809
        %v9811 = vpop.f32.mrf.mxu0
        %v9812 = vpop.f32.mrf.mxu0
        %v9813 = vadd.f32 0.0, %v9812
        %v9814 = vpop.f32.mrf.mxu0
        %9815 = vmatprep.mubr.bf16.mxu0 %v9071
        %9816 = vmatmul.mubr.bf16.gmra.mxu0 %v9070
        %v9817 = vpop.f32.mrf.mxu0
        %v9818 = vadd.f32 0.0, %v9817
        %v9819 = vpop.f32.mrf.mxu0
        %v9820 = vpop.f32.mrf.mxu0
        %v9821 = vadd.f32 0.0, %v9820
        %v9822 = vpop.f32.mrf.mxu0
        %9823 = vmatprep.mubr.bf16.mxu0 %v9080
        %9824 = vmatmul.mubr.bf16.gmra.mxu0 %v9079
        %v9825 = vpop.f32.mrf.mxu0
        %v9826 = vadd.f32 0.0, %v9825
        %v9827 = vpop.f32.mrf.mxu0
        %v9828 = vpop.f32.mrf.mxu0
        %v9829 = vadd.f32 0.0, %v9828
        %v9830 = vpop.f32.mrf.mxu0
        %9831 = vmatprep.mubr.bf16.mxu0 %v9089
        %9832 = vmatmul.mubr.bf16.gmra.mxu0 %v9088
        %v9833 = vpop.f32.mrf.mxu0
        %v9834 = vadd.f32 0.0, %v9833
        %v9835 = vpop.f32.mrf.mxu0
        %v9836 = vpop.f32.mrf.mxu0
        %v9837 = vadd.f32 0.0, %v9836
        %v9838 = vpop.f32.mrf.mxu0
        %9839 = vmatprep.mubr.bf16.mxu0 %v9098
        %9840 = vmatmul.mubr.bf16.gmra.mxu0 %v9097
        %v9841 = vpop.f32.mrf.mxu0
        %v9842 = vadd.f32 0.0, %v9841
        %v9843 = vpop.f32.mrf.mxu0
        %v9844 = vpop.f32.mrf.mxu0
        %v9845 = vadd.f32 0.0, %v9844
        %v9846 = vpop.f32.mrf.mxu0
        %9847 = vmatprep.mubr.bf16.mxu0 %v9107
        %9848 = vmatmul.mubr.bf16.gmra.mxu0 %v9106
        %v9849 = vpop.f32.mrf.mxu0
        %v9850 = vadd.f32 0.0, %v9849
        %v9851 = vpop.f32.mrf.mxu0
        %v9852 = vpop.f32.mrf.mxu0
        %v9853 = vadd.f32 0.0, %v9852
        %v9854 = vpop.f32.mrf.mxu0
        %9855 = vmatprep.mubr.bf16.mxu0 %v9116
        %9856 = vmatmul.mubr.bf16.gmra.mxu0 %v9115
        %v9857 = vpop.f32.mrf.mxu0
        %v9858 = vadd.f32 0.0, %v9857
        %v9859 = vpop.f32.mrf.mxu0
        %v9860 = vpop.f32.mrf.mxu0
        %v9861 = vadd.f32 0.0, %v9860
        %v9862 = vpop.f32.mrf.mxu0
        %9863 = vmatprep.mubr.bf16.mxu0 %v9125
        %9864 = vmatmul.mubr.bf16.gmra.mxu0 %v9124
        %v9865 = vpop.f32.mrf.mxu0
        %v9866 = vadd.f32 0.0, %v9865
        %v9867 = vpop.f32.mrf.mxu0
        %v9868 = vpop.f32.mrf.mxu0
        %v9869 = vadd.f32 0.0, %v9868
        %v9870 = vpop.f32.mrf.mxu0
        %9871 = vmatprep.mubr.bf16.mxu0 %v9134
        %9872 = vmatmul.mubr.bf16.gmra.mxu0 %v9133
        %v9873 = vpop.f32.mrf.mxu0
        %v9874 = vadd.f32 0.0, %v9873
        %v9875 = vpop.f32.mrf.mxu0
        %v9876 = vpop.f32.mrf.mxu0
        %v9877 = vadd.f32 0.0, %v9876
        %v9878 = vpop.f32.mrf.mxu0
        %9879 = vmatprep.mubr.bf16.mxu0 %v9143
        %9880 = vmatmul.mubr.bf16.gmra.mxu0 %v9142
        %v9881 = vpop.f32.mrf.mxu0
        %v9882 = vadd.f32 0.0, %v9881
        %v9883 = vpop.f32.mrf.mxu0
        %v9884 = vpop.f32.mrf.mxu0
        %v9885 = vadd.f32 0.0, %v9884
        %v9886 = vpop.f32.mrf.mxu0
        %9887 = vdwg.mxu0
        %9888 = vmatprep.subr.bf16.mxu0 0
        %9889 = vmatpush1.bf16.msra.mxu0 %v9606
        %9890 = vmatprep.subr.bf16.mxu0 0
        %9891 = vmatpush1.bf16.msra.mxu0 %v9605
        %9892 = vmatprep.subr.bf16.mxu0 0
        %9893 = vmatpush1.bf16.msra.mxu0 %v9604
        %9894 = vmatprep.subr.bf16.mxu0 0
        %9895 = vmatpush1.bf16.msra.mxu0 %v9603
        %9896 = vmatprep.subr.bf16.mxu0 0
        %9897 = vmatpush1.bf16.msra.mxu0 %v9602
        %9898 = vmatprep.subr.bf16.mxu0 0
        %9899 = vmatpush1.bf16.msra.mxu0 %v9601
        %9900 = vmatprep.subr.bf16.mxu0 0
        %9901 = vmatpush1.bf16.msra.mxu0 %v9600
        %9902 = vmatprep.subr.bf16.mxu0 0
        %9903 = vmatpush1.bf16.msra.mxu0 %v9599
        %9904 = vmatprep.subr.bf16.mxu0 0
        %9905 = vmatpush2.bf16.msra.mxu0 %v9614
        %9906 = vmatprep.subr.bf16.mxu0 0
        %9907 = vmatpush2.bf16.msra.mxu0 %v9613
        %9908 = vmatprep.subr.bf16.mxu0 0
        %9909 = vmatpush2.bf16.msra.mxu0 %v9612
        %9910 = vmatprep.subr.bf16.mxu0 0
        %9911 = vmatpush2.bf16.msra.mxu0 %v9611
        %9912 = vmatprep.subr.bf16.mxu0 0
        %9913 = vmatpush2.bf16.msra.mxu0 %v9610
        %9914 = vmatprep.subr.bf16.mxu0 0
        %9915 = vmatpush2.bf16.msra.mxu0 %v9609
        %9916 = vmatprep.subr.bf16.mxu0 0
        %9917 = vmatpush2.bf16.msra.mxu0 %v9608
        %9918 = vmatprep.subr.bf16.mxu0 0
        %9919 = vmatpush2.bf16.msra.mxu0 %v9607
        %9920 = vmatprep.mubr.bf16.mxu0 %v9010
        %9921 = vmatmul.mubr.bf16.gmra.mxu0 %v9009
        %v9922 = vpop.f32.mrf.mxu0
        %v9923 = vadd.f32 %v9762, %v9922
        %v9924 = vpop.f32.mrf.mxu0
        %v9925 = vpop.f32.mrf.mxu0
        %v9926 = vadd.f32 %v9765, %v9925
        %v9927 = vpop.f32.mrf.mxu0
        %9928 = vmatprep.mubr.bf16.mxu0 %v9019
        %9929 = vmatmul.mubr.bf16.gmra.mxu0 %v9018
        %v9930 = vpop.f32.mrf.mxu0
        %v9931 = vadd.f32 %v9770, %v9930
        %v9932 = vpop.f32.mrf.mxu0
        %v9933 = vpop.f32.mrf.mxu0
        %v9934 = vadd.f32 %v9773, %v9933
        %v9935 = vpop.f32.mrf.mxu0
        %9936 = vmatprep.mubr.bf16.mxu0 %v9028
        %9937 = vmatmul.mubr.bf16.gmra.mxu0 %v9027
        %v9938 = vpop.f32.mrf.mxu0
        %v9939 = vadd.f32 %v9778, %v9938
        %v9940 = vpop.f32.mrf.mxu0
        %v9941 = vpop.f32.mrf.mxu0
        %v9942 = vadd.f32 %v9781, %v9941
        %v9943 = vpop.f32.mrf.mxu0
        %9944 = vmatprep.mubr.bf16.mxu0 %v9037
        %9945 = vmatmul.mubr.bf16.gmra.mxu0 %v9036
        %v9946 = vpop.f32.mrf.mxu0
        %v9947 = vadd.f32 %v9786, %v9946
        %v9948 = vpop.f32.mrf.mxu0
        %v9949 = vpop.f32.mrf.mxu0
        %v9950 = vadd.f32 %v9789, %v9949
        %v9951 = vpop.f32.mrf.mxu0
        %9952 = vmatprep.mubr.bf16.mxu0 %v9046
        %9953 = vmatmul.mubr.bf16.gmra.mxu0 %v9045
        %v9954 = vpop.f32.mrf.mxu0
        %v9955 = vadd.f32 %v9794, %v9954
        %v9956 = vpop.f32.mrf.mxu0
        %v9957 = vpop.f32.mrf.mxu0
        %v9958 = vadd.f32 %v9797, %v9957
        %v9959 = vpop.f32.mrf.mxu0
        %9960 = vmatprep.mubr.bf16.mxu0 %v9055
        %9961 = vmatmul.mubr.bf16.gmra.mxu0 %v9054
        %v9962 = vpop.f32.mrf.mxu0
        %v9963 = vadd.f32 %v9802, %v9962
        %v9964 = vpop.f32.mrf.mxu0
        %v9965 = vpop.f32.mrf.mxu0
        %v9966 = vadd.f32 %v9805, %v9965
        %v9967 = vpop.f32.mrf.mxu0
        %9968 = vmatprep.mubr.bf16.mxu0 %v9064
        %9969 = vmatmul.mubr.bf16.gmra.mxu0 %v9063
        %v9970 = vpop.f32.mrf.mxu0
        %v9971 = vadd.f32 %v9810, %v9970
        %v9972 = vpop.f32.mrf.mxu0
        %v9973 = vpop.f32.mrf.mxu0
        %v9974 = vadd.f32 %v9813, %v9973
        %v9975 = vpop.f32.mrf.mxu0
        %9976 = vmatprep.mubr.bf16.mxu0 %v9073
        %9977 = vmatmul.mubr.bf16.gmra.mxu0 %v9072
        %v9978 = vpop.f32.mrf.mxu0
        %v9979 = vadd.f32 %v9818, %v9978
        %v9980 = vpop.f32.mrf.mxu0
        %v9981 = vpop.f32.mrf.mxu0
        %v9982 = vadd.f32 %v9821, %v9981
        %v9983 = vpop.f32.mrf.mxu0
        %9984 = vmatprep.mubr.bf16.mxu0 %v9082
        %9985 = vmatmul.mubr.bf16.gmra.mxu0 %v9081
        %v9986 = vpop.f32.mrf.mxu0
        %v9987 = vadd.f32 %v9826, %v9986
        %v9988 = vpop.f32.mrf.mxu0
        %v9989 = vpop.f32.mrf.mxu0
        %v9990 = vadd.f32 %v9829, %v9989
        %v9991 = vpop.f32.mrf.mxu0
        %9992 = vmatprep.mubr.bf16.mxu0 %v9091
        %9993 = vmatmul.mubr.bf16.gmra.mxu0 %v9090
        %v9994 = vpop.f32.mrf.mxu0
        %v9995 = vadd.f32 %v9834, %v9994
        %v9996 = vpop.f32.mrf.mxu0
        %v9997 = vpop.f32.mrf.mxu0
        %v9998 = vadd.f32 %v9837, %v9997
        %v9999 = vpop.f32.mrf.mxu0
        %10000 = vmatprep.mubr.bf16.mxu0 %v9100
        %10001 = vmatmul.mubr.bf16.gmra.mxu0 %v9099
        %v10002 = vpop.f32.mrf.mxu0
        %v10003 = vadd.f32 %v9842, %v10002
        %v10004 = vpop.f32.mrf.mxu0
        %v10005 = vpop.f32.mrf.mxu0
        %v10006 = vadd.f32 %v9845, %v10005
        %v10007 = vpop.f32.mrf.mxu0
        %10008 = vmatprep.mubr.bf16.mxu0 %v9109
        %10009 = vmatmul.mubr.bf16.gmra.mxu0 %v9108
        %v10010 = vpop.f32.mrf.mxu0
        %v10011 = vadd.f32 %v9850, %v10010
        %v10012 = vpop.f32.mrf.mxu0
        %v10013 = vpop.f32.mrf.mxu0
        %v10014 = vadd.f32 %v9853, %v10013
        %v10015 = vpop.f32.mrf.mxu0
        %10016 = vmatprep.mubr.bf16.mxu0 %v9118
        %10017 = vmatmul.mubr.bf16.gmra.mxu0 %v9117
        %v10018 = vpop.f32.mrf.mxu0
        %v10019 = vadd.f32 %v9858, %v10018
        %v10020 = vpop.f32.mrf.mxu0
        %v10021 = vpop.f32.mrf.mxu0
        %v10022 = vadd.f32 %v9861, %v10021
        %v10023 = vpop.f32.mrf.mxu0
        %10024 = vmatprep.mubr.bf16.mxu0 %v9127
        %10025 = vmatmul.mubr.bf16.gmra.mxu0 %v9126
        %v10026 = vpop.f32.mrf.mxu0
        %v10027 = vadd.f32 %v9866, %v10026
        %v10028 = vpop.f32.mrf.mxu0
        %v10029 = vpop.f32.mrf.mxu0
        %v10030 = vadd.f32 %v9869, %v10029
        %v10031 = vpop.f32.mrf.mxu0
        %10032 = vmatprep.mubr.bf16.mxu0 %v9136
        %10033 = vmatmul.mubr.bf16.gmra.mxu0 %v9135
        %v10034 = vpop.f32.mrf.mxu0
        %v10035 = vadd.f32 %v9874, %v10034
        %v10036 = vpop.f32.mrf.mxu0
        %v10037 = vpop.f32.mrf.mxu0
        %v10038 = vadd.f32 %v9877, %v10037
        %v10039 = vpop.f32.mrf.mxu0
        %10040 = vmatprep.mubr.bf16.mxu0 %v9145
        %10041 = vmatmul.mubr.bf16.gmra.mxu0 %v9144
        %v10042 = vpop.f32.mrf.mxu0
        %v10043 = vadd.f32 %v9882, %v10042
        %v10044 = vpop.f32.mrf.mxu0
        %v10045 = vpop.f32.mrf.mxu0
        %v10046 = vadd.f32 %v9885, %v10045
        %v10047 = vpop.f32.mrf.mxu0
        %10048 = vdwg.mxu0
        %10049 = vmatprep.subr.bf16.mxu0 0
        %10050 = vmatpush1.bf16.msra.mxu0 %v9622
        %10051 = vmatprep.subr.bf16.mxu0 0
        %10052 = vmatpush1.bf16.msra.mxu0 %v9621
        %10053 = vmatprep.subr.bf16.mxu0 0
        %10054 = vmatpush1.bf16.msra.mxu0 %v9620
        %10055 = vmatprep.subr.bf16.mxu0 0
        %10056 = vmatpush1.bf16.msra.mxu0 %v9619
        %10057 = vmatprep.subr.bf16.mxu0 0
        %10058 = vmatpush1.bf16.msra.mxu0 %v9618
        %10059 = vmatprep.subr.bf16.mxu0 0
        %10060 = vmatpush1.bf16.msra.mxu0 %v9617
        %10061 = vmatprep.subr.bf16.mxu0 0
        %10062 = vmatpush1.bf16.msra.mxu0 %v9616
        %10063 = vmatprep.subr.bf16.mxu0 0
        %10064 = vmatpush1.bf16.msra.mxu0 %v9615
        %10065 = vmatprep.subr.bf16.mxu0 0
        %10066 = vmatpush2.bf16.msra.mxu0 %v9630
        %10067 = vmatprep.subr.bf16.mxu0 0
        %10068 = vmatpush2.bf16.msra.mxu0 %v9629
        %10069 = vmatprep.subr.bf16.mxu0 0
        %10070 = vmatpush2.bf16.msra.mxu0 %v9628
        %10071 = vmatprep.subr.bf16.mxu0 0
        %10072 = vmatpush2.bf16.msra.mxu0 %v9627
        %10073 = vmatprep.subr.bf16.mxu0 0
        %10074 = vmatpush2.bf16.msra.mxu0 %v9626
        %10075 = vmatprep.subr.bf16.mxu0 0
        %10076 = vmatpush2.bf16.msra.mxu0 %v9625
        %10077 = vmatprep.subr.bf16.mxu0 0
        %10078 = vmatpush2.bf16.msra.mxu0 %v9624
        %10079 = vmatprep.subr.bf16.mxu0 0
        %10080 = vmatpush2.bf16.msra.mxu0 %v9623
        %10081 = vmatprep.mubr.bf16.mxu0 %v9012
        %10082 = vmatmul.mubr.bf16.gmra.mxu0 %v9011
        %v10083 = vpop.f32.mrf.mxu0
        %v10084 = vadd.f32 %v9923, %v10083
        %v10085 = vpop.f32.mrf.mxu0
        %v10086 = vpop.f32.mrf.mxu0
        %v10087 = vadd.f32 %v9926, %v10086
        %v10088 = vpop.f32.mrf.mxu0
        %10089 = vmatprep.mubr.bf16.mxu0 %v9021
        %10090 = vmatmul.mubr.bf16.gmra.mxu0 %v9020
        %v10091 = vpop.f32.mrf.mxu0
        %v10092 = vadd.f32 %v9931, %v10091
        %v10093 = vpop.f32.mrf.mxu0
        %v10094 = vpop.f32.mrf.mxu0
        %v10095 = vadd.f32 %v9934, %v10094
        %v10096 = vpop.f32.mrf.mxu0
        %10097 = vmatprep.mubr.bf16.mxu0 %v9030
        %10098 = vmatmul.mubr.bf16.gmra.mxu0 %v9029
        %v10099 = vpop.f32.mrf.mxu0
        %v10100 = vadd.f32 %v9939, %v10099
        %v10101 = vpop.f32.mrf.mxu0
        %v10102 = vpop.f32.mrf.mxu0
        %v10103 = vadd.f32 %v9942, %v10102
        %v10104 = vpop.f32.mrf.mxu0
        %10105 = vmatprep.mubr.bf16.mxu0 %v9039
        %10106 = vmatmul.mubr.bf16.gmra.mxu0 %v9038
        %v10107 = vpop.f32.mrf.mxu0
        %v10108 = vadd.f32 %v9947, %v10107
        %v10109 = vpop.f32.mrf.mxu0
        %v10110 = vpop.f32.mrf.mxu0
        %v10111 = vadd.f32 %v9950, %v10110
        %v10112 = vpop.f32.mrf.mxu0
        %10113 = vmatprep.mubr.bf16.mxu0 %v9048
        %10114 = vmatmul.mubr.bf16.gmra.mxu0 %v9047
        %v10115 = vpop.f32.mrf.mxu0
        %v10116 = vadd.f32 %v9955, %v10115
        %v10117 = vpop.f32.mrf.mxu0
        %v10118 = vpop.f32.mrf.mxu0
        %v10119 = vadd.f32 %v9958, %v10118
        %v10120 = vpop.f32.mrf.mxu0
        %10121 = vmatprep.mubr.bf16.mxu0 %v9057
        %10122 = vmatmul.mubr.bf16.gmra.mxu0 %v9056
        %v10123 = vpop.f32.mrf.mxu0
        %v10124 = vadd.f32 %v9963, %v10123
        %v10125 = vpop.f32.mrf.mxu0
        %v10126 = vpop.f32.mrf.mxu0
        %v10127 = vadd.f32 %v9966, %v10126
        %v10128 = vpop.f32.mrf.mxu0
        %10129 = vmatprep.mubr.bf16.mxu0 %v9066
        %10130 = vmatmul.mubr.bf16.gmra.mxu0 %v9065
        %v10131 = vpop.f32.mrf.mxu0
        %v10132 = vadd.f32 %v9971, %v10131
        %v10133 = vpop.f32.mrf.mxu0
        %v10134 = vpop.f32.mrf.mxu0
        %v10135 = vadd.f32 %v9974, %v10134
        %v10136 = vpop.f32.mrf.mxu0
        %10137 = vmatprep.mubr.bf16.mxu0 %v9075
        %10138 = vmatmul.mubr.bf16.gmra.mxu0 %v9074
        %v10139 = vpop.f32.mrf.mxu0
        %v10140 = vadd.f32 %v9979, %v10139
        %v10141 = vpop.f32.mrf.mxu0
        %v10142 = vpop.f32.mrf.mxu0
        %v10143 = vadd.f32 %v9982, %v10142
        %v10144 = vpop.f32.mrf.mxu0
        %10145 = vmatprep.mubr.bf16.mxu0 %v9084
        %10146 = vmatmul.mubr.bf16.gmra.mxu0 %v9083
        %v10147 = vpop.f32.mrf.mxu0
        %v10148 = vadd.f32 %v9987, %v10147
        %v10149 = vpop.f32.mrf.mxu0
        %v10150 = vpop.f32.mrf.mxu0
        %v10151 = vadd.f32 %v9990, %v10150
        %v10152 = vpop.f32.mrf.mxu0
        %10153 = vmatprep.mubr.bf16.mxu0 %v9093
        %10154 = vmatmul.mubr.bf16.gmra.mxu0 %v9092
        %v10155 = vpop.f32.mrf.mxu0
        %v10156 = vadd.f32 %v9995, %v10155
        %v10157 = vpop.f32.mrf.mxu0
        %v10158 = vpop.f32.mrf.mxu0
        %v10159 = vadd.f32 %v9998, %v10158
        %v10160 = vpop.f32.mrf.mxu0
        %10161 = vmatprep.mubr.bf16.mxu0 %v9102
        %10162 = vmatmul.mubr.bf16.gmra.mxu0 %v9101
        %v10163 = vpop.f32.mrf.mxu0
        %v10164 = vadd.f32 %v10003, %v10163
        %v10165 = vpop.f32.mrf.mxu0
        %v10166 = vpop.f32.mrf.mxu0
        %v10167 = vadd.f32 %v10006, %v10166
        %v10168 = vpop.f32.mrf.mxu0
        %10169 = vmatprep.mubr.bf16.mxu0 %v9111
        %10170 = vmatmul.mubr.bf16.gmra.mxu0 %v9110
        %v10171 = vpop.f32.mrf.mxu0
        %v10172 = vadd.f32 %v10011, %v10171
        %v10173 = vpop.f32.mrf.mxu0
        %v10174 = vpop.f32.mrf.mxu0
        %v10175 = vadd.f32 %v10014, %v10174
        %v10176 = vpop.f32.mrf.mxu0
        %10177 = vmatprep.mubr.bf16.mxu0 %v9120
        %10178 = vmatmul.mubr.bf16.gmra.mxu0 %v9119
        %v10179 = vpop.f32.mrf.mxu0
        %v10180 = vadd.f32 %v10019, %v10179
        %v10181 = vpop.f32.mrf.mxu0
        %v10182 = vpop.f32.mrf.mxu0
        %v10183 = vadd.f32 %v10022, %v10182
        %v10184 = vpop.f32.mrf.mxu0
        %10185 = vmatprep.mubr.bf16.mxu0 %v9129
        %10186 = vmatmul.mubr.bf16.gmra.mxu0 %v9128
        %v10187 = vpop.f32.mrf.mxu0
        %v10188 = vadd.f32 %v10027, %v10187
        %v10189 = vpop.f32.mrf.mxu0
        %v10190 = vpop.f32.mrf.mxu0
        %v10191 = vadd.f32 %v10030, %v10190
        %v10192 = vpop.f32.mrf.mxu0
        %10193 = vmatprep.mubr.bf16.mxu0 %v9138
        %10194 = vmatmul.mubr.bf16.gmra.mxu0 %v9137
        %v10195 = vpop.f32.mrf.mxu0
        %v10196 = vadd.f32 %v10035, %v10195
        %v10197 = vpop.f32.mrf.mxu0
        %v10198 = vpop.f32.mrf.mxu0
        %v10199 = vadd.f32 %v10038, %v10198
        %v10200 = vpop.f32.mrf.mxu0
        %10201 = vmatprep.mubr.bf16.mxu0 %v9147
        %10202 = vmatmul.mubr.bf16.gmra.mxu0 %v9146
        %v10203 = vpop.f32.mrf.mxu0
        %v10204 = vadd.f32 %v10043, %v10203
        %v10205 = vpop.f32.mrf.mxu0
        %v10206 = vpop.f32.mrf.mxu0
        %v10207 = vadd.f32 %v10046, %v10206
        %v10208 = vpop.f32.mrf.mxu0
        %10209 = vdwg.mxu0
        %10210 = vmatprep.subr.bf16.mxu0 0
        %10211 = vmatpush1.bf16.msra.mxu0 %v9638
        %10212 = vmatprep.subr.bf16.mxu0 0
        %10213 = vmatpush1.bf16.msra.mxu0 %v9637
        %10214 = vmatprep.subr.bf16.mxu0 0
        %10215 = vmatpush1.bf16.msra.mxu0 %v9636
        %10216 = vmatprep.subr.bf16.mxu0 0
        %10217 = vmatpush1.bf16.msra.mxu0 %v9635
        %10218 = vmatprep.subr.bf16.mxu0 0
        %10219 = vmatpush1.bf16.msra.mxu0 %v9634
        %10220 = vmatprep.subr.bf16.mxu0 0
        %10221 = vmatpush1.bf16.msra.mxu0 %v9633
        %10222 = vmatprep.subr.bf16.mxu0 0
        %10223 = vmatpush1.bf16.msra.mxu0 %v9632
        %10224 = vmatprep.subr.bf16.mxu0 0
        %10225 = vmatpush1.bf16.msra.mxu0 %v9631
        %10226 = vmatprep.subr.bf16.mxu0 0
        %10227 = vmatpush2.bf16.msra.mxu0 %v9646
        %10228 = vmatprep.subr.bf16.mxu0 0
        %10229 = vmatpush2.bf16.msra.mxu0 %v9645
        %10230 = vmatprep.subr.bf16.mxu0 0
        %10231 = vmatpush2.bf16.msra.mxu0 %v9644
        %10232 = vmatprep.subr.bf16.mxu0 0
        %10233 = vmatpush2.bf16.msra.mxu0 %v9643
        %10234 = vmatprep.subr.bf16.mxu0 0
        %10235 = vmatpush2.bf16.msra.mxu0 %v9642
        %10236 = vmatprep.subr.bf16.mxu0 0
        %10237 = vmatpush2.bf16.msra.mxu0 %v9641
        %10238 = vmatprep.subr.bf16.mxu0 0
        %10239 = vmatpush2.bf16.msra.mxu0 %v9640
        %10240 = vmatprep.subr.bf16.mxu0 0
        %10241 = vmatpush2.bf16.msra.mxu0 %v9639
        %10242 = vmatprep.mubr.bf16.mxu0 %v9014
        %10243 = vmatmul.mubr.bf16.gmra.mxu0 %v9013
        %v10244 = vpop.f32.mrf.mxu0
        %v10245 = vadd.f32 %v10084, %v10244
        %v10246 = vpop.f32.mrf.mxu0
        %v10247 = vpop.f32.mrf.mxu0
        %v10248 = vadd.f32 %v10087, %v10247
        %v10249 = vpop.f32.mrf.mxu0
        %10250 = vmatprep.mubr.bf16.mxu0 %v9023
        %10251 = vmatmul.mubr.bf16.gmra.mxu0 %v9022
        %v10252 = vpop.f32.mrf.mxu0
        %v10253 = vadd.f32 %v10092, %v10252
        %v10254 = vpop.f32.mrf.mxu0
        %v10255 = vpop.f32.mrf.mxu0
        %v10256 = vadd.f32 %v10095, %v10255
        %v10257 = vpop.f32.mrf.mxu0
        %10258 = vmatprep.mubr.bf16.mxu0 %v9032
        %10259 = vmatmul.mubr.bf16.gmra.mxu0 %v9031
        %v10260 = vpop.f32.mrf.mxu0
        %v10261 = vadd.f32 %v10100, %v10260
        %v10262 = vpop.f32.mrf.mxu0
        %v10263 = vpop.f32.mrf.mxu0
        %v10264 = vadd.f32 %v10103, %v10263
        %v10265 = vpop.f32.mrf.mxu0
        %10266 = vmatprep.mubr.bf16.mxu0 %v9041
        %10267 = vmatmul.mubr.bf16.gmra.mxu0 %v9040
        %v10268 = vpop.f32.mrf.mxu0
        %v10269 = vadd.f32 %v10108, %v10268
        %v10270 = vpop.f32.mrf.mxu0
        %v10271 = vpop.f32.mrf.mxu0
        %v10272 = vadd.f32 %v10111, %v10271
        %v10273 = vpop.f32.mrf.mxu0
        %10274 = vmatprep.mubr.bf16.mxu0 %v9050
        %10275 = vmatmul.mubr.bf16.gmra.mxu0 %v9049
        %v10276 = vpop.f32.mrf.mxu0
        %v10277 = vadd.f32 %v10116, %v10276
        %v10278 = vpop.f32.mrf.mxu0
        %v10279 = vpop.f32.mrf.mxu0
        %v10280 = vadd.f32 %v10119, %v10279
        %v10281 = vpop.f32.mrf.mxu0
        %10282 = vmatprep.mubr.bf16.mxu0 %v9059
        %10283 = vmatmul.mubr.bf16.gmra.mxu0 %v9058
        %v10284 = vpop.f32.mrf.mxu0
        %v10285 = vadd.f32 %v10124, %v10284
        %v10286 = vpop.f32.mrf.mxu0
        %v10287 = vpop.f32.mrf.mxu0
        %v10288 = vadd.f32 %v10127, %v10287
        %v10289 = vpop.f32.mrf.mxu0
        %10290 = vmatprep.mubr.bf16.mxu0 %v9068
        %10291 = vmatmul.mubr.bf16.gmra.mxu0 %v9067
        %v10292 = vpop.f32.mrf.mxu0
        %v10293 = vadd.f32 %v10132, %v10292
        %v10294 = vpop.f32.mrf.mxu0
        %v10295 = vpop.f32.mrf.mxu0
        %v10296 = vadd.f32 %v10135, %v10295
        %v10297 = vpop.f32.mrf.mxu0
        %10298 = vmatprep.mubr.bf16.mxu0 %v9077
        %10299 = vmatmul.mubr.bf16.gmra.mxu0 %v9076
        %v10300 = vpop.f32.mrf.mxu0
        %v10301 = vadd.f32 %v10140, %v10300
        %v10302 = vpop.f32.mrf.mxu0
        %v10303 = vpop.f32.mrf.mxu0
        %v10304 = vadd.f32 %v10143, %v10303
        %v10305 = vpop.f32.mrf.mxu0
        %10306 = vmatprep.mubr.bf16.mxu0 %v9086
        %10307 = vmatmul.mubr.bf16.gmra.mxu0 %v9085
        %v10308 = vpop.f32.mrf.mxu0
        %v10309 = vadd.f32 %v10148, %v10308
        %v10310 = vpop.f32.mrf.mxu0
        %v10311 = vpop.f32.mrf.mxu0
        %v10312 = vadd.f32 %v10151, %v10311
        %v10313 = vpop.f32.mrf.mxu0
        %10314 = vmatprep.mubr.bf16.mxu0 %v9095
        %10315 = vmatmul.mubr.bf16.gmra.mxu0 %v9094
        %v10316 = vpop.f32.mrf.mxu0
        %v10317 = vadd.f32 %v10156, %v10316
        %v10318 = vpop.f32.mrf.mxu0
        %v10319 = vpop.f32.mrf.mxu0
        %v10320 = vadd.f32 %v10159, %v10319
        %v10321 = vpop.f32.mrf.mxu0
        %10322 = vmatprep.mubr.bf16.mxu0 %v9104
        %10323 = vmatmul.mubr.bf16.gmra.mxu0 %v9103
        %v10324 = vpop.f32.mrf.mxu0
        %v10325 = vadd.f32 %v10164, %v10324
        %v10326 = vpop.f32.mrf.mxu0
        %v10327 = vpop.f32.mrf.mxu0
        %v10328 = vadd.f32 %v10167, %v10327
        %v10329 = vpop.f32.mrf.mxu0
        %10330 = vmatprep.mubr.bf16.mxu0 %v9113
        %10331 = vmatmul.mubr.bf16.gmra.mxu0 %v9112
        %v10332 = vpop.f32.mrf.mxu0
        %v10333 = vadd.f32 %v10172, %v10332
        %v10334 = vpop.f32.mrf.mxu0
        %v10335 = vpop.f32.mrf.mxu0
        %v10336 = vadd.f32 %v10175, %v10335
        %v10337 = vpop.f32.mrf.mxu0
        %10338 = vmatprep.mubr.bf16.mxu0 %v9122
        %10339 = vmatmul.mubr.bf16.gmra.mxu0 %v9121
        %v10340 = vpop.f32.mrf.mxu0
        %v10341 = vadd.f32 %v10180, %v10340
        %v10342 = vpop.f32.mrf.mxu0
        %v10343 = vpop.f32.mrf.mxu0
        %v10344 = vadd.f32 %v10183, %v10343
        %v10345 = vpop.f32.mrf.mxu0
        %10346 = vmatprep.mubr.bf16.mxu0 %v9131
        %10347 = vmatmul.mubr.bf16.gmra.mxu0 %v9130
        %v10348 = vpop.f32.mrf.mxu0
        %v10349 = vadd.f32 %v10188, %v10348
        %v10350 = vpop.f32.mrf.mxu0
        %v10351 = vpop.f32.mrf.mxu0
        %v10352 = vadd.f32 %v10191, %v10351
        %v10353 = vpop.f32.mrf.mxu0
        %10354 = vmatprep.mubr.bf16.mxu0 %v9140
        %10355 = vmatmul.mubr.bf16.gmra.mxu0 %v9139
        %v10356 = vpop.f32.mrf.mxu0
        %v10357 = vadd.f32 %v10196, %v10356
        %v10358 = vpop.f32.mrf.mxu0
        %v10359 = vpop.f32.mrf.mxu0
        %v10360 = vadd.f32 %v10199, %v10359
        %v10361 = vpop.f32.mrf.mxu0
        %10362 = vmatprep.mubr.bf16.mxu0 %v9149
        %10363 = vmatmul.mubr.bf16.gmra.mxu0 %v9148
        %v10364 = vpop.f32.mrf.mxu0
        %v10365 = vadd.f32 %v10204, %v10364
        %v10366 = vpop.f32.mrf.mxu0
        %v10367 = vpop.f32.mrf.mxu0
        %v10368 = vadd.f32 %v10207, %v10367
        %v10369 = vpop.f32.mrf.mxu0
        %10370 = vdwg.mxu0
        %10371 = vmatprep.subr.bf16.mxu0 0
        %10372 = vmatpush1.bf16.msra.mxu0 %v9654
        %10373 = vmatprep.subr.bf16.mxu0 0
        %10374 = vmatpush1.bf16.msra.mxu0 %v9653
        %10375 = vmatprep.subr.bf16.mxu0 0
        %10376 = vmatpush1.bf16.msra.mxu0 %v9652
        %10377 = vmatprep.subr.bf16.mxu0 0
        %10378 = vmatpush1.bf16.msra.mxu0 %v9651
        %10379 = vmatprep.subr.bf16.mxu0 0
        %10380 = vmatpush1.bf16.msra.mxu0 %v9650
        %10381 = vmatprep.subr.bf16.mxu0 0
        %10382 = vmatpush1.bf16.msra.mxu0 %v9649
        %10383 = vmatprep.subr.bf16.mxu0 0
        %10384 = vmatpush1.bf16.msra.mxu0 %v9648
        %10385 = vmatprep.subr.bf16.mxu0 0
        %10386 = vmatpush1.bf16.msra.mxu0 %v9647
        %10387 = vmatprep.subr.bf16.mxu0 0
        %10388 = vmatpush2.bf16.msra.mxu0 0
        %10389 = vmatprep.subr.bf16.mxu0 0
        %10390 = vmatpush2.bf16.msra.mxu0 0
        %10391 = vmatprep.subr.bf16.mxu0 0
        %10392 = vmatpush2.bf16.msra.mxu0 0
        %10393 = vmatprep.subr.bf16.mxu0 0
        %10394 = vmatpush2.bf16.msra.mxu0 0
        %10395 = vmatprep.subr.bf16.mxu0 0
        %10396 = vmatpush2.bf16.msra.mxu0 0
        %10397 = vmatprep.subr.bf16.mxu0 0
        %10398 = vmatpush2.bf16.msra.mxu0 0
        %10399 = vmatprep.subr.bf16.mxu0 0
        %10400 = vmatpush2.bf16.msra.mxu0 0
        %10401 = vmatprep.subr.bf16.mxu0 0
        %10402 = vmatpush2.bf16.msra.mxu0 0
        %10403 = vmatprep.mubr.bf16.mxu0 0
        %10404 = vmatmul.mubr.bf16.gmra.mxu0 %v9015
        %v10405 = vpop.f32.mrf.mxu0
        %v10406 = vadd.f32 %v10245, %v10405
        %v10407 = vpop.f32.mrf.mxu0
        %v10408 = vpop.f32.mrf.mxu0
        %v10409 = vadd.f32 %v10248, %v10408
        %v10410 = vpop.f32.mrf.mxu0
        %10411 = vmatprep.mubr.bf16.mxu0 0
        %10412 = vmatmul.mubr.bf16.gmra.mxu0 %v9024
        %v10413 = vpop.f32.mrf.mxu0
        %v10414 = vadd.f32 %v10253, %v10413
        %v10415 = vpop.f32.mrf.mxu0
        %v10416 = vpop.f32.mrf.mxu0
        %v10417 = vadd.f32 %v10256, %v10416
        %v10418 = vpop.f32.mrf.mxu0
        %10419 = vmatprep.mubr.bf16.mxu0 0
        %10420 = vmatmul.mubr.bf16.gmra.mxu0 %v9033
        %v10421 = vpop.f32.mrf.mxu0
        %v10422 = vadd.f32 %v10261, %v10421
        %v10423 = vpop.f32.mrf.mxu0
        %v10424 = vpop.f32.mrf.mxu0
        %v10425 = vadd.f32 %v10264, %v10424
        %v10426 = vpop.f32.mrf.mxu0
        %10427 = vmatprep.mubr.bf16.mxu0 0
        %10428 = vmatmul.mubr.bf16.gmra.mxu0 %v9042
        %v10429 = vpop.f32.mrf.mxu0
        %v10430 = vadd.f32 %v10269, %v10429
        %v10431 = vpop.f32.mrf.mxu0
        %v10432 = vpop.f32.mrf.mxu0
        %v10433 = vadd.f32 %v10272, %v10432
        %v10434 = vpop.f32.mrf.mxu0
        %10435 = vmatprep.mubr.bf16.mxu0 0
        %10436 = vmatmul.mubr.bf16.gmra.mxu0 %v9051
        %v10437 = vpop.f32.mrf.mxu0
        %v10438 = vadd.f32 %v10277, %v10437
        %v10439 = vpop.f32.mrf.mxu0
        %v10440 = vpop.f32.mrf.mxu0
        %v10441 = vadd.f32 %v10280, %v10440
        %v10442 = vpop.f32.mrf.mxu0
        %10443 = vmatprep.mubr.bf16.mxu0 0
        %10444 = vmatmul.mubr.bf16.gmra.mxu0 %v9060
        %v10445 = vpop.f32.mrf.mxu0
        %v10446 = vadd.f32 %v10285, %v10445
        %v10447 = vpop.f32.mrf.mxu0
        %v10448 = vpop.f32.mrf.mxu0
        %v10449 = vadd.f32 %v10288, %v10448
        %v10450 = vpop.f32.mrf.mxu0
        %10451 = vmatprep.mubr.bf16.mxu0 0
        %10452 = vmatmul.mubr.bf16.gmra.mxu0 %v9069
        %v10453 = vpop.f32.mrf.mxu0
        %v10454 = vadd.f32 %v10293, %v10453
        %v10455 = vpop.f32.mrf.mxu0
        %v10456 = vpop.f32.mrf.mxu0
        %v10457 = vadd.f32 %v10296, %v10456
        %v10458 = vpop.f32.mrf.mxu0
        %10459 = vmatprep.mubr.bf16.mxu0 0
        %10460 = vmatmul.mubr.bf16.gmra.mxu0 %v9078
        %v10461 = vpop.f32.mrf.mxu0
        %v10462 = vadd.f32 %v10301, %v10461
        %v10463 = vpop.f32.mrf.mxu0
        %v10464 = vpop.f32.mrf.mxu0
        %v10465 = vadd.f32 %v10304, %v10464
        %v10466 = vpop.f32.mrf.mxu0
        %10467 = vmatprep.mubr.bf16.mxu0 0
        %10468 = vmatmul.mubr.bf16.gmra.mxu0 %v9087
        %v10469 = vpop.f32.mrf.mxu0
        %v10470 = vadd.f32 %v10309, %v10469
        %v10471 = vpop.f32.mrf.mxu0
        %v10472 = vpop.f32.mrf.mxu0
        %v10473 = vadd.f32 %v10312, %v10472
        %v10474 = vpop.f32.mrf.mxu0
        %10475 = vmatprep.mubr.bf16.mxu0 0
        %10476 = vmatmul.mubr.bf16.gmra.mxu0 %v9096
        %v10477 = vpop.f32.mrf.mxu0
        %v10478 = vadd.f32 %v10317, %v10477
        %v10479 = vpop.f32.mrf.mxu0
        %v10480 = vpop.f32.mrf.mxu0
        %v10481 = vadd.f32 %v10320, %v10480
        %v10482 = vpop.f32.mrf.mxu0
        %10483 = vmatprep.mubr.bf16.mxu0 0
        %10484 = vmatmul.mubr.bf16.gmra.mxu0 %v9105
        %v10485 = vpop.f32.mrf.mxu0
        %v10486 = vadd.f32 %v10325, %v10485
        %v10487 = vpop.f32.mrf.mxu0
        %v10488 = vpop.f32.mrf.mxu0
        %v10489 = vadd.f32 %v10328, %v10488
        %v10490 = vpop.f32.mrf.mxu0
        %10491 = vmatprep.mubr.bf16.mxu0 0
        %10492 = vmatmul.mubr.bf16.gmra.mxu0 %v9114
        %v10493 = vpop.f32.mrf.mxu0
        %v10494 = vadd.f32 %v10333, %v10493
        %v10495 = vpop.f32.mrf.mxu0
        %v10496 = vpop.f32.mrf.mxu0
        %v10497 = vadd.f32 %v10336, %v10496
        %v10498 = vpop.f32.mrf.mxu0
        %10499 = vmatprep.mubr.bf16.mxu0 0
        %10500 = vmatmul.mubr.bf16.gmra.mxu0 %v9123
        %v10501 = vpop.f32.mrf.mxu0
        %v10502 = vadd.f32 %v10341, %v10501
        %v10503 = vpop.f32.mrf.mxu0
        %v10504 = vpop.f32.mrf.mxu0
        %v10505 = vadd.f32 %v10344, %v10504
        %v10506 = vpop.f32.mrf.mxu0
        %10507 = vmatprep.mubr.bf16.mxu0 0
        %10508 = vmatmul.mubr.bf16.gmra.mxu0 %v9132
        %v10509 = vpop.f32.mrf.mxu0
        %v10510 = vadd.f32 %v10349, %v10509
        %v10511 = vpop.f32.mrf.mxu0
        %v10512 = vpop.f32.mrf.mxu0
        %v10513 = vadd.f32 %v10352, %v10512
        %v10514 = vpop.f32.mrf.mxu0
        %10515 = vmatprep.mubr.bf16.mxu0 0
        %10516 = vmatmul.mubr.bf16.gmra.mxu0 %v9141
        %v10517 = vpop.f32.mrf.mxu0
        %v10518 = vadd.f32 %v10357, %v10517
        %v10519 = vpop.f32.mrf.mxu0
        %v10520 = vpop.f32.mrf.mxu0
        %v10521 = vadd.f32 %v10360, %v10520
        %v10522 = vpop.f32.mrf.mxu0
        %10523 = vmatprep.mubr.bf16.mxu0 0
        %10524 = vmatmul.mubr.bf16.gmra.mxu0 %v9150
        %v10525 = vpop.f32.mrf.mxu0
        %v10526 = vadd.f32 %v10365, %v10525
        %v10527 = vpop.f32.mrf.mxu0
        %v10528 = vpop.f32.mrf.mxu0
        %v10529 = vadd.f32 %v10368, %v10528
        %v10530 = vpop.f32.mrf.mxu0
        %10531 = vdwg.mxu0
        %v10532 = vld [vmem:[%s3 + $0x2] sm:$0x1]
        %v10533 = vlaneseq
        %v10534 = vshrl.u32 %v10533, 7
        %v10535 = vsub.s32 0, %v10534
        %v10536 = vrot.slane %v10532, %v10535
        %v10537 = vmul.f32 %v10406, %v10536
        %v10538 = vmul.f32 %v10409, %v10536
        %v10539 = vmul.f32 %v10414, %v10536
        %v10540 = vmul.f32 %v10417, %v10536
        %v10541 = vmul.f32 %v10422, %v10536
        %v10542 = vmul.f32 %v10425, %v10536
        %v10543 = vmul.f32 %v10430, %v10536
        %v10544 = vmul.f32 %v10433, %v10536
        %v10545 = vmul.f32 %v10438, %v10536
        %v10546 = vmul.f32 %v10441, %v10536
        %v10547 = vmul.f32 %v10446, %v10536
        %v10548 = vmul.f32 %v10449, %v10536
        %v10549 = vmul.f32 %v10454, %v10536
        %v10550 = vmul.f32 %v10457, %v10536
        %v10551 = vmul.f32 %v10462, %v10536
        %v10552 = vmul.f32 %v10465, %v10536
        %v10553 = vmul.f32 %v10470, %v10536
        %v10554 = vmul.f32 %v10473, %v10536
        %v10555 = vmul.f32 %v10478, %v10536
        %v10556 = vmul.f32 %v10481, %v10536
        %v10557 = vmul.f32 %v10486, %v10536
        %v10558 = vmul.f32 %v10489, %v10536
        %v10559 = vmul.f32 %v10494, %v10536
        %v10560 = vmul.f32 %v10497, %v10536
        %v10561 = vmul.f32 %v10502, %v10536
        %v10562 = vmul.f32 %v10505, %v10536
        %v10563 = vmul.f32 %v10510, %v10536
        %v10564 = vmul.f32 %v10513, %v10536
        %v10565 = vmul.f32 %v10518, %v10536
        %v10566 = vmul.f32 %v10521, %v10536
        %v10567 = vmul.f32 %v10526, %v10536
        %v10568 = vmul.f32 %v10529, %v10536
        %v10569 = vld [vmem:[%s3 + $0x3] sm:$0x1]
        %v10570 = vlaneseq
        %v10571 = vshrl.u32 %v10570, 7
        %v10572 = vsub.s32 0, %v10571
        %v10573 = vrot.slane %v10569, %v10572
        %v10574 = vadd.f32 %v10537, %v10573
        %v10575 = vadd.f32 %v10538, %v10573
        %v10576 = vadd.f32 %v10539, %v10573
        %v10577 = vadd.f32 %v10540, %v10573
        %v10578 = vadd.f32 %v10541, %v10573
        %v10579 = vadd.f32 %v10542, %v10573
        %v10580 = vadd.f32 %v10543, %v10573
        %v10581 = vadd.f32 %v10544, %v10573
        %v10582 = vadd.f32 %v10545, %v10573
        %v10583 = vadd.f32 %v10546, %v10573
        %v10584 = vadd.f32 %v10547, %v10573
        %v10585 = vadd.f32 %v10548, %v10573
        %v10586 = vadd.f32 %v10549, %v10573
        %v10587 = vadd.f32 %v10550, %v10573
        %v10588 = vadd.f32 %v10551, %v10573
        %v10589 = vadd.f32 %v10552, %v10573
        %v10590 = vadd.f32 %v10553, %v10573
        %v10591 = vadd.f32 %v10554, %v10573
        %v10592 = vadd.f32 %v10555, %v10573
        %v10593 = vadd.f32 %v10556, %v10573
        %v10594 = vadd.f32 %v10557, %v10573
        %v10595 = vadd.f32 %v10558, %v10573
        %v10596 = vadd.f32 %v10559, %v10573
        %v10597 = vadd.f32 %v10560, %v10573
        %v10598 = vadd.f32 %v10561, %v10573
        %v10599 = vadd.f32 %v10562, %v10573
        %v10600 = vadd.f32 %v10563, %v10573
        %v10601 = vadd.f32 %v10564, %v10573
        %v10602 = vadd.f32 %v10565, %v10573
        %v10603 = vadd.f32 %v10566, %v10573
        %v10604 = vadd.f32 %v10567, %v10573
        %v10605 = vadd.f32 %v10568, %v10573
        %v10606 = vld [vmem:[#allocation5] sm:$0xff]
        %v10607 = vld [vmem:[#allocation5 + $0x8] sm:$0xff]
        %v10608 = vld [vmem:[#allocation5 + $0x10] sm:$0xff]
        %v10609 = vld [vmem:[#allocation5 + $0x18] sm:$0xff]
        %v10610 = vld [vmem:[#allocation5 + $0x20] sm:$0xff]
        %v10611 = vld [vmem:[#allocation5 + $0x28] sm:$0xff]
        %v10612 = vld [vmem:[#allocation5 + $0x30] sm:$0xff]
        %v10613 = vld [vmem:[#allocation5 + $0x38] sm:$0xff]
        %v10614 = vld [vmem:[#allocation5 + $0x40] sm:$0xff]
        %v10615 = vld [vmem:[#allocation5 + $0x48] sm:$0xff]
        %v10616 = vld [vmem:[#allocation5 + $0x50] sm:$0xff]
        %v10617 = vld [vmem:[#allocation5 + $0x58] sm:$0xff]
        %v10618 = vld [vmem:[#allocation5 + $0x60] sm:$0xff]
        %v10619 = vld [vmem:[#allocation5 + $0x68] sm:$0xff]
        %v10620 = vld [vmem:[#allocation5 + $0x70] sm:$0xff]
        %v10621 = vld [vmem:[#allocation5 + $0x78] sm:$0xff]
        %v10622 = vld [vmem:[#allocation5 + $0x80] sm:$0xff]
        %v10623 = vld [vmem:[#allocation5 + $0x88] sm:$0xff]
        %v10624 = vld [vmem:[#allocation5 + $0x90] sm:$0xff]
        %v10625 = vld [vmem:[#allocation5 + $0x98] sm:$0xff]
        %v10626 = vld [vmem:[#allocation5 + $0xa0] sm:$0xff]
        %v10627 = vld [vmem:[#allocation5 + $0xa8] sm:$0xff]
        %v10628 = vld [vmem:[#allocation5 + $0xb0] sm:$0xff]
        %v10629 = vld [vmem:[#allocation5 + $0xb8] sm:$0xff]
        %v10630 = vld [vmem:[#allocation5 + $0xc0] sm:$0xff]
        %v10631 = vld [vmem:[#allocation5 + $0xc8] sm:$0xff]
        %v10632 = vld [vmem:[#allocation5 + $0xd0] sm:$0xff]
        %v10633 = vld [vmem:[#allocation5 + $0xd8] sm:$0xff]
        %v10634 = vld [vmem:[#allocation5 + $0xe0] sm:$0xff]
        %v10635 = vld [vmem:[#allocation5 + $0xe8] sm:$0xff]
        %v10636 = vld [vmem:[#allocation5 + $0xf0] sm:$0xff]
        %v10637 = vld [vmem:[#allocation5 + $0xf8] sm:$0xff]
        %v10638 = vadd.f32 %v10574, %v10606
        %v10639 = vadd.f32 %v10575, %v10607
        %v10640 = vadd.f32 %v10576, %v10608
        %v10641 = vadd.f32 %v10577, %v10609
        %v10642 = vadd.f32 %v10578, %v10610
        %v10643 = vadd.f32 %v10579, %v10611
        %v10644 = vadd.f32 %v10580, %v10612
        %v10645 = vadd.f32 %v10581, %v10613
        %v10646 = vadd.f32 %v10582, %v10614
        %v10647 = vadd.f32 %v10583, %v10615
        %v10648 = vadd.f32 %v10584, %v10616
        %v10649 = vadd.f32 %v10585, %v10617
        %v10650 = vadd.f32 %v10586, %v10618
        %v10651 = vadd.f32 %v10587, %v10619
        %v10652 = vadd.f32 %v10588, %v10620
        %v10653 = vadd.f32 %v10589, %v10621
        %v10654 = vadd.f32 %v10590, %v10622
        %v10655 = vadd.f32 %v10591, %v10623
        %v10656 = vadd.f32 %v10592, %v10624
        %v10657 = vadd.f32 %v10593, %v10625
        %v10658 = vadd.f32 %v10594, %v10626
        %v10659 = vadd.f32 %v10595, %v10627
        %v10660 = vadd.f32 %v10596, %v10628
        %v10661 = vadd.f32 %v10597, %v10629
        %v10662 = vadd.f32 %v10598, %v10630
        %v10663 = vadd.f32 %v10599, %v10631
        %v10664 = vadd.f32 %v10600, %v10632
        %v10665 = vadd.f32 %v10601, %v10633
        %v10666 = vadd.f32 %v10602, %v10634
        %v10667 = vadd.f32 %v10603, %v10635
        %v10668 = vadd.f32 %v10604, %v10636
        %v10669 = vadd.f32 %v10605, %v10637
        %v10670 = vmax.f32 %v10638, 0.0
        %v10671 = vmax.f32 %v10639, 0.0
        %v10672 = vmax.f32 %v10640, 0.0
        %v10673 = vmax.f32 %v10641, 0.0
        %v10674 = vmax.f32 %v10642, 0.0
        %v10675 = vmax.f32 %v10643, 0.0
        %v10676 = vmax.f32 %v10644, 0.0
        %v10677 = vmax.f32 %v10645, 0.0
        %v10678 = vmax.f32 %v10646, 0.0
        %v10679 = vmax.f32 %v10647, 0.0
        %v10680 = vmax.f32 %v10648, 0.0
        %v10681 = vmax.f32 %v10649, 0.0
        %v10682 = vmax.f32 %v10650, 0.0
        %v10683 = vmax.f32 %v10651, 0.0
        %v10684 = vmax.f32 %v10652, 0.0
        %v10685 = vmax.f32 %v10653, 0.0
        %v10686 = vmax.f32 %v10654, 0.0
        %v10687 = vmax.f32 %v10655, 0.0
        %v10688 = vmax.f32 %v10656, 0.0
        %v10689 = vmax.f32 %v10657, 0.0
        %v10690 = vmax.f32 %v10658, 0.0
        %v10691 = vmax.f32 %v10659, 0.0
        %v10692 = vmax.f32 %v10660, 0.0
        %v10693 = vmax.f32 %v10661, 0.0
        %v10694 = vmax.f32 %v10662, 0.0
        %v10695 = vmax.f32 %v10663, 0.0
        %v10696 = vmax.f32 %v10664, 0.0
        %v10697 = vmax.f32 %v10665, 0.0
        %v10698 = vmax.f32 %v10666, 0.0
        %v10699 = vmax.f32 %v10667, 0.0
        %v10700 = vmax.f32 %v10668, 0.0
        %v10701 = vmax.f32 %v10669, 0.0
        %10702 = vst [vmem:[%s232] sm:$0xff] %v10670
        %10703 = vst [vmem:[%s232 + $0x8] sm:$0xff] %v10671
        %10704 = vst [vmem:[%s232 + $0x10] sm:$0xff] %v10672
        %10705 = vst [vmem:[%s232 + $0x18] sm:$0xff] %v10673
        %10706 = vst [vmem:[%s232 + $0x20] sm:$0xff] %v10674
        %10707 = vst [vmem:[%s232 + $0x28] sm:$0xff] %v10675
        %10708 = vst [vmem:[%s232 + $0x30] sm:$0xff] %v10676
        %10709 = vst [vmem:[%s232 + $0x38] sm:$0xff] %v10677
        %10710 = vst [vmem:[%s232 + $0x40] sm:$0xff] %v10678
        %10711 = vst [vmem:[%s232 + $0x48] sm:$0xff] %v10679
        %10712 = vst [vmem:[%s232 + $0x50] sm:$0xff] %v10680
        %10713 = vst [vmem:[%s232 + $0x58] sm:$0xff] %v10681
        %10714 = vst [vmem:[%s232 + $0x60] sm:$0xff] %v10682
        %10715 = vst [vmem:[%s232 + $0x68] sm:$0xff] %v10683
        %10716 = vst [vmem:[%s232 + $0x70] sm:$0xff] %v10684
        %10717 = vst [vmem:[%s232 + $0x78] sm:$0xff] %v10685
        %10718 = vst [vmem:[%s232 + $0x80] sm:$0xff] %v10686
        %10719 = vst [vmem:[%s232 + $0x88] sm:$0xff] %v10687
        %10720 = vst [vmem:[%s232 + $0x90] sm:$0xff] %v10688
        %10721 = vst [vmem:[%s232 + $0x98] sm:$0xff] %v10689
        %10722 = vst [vmem:[%s232 + $0xa0] sm:$0xff] %v10690
        %10723 = vst [vmem:[%s232 + $0xa8] sm:$0xff] %v10691
        %10724 = vst [vmem:[%s232 + $0xb0] sm:$0xff] %v10692
        %10725 = vst [vmem:[%s232 + $0xb8] sm:$0xff] %v10693
        %10726 = vst [vmem:[%s232 + $0xc0] sm:$0xff] %v10694
        %10727 = vst [vmem:[%s232 + $0xc8] sm:$0xff] %v10695
        %10728 = vst [vmem:[%s232 + $0xd0] sm:$0xff] %v10696
        %10729 = vst [vmem:[%s232 + $0xd8] sm:$0xff] %v10697
        %10730 = vst [vmem:[%s232 + $0xe0] sm:$0xff] %v10698
        %10731 = vst [vmem:[%s232 + $0xe8] sm:$0xff] %v10699
        %10732 = vst [vmem:[%s232 + $0xf0] sm:$0xff] %v10700
        %10733 = vst [vmem:[%s232 + $0xf8] sm:$0xff] %v10701
        %s10734 = sand.u32 %s138, 1
        %s10735 = scalar_lea.sflag [#allocation8], %s10734
        %s10736 = sand.u32 %s138, 1
        %s10737 = smul.addr %s10736, 256
        %s10738 = scalar_lea.vmem [#allocation9], %s10737
        // Predicated region
        $region45: #{tpu_custom_call.1} parent=39 // pred_check
          %p10739 = pneg %p148
        $region46: #{tpu_custom_call.1} parent=39 // pred_check_branch
          %10741 = sbr.rel (%p10739) target = $region48
        $region47: #{tpu_custom_call.1} parent=39 // pred_region
          %s10743 = ssub.s32 4096, 4096
          %10744 = vsyncadd %s10735, %s10743
          %s10745 = smul.addr %s20, 32
          %s10746 = smul.addr %s10745, 128
          %s10747 = scalar_lea.hbm %s5, %s10746
          %s10748 = sshll.u32 %s10738, 4
          %s10749 = int_to_ptr.vmem [resolvable:$true] %s10748
          %10754 = dma.vmem_to_hbm [thread:$0]  %s10749, 4096, %s10747, %s10735, 128, 128, 8
        $region48: #{tpu_custom_call.1} parent=39 // pred_fallthru
          _
      $region40: #{tpu_custom_call.1} parent=5 // pred_fallthru
        _
      %p10755 = scmp.le.s32.totalorder 2, %s15
      // Predicated region
      $region49: #{tpu_custom_call.1} parent=5 // pred_check
        %p10756 = pneg %p10755
      $region50: #{tpu_custom_call.1} parent=5 // pred_check_branch
        %10758 = sbr.rel (%p10756) target = $region52
      $region51: #{tpu_custom_call.1} parent=5 // pred_region
        %s10759 = ssub.s32 %s15, 2
        // Predicated region
        $region53: #{tpu_custom_call.1} parent=51 // pred_check
          %p10760 = pneg %p154
        $region54: #{tpu_custom_call.1} parent=51 // pred_check_branch
          %10762 = sbr.rel (%p10760) target = $region56
        $region55: #{tpu_custom_call.1} parent=51 // pred_region
          %s10763 = sand.u32 %s139, 1
          %s10764 = scalar_lea.sflag [#allocation8], %s10763
          %s10765 = sand.u32 %s139, 1
          %s10766 = smul.addr %s10765, 256
          %s10767 = scalar_lea.vmem [#allocation9], %s10766
          %10768 = dma.done %s10764, 4096
        $region56: #{tpu_custom_call.1} parent=51 // pred_fallthru
          _
      $region52: #{tpu_custom_call.1} parent=5 // pred_fallthru
        _
    $region6: #{tpu_custom_call.1} parent=1 // loop_footer
      %s19 = sadd.s32 1, %s15
    $region7: #{tpu_custom_call.1} parent=1 // loop_footer_branch
      %14 = sbr.rel target = $region3
    $region8: #{tpu_custom_call.1} parent=1 // loop_exit
      _
    %10769 = vsyncpa [#allocation7], 1
    %s10770 = scalar_lea.sflag [#allocation7], 1
    %10771 = vsyncpa %s10770, 1
    %10772 = vsyncpa [#allocation8], 1
    %s10773 = scalar_lea.sflag [#allocation8], 1
    %10774 = vsyncpa %s10773, 1

</llo_original>
